<compile_context>
chip_gen: v7x
topology: tpu7x:2x2x1
jax: 0.10.0
libtpu: 0.0.40
codegen_flags: <defaults>
</compile_context>

<pallas_src>
import jax
import jax.numpy as jnp
from jax import lax
from jax.experimental import pallas as pl
from jax.experimental.pallas import tpu as pltpu

EMB = 512
FF_DIM = 2048
HEADS = 8
DK = EMB // HEADS          # = 64 ; Q_dim = K_dim = V_dim
EPS = 1e-5
SCALE = 1.0 / (DK ** 0.5)  # folded into Q before the scores matmul


def _layernorm(x):
    # LayerNorm over last dim with gamma=1, beta=0 (fresh nn.LayerNorm).
    mu = jnp.mean(x, axis=-1, keepdims=True)
    var = jnp.mean((x - mu) ** 2, axis=-1, keepdims=True)
    return (x - mu) * lax.rsqrt(var + EPS)


# ---------------- Pallas kernels ----------------

def mha_kernel(x_ref, wqkv_ref, wo_ref, out_ref, attn_ref):
    """Whole MultiHeadAttention module for one batch element.

    x_ref   : [1, L, EMB] f32 (residual kept in f32)
    wqkv_ref: [EMB, 3*EMB] bf16 (fused W_Q | W_K | W_V), resident
    wo_ref  : [EMB, EMB]   bf16, resident
    out_ref : [1, L, EMB] f32   = LayerNorm(ctx @ W_O + x)
    attn_ref: [1, HEADS, L, L] f32 attention probabilities
    """
    x = x_ref[0]                                           # [L, EMB] f32
    # Fused QKV projection: bf16 operands, f32 accumulation.
    qkv = jnp.dot(x.astype(jnp.bfloat16), wqkv_ref[...],
                  preferred_element_type=jnp.float32)       # [L, 3*EMB] f32

    ctx_parts = []
    for h in range(HEADS):                                  # static unroll
        q_h = (qkv[:, h * DK:(h + 1) * DK] * SCALE).astype(jnp.bfloat16)
        k_h = qkv[:, EMB + h * DK:EMB + (h + 1) * DK].astype(jnp.bfloat16)
        v_h = qkv[:, 2 * EMB + h * DK:2 * EMB + (h + 1) * DK].astype(jnp.bfloat16)

        # Q @ K^T without an explicit transpose: contract last dims.
        scores = lax.dot_general(q_h, k_h, (((1,), (1,)), ((), ())),
                                 preferred_element_type=jnp.float32)  # [L, L]
        # NOTE: masked_fill in the reference is a discarded non-inplace op -> no mask.
        m = jnp.max(scores, axis=-1, keepdims=True)
        e = jnp.exp(scores - m)
        attn_h = e * pl.reciprocal(jnp.sum(e, axis=-1, keepdims=True),
                                   approx=True)
        attn_ref[0, h] = attn_h
        ctx_parts.append(jnp.dot(attn_h.astype(jnp.bfloat16), v_h,
                                 preferred_element_type=jnp.float32))

    ctx = jnp.concatenate(ctx_parts, axis=-1)               # [L, EMB] merged heads
    y = jnp.dot(ctx.astype(jnp.bfloat16), wo_ref[...],
                preferred_element_type=jnp.float32) + x
    out_ref[0] = _layernorm(y)


def ffn_kernel(x_ref, w1_ref, w2_ref, o_ref):
    """out = LayerNorm(relu(x @ W1) @ W2 + x) on a [TILE_M, EMB] row tile."""
    x = x_ref[...]                                           # f32 residual
    h = jnp.dot(x.astype(jnp.bfloat16), w1_ref[...],
                preferred_element_type=jnp.float32)
    h = jnp.maximum(h, 0.0).astype(jnp.bfloat16)
    y = jnp.dot(h, w2_ref[...], preferred_element_type=jnp.float32) + x
    o_ref[...] = _layernorm(y)


# ---------------- wrappers ----------------

def pallas_mha(x, wqkv_bf16, wo_bf16):
    B, L, E = x.shape
    out, attn = pl.pallas_call(
        mha_kernel,
        grid=(B,),
        in_specs=[
            pl.BlockSpec((1, L, E), lambda b: (b, 0, 0)),
            pl.BlockSpec((E, 3 * E), lambda b: (0, 0)),      # resident weight
            pl.BlockSpec((E, E), lambda b: (0, 0)),          # resident weight
        ],
        out_specs=(
            pl.BlockSpec((1, L, E), lambda b: (b, 0, 0)),
            pl.BlockSpec((1, HEADS, L, L), lambda b: (b, 0, 0, 0)),
        ),
        out_shape=(
            jax.ShapeDtypeStruct((B, L, E), jnp.float32),
            jax.ShapeDtypeStruct((B, HEADS, L, L), jnp.float32),
        ),
        compiler_params=pltpu.CompilerParams(
            dimension_semantics=("parallel",),
            vmem_limit_bytes=32 << 20),
    )(x, wqkv_bf16, wo_bf16)
    return out, attn


def _pick_tile_m(m):
    # Largest row tile (<=512, VMEM-safe on v7x's 64 MiB) that divides M;
    # falls back to the full extent (always a legal block shape).
    for t in (512, 256, 128, 64, 32, 16, 8):
        if m % t == 0:
            return t
    return m


def pallas_ffn(x2d, w1_bf16, w2_bf16):
    m = x2d.shape[0]
    tile_m = _pick_tile_m(m)
    return pl.pallas_call(
        ffn_kernel,
        grid=(m // tile_m,),
        in_specs=[
            pl.BlockSpec((tile_m, EMB), lambda i: (i, 0)),
            pl.BlockSpec((EMB, FF_DIM), lambda i: (0, 0)),   # resident weight
            pl.BlockSpec((FF_DIM, EMB), lambda i: (0, 0)),   # resident weight
        ],
        out_specs=pl.BlockSpec((tile_m, EMB), lambda i: (i, 0)),
        out_shape=jax.ShapeDtypeStruct((m, EMB), jnp.float32),
        compiler_params=pltpu.CompilerParams(
            dimension_semantics=("parallel",),
            vmem_limit_bytes=32 << 20),
    )(x2d, w1_bf16, w2_bf16)


def encoder_layer(x, attention_mask, params):
    """x: [B, L, EMB] float32, attention_mask: [B, L, L] (unused, see note)."""
    del attention_mask  # faithfully unused (masked_fill result is discarded)
    B, L, E = x.shape

    # Fuse QKV weights and down-cast weights to bf16 once (f32 MXU accumulate).
    wqkv = jnp.concatenate(
        [params["wq"], params["wk"], params["wv"]], axis=1).astype(jnp.bfloat16)
    wo = params["wo"].astype(jnp.bfloat16)
    w1 = params["w1"].astype(jnp.bfloat16)
    w2 = params["w2"].astype(jnp.bfloat16)

    # Fused multi-head attention (QKV proj + softmax attn + out proj + LN).
    attn_out, attn = pallas_mha(x, wqkv, wo)

    # FeedForward + residual + LayerNorm, M-tiled over B*L rows.
    enc = pallas_ffn(attn_out.reshape(B * L, E), w1, w2)

    return enc.reshape(B, L, E), attn


# ---------------- reference (pure JAX, f32) for a sanity check ----------------

def encoder_layer_ref(x, params):
    B, L, E = x.shape
    x2 = x.reshape(B * L, E)
    q = (x2 @ params["wq"]).reshape(B, L, HEADS, DK).transpose(0, 2, 1, 3)
    k = (x2 @ params["wk"]).reshape(B, L, HEADS, DK).transpose(0, 2, 1, 3)
    v = (x2 @ params["wv"]).reshape(B, L, HEADS, DK).transpose(0, 2, 1, 3)
    scores = jnp.einsum("bhqd,bhkd->bhqk", q, k) / jnp.sqrt(jnp.float32(DK))
    attn = jax.nn.softmax(scores, axis=-1)
    ctx = jnp.einsum("bhqk,bhkd->bhqd", attn, v)
    ctx2 = ctx.transpose(0, 2, 1, 3).reshape(B * L, HEADS * DK)
    a = _layernorm(ctx2 @ params["wo"] + x2)
    f = _layernorm(jnp.maximum(a @ params["w1"], 0.0) @ params["w2"] + a)
    return f.reshape(B, L, E), attn


# ---------------- main ----------------

def init_params(key):
    ks = jax.random.split(key, 6)

    def lin(k, fan_in, fan_out):
        bound = 1.0 / jnp.sqrt(jnp.float32(fan_in))
        return jax.random.uniform(k, (fan_in, fan_out), jnp.float32,
                                  minval=-bound, maxval=bound)

    return {
        "wq": lin(ks[0], EMB, HEADS * DK),
        "wk": lin(ks[1], EMB, HEADS * DK),
        "wv": lin(ks[2], EMB, HEADS * DK),
        "wo": lin(ks[3], HEADS * DK, EMB),
        "w1": lin(ks[4], EMB, FF_DIM),
        "w2": lin(ks[5], FF_DIM, EMB),
    }


if __name__ == "__main__":
    key = jax.random.PRNGKey(0)
    k_x, k_p = jax.random.split(key)

    B, L = 2, 8
    x = jax.random.normal(k_x, (B, L, EMB), dtype=jnp.float32)
    attention_mask = jnp.zeros((B, L, L), dtype=jnp.bool_)
    params = init_params(k_p)

    enc_out, attn = jax.block_until_ready(
        jax.jit(encoder_layer)(x, attention_mask, params))

    ref_out, ref_attn = encoder_layer_ref(x, params)
    assert enc_out.shape == (B, L, EMB) and attn.shape == (B, HEADS, L, L)
    # bf16 operands / f32 accumulation vs. pure-f32 reference.
    assert jnp.allclose(enc_out, ref_out, atol=2e-2, rtol=2e-2)
    assert jnp.allclose(attn, ref_attn, atol=2e-2, rtol=2e-2)

    print("KERNEL_OK")
</pallas_src>

<mosaic_0001>
module attributes {stable_mosaic.version = 11 : i64} {
  func.func @mha_kernel(%arg0: i32, %arg1: memref<1x8x512xf32, #tpu.memory_space<vmem>>, %arg2: memref<512x1536xbf16, #tpu.memory_space<vmem>>, %arg3: memref<512x512xbf16, #tpu.memory_space<vmem>>, %arg4: memref<1x8x512xf32, #tpu.memory_space<vmem>>, %arg5: memref<1x8x8x8xf32, #tpu.memory_space<vmem>>) attributes {dimension_semantics = [#tpu.dimension_semantics<parallel>], iteration_bounds = array<i64: 2>, scalar_prefetch = 0 : i64, scratch_operands = 0 : i64, tpu.core_type = #tpu.core_type<tc>, window_params = [{transform_indices = @transform_0, window_bounds = array<i64: 1, 8, 512>}, {pipeline_mode = #tpu.pipeline_mode<synchronous>, transform_indices = @transform_1, window_bounds = array<i64: 512, 1536>}, {pipeline_mode = #tpu.pipeline_mode<synchronous>, transform_indices = @transform_2, window_bounds = array<i64: 512, 512>}, {transform_indices = @transform_3, window_bounds = array<i64: 1, 8, 512>}, {transform_indices = @transform_4, window_bounds = array<i64: 1, 8, 8, 8>}]} {
    %c0 = arith.constant 0 : index
    %c0_0 = arith.constant 0 : index
    %c0_1 = arith.constant 0 : index
    %0 = vector.load %arg1[%c0, %c0_0, %c0_1] : memref<1x8x512xf32, #tpu.memory_space<vmem>>, vector<1x8x512xf32>
    %1 = vector.shape_cast %0 : vector<1x8x512xf32> to vector<8x512xf32>
    %2 = arith.truncf %1 : vector<8x512xf32> to vector<8x512xbf16>
    %c0_2 = arith.constant 0 : index
    %c0_3 = arith.constant 0 : index
    %3 = vector.load %arg2[%c0_2, %c0_3] : memref<512x1536xbf16, #tpu.memory_space<vmem>>, vector<512x1536xbf16>
    %cst = arith.constant dense<0.000000e+00> : vector<8x1536xf32>
    %4 = tpu.matmul %2, %3, %cst {dimension_numbers = #tpu.dot_dimension_numbers<[1], [0], [0], [1], [0, 0, 1, 1], [], []>} : vector<8x512xbf16>, vector<512x1536xbf16>, vector<8x1536xf32> -> vector<8x1536xf32>
    %5 = vector.extract_strided_slice %4 {offsets = [0, 0], sizes = [8, 64], strides = [1, 1]} : vector<8x1536xf32> to vector<8x64xf32>
    %cst_4 = arith.constant 1.250000e-01 : f32
    %6 = vector.broadcast %cst_4 : f32 to vector<8x64xf32>
    %7 = arith.mulf %5, %6 : vector<8x64xf32>
    %8 = arith.truncf %7 : vector<8x64xf32> to vector<8x64xbf16>
    %9 = vector.extract_strided_slice %4 {offsets = [0, 512], sizes = [8, 64], strides = [1, 1]} : vector<8x1536xf32> to vector<8x64xf32>
    %10 = arith.truncf %9 : vector<8x64xf32> to vector<8x64xbf16>
    %11 = vector.extract_strided_slice %4 {offsets = [0, 1024], sizes = [8, 64], strides = [1, 1]} : vector<8x1536xf32> to vector<8x64xf32>
    %12 = arith.truncf %11 : vector<8x64xf32> to vector<8x64xbf16>
    %cst_5 = arith.constant dense<0.000000e+00> : vector<8x8xf32>
    %13 = tpu.matmul %8, %10, %cst_5 {dimension_numbers = #tpu.dot_dimension_numbers<[1], [1], [0], [0], [0, 0, 1, 0], [], []>} : vector<8x64xbf16>, vector<8x64xbf16>, vector<8x8xf32> -> vector<8x8xf32>
    %cst_6 = arith.constant dense<0xFF800000> : vector<8xf32>
    %14 = vector.multi_reduction <maximumf>, %13, %cst_6 [1] : vector<8x8xf32> to vector<8xf32>
    %15 = vector.shape_cast %14 : vector<8xf32> to vector<8x1xf32>
    %16 = vector.broadcast %15 : vector<8x1xf32> to vector<8x8xf32>
    %17 = arith.subf %13, %16 : vector<8x8xf32>
    %18 = math.exp %17 : vector<8x8xf32>
    %cst_7 = arith.constant dense<0.000000e+00> : vector<8xf32>
    %19 = vector.multi_reduction <add>, %18, %cst_7 [1] : vector<8x8xf32> to vector<8xf32>
    %20 = vector.shape_cast %19 : vector<8xf32> to vector<8x1xf32>
    %21 = tpu.reciprocal %20 {approx = true} : vector<8x1xf32> -> vector<8x1xf32>
    %22 = vector.broadcast %21 : vector<8x1xf32> to vector<8x8xf32>
    %23 = arith.mulf %18, %22 : vector<8x8xf32>
    %c0_8 = arith.constant 0 : index
    %c0_9 = arith.constant 0 : index
    %c0_10 = arith.constant 0 : index
    %c0_11 = arith.constant 0 : index
    %24 = vector.load %arg5[%c0_8, %c0_9, %c0_10, %c0_11] : memref<1x8x8x8xf32, #tpu.memory_space<vmem>>, vector<1x1x8x8xf32>
    %25 = vector.shape_cast %24 : vector<1x1x8x8xf32> to vector<8x8xf32>
    %26 = vector.shape_cast %23 : vector<8x8xf32> to vector<1x1x8x8xf32>
    tpu.vector_store %arg5[%c0_8, %c0_9, %c0_10, %c0_11], %26 {strides = array<i32>} : memref<1x8x8x8xf32, #tpu.memory_space<vmem>>, vector<1x1x8x8xf32>,
    %27 = arith.truncf %23 : vector<8x8xf32> to vector<8x8xbf16>
    %cst_12 = arith.constant dense<0.000000e+00> : vector<8x64xf32>
    %28 = tpu.matmul %27, %12, %cst_12 {dimension_numbers = #tpu.dot_dimension_numbers<[1], [0], [0], [1], [0, 0, 1, 1], [], []>} : vector<8x8xbf16>, vector<8x64xbf16>, vector<8x64xf32> -> vector<8x64xf32>
    %29 = vector.extract_strided_slice %4 {offsets = [0, 64], sizes = [8, 64], strides = [1, 1]} : vector<8x1536xf32> to vector<8x64xf32>
    %cst_13 = arith.constant 1.250000e-01 : f32
    %30 = vector.broadcast %cst_13 : f32 to vector<8x64xf32>
    %31 = arith.mulf %29, %30 : vector<8x64xf32>
    %32 = arith.truncf %31 : vector<8x64xf32> to vector<8x64xbf16>
    %33 = vector.extract_strided_slice %4 {offsets = [0, 576], sizes = [8, 64], strides = [1, 1]} : vector<8x1536xf32> to vector<8x64xf32>
    %34 = arith.truncf %33 : vector<8x64xf32> to vector<8x64xbf16>
    %35 = vector.extract_strided_slice %4 {offsets = [0, 1088], sizes = [8, 64], strides = [1, 1]} : vector<8x1536xf32> to vector<8x64xf32>
    %36 = arith.truncf %35 : vector<8x64xf32> to vector<8x64xbf16>
    %cst_14 = arith.constant dense<0.000000e+00> : vector<8x8xf32>
    %37 = tpu.matmul %32, %34, %cst_14 {dimension_numbers = #tpu.dot_dimension_numbers<[1], [1], [0], [0], [0, 0, 1, 0], [], []>} : vector<8x64xbf16>, vector<8x64xbf16>, vector<8x8xf32> -> vector<8x8xf32>
    %cst_15 = arith.constant dense<0xFF800000> : vector<8xf32>
    %38 = vector.multi_reduction <maximumf>, %37, %cst_15 [1] : vector<8x8xf32> to vector<8xf32>
    %39 = vector.shape_cast %38 : vector<8xf32> to vector<8x1xf32>
    %40 = vector.broadcast %39 : vector<8x1xf32> to vector<8x8xf32>
    %41 = arith.subf %37, %40 : vector<8x8xf32>
    %42 = math.exp %41 : vector<8x8xf32>
    %cst_16 = arith.constant dense<0.000000e+00> : vector<8xf32>
    %43 = vector.multi_reduction <add>, %42, %cst_16 [1] : vector<8x8xf32> to vector<8xf32>
    %44 = vector.shape_cast %43 : vector<8xf32> to vector<8x1xf32>
    %45 = tpu.reciprocal %44 {approx = true} : vector<8x1xf32> -> vector<8x1xf32>
    %46 = vector.broadcast %45 : vector<8x1xf32> to vector<8x8xf32>
    %47 = arith.mulf %42, %46 : vector<8x8xf32>
    %c0_17 = arith.constant 0 : index
    %c1 = arith.constant 1 : index
    %c0_18 = arith.constant 0 : index
    %c0_19 = arith.constant 0 : index
    %48 = vector.load %arg5[%c0_17, %c1, %c0_18, %c0_19] : memref<1x8x8x8xf32, #tpu.memory_space<vmem>>, vector<1x1x8x8xf32>
    %49 = vector.shape_cast %48 : vector<1x1x8x8xf32> to vector<8x8xf32>
    %50 = vector.shape_cast %47 : vector<8x8xf32> to vector<1x1x8x8xf32>
    tpu.vector_store %arg5[%c0_17, %c1, %c0_18, %c0_19], %50 {strides = array<i32>} : memref<1x8x8x8xf32, #tpu.memory_space<vmem>>, vector<1x1x8x8xf32>,
    %51 = arith.truncf %47 : vector<8x8xf32> to vector<8x8xbf16>
    %cst_20 = arith.constant dense<0.000000e+00> : vector<8x64xf32>
    %52 = tpu.matmul %51, %36, %cst_20 {dimension_numbers = #tpu.dot_dimension_numbers<[1], [0], [0], [1], [0, 0, 1, 1], [], []>} : vector<8x8xbf16>, vector<8x64xbf16>, vector<8x64xf32> -> vector<8x64xf32>
    %53 = vector.extract_strided_slice %4 {offsets = [0, 128], sizes = [8, 64], strides = [1, 1]} : vector<8x1536xf32> to vector<8x64xf32>
    %cst_21 = arith.constant 1.250000e-01 : f32
    %54 = vector.broadcast %cst_21 : f32 to vector<8x64xf32>
    %55 = arith.mulf %53, %54 : vector<8x64xf32>
    %56 = arith.truncf %55 : vector<8x64xf32> to vector<8x64xbf16>
    %57 = vector.extract_strided_slice %4 {offsets = [0, 640], sizes = [8, 64], strides = [1, 1]} : vector<8x1536xf32> to vector<8x64xf32>
    %58 = arith.truncf %57 : vector<8x64xf32> to vector<8x64xbf16>
    %59 = vector.extract_strided_slice %4 {offsets = [0, 1152], sizes = [8, 64], strides = [1, 1]} : vector<8x1536xf32> to vector<8x64xf32>
    %60 = arith.truncf %59 : vector<8x64xf32> to vector<8x64xbf16>
    %cst_22 = arith.constant dense<0.000000e+00> : vector<8x8xf32>
    %61 = tpu.matmul %56, %58, %cst_22 {dimension_numbers = #tpu.dot_dimension_numbers<[1], [1], [0], [0], [0, 0, 1, 0], [], []>} : vector<8x64xbf16>, vector<8x64xbf16>, vector<8x8xf32> -> vector<8x8xf32>
    %cst_23 = arith.constant dense<0xFF800000> : vector<8xf32>
    %62 = vector.multi_reduction <maximumf>, %61, %cst_23 [1] : vector<8x8xf32> to vector<8xf32>
    %63 = vector.shape_cast %62 : vector<8xf32> to vector<8x1xf32>
    %64 = vector.broadcast %63 : vector<8x1xf32> to vector<8x8xf32>
    %65 = arith.subf %61, %64 : vector<8x8xf32>
    %66 = math.exp %65 : vector<8x8xf32>
    %cst_24 = arith.constant dense<0.000000e+00> : vector<8xf32>
    %67 = vector.multi_reduction <add>, %66, %cst_24 [1] : vector<8x8xf32> to vector<8xf32>
    %68 = vector.shape_cast %67 : vector<8xf32> to vector<8x1xf32>
    %69 = tpu.reciprocal %68 {approx = true} : vector<8x1xf32> -> vector<8x1xf32>
    %70 = vector.broadcast %69 : vector<8x1xf32> to vector<8x8xf32>
    %71 = arith.mulf %66, %70 : vector<8x8xf32>
    %c0_25 = arith.constant 0 : index
    %c2 = arith.constant 2 : index
    %c0_26 = arith.constant 0 : index
    %c0_27 = arith.constant 0 : index
    %72 = vector.load %arg5[%c0_25, %c2, %c0_26, %c0_27] : memref<1x8x8x8xf32, #tpu.memory_space<vmem>>, vector<1x1x8x8xf32>
    %73 = vector.shape_cast %72 : vector<1x1x8x8xf32> to vector<8x8xf32>
    %74 = vector.shape_cast %71 : vector<8x8xf32> to vector<1x1x8x8xf32>
    tpu.vector_store %arg5[%c0_25, %c2, %c0_26, %c0_27], %74 {strides = array<i32>} : memref<1x8x8x8xf32, #tpu.memory_space<vmem>>, vector<1x1x8x8xf32>,
    %75 = arith.truncf %71 : vector<8x8xf32> to vector<8x8xbf16>
    %cst_28 = arith.constant dense<0.000000e+00> : vector<8x64xf32>
    %76 = tpu.matmul %75, %60, %cst_28 {dimension_numbers = #tpu.dot_dimension_numbers<[1], [0], [0], [1], [0, 0, 1, 1], [], []>} : vector<8x8xbf16>, vector<8x64xbf16>, vector<8x64xf32> -> vector<8x64xf32>
    %77 = vector.extract_strided_slice %4 {offsets = [0, 192], sizes = [8, 64], strides = [1, 1]} : vector<8x1536xf32> to vector<8x64xf32>
    %cst_29 = arith.constant 1.250000e-01 : f32
    %78 = vector.broadcast %cst_29 : f32 to vector<8x64xf32>
    %79 = arith.mulf %77, %78 : vector<8x64xf32>
    %80 = arith.truncf %79 : vector<8x64xf32> to vector<8x64xbf16>
    %81 = vector.extract_strided_slice %4 {offsets = [0, 704], sizes = [8, 64], strides = [1, 1]} : vector<8x1536xf32> to vector<8x64xf32>
    %82 = arith.truncf %81 : vector<8x64xf32> to vector<8x64xbf16>
    %83 = vector.extract_strided_slice %4 {offsets = [0, 1216], sizes = [8, 64], strides = [1, 1]} : vector<8x1536xf32> to vector<8x64xf32>
    %84 = arith.truncf %83 : vector<8x64xf32> to vector<8x64xbf16>
    %cst_30 = arith.constant dense<0.000000e+00> : vector<8x8xf32>
    %85 = tpu.matmul %80, %82, %cst_30 {dimension_numbers = #tpu.dot_dimension_numbers<[1], [1], [0], [0], [0, 0, 1, 0], [], []>} : vector<8x64xbf16>, vector<8x64xbf16>, vector<8x8xf32> -> vector<8x8xf32>
    %cst_31 = arith.constant dense<0xFF800000> : vector<8xf32>
    %86 = vector.multi_reduction <maximumf>, %85, %cst_31 [1] : vector<8x8xf32> to vector<8xf32>
    %87 = vector.shape_cast %86 : vector<8xf32> to vector<8x1xf32>
    %88 = vector.broadcast %87 : vector<8x1xf32> to vector<8x8xf32>
    %89 = arith.subf %85, %88 : vector<8x8xf32>
    %90 = math.exp %89 : vector<8x8xf32>
    %cst_32 = arith.constant dense<0.000000e+00> : vector<8xf32>
    %91 = vector.multi_reduction <add>, %90, %cst_32 [1] : vector<8x8xf32> to vector<8xf32>
    %92 = vector.shape_cast %91 : vector<8xf32> to vector<8x1xf32>
    %93 = tpu.reciprocal %92 {approx = true} : vector<8x1xf32> -> vector<8x1xf32>
    %94 = vector.broadcast %93 : vector<8x1xf32> to vector<8x8xf32>
    %95 = arith.mulf %90, %94 : vector<8x8xf32>
    %c0_33 = arith.constant 0 : index
    %c3 = arith.constant 3 : index
    %c0_34 = arith.constant 0 : index
    %c0_35 = arith.constant 0 : index
    %96 = vector.load %arg5[%c0_33, %c3, %c0_34, %c0_35] : memref<1x8x8x8xf32, #tpu.memory_space<vmem>>, vector<1x1x8x8xf32>
    %97 = vector.shape_cast %96 : vector<1x1x8x8xf32> to vector<8x8xf32>
    %98 = vector.shape_cast %95 : vector<8x8xf32> to vector<1x1x8x8xf32>
    tpu.vector_store %arg5[%c0_33, %c3, %c0_34, %c0_35], %98 {strides = array<i32>} : memref<1x8x8x8xf32, #tpu.memory_space<vmem>>, vector<1x1x8x8xf32>,
    %99 = arith.truncf %95 : vector<8x8xf32> to vector<8x8xbf16>
    %cst_36 = arith.constant dense<0.000000e+00> : vector<8x64xf32>
    %100 = tpu.matmul %99, %84, %cst_36 {dimension_numbers = #tpu.dot_dimension_numbers<[1], [0], [0], [1], [0, 0, 1, 1], [], []>} : vector<8x8xbf16>, vector<8x64xbf16>, vector<8x64xf32> -> vector<8x64xf32>
    %101 = vector.extract_strided_slice %4 {offsets = [0, 256], sizes = [8, 64], strides = [1, 1]} : vector<8x1536xf32> to vector<8x64xf32>
    %cst_37 = arith.constant 1.250000e-01 : f32
    %102 = vector.broadcast %cst_37 : f32 to vector<8x64xf32>
    %103 = arith.mulf %101, %102 : vector<8x64xf32>
    %104 = arith.truncf %103 : vector<8x64xf32> to vector<8x64xbf16>
    %105 = vector.extract_strided_slice %4 {offsets = [0, 768], sizes = [8, 64], strides = [1, 1]} : vector<8x1536xf32> to vector<8x64xf32>
    %106 = arith.truncf %105 : vector<8x64xf32> to vector<8x64xbf16>
    %107 = vector.extract_strided_slice %4 {offsets = [0, 1280], sizes = [8, 64], strides = [1, 1]} : vector<8x1536xf32> to vector<8x64xf32>
    %108 = arith.truncf %107 : vector<8x64xf32> to vector<8x64xbf16>
    %cst_38 = arith.constant dense<0.000000e+00> : vector<8x8xf32>
    %109 = tpu.matmul %104, %106, %cst_38 {dimension_numbers = #tpu.dot_dimension_numbers<[1], [1], [0], [0], [0, 0, 1, 0], [], []>} : vector<8x64xbf16>, vector<8x64xbf16>, vector<8x8xf32> -> vector<8x8xf32>
    %cst_39 = arith.constant dense<0xFF800000> : vector<8xf32>
    %110 = vector.multi_reduction <maximumf>, %109, %cst_39 [1] : vector<8x8xf32> to vector<8xf32>
    %111 = vector.shape_cast %110 : vector<8xf32> to vector<8x1xf32>
    %112 = vector.broadcast %111 : vector<8x1xf32> to vector<8x8xf32>
    %113 = arith.subf %109, %112 : vector<8x8xf32>
    %114 = math.exp %113 : vector<8x8xf32>
    %cst_40 = arith.constant dense<0.000000e+00> : vector<8xf32>
    %115 = vector.multi_reduction <add>, %114, %cst_40 [1] : vector<8x8xf32> to vector<8xf32>
    %116 = vector.shape_cast %115 : vector<8xf32> to vector<8x1xf32>
    %117 = tpu.reciprocal %116 {approx = true} : vector<8x1xf32> -> vector<8x1xf32>
    %118 = vector.broadcast %117 : vector<8x1xf32> to vector<8x8xf32>
    %119 = arith.mulf %114, %118 : vector<8x8xf32>
    %c0_41 = arith.constant 0 : index
    %c4 = arith.constant 4 : index
    %c0_42 = arith.constant 0 : index
    %c0_43 = arith.constant 0 : index
    %120 = vector.load %arg5[%c0_41, %c4, %c0_42, %c0_43] : memref<1x8x8x8xf32, #tpu.memory_space<vmem>>, vector<1x1x8x8xf32>
    %121 = vector.shape_cast %120 : vector<1x1x8x8xf32> to vector<8x8xf32>
    %122 = vector.shape_cast %119 : vector<8x8xf32> to vector<1x1x8x8xf32>
    tpu.vector_store %arg5[%c0_41, %c4, %c0_42, %c0_43], %122 {strides = array<i32>} : memref<1x8x8x8xf32, #tpu.memory_space<vmem>>, vector<1x1x8x8xf32>,
    %123 = arith.truncf %119 : vector<8x8xf32> to vector<8x8xbf16>
    %cst_44 = arith.constant dense<0.000000e+00> : vector<8x64xf32>
    %124 = tpu.matmul %123, %108, %cst_44 {dimension_numbers = #tpu.dot_dimension_numbers<[1], [0], [0], [1], [0, 0, 1, 1], [], []>} : vector<8x8xbf16>, vector<8x64xbf16>, vector<8x64xf32> -> vector<8x64xf32>
    %125 = vector.extract_strided_slice %4 {offsets = [0, 320], sizes = [8, 64], strides = [1, 1]} : vector<8x1536xf32> to vector<8x64xf32>
    %cst_45 = arith.constant 1.250000e-01 : f32
    %126 = vector.broadcast %cst_45 : f32 to vector<8x64xf32>
    %127 = arith.mulf %125, %126 : vector<8x64xf32>
    %128 = arith.truncf %127 : vector<8x64xf32> to vector<8x64xbf16>
    %129 = vector.extract_strided_slice %4 {offsets = [0, 832], sizes = [8, 64], strides = [1, 1]} : vector<8x1536xf32> to vector<8x64xf32>
    %130 = arith.truncf %129 : vector<8x64xf32> to vector<8x64xbf16>
    %131 = vector.extract_strided_slice %4 {offsets = [0, 1344], sizes = [8, 64], strides = [1, 1]} : vector<8x1536xf32> to vector<8x64xf32>
    %132 = arith.truncf %131 : vector<8x64xf32> to vector<8x64xbf16>
    %cst_46 = arith.constant dense<0.000000e+00> : vector<8x8xf32>
    %133 = tpu.matmul %128, %130, %cst_46 {dimension_numbers = #tpu.dot_dimension_numbers<[1], [1], [0], [0], [0, 0, 1, 0], [], []>} : vector<8x64xbf16>, vector<8x64xbf16>, vector<8x8xf32> -> vector<8x8xf32>
    %cst_47 = arith.constant dense<0xFF800000> : vector<8xf32>
    %134 = vector.multi_reduction <maximumf>, %133, %cst_47 [1] : vector<8x8xf32> to vector<8xf32>
    %135 = vector.shape_cast %134 : vector<8xf32> to vector<8x1xf32>
    %136 = vector.broadcast %135 : vector<8x1xf32> to vector<8x8xf32>
    %137 = arith.subf %133, %136 : vector<8x8xf32>
    %138 = math.exp %137 : vector<8x8xf32>
    %cst_48 = arith.constant dense<0.000000e+00> : vector<8xf32>
    %139 = vector.multi_reduction <add>, %138, %cst_48 [1] : vector<8x8xf32> to vector<8xf32>
    %140 = vector.shape_cast %139 : vector<8xf32> to vector<8x1xf32>
    %141 = tpu.reciprocal %140 {approx = true} : vector<8x1xf32> -> vector<8x1xf32>
    %142 = vector.broadcast %141 : vector<8x1xf32> to vector<8x8xf32>
    %143 = arith.mulf %138, %142 : vector<8x8xf32>
    %c0_49 = arith.constant 0 : index
    %c5 = arith.constant 5 : index
    %c0_50 = arith.constant 0 : index
    %c0_51 = arith.constant 0 : index
    %144 = vector.load %arg5[%c0_49, %c5, %c0_50, %c0_51] : memref<1x8x8x8xf32, #tpu.memory_space<vmem>>, vector<1x1x8x8xf32>
    %145 = vector.shape_cast %144 : vector<1x1x8x8xf32> to vector<8x8xf32>
    %146 = vector.shape_cast %143 : vector<8x8xf32> to vector<1x1x8x8xf32>
    tpu.vector_store %arg5[%c0_49, %c5, %c0_50, %c0_51], %146 {strides = array<i32>} : memref<1x8x8x8xf32, #tpu.memory_space<vmem>>, vector<1x1x8x8xf32>,
    %147 = arith.truncf %143 : vector<8x8xf32> to vector<8x8xbf16>
    %cst_52 = arith.constant dense<0.000000e+00> : vector<8x64xf32>
    %148 = tpu.matmul %147, %132, %cst_52 {dimension_numbers = #tpu.dot_dimension_numbers<[1], [0], [0], [1], [0, 0, 1, 1], [], []>} : vector<8x8xbf16>, vector<8x64xbf16>, vector<8x64xf32> -> vector<8x64xf32>
    %149 = vector.extract_strided_slice %4 {offsets = [0, 384], sizes = [8, 64], strides = [1, 1]} : vector<8x1536xf32> to vector<8x64xf32>
    %cst_53 = arith.constant 1.250000e-01 : f32
    %150 = vector.broadcast %cst_53 : f32 to vector<8x64xf32>
    %151 = arith.mulf %149, %150 : vector<8x64xf32>
    %152 = arith.truncf %151 : vector<8x64xf32> to vector<8x64xbf16>
    %153 = vector.extract_strided_slice %4 {offsets = [0, 896], sizes = [8, 64], strides = [1, 1]} : vector<8x1536xf32> to vector<8x64xf32>
    %154 = arith.truncf %153 : vector<8x64xf32> to vector<8x64xbf16>
    %155 = vector.extract_strided_slice %4 {offsets = [0, 1408], sizes = [8, 64], strides = [1, 1]} : vector<8x1536xf32> to vector<8x64xf32>
    %156 = arith.truncf %155 : vector<8x64xf32> to vector<8x64xbf16>
    %cst_54 = arith.constant dense<0.000000e+00> : vector<8x8xf32>
    %157 = tpu.matmul %152, %154, %cst_54 {dimension_numbers = #tpu.dot_dimension_numbers<[1], [1], [0], [0], [0, 0, 1, 0], [], []>} : vector<8x64xbf16>, vector<8x64xbf16>, vector<8x8xf32> -> vector<8x8xf32>
    %cst_55 = arith.constant dense<0xFF800000> : vector<8xf32>
    %158 = vector.multi_reduction <maximumf>, %157, %cst_55 [1] : vector<8x8xf32> to vector<8xf32>
    %159 = vector.shape_cast %158 : vector<8xf32> to vector<8x1xf32>
    %160 = vector.broadcast %159 : vector<8x1xf32> to vector<8x8xf32>
    %161 = arith.subf %157, %160 : vector<8x8xf32>
    %162 = math.exp %161 : vector<8x8xf32>
    %cst_56 = arith.constant dense<0.000000e+00> : vector<8xf32>
    %163 = vector.multi_reduction <add>, %162, %cst_56 [1] : vector<8x8xf32> to vector<8xf32>
    %164 = vector.shape_cast %163 : vector<8xf32> to vector<8x1xf32>
    %165 = tpu.reciprocal %164 {approx = true} : vector<8x1xf32> -> vector<8x1xf32>
    %166 = vector.broadcast %165 : vector<8x1xf32> to vector<8x8xf32>
    %167 = arith.mulf %162, %166 : vector<8x8xf32>
    %c0_57 = arith.constant 0 : index
    %c6 = arith.constant 6 : index
    %c0_58 = arith.constant 0 : index
    %c0_59 = arith.constant 0 : index
    %168 = vector.load %arg5[%c0_57, %c6, %c0_58, %c0_59] : memref<1x8x8x8xf32, #tpu.memory_space<vmem>>, vector<1x1x8x8xf32>
    %169 = vector.shape_cast %168 : vector<1x1x8x8xf32> to vector<8x8xf32>
    %170 = vector.shape_cast %167 : vector<8x8xf32> to vector<1x1x8x8xf32>
    tpu.vector_store %arg5[%c0_57, %c6, %c0_58, %c0_59], %170 {strides = array<i32>} : memref<1x8x8x8xf32, #tpu.memory_space<vmem>>, vector<1x1x8x8xf32>,
    %171 = arith.truncf %167 : vector<8x8xf32> to vector<8x8xbf16>
    %cst_60 = arith.constant dense<0.000000e+00> : vector<8x64xf32>
    %172 = tpu.matmul %171, %156, %cst_60 {dimension_numbers = #tpu.dot_dimension_numbers<[1], [0], [0], [1], [0, 0, 1, 1], [], []>} : vector<8x8xbf16>, vector<8x64xbf16>, vector<8x64xf32> -> vector<8x64xf32>
    %173 = vector.extract_strided_slice %4 {offsets = [0, 448], sizes = [8, 64], strides = [1, 1]} : vector<8x1536xf32> to vector<8x64xf32>
    %cst_61 = arith.constant 1.250000e-01 : f32
    %174 = vector.broadcast %cst_61 : f32 to vector<8x64xf32>
    %175 = arith.mulf %173, %174 : vector<8x64xf32>
    %176 = arith.truncf %175 : vector<8x64xf32> to vector<8x64xbf16>
    %177 = vector.extract_strided_slice %4 {offsets = [0, 960], sizes = [8, 64], strides = [1, 1]} : vector<8x1536xf32> to vector<8x64xf32>
    %178 = arith.truncf %177 : vector<8x64xf32> to vector<8x64xbf16>
    %179 = vector.extract_strided_slice %4 {offsets = [0, 1472], sizes = [8, 64], strides = [1, 1]} : vector<8x1536xf32> to vector<8x64xf32>
    %180 = arith.truncf %179 : vector<8x64xf32> to vector<8x64xbf16>
    %cst_62 = arith.constant dense<0.000000e+00> : vector<8x8xf32>
    %181 = tpu.matmul %176, %178, %cst_62 {dimension_numbers = #tpu.dot_dimension_numbers<[1], [1], [0], [0], [0, 0, 1, 0], [], []>} : vector<8x64xbf16>, vector<8x64xbf16>, vector<8x8xf32> -> vector<8x8xf32>
    %cst_63 = arith.constant dense<0xFF800000> : vector<8xf32>
    %182 = vector.multi_reduction <maximumf>, %181, %cst_63 [1] : vector<8x8xf32> to vector<8xf32>
    %183 = vector.shape_cast %182 : vector<8xf32> to vector<8x1xf32>
    %184 = vector.broadcast %183 : vector<8x1xf32> to vector<8x8xf32>
    %185 = arith.subf %181, %184 : vector<8x8xf32>
    %186 = math.exp %185 : vector<8x8xf32>
    %cst_64 = arith.constant dense<0.000000e+00> : vector<8xf32>
    %187 = vector.multi_reduction <add>, %186, %cst_64 [1] : vector<8x8xf32> to vector<8xf32>
    %188 = vector.shape_cast %187 : vector<8xf32> to vector<8x1xf32>
    %189 = tpu.reciprocal %188 {approx = true} : vector<8x1xf32> -> vector<8x1xf32>
    %190 = vector.broadcast %189 : vector<8x1xf32> to vector<8x8xf32>
    %191 = arith.mulf %186, %190 : vector<8x8xf32>
    %c0_65 = arith.constant 0 : index
    %c7 = arith.constant 7 : index
    %c0_66 = arith.constant 0 : index
    %c0_67 = arith.constant 0 : index
    %192 = vector.load %arg5[%c0_65, %c7, %c0_66, %c0_67] : memref<1x8x8x8xf32, #tpu.memory_space<vmem>>, vector<1x1x8x8xf32>
    %193 = vector.shape_cast %192 : vector<1x1x8x8xf32> to vector<8x8xf32>
    %194 = vector.shape_cast %191 : vector<8x8xf32> to vector<1x1x8x8xf32>
    tpu.vector_store %arg5[%c0_65, %c7, %c0_66, %c0_67], %194 {strides = array<i32>} : memref<1x8x8x8xf32, #tpu.memory_space<vmem>>, vector<1x1x8x8xf32>,
    %195 = arith.truncf %191 : vector<8x8xf32> to vector<8x8xbf16>
    %cst_68 = arith.constant dense<0.000000e+00> : vector<8x64xf32>
    %196 = tpu.matmul %195, %180, %cst_68 {dimension_numbers = #tpu.dot_dimension_numbers<[1], [0], [0], [1], [0, 0, 1, 1], [], []>} : vector<8x8xbf16>, vector<8x64xbf16>, vector<8x64xf32> -> vector<8x64xf32>
    %197 = tpu.concatenate %28, %52, %76, %100, %124, %148, %172, %196 in 1 : vector<8x64xf32>, vector<8x64xf32>, vector<8x64xf32>, vector<8x64xf32>, vector<8x64xf32>, vector<8x64xf32>, vector<8x64xf32>, vector<8x64xf32> -> vector<8x512xf32>
    %198 = arith.truncf %197 : vector<8x512xf32> to vector<8x512xbf16>
    %c0_69 = arith.constant 0 : index
    %c0_70 = arith.constant 0 : index
    %199 = vector.load %arg3[%c0_69, %c0_70] : memref<512x512xbf16, #tpu.memory_space<vmem>>, vector<512x512xbf16>
    %cst_71 = arith.constant dense<0.000000e+00> : vector<8x512xf32>
    %200 = tpu.matmul %198, %199, %cst_71 {dimension_numbers = #tpu.dot_dimension_numbers<[1], [0], [0], [1], [0, 0, 1, 1], [], []>} : vector<8x512xbf16>, vector<512x512xbf16>, vector<8x512xf32> -> vector<8x512xf32>
    %201 = arith.addf %200, %1 : vector<8x512xf32>
    %cst_72 = arith.constant dense<0.000000e+00> : vector<8xf32>
    %202 = vector.multi_reduction <add>, %201, %cst_72 [1] : vector<8x512xf32> to vector<8xf32>
    %203 = vector.shape_cast %202 : vector<8xf32> to vector<8x1xf32>
    %cst_73 = arith.constant 5.120000e+02 : f32
    %204 = vector.broadcast %cst_73 : f32 to vector<8x1xf32>
    %205 = arith.divf %203, %204 : vector<8x1xf32>
    %206 = vector.broadcast %205 : vector<8x1xf32> to vector<8x512xf32>
    %207 = arith.subf %201, %206 : vector<8x512xf32>
    %208 = arith.mulf %207, %207 : vector<8x512xf32>
    %cst_74 = arith.constant dense<0.000000e+00> : vector<8xf32>
    %209 = vector.multi_reduction <add>, %208, %cst_74 [1] : vector<8x512xf32> to vector<8xf32>
    %210 = vector.shape_cast %209 : vector<8xf32> to vector<8x1xf32>
    %cst_75 = arith.constant 5.120000e+02 : f32
    %211 = vector.broadcast %cst_75 : f32 to vector<8x1xf32>
    %212 = arith.divf %210, %211 : vector<8x1xf32>
    %213 = vector.broadcast %205 : vector<8x1xf32> to vector<8x512xf32>
    %214 = arith.subf %201, %213 : vector<8x512xf32>
    %cst_76 = arith.constant 9.99999974E-6 : f32
    %215 = vector.broadcast %cst_76 : f32 to vector<8x1xf32>
    %216 = arith.addf %212, %215 : vector<8x1xf32>
    %217 = math.rsqrt %216 : vector<8x1xf32>
    %218 = vector.broadcast %217 : vector<8x1xf32> to vector<8x512xf32>
    %219 = arith.mulf %214, %218 : vector<8x512xf32>
    %c0_77 = arith.constant 0 : index
    %c0_78 = arith.constant 0 : index
    %c0_79 = arith.constant 0 : index
    %220 = vector.load %arg4[%c0_77, %c0_78, %c0_79] : memref<1x8x512xf32, #tpu.memory_space<vmem>>, vector<1x8x512xf32>
    %221 = vector.shape_cast %220 : vector<1x8x512xf32> to vector<8x512xf32>
    %222 = vector.shape_cast %219 : vector<8x512xf32> to vector<1x8x512xf32>
    tpu.vector_store %arg4[%c0_77, %c0_78, %c0_79], %222 {strides = array<i32>} : memref<1x8x512xf32, #tpu.memory_space<vmem>>, vector<1x8x512xf32>,
    return
  }
  func.func @transform_0(%arg0: i32) -> (i32, i32, i32) {
    %c0_i32 = arith.constant 0 : i32
    %c0_i32_0 = arith.constant 0 : i32
    %c0_i32_1 = arith.constant 0 : i32
    return %arg0, %c0_i32, %c0_i32_0 : i32, i32, i32
  }
  func.func @transform_1(%arg0: i32) -> (i32, i32) {
    %c0_i32 = arith.constant 0 : i32
    %c0_i32_0 = arith.constant 0 : i32
    %c0_i32_1 = arith.constant 0 : i32
    return %c0_i32, %c0_i32_0 : i32, i32
  }
  func.func @transform_2(%arg0: i32) -> (i32, i32) {
    %c0_i32 = arith.constant 0 : i32
    %c0_i32_0 = arith.constant 0 : i32
    %c0_i32_1 = arith.constant 0 : i32
    return %c0_i32, %c0_i32_0 : i32, i32
  }
  func.func @transform_3(%arg0: i32) -> (i32, i32, i32) {
    %c0_i32 = arith.constant 0 : i32
    %c0_i32_0 = arith.constant 0 : i32
    %c0_i32_1 = arith.constant 0 : i32
    return %arg0, %c0_i32, %c0_i32_0 : i32, i32, i32
  }
  func.func @transform_4(%arg0: i32) -> (i32, i32, i32, i32) {
    %c0_i32 = arith.constant 0 : i32
    %c0_i32_0 = arith.constant 0 : i32
    %c0_i32_1 = arith.constant 0 : i32
    %c0_i32_2 = arith.constant 0 : i32
    return %arg0, %c0_i32, %c0_i32_0, %c0_i32_1 : i32, i32, i32, i32
  }
}

module attributes {stable_mosaic.version = 11 : i64} {
  func.func @ffn_kernel(%arg0: i32, %arg1: memref<16x512xf32, #tpu.memory_space<vmem>>, %arg2: memref<512x2048xbf16, #tpu.memory_space<vmem>>, %arg3: memref<2048x512xbf16, #tpu.memory_space<vmem>>, %arg4: memref<16x512xf32, #tpu.memory_space<vmem>>) attributes {dimension_semantics = [#tpu.dimension_semantics<parallel>], iteration_bounds = array<i64: 1>, scalar_prefetch = 0 : i64, scratch_operands = 0 : i64, tpu.core_type = #tpu.core_type<tc>, window_params = [{transform_indices = @transform_0, window_bounds = array<i64: 16, 512>}, {pipeline_mode = #tpu.pipeline_mode<synchronous>, transform_indices = @transform_1, window_bounds = array<i64: 512, 2048>}, {pipeline_mode = #tpu.pipeline_mode<synchronous>, transform_indices = @transform_2, window_bounds = array<i64: 2048, 512>}, {transform_indices = @transform_3, window_bounds = array<i64: 16, 512>}]} {
    %c0 = arith.constant 0 : index
    %c0_0 = arith.constant 0 : index
    %0 = vector.load %arg1[%c0, %c0_0] : memref<16x512xf32, #tpu.memory_space<vmem>>, vector<16x512xf32>
    %1 = arith.truncf %0 : vector<16x512xf32> to vector<16x512xbf16>
    %c0_1 = arith.constant 0 : index
    %c0_2 = arith.constant 0 : index
    %2 = vector.load %arg2[%c0_1, %c0_2] : memref<512x2048xbf16, #tpu.memory_space<vmem>>, vector<512x2048xbf16>
    %cst = arith.constant dense<0.000000e+00> : vector<16x2048xf32>
    %3 = tpu.matmul %1, %2, %cst {dimension_numbers = #tpu.dot_dimension_numbers<[1], [0], [0], [1], [0, 0, 1, 1], [], []>} : vector<16x512xbf16>, vector<512x2048xbf16>, vector<16x2048xf32> -> vector<16x2048xf32>
    %cst_3 = arith.constant 0.000000e+00 : f32
    %4 = vector.broadcast %cst_3 : f32 to vector<16x2048xf32>
    %5 = arith.maximumf %3, %4 : vector<16x2048xf32>
    %6 = arith.truncf %5 : vector<16x2048xf32> to vector<16x2048xbf16>
    %c0_4 = arith.constant 0 : index
    %c0_5 = arith.constant 0 : index
    %7 = vector.load %arg3[%c0_4, %c0_5] : memref<2048x512xbf16, #tpu.memory_space<vmem>>, vector<2048x512xbf16>
    %cst_6 = arith.constant dense<0.000000e+00> : vector<16x512xf32>
    %8 = tpu.matmul %6, %7, %cst_6 {dimension_numbers = #tpu.dot_dimension_numbers<[1], [0], [0], [1], [0, 0, 1, 1], [], []>} : vector<16x2048xbf16>, vector<2048x512xbf16>, vector<16x512xf32> -> vector<16x512xf32>
    %9 = arith.addf %8, %0 : vector<16x512xf32>
    %cst_7 = arith.constant dense<0.000000e+00> : vector<16xf32>
    %10 = vector.multi_reduction <add>, %9, %cst_7 [1] : vector<16x512xf32> to vector<16xf32>
    %11 = vector.shape_cast %10 : vector<16xf32> to vector<16x1xf32>
    %cst_8 = arith.constant 5.120000e+02 : f32
    %12 = vector.broadcast %cst_8 : f32 to vector<16x1xf32>
    %13 = arith.divf %11, %12 : vector<16x1xf32>
    %14 = vector.broadcast %13 : vector<16x1xf32> to vector<16x512xf32>
    %15 = arith.subf %9, %14 : vector<16x512xf32>
    %16 = arith.mulf %15, %15 : vector<16x512xf32>
    %cst_9 = arith.constant dense<0.000000e+00> : vector<16xf32>
    %17 = vector.multi_reduction <add>, %16, %cst_9 [1] : vector<16x512xf32> to vector<16xf32>
    %18 = vector.shape_cast %17 : vector<16xf32> to vector<16x1xf32>
    %cst_10 = arith.constant 5.120000e+02 : f32
    %19 = vector.broadcast %cst_10 : f32 to vector<16x1xf32>
    %20 = arith.divf %18, %19 : vector<16x1xf32>
    %21 = vector.broadcast %13 : vector<16x1xf32> to vector<16x512xf32>
    %22 = arith.subf %9, %21 : vector<16x512xf32>
    %cst_11 = arith.constant 9.99999974E-6 : f32
    %23 = vector.broadcast %cst_11 : f32 to vector<16x1xf32>
    %24 = arith.addf %20, %23 : vector<16x1xf32>
    %25 = math.rsqrt %24 : vector<16x1xf32>
    %26 = vector.broadcast %25 : vector<16x1xf32> to vector<16x512xf32>
    %27 = arith.mulf %22, %26 : vector<16x512xf32>
    %c0_12 = arith.constant 0 : index
    %c0_13 = arith.constant 0 : index
    %28 = vector.load %arg4[%c0_12, %c0_13] : memref<16x512xf32, #tpu.memory_space<vmem>>, vector<16x512xf32>
    tpu.vector_store %arg4[%c0_12, %c0_13], %27 {strides = array<i32>} : memref<16x512xf32, #tpu.memory_space<vmem>>, vector<16x512xf32>,
    return
  }
  func.func @transform_0(%arg0: i32) -> (i32, i32) {
    %c0_i32 = arith.constant 0 : i32
    %c0_i32_0 = arith.constant 0 : i32
    return %arg0, %c0_i32 : i32, i32
  }
  func.func @transform_1(%arg0: i32) -> (i32, i32) {
    %c0_i32 = arith.constant 0 : i32
    %c0_i32_0 = arith.constant 0 : i32
    %c0_i32_1 = arith.constant 0 : i32
    return %c0_i32, %c0_i32_0 : i32, i32
  }
  func.func @transform_2(%arg0: i32) -> (i32, i32) {
    %c0_i32 = arith.constant 0 : i32
    %c0_i32_0 = arith.constant 0 : i32
    %c0_i32_1 = arith.constant 0 : i32
    return %c0_i32, %c0_i32_0 : i32, i32
  }
  func.func @transform_3(%arg0: i32) -> (i32, i32) {
    %c0_i32 = arith.constant 0 : i32
    %c0_i32_0 = arith.constant 0 : i32
    return %arg0, %c0_i32 : i32, i32
  }
}

</mosaic_0001>

<llo_original>
// kernel: encoder_layer.2
$region0: #{encoder_layer.2}
  #allocation0 [shape = 'u32[]', space=smem, size = 0x4, offset = 0x4, fixed_abs, tag = 'smem constant byte address 0x4 - core index']
  #allocation1 [shape = 'u32[144,128]{1,0:T(1,128)}', space=vmem, size = 0x12000, scoped, tag = 'internal scratch']
  %s0 = inlined_call_operand.vmem [shape: f32[2,8,512], index: 0, kind: input, shape index: {}]
  %s1 = inlined_call_operand.vmem [shape: bf16[512,1536], index: 1, kind: input, shape index: {}]
  %s2 = inlined_call_operand.vmem [shape: bf16[512,512], index: 2, kind: input, shape index: {}]
  %s3 = inlined_call_operand.vmem [shape: f32[2,8,512], index: 3, kind: output, shape index: {0}]
  %s4 = inlined_call_operand.hbm [shape: f32[2,8,8,8], index: 4, kind: output, shape index: {1}]
  %5 = xla_tuple %s3, %s4
  %s6 = sld [smem:[#allocation0]]
  $region53: #{encoder_layer.2} parent=0
    _
  %s8 = ssub.s32 1, %s6
  %s9 = scalar_select 0, %s8, %s6
  $region1: #{encoder_layer.2} parent=0
    #allocation2 [shape = 'u8[65536]{0}', space=vmem, size = 0x10000, scoped, tag = 'output window, operand 1']
    #allocation3 [shape = 's32[2]{0}', space=sflag, size = 0x8, scoped, tag = 'scoped memory for encoder_layer.2']
    %10 = vsyncpa [#allocation3], 0
    %s11 = scalar_lea.sflag [#allocation3], 1
    %12 = vsyncpa %s11, 0
    loop: start=0, step=1, limit=4
    $region2: #{encoder_layer.2} parent=1 // loop_pre_header
      _
    $region3: #{encoder_layer.2} parent=1 // loop_header
      %s14 = sphi 0, %s18
      %p15 = scmp.ge.s32.totalorder %s14, 4
      %s24 = sphi 0, %s26
      %s27 = sphi 0, %s24
      %s28 = sphi 0, %s27
      %s44 = sphi 0, %s28
      %s48 = sphi 0, %s48
      %s50 = sphi 0, %s48
      %s51 = sphi 0, %s50
      %s65 = sphi 0, %s51
      %s69 = sphi 0, %s69
      %s71 = sphi 0, %s69
      %s72 = sphi 0, %s71
      %s86 = sphi 0, %s72
      %s92 = sphi 0, %s94
      %s95 = sphi 0, %s92
      %s96 = sphi 0, %s95
      %s112 = sphi 0, %s96
      %s118 = sphi 0, %s120
      %s121 = sphi 0, %s118
      %s122 = sphi 0, %s121
      %s138 = sphi 0, %s122
    $region4: #{encoder_layer.2} parent=1 // loop_header_branch
      %17 = sbr.rel (%p15) target = $region8
    $region5: #{encoder_layer.2} parent=1 // loop_body
      %s19 = ssub.s32 %s14, 1
      %s20 = ssub.s32 %s14, 2
      %s21 = sadd.s32 %s14, 1
      %s22 = ssub.s32 %s14, %s21
      %p23 = scmp.eq.s32.totalorder %s22, 0
      %s25 = sadd.s32 %s24, 1
      %s26 = scalar_select %p23, %s24, %s25
      %p29 = pneg %p23
      %p30 = scmp.eq.s32.totalorder %s14, 1
      %p31 = por %p29, %p30
      %p32 = scmp.ne.s32.totalorder %s24, %s27
      %p33 = scmp.eq.s32.totalorder %s14, 0
      %p34 = por %p32, %p33
      %p35 = scmp.ne.s32.totalorder %s24, %s27
      %p36 = scmp.eq.s32.totalorder %s19, 1
      %p37 = por %p35, %p36
      %p38 = scmp.ne.s32.totalorder %s27, %s28
      %p39 = scmp.eq.s32.totalorder %s19, 0
      %p40 = por %p38, %p39
      %p41 = scmp.ne.s32.totalorder %s27, %s28
      %p42 = scmp.eq.s32.totalorder %s20, 1
      %p43 = por %p41, %p42
      %p45 = scmp.ne.s32.totalorder %s28, %s44
      %p46 = scmp.eq.s32.totalorder %s20, 0
      %p47 = por %p45, %p46
      %s49 = sadd.s32 %s48, 1
      %p52 = scmp.eq.s32.totalorder %s14, 1
      %p53 = scmp.ne.s32.totalorder %s48, %s50
      %p54 = scmp.eq.s32.totalorder %s14, 0
      %p55 = por %p53, %p54
      %p56 = scmp.ne.s32.totalorder %s48, %s50
      %p57 = scmp.eq.s32.totalorder %s19, 1
      %p58 = por %p56, %p57
      %p59 = scmp.ne.s32.totalorder %s50, %s51
      %p60 = scmp.eq.s32.totalorder %s19, 0
      %p61 = por %p59, %p60
      %p62 = scmp.ne.s32.totalorder %s50, %s51
      %p63 = scmp.eq.s32.totalorder %s20, 1
      %p64 = por %p62, %p63
      %p66 = scmp.ne.s32.totalorder %s51, %s65
      %p67 = scmp.eq.s32.totalorder %s20, 0
      %p68 = por %p66, %p67
      %s70 = sadd.s32 %s69, 1
      %p73 = scmp.eq.s32.totalorder %s14, 1
      %p74 = scmp.ne.s32.totalorder %s69, %s71
      %p75 = scmp.eq.s32.totalorder %s14, 0
      %p76 = por %p74, %p75
      %p77 = scmp.ne.s32.totalorder %s69, %s71
      %p78 = scmp.eq.s32.totalorder %s19, 1
      %p79 = por %p77, %p78
      %p80 = scmp.ne.s32.totalorder %s71, %s72
      %p81 = scmp.eq.s32.totalorder %s19, 0
      %p82 = por %p80, %p81
      %p83 = scmp.ne.s32.totalorder %s71, %s72
      %p84 = scmp.eq.s32.totalorder %s20, 1
      %p85 = por %p83, %p84
      %p87 = scmp.ne.s32.totalorder %s72, %s86
      %p88 = scmp.eq.s32.totalorder %s20, 0
      %p89 = por %p87, %p88
      %s90 = ssub.s32 %s14, %s21
      %p91 = scmp.eq.s32.totalorder %s90, 0
      %s93 = sadd.s32 %s92, 1
      %s94 = scalar_select %p91, %s92, %s93
      %p97 = pneg %p91
      %p98 = scmp.eq.s32.totalorder %s14, 1
      %p99 = por %p97, %p98
      %p100 = scmp.ne.s32.totalorder %s92, %s95
      %p101 = scmp.eq.s32.totalorder %s14, 0
      %p102 = por %p100, %p101
      %p103 = scmp.ne.s32.totalorder %s92, %s95
      %p104 = scmp.eq.s32.totalorder %s19, 1
      %p105 = por %p103, %p104
      %p106 = scmp.ne.s32.totalorder %s95, %s96
      %p107 = scmp.eq.s32.totalorder %s19, 0
      %p108 = por %p106, %p107
      %p109 = scmp.ne.s32.totalorder %s95, %s96
      %p110 = scmp.eq.s32.totalorder %s20, 1
      %p111 = por %p109, %p110
      %p113 = scmp.ne.s32.totalorder %s96, %s112
      %p114 = scmp.eq.s32.totalorder %s20, 0
      %p115 = por %p113, %p114
      %s116 = ssub.s32 %s14, %s21
      %p117 = scmp.eq.s32.totalorder %s116, 0
      %s119 = sadd.s32 %s118, 1
      %s120 = scalar_select %p117, %s118, %s119
      %p123 = pneg %p117
      %p124 = scmp.eq.s32.totalorder %s14, 1
      %p125 = por %p123, %p124
      %p126 = scmp.ne.s32.totalorder %s118, %s121
      %p127 = scmp.eq.s32.totalorder %s14, 0
      %p128 = por %p126, %p127
      %p129 = scmp.ne.s32.totalorder %s118, %s121
      %p130 = scmp.eq.s32.totalorder %s19, 1
      %p131 = por %p129, %p130
      %p132 = scmp.ne.s32.totalorder %s121, %s122
      %p133 = scmp.eq.s32.totalorder %s19, 0
      %p134 = por %p132, %p133
      %p135 = scmp.ne.s32.totalorder %s121, %s122
      %p136 = scmp.eq.s32.totalorder %s20, 1
      %p137 = por %p135, %p136
      %p139 = scmp.ne.s32.totalorder %s122, %s138
      %p140 = scmp.eq.s32.totalorder %s20, 0
      %p141 = por %p139, %p140
      %p142 = scmp.le.s32.totalorder 1, %s14
      %p143 = scmp.lt.s32.totalorder %s14, 3
      %p144 = pnand %p142, %p143
      %p145 = pneg %p144
      // Predicated region
      $region9: #{encoder_layer.2} parent=5 // pred_check
        _
      $region10: #{encoder_layer.2} parent=5 // pred_check_branch
        %147 = sbr.rel (%p144) target = $region12
      $region11: #{encoder_layer.2} parent=5 // pred_region
        %s148 = ssub.s32 %s14, 1
        // Predicated region
        $region13: #{encoder_layer.2} parent=11 // pred_check
          %p149 = pneg %p61
        $region14: #{encoder_layer.2} parent=11 // pred_check_branch
          %151 = sbr.rel (%p149) target = $region16
        $region15: #{encoder_layer.2} parent=11 // pred_region
          _
        $region16: #{encoder_layer.2} parent=11 // pred_fallthru
          _
        // Predicated region
        $region17: #{encoder_layer.2} parent=11 // pred_check
          %p152 = pneg %p82
        $region18: #{encoder_layer.2} parent=11 // pred_check_branch
          %154 = sbr.rel (%p152) target = $region20
        $region19: #{encoder_layer.2} parent=11 // pred_region
          _
        $region20: #{encoder_layer.2} parent=11 // pred_fallthru
          _
      $region12: #{encoder_layer.2} parent=5 // pred_fallthru
        _
      %p155 = scmp.lt.s32.totalorder %s14, 2
      // Predicated region
      $region21: #{encoder_layer.2} parent=5 // pred_check
        %p156 = pneg %p155
      $region22: #{encoder_layer.2} parent=5 // pred_check_branch
        %158 = sbr.rel (%p156) target = $region24
      $region23: #{encoder_layer.2} parent=5 // pred_region
        // Predicated region
        $region25: #{encoder_layer.2} parent=23 // pred_check
          %p159 = pneg %p34
        $region26: #{encoder_layer.2} parent=23 // pred_check_branch
          %161 = sbr.rel (%p159) target = $region28
        $region27: #{encoder_layer.2} parent=23 // pred_region
          %p162 = scmp.lt.s32.totalorder %s14, 1
          %s163 = scalar_select %p162, %s14, 1
          %s164 = smul.addr %s163, 4
          %s165 = smul.addr %s164, 8
          %s166 = scalar_lea.vmem %s0, %s165
        $region28: #{encoder_layer.2} parent=23 // pred_fallthru
          _
      $region24: #{encoder_layer.2} parent=5 // pred_fallthru
        _
      %p167 = scmp.le.s32.totalorder 1, %s14
      %p168 = scmp.lt.s32.totalorder %s14, 3
      %p169 = pnand %p167, %p168
      %p170 = pneg %p169
      // Predicated region
      $region29: #{encoder_layer.2} parent=5 // pred_check
        _
      $region30: #{encoder_layer.2} parent=5 // pred_check_branch
        %172 = sbr.rel (%p169) target = $region32
      $region31: #{encoder_layer.2} parent=5 // pred_region
        %s173 = ssub.s32 %s14, 1
        %p174 = scmp.lt.s32.totalorder %s19, 1
        %s175 = scalar_select %p174, %s19, 1
        %s176 = smul.addr %s175, 4
        %s177 = smul.addr %s176, 8
        %s178 = scalar_lea.vmem %s0, %s177
        %p179 = pneg %p40
        %p180 = pneg %p37
        %p181 = pneg %p61
        %p182 = pneg %p58
        %p183 = pneg %p82
        %p184 = pneg %p79
        %p185 = pneg %p108
        %p186 = pneg %p105
        %p187 = scmp.lt.s32.totalorder %s19, 1
        %s188 = scalar_select %p187, %s19, 1
        %s189 = smul.addr %s188, 4
        %s190 = smul.addr %s189, 8
        %s191 = scalar_lea.vmem %s3, %s190
        %p192 = pneg %p134
        %p193 = pneg %p131
        %s194 = sand.u32 %s121, 1
        %s195 = scalar_lea.sflag [#allocation3], %s194
        %s196 = sand.u32 %s121, 1
        %s197 = smul.addr %s196, 64
        %s198 = scalar_lea.vmem [#allocation2], %s197
        %p199 = scmp.lt.s32.totalorder %s19, 1
        %s200 = scalar_select %p199, %s19, 1
        %s201 = smul.addr %s200, 4
        %s202 = smul.addr %s201, 8
        %s203 = scalar_lea.vmem %s0, %s202
        %p204 = scmp.lt.s32.totalorder %s19, 1
        %s205 = scalar_select %p204, %s19, 1
        %s206 = smul.addr %s205, 4
        %s207 = smul.addr %s206, 8
        %s208 = scalar_lea.vmem %s3, %s207
        %v210 = vld [vmem:[%s203] sm:$0xff]
        %v211 = vld [vmem:[%s203 + $0x8] sm:$0xff]
        %v212 = vld [vmem:[%s203 + $0x10] sm:$0xff]
        %v213 = vld [vmem:[%s203 + $0x18] sm:$0xff]
        %v214 = vpack.c.bf16 %v210, %v210
        %v215 = vpack.c.bf16 %v211, %v211
        %v216 = vpack.c.bf16 %v212, %v212
        %v217 = vpack.c.bf16 %v213, %v213
        %v218 = vld [vmem:[%s1] sm:$0xff]
        %v219 = vld [vmem:[%s1 + $0x8] sm:$0xff]
        %v220 = vld [vmem:[%s1 + $0x10] sm:$0xff]
        %v221 = vld [vmem:[%s1 + $0x18] sm:$0xff]
        %v222 = vld [vmem:[%s1 + $0x20] sm:$0xff]
        %v223 = vld [vmem:[%s1 + $0x28] sm:$0xff]
        %v224 = vld [vmem:[%s1 + $0x30] sm:$0xff]
        %v225 = vld [vmem:[%s1 + $0x38] sm:$0xff]
        %v226 = vld [vmem:[%s1 + $0x40] sm:$0xff]
        %v227 = vld [vmem:[%s1 + $0x48] sm:$0xff]
        %v228 = vld [vmem:[%s1 + $0x50] sm:$0xff]
        %v229 = vld [vmem:[%s1 + $0x58] sm:$0xff]
        %v230 = vld [vmem:[%s1 + $0x60] sm:$0xff]
        %v231 = vld [vmem:[%s1 + $0x68] sm:$0xff]
        %v232 = vld [vmem:[%s1 + $0x70] sm:$0xff]
        %v233 = vld [vmem:[%s1 + $0x78] sm:$0xff]
        %v234 = vld [vmem:[%s1 + $0x80] sm:$0xff]
        %v235 = vld [vmem:[%s1 + $0x88] sm:$0xff]
        %v236 = vld [vmem:[%s1 + $0x90] sm:$0xff]
        %v237 = vld [vmem:[%s1 + $0x98] sm:$0xff]
        %v238 = vld [vmem:[%s1 + $0xa0] sm:$0xff]
        %v239 = vld [vmem:[%s1 + $0xa8] sm:$0xff]
        %v240 = vld [vmem:[%s1 + $0xb0] sm:$0xff]
        %v241 = vld [vmem:[%s1 + $0xb8] sm:$0xff]
        %v242 = vld [vmem:[%s1 + $0xc0] sm:$0xff]
        %v243 = vld [vmem:[%s1 + $0xc8] sm:$0xff]
        %v244 = vld [vmem:[%s1 + $0xd0] sm:$0xff]
        %v245 = vld [vmem:[%s1 + $0xd8] sm:$0xff]
        %v246 = vld [vmem:[%s1 + $0xe0] sm:$0xff]
        %v247 = vld [vmem:[%s1 + $0xe8] sm:$0xff]
        %v248 = vld [vmem:[%s1 + $0xf0] sm:$0xff]
        %v249 = vld [vmem:[%s1 + $0xf8] sm:$0xff]
        %v250 = vld [vmem:[%s1 + $0x100] sm:$0xff]
        %v251 = vld [vmem:[%s1 + $0x108] sm:$0xff]
        %v252 = vld [vmem:[%s1 + $0x110] sm:$0xff]
        %v253 = vld [vmem:[%s1 + $0x118] sm:$0xff]
        %v254 = vld [vmem:[%s1 + $0x120] sm:$0xff]
        %v255 = vld [vmem:[%s1 + $0x128] sm:$0xff]
        %v256 = vld [vmem:[%s1 + $0x130] sm:$0xff]
        %v257 = vld [vmem:[%s1 + $0x138] sm:$0xff]
        %v258 = vld [vmem:[%s1 + $0x140] sm:$0xff]
        %v259 = vld [vmem:[%s1 + $0x148] sm:$0xff]
        %v260 = vld [vmem:[%s1 + $0x150] sm:$0xff]
        %v261 = vld [vmem:[%s1 + $0x158] sm:$0xff]
        %v262 = vld [vmem:[%s1 + $0x160] sm:$0xff]
        %v263 = vld [vmem:[%s1 + $0x168] sm:$0xff]
        %v264 = vld [vmem:[%s1 + $0x170] sm:$0xff]
        %v265 = vld [vmem:[%s1 + $0x178] sm:$0xff]
        %v266 = vld [vmem:[%s1 + $0x180] sm:$0xff]
        %v267 = vld [vmem:[%s1 + $0x188] sm:$0xff]
        %v268 = vld [vmem:[%s1 + $0x190] sm:$0xff]
        %v269 = vld [vmem:[%s1 + $0x198] sm:$0xff]
        %v270 = vld [vmem:[%s1 + $0x1a0] sm:$0xff]
        %v271 = vld [vmem:[%s1 + $0x1a8] sm:$0xff]
        %v272 = vld [vmem:[%s1 + $0x1b0] sm:$0xff]
        %v273 = vld [vmem:[%s1 + $0x1b8] sm:$0xff]
        %v274 = vld [vmem:[%s1 + $0x1c0] sm:$0xff]
        %v275 = vld [vmem:[%s1 + $0x1c8] sm:$0xff]
        %v276 = vld [vmem:[%s1 + $0x1d0] sm:$0xff]
        %v277 = vld [vmem:[%s1 + $0x1d8] sm:$0xff]
        %v278 = vld [vmem:[%s1 + $0x1e0] sm:$0xff]
        %v279 = vld [vmem:[%s1 + $0x1e8] sm:$0xff]
        %v280 = vld [vmem:[%s1 + $0x1f0] sm:$0xff]
        %v281 = vld [vmem:[%s1 + $0x1f8] sm:$0xff]
        %v282 = vld [vmem:[%s1 + $0x200] sm:$0xff]
        %v283 = vld [vmem:[%s1 + $0x208] sm:$0xff]
        %v284 = vld [vmem:[%s1 + $0x210] sm:$0xff]
        %v285 = vld [vmem:[%s1 + $0x218] sm:$0xff]
        %v286 = vld [vmem:[%s1 + $0x220] sm:$0xff]
        %v287 = vld [vmem:[%s1 + $0x228] sm:$0xff]
        %v288 = vld [vmem:[%s1 + $0x230] sm:$0xff]
        %v289 = vld [vmem:[%s1 + $0x238] sm:$0xff]
        %v290 = vld [vmem:[%s1 + $0x240] sm:$0xff]
        %v291 = vld [vmem:[%s1 + $0x248] sm:$0xff]
        %v292 = vld [vmem:[%s1 + $0x250] sm:$0xff]
        %v293 = vld [vmem:[%s1 + $0x258] sm:$0xff]
        %v294 = vld [vmem:[%s1 + $0x260] sm:$0xff]
        %v295 = vld [vmem:[%s1 + $0x268] sm:$0xff]
        %v296 = vld [vmem:[%s1 + $0x270] sm:$0xff]
        %v297 = vld [vmem:[%s1 + $0x278] sm:$0xff]
        %v298 = vld [vmem:[%s1 + $0x280] sm:$0xff]
        %v299 = vld [vmem:[%s1 + $0x288] sm:$0xff]
        %v300 = vld [vmem:[%s1 + $0x290] sm:$0xff]
        %v301 = vld [vmem:[%s1 + $0x298] sm:$0xff]
        %v302 = vld [vmem:[%s1 + $0x2a0] sm:$0xff]
        %v303 = vld [vmem:[%s1 + $0x2a8] sm:$0xff]
        %v304 = vld [vmem:[%s1 + $0x2b0] sm:$0xff]
        %v305 = vld [vmem:[%s1 + $0x2b8] sm:$0xff]
        %v306 = vld [vmem:[%s1 + $0x2c0] sm:$0xff]
        %v307 = vld [vmem:[%s1 + $0x2c8] sm:$0xff]
        %v308 = vld [vmem:[%s1 + $0x2d0] sm:$0xff]
        %v309 = vld [vmem:[%s1 + $0x2d8] sm:$0xff]
        %v310 = vld [vmem:[%s1 + $0x2e0] sm:$0xff]
        %v311 = vld [vmem:[%s1 + $0x2e8] sm:$0xff]
        %v312 = vld [vmem:[%s1 + $0x2f0] sm:$0xff]
        %v313 = vld [vmem:[%s1 + $0x2f8] sm:$0xff]
        %v314 = vld [vmem:[%s1 + $0x300] sm:$0xff]
        %v315 = vld [vmem:[%s1 + $0x308] sm:$0xff]
        %v316 = vld [vmem:[%s1 + $0x310] sm:$0xff]
        %v317 = vld [vmem:[%s1 + $0x318] sm:$0xff]
        %v318 = vld [vmem:[%s1 + $0x320] sm:$0xff]
        %v319 = vld [vmem:[%s1 + $0x328] sm:$0xff]
        %v320 = vld [vmem:[%s1 + $0x330] sm:$0xff]
        %v321 = vld [vmem:[%s1 + $0x338] sm:$0xff]
        %v322 = vld [vmem:[%s1 + $0x340] sm:$0xff]
        %v323 = vld [vmem:[%s1 + $0x348] sm:$0xff]
        %v324 = vld [vmem:[%s1 + $0x350] sm:$0xff]
        %v325 = vld [vmem:[%s1 + $0x358] sm:$0xff]
        %v326 = vld [vmem:[%s1 + $0x360] sm:$0xff]
        %v327 = vld [vmem:[%s1 + $0x368] sm:$0xff]
        %v328 = vld [vmem:[%s1 + $0x370] sm:$0xff]
        %v329 = vld [vmem:[%s1 + $0x378] sm:$0xff]
        %v330 = vld [vmem:[%s1 + $0x380] sm:$0xff]
        %v331 = vld [vmem:[%s1 + $0x388] sm:$0xff]
        %v332 = vld [vmem:[%s1 + $0x390] sm:$0xff]
        %v333 = vld [vmem:[%s1 + $0x398] sm:$0xff]
        %v334 = vld [vmem:[%s1 + $0x3a0] sm:$0xff]
        %v335 = vld [vmem:[%s1 + $0x3a8] sm:$0xff]
        %v336 = vld [vmem:[%s1 + $0x3b0] sm:$0xff]
        %v337 = vld [vmem:[%s1 + $0x3b8] sm:$0xff]
        %v338 = vld [vmem:[%s1 + $0x3c0] sm:$0xff]
        %v339 = vld [vmem:[%s1 + $0x3c8] sm:$0xff]
        %v340 = vld [vmem:[%s1 + $0x3d0] sm:$0xff]
        %v341 = vld [vmem:[%s1 + $0x3d8] sm:$0xff]
        %v342 = vld [vmem:[%s1 + $0x3e0] sm:$0xff]
        %v343 = vld [vmem:[%s1 + $0x3e8] sm:$0xff]
        %v344 = vld [vmem:[%s1 + $0x3f0] sm:$0xff]
        %v345 = vld [vmem:[%s1 + $0x3f8] sm:$0xff]
        %v346 = vld [vmem:[%s1 + $0x400] sm:$0xff]
        %v347 = vld [vmem:[%s1 + $0x408] sm:$0xff]
        %v348 = vld [vmem:[%s1 + $0x410] sm:$0xff]
        %v349 = vld [vmem:[%s1 + $0x418] sm:$0xff]
        %v350 = vld [vmem:[%s1 + $0x420] sm:$0xff]
        %v351 = vld [vmem:[%s1 + $0x428] sm:$0xff]
        %v352 = vld [vmem:[%s1 + $0x430] sm:$0xff]
        %v353 = vld [vmem:[%s1 + $0x438] sm:$0xff]
        %v354 = vld [vmem:[%s1 + $0x440] sm:$0xff]
        %v355 = vld [vmem:[%s1 + $0x448] sm:$0xff]
        %v356 = vld [vmem:[%s1 + $0x450] sm:$0xff]
        %v357 = vld [vmem:[%s1 + $0x458] sm:$0xff]
        %v358 = vld [vmem:[%s1 + $0x460] sm:$0xff]
        %v359 = vld [vmem:[%s1 + $0x468] sm:$0xff]
        %v360 = vld [vmem:[%s1 + $0x470] sm:$0xff]
        %v361 = vld [vmem:[%s1 + $0x478] sm:$0xff]
        %v362 = vld [vmem:[%s1 + $0x480] sm:$0xff]
        %v363 = vld [vmem:[%s1 + $0x488] sm:$0xff]
        %v364 = vld [vmem:[%s1 + $0x490] sm:$0xff]
        %v365 = vld [vmem:[%s1 + $0x498] sm:$0xff]
        %v366 = vld [vmem:[%s1 + $0x4a0] sm:$0xff]
        %v367 = vld [vmem:[%s1 + $0x4a8] sm:$0xff]
        %v368 = vld [vmem:[%s1 + $0x4b0] sm:$0xff]
        %v369 = vld [vmem:[%s1 + $0x4b8] sm:$0xff]
        %v370 = vld [vmem:[%s1 + $0x4c0] sm:$0xff]
        %v371 = vld [vmem:[%s1 + $0x4c8] sm:$0xff]
        %v372 = vld [vmem:[%s1 + $0x4d0] sm:$0xff]
        %v373 = vld [vmem:[%s1 + $0x4d8] sm:$0xff]
        %v374 = vld [vmem:[%s1 + $0x4e0] sm:$0xff]
        %v375 = vld [vmem:[%s1 + $0x4e8] sm:$0xff]
        %v376 = vld [vmem:[%s1 + $0x4f0] sm:$0xff]
        %v377 = vld [vmem:[%s1 + $0x4f8] sm:$0xff]
        %v378 = vld [vmem:[%s1 + $0x500] sm:$0xff]
        %v379 = vld [vmem:[%s1 + $0x508] sm:$0xff]
        %v380 = vld [vmem:[%s1 + $0x510] sm:$0xff]
        %v381 = vld [vmem:[%s1 + $0x518] sm:$0xff]
        %v382 = vld [vmem:[%s1 + $0x520] sm:$0xff]
        %v383 = vld [vmem:[%s1 + $0x528] sm:$0xff]
        %v384 = vld [vmem:[%s1 + $0x530] sm:$0xff]
        %v385 = vld [vmem:[%s1 + $0x538] sm:$0xff]
        %v386 = vld [vmem:[%s1 + $0x540] sm:$0xff]
        %v387 = vld [vmem:[%s1 + $0x548] sm:$0xff]
        %v388 = vld [vmem:[%s1 + $0x550] sm:$0xff]
        %v389 = vld [vmem:[%s1 + $0x558] sm:$0xff]
        %v390 = vld [vmem:[%s1 + $0x560] sm:$0xff]
        %v391 = vld [vmem:[%s1 + $0x568] sm:$0xff]
        %v392 = vld [vmem:[%s1 + $0x570] sm:$0xff]
        %v393 = vld [vmem:[%s1 + $0x578] sm:$0xff]
        %v394 = vld [vmem:[%s1 + $0x580] sm:$0xff]
        %v395 = vld [vmem:[%s1 + $0x588] sm:$0xff]
        %v396 = vld [vmem:[%s1 + $0x590] sm:$0xff]
        %v397 = vld [vmem:[%s1 + $0x598] sm:$0xff]
        %v398 = vld [vmem:[%s1 + $0x5a0] sm:$0xff]
        %v399 = vld [vmem:[%s1 + $0x5a8] sm:$0xff]
        %v400 = vld [vmem:[%s1 + $0x5b0] sm:$0xff]
        %v401 = vld [vmem:[%s1 + $0x5b8] sm:$0xff]
        %v402 = vld [vmem:[%s1 + $0x5c0] sm:$0xff]
        %v403 = vld [vmem:[%s1 + $0x5c8] sm:$0xff]
        %v404 = vld [vmem:[%s1 + $0x5d0] sm:$0xff]
        %v405 = vld [vmem:[%s1 + $0x5d8] sm:$0xff]
        %v406 = vld [vmem:[%s1 + $0x5e0] sm:$0xff]
        %v407 = vld [vmem:[%s1 + $0x5e8] sm:$0xff]
        %v408 = vld [vmem:[%s1 + $0x5f0] sm:$0xff]
        %v409 = vld [vmem:[%s1 + $0x5f8] sm:$0xff]
        %v410 = vld [vmem:[%s1 + $0x600] sm:$0xff]
        %v411 = vld [vmem:[%s1 + $0x608] sm:$0xff]
        %v412 = vld [vmem:[%s1 + $0x610] sm:$0xff]
        %v413 = vld [vmem:[%s1 + $0x618] sm:$0xff]
        %v414 = vld [vmem:[%s1 + $0x620] sm:$0xff]
        %v415 = vld [vmem:[%s1 + $0x628] sm:$0xff]
        %v416 = vld [vmem:[%s1 + $0x630] sm:$0xff]
        %v417 = vld [vmem:[%s1 + $0x638] sm:$0xff]
        %v418 = vld [vmem:[%s1 + $0x640] sm:$0xff]
        %v419 = vld [vmem:[%s1 + $0x648] sm:$0xff]
        %v420 = vld [vmem:[%s1 + $0x650] sm:$0xff]
        %v421 = vld [vmem:[%s1 + $0x658] sm:$0xff]
        %v422 = vld [vmem:[%s1 + $0x660] sm:$0xff]
        %v423 = vld [vmem:[%s1 + $0x668] sm:$0xff]
        %v424 = vld [vmem:[%s1 + $0x670] sm:$0xff]
        %v425 = vld [vmem:[%s1 + $0x678] sm:$0xff]
        %v426 = vld [vmem:[%s1 + $0x680] sm:$0xff]
        %v427 = vld [vmem:[%s1 + $0x688] sm:$0xff]
        %v428 = vld [vmem:[%s1 + $0x690] sm:$0xff]
        %v429 = vld [vmem:[%s1 + $0x698] sm:$0xff]
        %v430 = vld [vmem:[%s1 + $0x6a0] sm:$0xff]
        %v431 = vld [vmem:[%s1 + $0x6a8] sm:$0xff]
        %v432 = vld [vmem:[%s1 + $0x6b0] sm:$0xff]
        %v433 = vld [vmem:[%s1 + $0x6b8] sm:$0xff]
        %v434 = vld [vmem:[%s1 + $0x6c0] sm:$0xff]
        %v435 = vld [vmem:[%s1 + $0x6c8] sm:$0xff]
        %v436 = vld [vmem:[%s1 + $0x6d0] sm:$0xff]
        %v437 = vld [vmem:[%s1 + $0x6d8] sm:$0xff]
        %v438 = vld [vmem:[%s1 + $0x6e0] sm:$0xff]
        %v439 = vld [vmem:[%s1 + $0x6e8] sm:$0xff]
        %v440 = vld [vmem:[%s1 + $0x6f0] sm:$0xff]
        %v441 = vld [vmem:[%s1 + $0x6f8] sm:$0xff]
        %v442 = vld [vmem:[%s1 + $0x700] sm:$0xff]
        %v443 = vld [vmem:[%s1 + $0x708] sm:$0xff]
        %v444 = vld [vmem:[%s1 + $0x710] sm:$0xff]
        %v445 = vld [vmem:[%s1 + $0x718] sm:$0xff]
        %v446 = vld [vmem:[%s1 + $0x720] sm:$0xff]
        %v447 = vld [vmem:[%s1 + $0x728] sm:$0xff]
        %v448 = vld [vmem:[%s1 + $0x730] sm:$0xff]
        %v449 = vld [vmem:[%s1 + $0x738] sm:$0xff]
        %v450 = vld [vmem:[%s1 + $0x740] sm:$0xff]
        %v451 = vld [vmem:[%s1 + $0x748] sm:$0xff]
        %v452 = vld [vmem:[%s1 + $0x750] sm:$0xff]
        %v453 = vld [vmem:[%s1 + $0x758] sm:$0xff]
        %v454 = vld [vmem:[%s1 + $0x760] sm:$0xff]
        %v455 = vld [vmem:[%s1 + $0x768] sm:$0xff]
        %v456 = vld [vmem:[%s1 + $0x770] sm:$0xff]
        %v457 = vld [vmem:[%s1 + $0x778] sm:$0xff]
        %v458 = vld [vmem:[%s1 + $0x780] sm:$0xff]
        %v459 = vld [vmem:[%s1 + $0x788] sm:$0xff]
        %v460 = vld [vmem:[%s1 + $0x790] sm:$0xff]
        %v461 = vld [vmem:[%s1 + $0x798] sm:$0xff]
        %v462 = vld [vmem:[%s1 + $0x7a0] sm:$0xff]
        %v463 = vld [vmem:[%s1 + $0x7a8] sm:$0xff]
        %v464 = vld [vmem:[%s1 + $0x7b0] sm:$0xff]
        %v465 = vld [vmem:[%s1 + $0x7b8] sm:$0xff]
        %v466 = vld [vmem:[%s1 + $0x7c0] sm:$0xff]
        %v467 = vld [vmem:[%s1 + $0x7c8] sm:$0xff]
        %v468 = vld [vmem:[%s1 + $0x7d0] sm:$0xff]
        %v469 = vld [vmem:[%s1 + $0x7d8] sm:$0xff]
        %v470 = vld [vmem:[%s1 + $0x7e0] sm:$0xff]
        %v471 = vld [vmem:[%s1 + $0x7e8] sm:$0xff]
        %v472 = vld [vmem:[%s1 + $0x7f0] sm:$0xff]
        %v473 = vld [vmem:[%s1 + $0x7f8] sm:$0xff]
        %v474 = vld [vmem:[%s1 + $0x800] sm:$0xff]
        %v475 = vld [vmem:[%s1 + $0x808] sm:$0xff]
        %v476 = vld [vmem:[%s1 + $0x810] sm:$0xff]
        %v477 = vld [vmem:[%s1 + $0x818] sm:$0xff]
        %v478 = vld [vmem:[%s1 + $0x820] sm:$0xff]
        %v479 = vld [vmem:[%s1 + $0x828] sm:$0xff]
        %v480 = vld [vmem:[%s1 + $0x830] sm:$0xff]
        %v481 = vld [vmem:[%s1 + $0x838] sm:$0xff]
        %v482 = vld [vmem:[%s1 + $0x840] sm:$0xff]
        %v483 = vld [vmem:[%s1 + $0x848] sm:$0xff]
        %v484 = vld [vmem:[%s1 + $0x850] sm:$0xff]
        %v485 = vld [vmem:[%s1 + $0x858] sm:$0xff]
        %v486 = vld [vmem:[%s1 + $0x860] sm:$0xff]
        %v487 = vld [vmem:[%s1 + $0x868] sm:$0xff]
        %v488 = vld [vmem:[%s1 + $0x870] sm:$0xff]
        %v489 = vld [vmem:[%s1 + $0x878] sm:$0xff]
        %v490 = vld [vmem:[%s1 + $0x880] sm:$0xff]
        %v491 = vld [vmem:[%s1 + $0x888] sm:$0xff]
        %v492 = vld [vmem:[%s1 + $0x890] sm:$0xff]
        %v493 = vld [vmem:[%s1 + $0x898] sm:$0xff]
        %v494 = vld [vmem:[%s1 + $0x8a0] sm:$0xff]
        %v495 = vld [vmem:[%s1 + $0x8a8] sm:$0xff]
        %v496 = vld [vmem:[%s1 + $0x8b0] sm:$0xff]
        %v497 = vld [vmem:[%s1 + $0x8b8] sm:$0xff]
        %v498 = vld [vmem:[%s1 + $0x8c0] sm:$0xff]
        %v499 = vld [vmem:[%s1 + $0x8c8] sm:$0xff]
        %v500 = vld [vmem:[%s1 + $0x8d0] sm:$0xff]
        %v501 = vld [vmem:[%s1 + $0x8d8] sm:$0xff]
        %v502 = vld [vmem:[%s1 + $0x8e0] sm:$0xff]
        %v503 = vld [vmem:[%s1 + $0x8e8] sm:$0xff]
        %v504 = vld [vmem:[%s1 + $0x8f0] sm:$0xff]
        %v505 = vld [vmem:[%s1 + $0x8f8] sm:$0xff]
        %v506 = vld [vmem:[%s1 + $0x900] sm:$0xff]
        %v507 = vld [vmem:[%s1 + $0x908] sm:$0xff]
        %v508 = vld [vmem:[%s1 + $0x910] sm:$0xff]
        %v509 = vld [vmem:[%s1 + $0x918] sm:$0xff]
        %v510 = vld [vmem:[%s1 + $0x920] sm:$0xff]
        %v511 = vld [vmem:[%s1 + $0x928] sm:$0xff]
        %v512 = vld [vmem:[%s1 + $0x930] sm:$0xff]
        %v513 = vld [vmem:[%s1 + $0x938] sm:$0xff]
        %v514 = vld [vmem:[%s1 + $0x940] sm:$0xff]
        %v515 = vld [vmem:[%s1 + $0x948] sm:$0xff]
        %v516 = vld [vmem:[%s1 + $0x950] sm:$0xff]
        %v517 = vld [vmem:[%s1 + $0x958] sm:$0xff]
        %v518 = vld [vmem:[%s1 + $0x960] sm:$0xff]
        %v519 = vld [vmem:[%s1 + $0x968] sm:$0xff]
        %v520 = vld [vmem:[%s1 + $0x970] sm:$0xff]
        %v521 = vld [vmem:[%s1 + $0x978] sm:$0xff]
        %v522 = vld [vmem:[%s1 + $0x980] sm:$0xff]
        %v523 = vld [vmem:[%s1 + $0x988] sm:$0xff]
        %v524 = vld [vmem:[%s1 + $0x990] sm:$0xff]
        %v525 = vld [vmem:[%s1 + $0x998] sm:$0xff]
        %v526 = vld [vmem:[%s1 + $0x9a0] sm:$0xff]
        %v527 = vld [vmem:[%s1 + $0x9a8] sm:$0xff]
        %v528 = vld [vmem:[%s1 + $0x9b0] sm:$0xff]
        %v529 = vld [vmem:[%s1 + $0x9b8] sm:$0xff]
        %v530 = vld [vmem:[%s1 + $0x9c0] sm:$0xff]
        %v531 = vld [vmem:[%s1 + $0x9c8] sm:$0xff]
        %v532 = vld [vmem:[%s1 + $0x9d0] sm:$0xff]
        %v533 = vld [vmem:[%s1 + $0x9d8] sm:$0xff]
        %v534 = vld [vmem:[%s1 + $0x9e0] sm:$0xff]
        %v535 = vld [vmem:[%s1 + $0x9e8] sm:$0xff]
        %v536 = vld [vmem:[%s1 + $0x9f0] sm:$0xff]
        %v537 = vld [vmem:[%s1 + $0x9f8] sm:$0xff]
        %v538 = vld [vmem:[%s1 + $0xa00] sm:$0xff]
        %v539 = vld [vmem:[%s1 + $0xa08] sm:$0xff]
        %v540 = vld [vmem:[%s1 + $0xa10] sm:$0xff]
        %v541 = vld [vmem:[%s1 + $0xa18] sm:$0xff]
        %v542 = vld [vmem:[%s1 + $0xa20] sm:$0xff]
        %v543 = vld [vmem:[%s1 + $0xa28] sm:$0xff]
        %v544 = vld [vmem:[%s1 + $0xa30] sm:$0xff]
        %v545 = vld [vmem:[%s1 + $0xa38] sm:$0xff]
        %v546 = vld [vmem:[%s1 + $0xa40] sm:$0xff]
        %v547 = vld [vmem:[%s1 + $0xa48] sm:$0xff]
        %v548 = vld [vmem:[%s1 + $0xa50] sm:$0xff]
        %v549 = vld [vmem:[%s1 + $0xa58] sm:$0xff]
        %v550 = vld [vmem:[%s1 + $0xa60] sm:$0xff]
        %v551 = vld [vmem:[%s1 + $0xa68] sm:$0xff]
        %v552 = vld [vmem:[%s1 + $0xa70] sm:$0xff]
        %v553 = vld [vmem:[%s1 + $0xa78] sm:$0xff]
        %v554 = vld [vmem:[%s1 + $0xa80] sm:$0xff]
        %v555 = vld [vmem:[%s1 + $0xa88] sm:$0xff]
        %v556 = vld [vmem:[%s1 + $0xa90] sm:$0xff]
        %v557 = vld [vmem:[%s1 + $0xa98] sm:$0xff]
        %v558 = vld [vmem:[%s1 + $0xaa0] sm:$0xff]
        %v559 = vld [vmem:[%s1 + $0xaa8] sm:$0xff]
        %v560 = vld [vmem:[%s1 + $0xab0] sm:$0xff]
        %v561 = vld [vmem:[%s1 + $0xab8] sm:$0xff]
        %v562 = vld [vmem:[%s1 + $0xac0] sm:$0xff]
        %v563 = vld [vmem:[%s1 + $0xac8] sm:$0xff]
        %v564 = vld [vmem:[%s1 + $0xad0] sm:$0xff]
        %v565 = vld [vmem:[%s1 + $0xad8] sm:$0xff]
        %v566 = vld [vmem:[%s1 + $0xae0] sm:$0xff]
        %v567 = vld [vmem:[%s1 + $0xae8] sm:$0xff]
        %v568 = vld [vmem:[%s1 + $0xaf0] sm:$0xff]
        %v569 = vld [vmem:[%s1 + $0xaf8] sm:$0xff]
        %v570 = vld [vmem:[%s1 + $0xb00] sm:$0xff]
        %v571 = vld [vmem:[%s1 + $0xb08] sm:$0xff]
        %v572 = vld [vmem:[%s1 + $0xb10] sm:$0xff]
        %v573 = vld [vmem:[%s1 + $0xb18] sm:$0xff]
        %v574 = vld [vmem:[%s1 + $0xb20] sm:$0xff]
        %v575 = vld [vmem:[%s1 + $0xb28] sm:$0xff]
        %v576 = vld [vmem:[%s1 + $0xb30] sm:$0xff]
        %v577 = vld [vmem:[%s1 + $0xb38] sm:$0xff]
        %v578 = vld [vmem:[%s1 + $0xb40] sm:$0xff]
        %v579 = vld [vmem:[%s1 + $0xb48] sm:$0xff]
        %v580 = vld [vmem:[%s1 + $0xb50] sm:$0xff]
        %v581 = vld [vmem:[%s1 + $0xb58] sm:$0xff]
        %v582 = vld [vmem:[%s1 + $0xb60] sm:$0xff]
        %v583 = vld [vmem:[%s1 + $0xb68] sm:$0xff]
        %v584 = vld [vmem:[%s1 + $0xb70] sm:$0xff]
        %v585 = vld [vmem:[%s1 + $0xb78] sm:$0xff]
        %v586 = vld [vmem:[%s1 + $0xb80] sm:$0xff]
        %v587 = vld [vmem:[%s1 + $0xb88] sm:$0xff]
        %v588 = vld [vmem:[%s1 + $0xb90] sm:$0xff]
        %v589 = vld [vmem:[%s1 + $0xb98] sm:$0xff]
        %v590 = vld [vmem:[%s1 + $0xba0] sm:$0xff]
        %v591 = vld [vmem:[%s1 + $0xba8] sm:$0xff]
        %v592 = vld [vmem:[%s1 + $0xbb0] sm:$0xff]
        %v593 = vld [vmem:[%s1 + $0xbb8] sm:$0xff]
        %v594 = vld [vmem:[%s1 + $0xbc0] sm:$0xff]
        %v595 = vld [vmem:[%s1 + $0xbc8] sm:$0xff]
        %v596 = vld [vmem:[%s1 + $0xbd0] sm:$0xff]
        %v597 = vld [vmem:[%s1 + $0xbd8] sm:$0xff]
        %v598 = vld [vmem:[%s1 + $0xbe0] sm:$0xff]
        %v599 = vld [vmem:[%s1 + $0xbe8] sm:$0xff]
        %v600 = vld [vmem:[%s1 + $0xbf0] sm:$0xff]
        %v601 = vld [vmem:[%s1 + $0xbf8] sm:$0xff]
        %v986 = vunpack.c.l.b16 %v218
        %v987 = vunpack.c.h.b16 %v218
        %v988 = vunpack.c.l.b16 %v219
        %v989 = vunpack.c.h.b16 %v219
        %v990 = vunpack.c.l.b16 %v220
        %v991 = vunpack.c.h.b16 %v220
        %v992 = vunpack.c.l.b16 %v221
        %v993 = vunpack.c.h.b16 %v221
        %v994 = vunpack.c.l.b16 %v222
        %v995 = vunpack.c.h.b16 %v222
        %v996 = vunpack.c.l.b16 %v223
        %v997 = vunpack.c.h.b16 %v223
        %v998 = vunpack.c.l.b16 %v224
        %v999 = vunpack.c.h.b16 %v224
        %v1000 = vunpack.c.l.b16 %v225
        %v1001 = vunpack.c.h.b16 %v225
        %v1002 = vunpack.c.l.b16 %v226
        %v1003 = vunpack.c.h.b16 %v226
        %v1004 = vunpack.c.l.b16 %v227
        %v1005 = vunpack.c.h.b16 %v227
        %v1006 = vunpack.c.l.b16 %v228
        %v1007 = vunpack.c.h.b16 %v228
        %v1008 = vunpack.c.l.b16 %v229
        %v1009 = vunpack.c.h.b16 %v229
        %v1010 = vunpack.c.l.b16 %v230
        %v1011 = vunpack.c.h.b16 %v230
        %v1012 = vunpack.c.l.b16 %v231
        %v1013 = vunpack.c.h.b16 %v231
        %v1014 = vunpack.c.l.b16 %v232
        %v1015 = vunpack.c.h.b16 %v232
        %v1016 = vunpack.c.l.b16 %v233
        %v1017 = vunpack.c.h.b16 %v233
        %v1018 = vunpack.c.l.b16 %v234
        %v1019 = vunpack.c.h.b16 %v234
        %v1020 = vunpack.c.l.b16 %v235
        %v1021 = vunpack.c.h.b16 %v235
        %v1022 = vunpack.c.l.b16 %v236
        %v1023 = vunpack.c.h.b16 %v236
        %v1024 = vunpack.c.l.b16 %v237
        %v1025 = vunpack.c.h.b16 %v237
        %v1026 = vunpack.c.l.b16 %v238
        %v1027 = vunpack.c.h.b16 %v238
        %v1028 = vunpack.c.l.b16 %v239
        %v1029 = vunpack.c.h.b16 %v239
        %v1030 = vunpack.c.l.b16 %v240
        %v1031 = vunpack.c.h.b16 %v240
        %v1032 = vunpack.c.l.b16 %v241
        %v1033 = vunpack.c.h.b16 %v241
        %v1034 = vunpack.c.l.b16 %v242
        %v1035 = vunpack.c.h.b16 %v242
        %v1036 = vunpack.c.l.b16 %v243
        %v1037 = vunpack.c.h.b16 %v243
        %v1038 = vunpack.c.l.b16 %v244
        %v1039 = vunpack.c.h.b16 %v244
        %v1040 = vunpack.c.l.b16 %v245
        %v1041 = vunpack.c.h.b16 %v245
        %v1042 = vunpack.c.l.b16 %v246
        %v1043 = vunpack.c.h.b16 %v246
        %v1044 = vunpack.c.l.b16 %v247
        %v1045 = vunpack.c.h.b16 %v247
        %v1046 = vunpack.c.l.b16 %v248
        %v1047 = vunpack.c.h.b16 %v248
        %v1048 = vunpack.c.l.b16 %v249
        %v1049 = vunpack.c.h.b16 %v249
        %v1050 = vunpack.c.l.b16 %v250
        %v1051 = vunpack.c.h.b16 %v250
        %v1052 = vunpack.c.l.b16 %v251
        %v1053 = vunpack.c.h.b16 %v251
        %v1054 = vunpack.c.l.b16 %v252
        %v1055 = vunpack.c.h.b16 %v252
        %v1056 = vunpack.c.l.b16 %v253
        %v1057 = vunpack.c.h.b16 %v253
        %v1058 = vunpack.c.l.b16 %v254
        %v1059 = vunpack.c.h.b16 %v254
        %v1060 = vunpack.c.l.b16 %v255
        %v1061 = vunpack.c.h.b16 %v255
        %v1062 = vunpack.c.l.b16 %v256
        %v1063 = vunpack.c.h.b16 %v256
        %v1064 = vunpack.c.l.b16 %v257
        %v1065 = vunpack.c.h.b16 %v257
        %v1066 = vunpack.c.l.b16 %v258
        %v1067 = vunpack.c.h.b16 %v258
        %v1068 = vunpack.c.l.b16 %v259
        %v1069 = vunpack.c.h.b16 %v259
        %v1070 = vunpack.c.l.b16 %v260
        %v1071 = vunpack.c.h.b16 %v260
        %v1072 = vunpack.c.l.b16 %v261
        %v1073 = vunpack.c.h.b16 %v261
        %v1074 = vunpack.c.l.b16 %v262
        %v1075 = vunpack.c.h.b16 %v262
        %v1076 = vunpack.c.l.b16 %v263
        %v1077 = vunpack.c.h.b16 %v263
        %v1078 = vunpack.c.l.b16 %v264
        %v1079 = vunpack.c.h.b16 %v264
        %v1080 = vunpack.c.l.b16 %v265
        %v1081 = vunpack.c.h.b16 %v265
        %v1082 = vunpack.c.l.b16 %v266
        %v1083 = vunpack.c.h.b16 %v266
        %v1084 = vunpack.c.l.b16 %v267
        %v1085 = vunpack.c.h.b16 %v267
        %v1086 = vunpack.c.l.b16 %v268
        %v1087 = vunpack.c.h.b16 %v268
        %v1088 = vunpack.c.l.b16 %v269
        %v1089 = vunpack.c.h.b16 %v269
        %v1090 = vunpack.c.l.b16 %v270
        %v1091 = vunpack.c.h.b16 %v270
        %v1092 = vunpack.c.l.b16 %v271
        %v1093 = vunpack.c.h.b16 %v271
        %v1094 = vunpack.c.l.b16 %v272
        %v1095 = vunpack.c.h.b16 %v272
        %v1096 = vunpack.c.l.b16 %v273
        %v1097 = vunpack.c.h.b16 %v273
        %v1098 = vunpack.c.l.b16 %v274
        %v1099 = vunpack.c.h.b16 %v274
        %v1100 = vunpack.c.l.b16 %v275
        %v1101 = vunpack.c.h.b16 %v275
        %v1102 = vunpack.c.l.b16 %v276
        %v1103 = vunpack.c.h.b16 %v276
        %v1104 = vunpack.c.l.b16 %v277
        %v1105 = vunpack.c.h.b16 %v277
        %v1106 = vunpack.c.l.b16 %v278
        %v1107 = vunpack.c.h.b16 %v278
        %v1108 = vunpack.c.l.b16 %v279
        %v1109 = vunpack.c.h.b16 %v279
        %v1110 = vunpack.c.l.b16 %v280
        %v1111 = vunpack.c.h.b16 %v280
        %v1112 = vunpack.c.l.b16 %v281
        %v1113 = vunpack.c.h.b16 %v281
        %v1114 = vunpack.c.l.b16 %v282
        %v1115 = vunpack.c.h.b16 %v282
        %v1116 = vunpack.c.l.b16 %v283
        %v1117 = vunpack.c.h.b16 %v283
        %v1118 = vunpack.c.l.b16 %v284
        %v1119 = vunpack.c.h.b16 %v284
        %v1120 = vunpack.c.l.b16 %v285
        %v1121 = vunpack.c.h.b16 %v285
        %v1122 = vunpack.c.l.b16 %v286
        %v1123 = vunpack.c.h.b16 %v286
        %v1124 = vunpack.c.l.b16 %v287
        %v1125 = vunpack.c.h.b16 %v287
        %v1126 = vunpack.c.l.b16 %v288
        %v1127 = vunpack.c.h.b16 %v288
        %v1128 = vunpack.c.l.b16 %v289
        %v1129 = vunpack.c.h.b16 %v289
        %v1130 = vunpack.c.l.b16 %v290
        %v1131 = vunpack.c.h.b16 %v290
        %v1132 = vunpack.c.l.b16 %v291
        %v1133 = vunpack.c.h.b16 %v291
        %v1134 = vunpack.c.l.b16 %v292
        %v1135 = vunpack.c.h.b16 %v292
        %v1136 = vunpack.c.l.b16 %v293
        %v1137 = vunpack.c.h.b16 %v293
        %v1138 = vunpack.c.l.b16 %v294
        %v1139 = vunpack.c.h.b16 %v294
        %v1140 = vunpack.c.l.b16 %v295
        %v1141 = vunpack.c.h.b16 %v295
        %v1142 = vunpack.c.l.b16 %v296
        %v1143 = vunpack.c.h.b16 %v296
        %v1144 = vunpack.c.l.b16 %v297
        %v1145 = vunpack.c.h.b16 %v297
        %v1146 = vunpack.c.l.b16 %v298
        %v1147 = vunpack.c.h.b16 %v298
        %v1148 = vunpack.c.l.b16 %v299
        %v1149 = vunpack.c.h.b16 %v299
        %v1150 = vunpack.c.l.b16 %v300
        %v1151 = vunpack.c.h.b16 %v300
        %v1152 = vunpack.c.l.b16 %v301
        %v1153 = vunpack.c.h.b16 %v301
        %v1154 = vunpack.c.l.b16 %v302
        %v1155 = vunpack.c.h.b16 %v302
        %v1156 = vunpack.c.l.b16 %v303
        %v1157 = vunpack.c.h.b16 %v303
        %v1158 = vunpack.c.l.b16 %v304
        %v1159 = vunpack.c.h.b16 %v304
        %v1160 = vunpack.c.l.b16 %v305
        %v1161 = vunpack.c.h.b16 %v305
        %v1162 = vunpack.c.l.b16 %v306
        %v1163 = vunpack.c.h.b16 %v306
        %v1164 = vunpack.c.l.b16 %v307
        %v1165 = vunpack.c.h.b16 %v307
        %v1166 = vunpack.c.l.b16 %v308
        %v1167 = vunpack.c.h.b16 %v308
        %v1168 = vunpack.c.l.b16 %v309
        %v1169 = vunpack.c.h.b16 %v309
        %v1170 = vunpack.c.l.b16 %v310
        %v1171 = vunpack.c.h.b16 %v310
        %v1172 = vunpack.c.l.b16 %v311
        %v1173 = vunpack.c.h.b16 %v311
        %v1174 = vunpack.c.l.b16 %v312
        %v1175 = vunpack.c.h.b16 %v312
        %v1176 = vunpack.c.l.b16 %v313
        %v1177 = vunpack.c.h.b16 %v313
        %v1178 = vunpack.c.l.b16 %v314
        %v1179 = vunpack.c.h.b16 %v314
        %v1180 = vunpack.c.l.b16 %v315
        %v1181 = vunpack.c.h.b16 %v315
        %v1182 = vunpack.c.l.b16 %v316
        %v1183 = vunpack.c.h.b16 %v316
        %v1184 = vunpack.c.l.b16 %v317
        %v1185 = vunpack.c.h.b16 %v317
        %v1186 = vunpack.c.l.b16 %v318
        %v1187 = vunpack.c.h.b16 %v318
        %v1188 = vunpack.c.l.b16 %v319
        %v1189 = vunpack.c.h.b16 %v319
        %v1190 = vunpack.c.l.b16 %v320
        %v1191 = vunpack.c.h.b16 %v320
        %v1192 = vunpack.c.l.b16 %v321
        %v1193 = vunpack.c.h.b16 %v321
        %v1194 = vunpack.c.l.b16 %v322
        %v1195 = vunpack.c.h.b16 %v322
        %v1196 = vunpack.c.l.b16 %v323
        %v1197 = vunpack.c.h.b16 %v323
        %v1198 = vunpack.c.l.b16 %v324
        %v1199 = vunpack.c.h.b16 %v324
        %v1200 = vunpack.c.l.b16 %v325
        %v1201 = vunpack.c.h.b16 %v325
        %v1202 = vunpack.c.l.b16 %v326
        %v1203 = vunpack.c.h.b16 %v326
        %v1204 = vunpack.c.l.b16 %v327
        %v1205 = vunpack.c.h.b16 %v327
        %v1206 = vunpack.c.l.b16 %v328
        %v1207 = vunpack.c.h.b16 %v328
        %v1208 = vunpack.c.l.b16 %v329
        %v1209 = vunpack.c.h.b16 %v329
        %v1210 = vunpack.c.l.b16 %v330
        %v1211 = vunpack.c.h.b16 %v330
        %v1212 = vunpack.c.l.b16 %v331
        %v1213 = vunpack.c.h.b16 %v331
        %v1214 = vunpack.c.l.b16 %v332
        %v1215 = vunpack.c.h.b16 %v332
        %v1216 = vunpack.c.l.b16 %v333
        %v1217 = vunpack.c.h.b16 %v333
        %v1218 = vunpack.c.l.b16 %v334
        %v1219 = vunpack.c.h.b16 %v334
        %v1220 = vunpack.c.l.b16 %v335
        %v1221 = vunpack.c.h.b16 %v335
        %v1222 = vunpack.c.l.b16 %v336
        %v1223 = vunpack.c.h.b16 %v336
        %v1224 = vunpack.c.l.b16 %v337
        %v1225 = vunpack.c.h.b16 %v337
        %v1226 = vunpack.c.l.b16 %v338
        %v1227 = vunpack.c.h.b16 %v338
        %v1228 = vunpack.c.l.b16 %v339
        %v1229 = vunpack.c.h.b16 %v339
        %v1230 = vunpack.c.l.b16 %v340
        %v1231 = vunpack.c.h.b16 %v340
        %v1232 = vunpack.c.l.b16 %v341
        %v1233 = vunpack.c.h.b16 %v341
        %v1234 = vunpack.c.l.b16 %v342
        %v1235 = vunpack.c.h.b16 %v342
        %v1236 = vunpack.c.l.b16 %v343
        %v1237 = vunpack.c.h.b16 %v343
        %v1238 = vunpack.c.l.b16 %v344
        %v1239 = vunpack.c.h.b16 %v344
        %v1240 = vunpack.c.l.b16 %v345
        %v1241 = vunpack.c.h.b16 %v345
        %v1242 = vunpack.c.l.b16 %v346
        %v1243 = vunpack.c.h.b16 %v346
        %v1244 = vunpack.c.l.b16 %v347
        %v1245 = vunpack.c.h.b16 %v347
        %v1246 = vunpack.c.l.b16 %v348
        %v1247 = vunpack.c.h.b16 %v348
        %v1248 = vunpack.c.l.b16 %v349
        %v1249 = vunpack.c.h.b16 %v349
        %v1250 = vunpack.c.l.b16 %v350
        %v1251 = vunpack.c.h.b16 %v350
        %v1252 = vunpack.c.l.b16 %v351
        %v1253 = vunpack.c.h.b16 %v351
        %v1254 = vunpack.c.l.b16 %v352
        %v1255 = vunpack.c.h.b16 %v352
        %v1256 = vunpack.c.l.b16 %v353
        %v1257 = vunpack.c.h.b16 %v353
        %v1258 = vunpack.c.l.b16 %v354
        %v1259 = vunpack.c.h.b16 %v354
        %v1260 = vunpack.c.l.b16 %v355
        %v1261 = vunpack.c.h.b16 %v355
        %v1262 = vunpack.c.l.b16 %v356
        %v1263 = vunpack.c.h.b16 %v356
        %v1264 = vunpack.c.l.b16 %v357
        %v1265 = vunpack.c.h.b16 %v357
        %v1266 = vunpack.c.l.b16 %v358
        %v1267 = vunpack.c.h.b16 %v358
        %v1268 = vunpack.c.l.b16 %v359
        %v1269 = vunpack.c.h.b16 %v359
        %v1270 = vunpack.c.l.b16 %v360
        %v1271 = vunpack.c.h.b16 %v360
        %v1272 = vunpack.c.l.b16 %v361
        %v1273 = vunpack.c.h.b16 %v361
        %v1274 = vunpack.c.l.b16 %v362
        %v1275 = vunpack.c.h.b16 %v362
        %v1276 = vunpack.c.l.b16 %v363
        %v1277 = vunpack.c.h.b16 %v363
        %v1278 = vunpack.c.l.b16 %v364
        %v1279 = vunpack.c.h.b16 %v364
        %v1280 = vunpack.c.l.b16 %v365
        %v1281 = vunpack.c.h.b16 %v365
        %v1282 = vunpack.c.l.b16 %v366
        %v1283 = vunpack.c.h.b16 %v366
        %v1284 = vunpack.c.l.b16 %v367
        %v1285 = vunpack.c.h.b16 %v367
        %v1286 = vunpack.c.l.b16 %v368
        %v1287 = vunpack.c.h.b16 %v368
        %v1288 = vunpack.c.l.b16 %v369
        %v1289 = vunpack.c.h.b16 %v369
        %v1290 = vunpack.c.l.b16 %v370
        %v1291 = vunpack.c.h.b16 %v370
        %v1292 = vunpack.c.l.b16 %v371
        %v1293 = vunpack.c.h.b16 %v371
        %v1294 = vunpack.c.l.b16 %v372
        %v1295 = vunpack.c.h.b16 %v372
        %v1296 = vunpack.c.l.b16 %v373
        %v1297 = vunpack.c.h.b16 %v373
        %v1298 = vunpack.c.l.b16 %v374
        %v1299 = vunpack.c.h.b16 %v374
        %v1300 = vunpack.c.l.b16 %v375
        %v1301 = vunpack.c.h.b16 %v375
        %v1302 = vunpack.c.l.b16 %v376
        %v1303 = vunpack.c.h.b16 %v376
        %v1304 = vunpack.c.l.b16 %v377
        %v1305 = vunpack.c.h.b16 %v377
        %v1306 = vunpack.c.l.b16 %v378
        %v1307 = vunpack.c.h.b16 %v378
        %v1308 = vunpack.c.l.b16 %v379
        %v1309 = vunpack.c.h.b16 %v379
        %v1310 = vunpack.c.l.b16 %v380
        %v1311 = vunpack.c.h.b16 %v380
        %v1312 = vunpack.c.l.b16 %v381
        %v1313 = vunpack.c.h.b16 %v381
        %v1314 = vunpack.c.l.b16 %v382
        %v1315 = vunpack.c.h.b16 %v382
        %v1316 = vunpack.c.l.b16 %v383
        %v1317 = vunpack.c.h.b16 %v383
        %v1318 = vunpack.c.l.b16 %v384
        %v1319 = vunpack.c.h.b16 %v384
        %v1320 = vunpack.c.l.b16 %v385
        %v1321 = vunpack.c.h.b16 %v385
        %v1322 = vunpack.c.l.b16 %v386
        %v1323 = vunpack.c.h.b16 %v386
        %v1324 = vunpack.c.l.b16 %v387
        %v1325 = vunpack.c.h.b16 %v387
        %v1326 = vunpack.c.l.b16 %v388
        %v1327 = vunpack.c.h.b16 %v388
        %v1328 = vunpack.c.l.b16 %v389
        %v1329 = vunpack.c.h.b16 %v389
        %v1330 = vunpack.c.l.b16 %v390
        %v1331 = vunpack.c.h.b16 %v390
        %v1332 = vunpack.c.l.b16 %v391
        %v1333 = vunpack.c.h.b16 %v391
        %v1334 = vunpack.c.l.b16 %v392
        %v1335 = vunpack.c.h.b16 %v392
        %v1336 = vunpack.c.l.b16 %v393
        %v1337 = vunpack.c.h.b16 %v393
        %v1338 = vunpack.c.l.b16 %v394
        %v1339 = vunpack.c.h.b16 %v394
        %v1340 = vunpack.c.l.b16 %v395
        %v1341 = vunpack.c.h.b16 %v395
        %v1342 = vunpack.c.l.b16 %v396
        %v1343 = vunpack.c.h.b16 %v396
        %v1344 = vunpack.c.l.b16 %v397
        %v1345 = vunpack.c.h.b16 %v397
        %v1346 = vunpack.c.l.b16 %v398
        %v1347 = vunpack.c.h.b16 %v398
        %v1348 = vunpack.c.l.b16 %v399
        %v1349 = vunpack.c.h.b16 %v399
        %v1350 = vunpack.c.l.b16 %v400
        %v1351 = vunpack.c.h.b16 %v400
        %v1352 = vunpack.c.l.b16 %v401
        %v1353 = vunpack.c.h.b16 %v401
        %v1354 = vunpack.c.l.b16 %v402
        %v1355 = vunpack.c.h.b16 %v402
        %v1356 = vunpack.c.l.b16 %v403
        %v1357 = vunpack.c.h.b16 %v403
        %v1358 = vunpack.c.l.b16 %v404
        %v1359 = vunpack.c.h.b16 %v404
        %v1360 = vunpack.c.l.b16 %v405
        %v1361 = vunpack.c.h.b16 %v405
        %v1362 = vunpack.c.l.b16 %v406
        %v1363 = vunpack.c.h.b16 %v406
        %v1364 = vunpack.c.l.b16 %v407
        %v1365 = vunpack.c.h.b16 %v407
        %v1366 = vunpack.c.l.b16 %v408
        %v1367 = vunpack.c.h.b16 %v408
        %v1368 = vunpack.c.l.b16 %v409
        %v1369 = vunpack.c.h.b16 %v409
        %v1370 = vunpack.c.l.b16 %v410
        %v1371 = vunpack.c.h.b16 %v410
        %v1372 = vunpack.c.l.b16 %v411
        %v1373 = vunpack.c.h.b16 %v411
        %v1374 = vunpack.c.l.b16 %v412
        %v1375 = vunpack.c.h.b16 %v412
        %v1376 = vunpack.c.l.b16 %v413
        %v1377 = vunpack.c.h.b16 %v413
        %v1378 = vunpack.c.l.b16 %v414
        %v1379 = vunpack.c.h.b16 %v414
        %v1380 = vunpack.c.l.b16 %v415
        %v1381 = vunpack.c.h.b16 %v415
        %v1382 = vunpack.c.l.b16 %v416
        %v1383 = vunpack.c.h.b16 %v416
        %v1384 = vunpack.c.l.b16 %v417
        %v1385 = vunpack.c.h.b16 %v417
        %v1386 = vunpack.c.l.b16 %v418
        %v1387 = vunpack.c.h.b16 %v418
        %v1388 = vunpack.c.l.b16 %v419
        %v1389 = vunpack.c.h.b16 %v419
        %v1390 = vunpack.c.l.b16 %v420
        %v1391 = vunpack.c.h.b16 %v420
        %v1392 = vunpack.c.l.b16 %v421
        %v1393 = vunpack.c.h.b16 %v421
        %v1394 = vunpack.c.l.b16 %v422
        %v1395 = vunpack.c.h.b16 %v422
        %v1396 = vunpack.c.l.b16 %v423
        %v1397 = vunpack.c.h.b16 %v423
        %v1398 = vunpack.c.l.b16 %v424
        %v1399 = vunpack.c.h.b16 %v424
        %v1400 = vunpack.c.l.b16 %v425
        %v1401 = vunpack.c.h.b16 %v425
        %v1402 = vunpack.c.l.b16 %v426
        %v1403 = vunpack.c.h.b16 %v426
        %v1404 = vunpack.c.l.b16 %v427
        %v1405 = vunpack.c.h.b16 %v427
        %v1406 = vunpack.c.l.b16 %v428
        %v1407 = vunpack.c.h.b16 %v428
        %v1408 = vunpack.c.l.b16 %v429
        %v1409 = vunpack.c.h.b16 %v429
        %v1410 = vunpack.c.l.b16 %v430
        %v1411 = vunpack.c.h.b16 %v430
        %v1412 = vunpack.c.l.b16 %v431
        %v1413 = vunpack.c.h.b16 %v431
        %v1414 = vunpack.c.l.b16 %v432
        %v1415 = vunpack.c.h.b16 %v432
        %v1416 = vunpack.c.l.b16 %v433
        %v1417 = vunpack.c.h.b16 %v433
        %v1418 = vunpack.c.l.b16 %v434
        %v1419 = vunpack.c.h.b16 %v434
        %v1420 = vunpack.c.l.b16 %v435
        %v1421 = vunpack.c.h.b16 %v435
        %v1422 = vunpack.c.l.b16 %v436
        %v1423 = vunpack.c.h.b16 %v436
        %v1424 = vunpack.c.l.b16 %v437
        %v1425 = vunpack.c.h.b16 %v437
        %v1426 = vunpack.c.l.b16 %v438
        %v1427 = vunpack.c.h.b16 %v438
        %v1428 = vunpack.c.l.b16 %v439
        %v1429 = vunpack.c.h.b16 %v439
        %v1430 = vunpack.c.l.b16 %v440
        %v1431 = vunpack.c.h.b16 %v440
        %v1432 = vunpack.c.l.b16 %v441
        %v1433 = vunpack.c.h.b16 %v441
        %v1434 = vunpack.c.l.b16 %v442
        %v1435 = vunpack.c.h.b16 %v442
        %v1436 = vunpack.c.l.b16 %v443
        %v1437 = vunpack.c.h.b16 %v443
        %v1438 = vunpack.c.l.b16 %v444
        %v1439 = vunpack.c.h.b16 %v444
        %v1440 = vunpack.c.l.b16 %v445
        %v1441 = vunpack.c.h.b16 %v445
        %v1442 = vunpack.c.l.b16 %v446
        %v1443 = vunpack.c.h.b16 %v446
        %v1444 = vunpack.c.l.b16 %v447
        %v1445 = vunpack.c.h.b16 %v447
        %v1446 = vunpack.c.l.b16 %v448
        %v1447 = vunpack.c.h.b16 %v448
        %v1448 = vunpack.c.l.b16 %v449
        %v1449 = vunpack.c.h.b16 %v449
        %v1450 = vunpack.c.l.b16 %v450
        %v1451 = vunpack.c.h.b16 %v450
        %v1452 = vunpack.c.l.b16 %v451
        %v1453 = vunpack.c.h.b16 %v451
        %v1454 = vunpack.c.l.b16 %v452
        %v1455 = vunpack.c.h.b16 %v452
        %v1456 = vunpack.c.l.b16 %v453
        %v1457 = vunpack.c.h.b16 %v453
        %v1458 = vunpack.c.l.b16 %v454
        %v1459 = vunpack.c.h.b16 %v454
        %v1460 = vunpack.c.l.b16 %v455
        %v1461 = vunpack.c.h.b16 %v455
        %v1462 = vunpack.c.l.b16 %v456
        %v1463 = vunpack.c.h.b16 %v456
        %v1464 = vunpack.c.l.b16 %v457
        %v1465 = vunpack.c.h.b16 %v457
        %v1466 = vunpack.c.l.b16 %v458
        %v1467 = vunpack.c.h.b16 %v458
        %v1468 = vunpack.c.l.b16 %v459
        %v1469 = vunpack.c.h.b16 %v459
        %v1470 = vunpack.c.l.b16 %v460
        %v1471 = vunpack.c.h.b16 %v460
        %v1472 = vunpack.c.l.b16 %v461
        %v1473 = vunpack.c.h.b16 %v461
        %v1474 = vunpack.c.l.b16 %v462
        %v1475 = vunpack.c.h.b16 %v462
        %v1476 = vunpack.c.l.b16 %v463
        %v1477 = vunpack.c.h.b16 %v463
        %v1478 = vunpack.c.l.b16 %v464
        %v1479 = vunpack.c.h.b16 %v464
        %v1480 = vunpack.c.l.b16 %v465
        %v1481 = vunpack.c.h.b16 %v465
        %v1482 = vunpack.c.l.b16 %v466
        %v1483 = vunpack.c.h.b16 %v466
        %v1484 = vunpack.c.l.b16 %v467
        %v1485 = vunpack.c.h.b16 %v467
        %v1486 = vunpack.c.l.b16 %v468
        %v1487 = vunpack.c.h.b16 %v468
        %v1488 = vunpack.c.l.b16 %v469
        %v1489 = vunpack.c.h.b16 %v469
        %v1490 = vunpack.c.l.b16 %v470
        %v1491 = vunpack.c.h.b16 %v470
        %v1492 = vunpack.c.l.b16 %v471
        %v1493 = vunpack.c.h.b16 %v471
        %v1494 = vunpack.c.l.b16 %v472
        %v1495 = vunpack.c.h.b16 %v472
        %v1496 = vunpack.c.l.b16 %v473
        %v1497 = vunpack.c.h.b16 %v473
        %v1498 = vunpack.c.l.b16 %v474
        %v1499 = vunpack.c.h.b16 %v474
        %v1500 = vunpack.c.l.b16 %v475
        %v1501 = vunpack.c.h.b16 %v475
        %v1502 = vunpack.c.l.b16 %v476
        %v1503 = vunpack.c.h.b16 %v476
        %v1504 = vunpack.c.l.b16 %v477
        %v1505 = vunpack.c.h.b16 %v477
        %v1506 = vunpack.c.l.b16 %v478
        %v1507 = vunpack.c.h.b16 %v478
        %v1508 = vunpack.c.l.b16 %v479
        %v1509 = vunpack.c.h.b16 %v479
        %v1510 = vunpack.c.l.b16 %v480
        %v1511 = vunpack.c.h.b16 %v480
        %v1512 = vunpack.c.l.b16 %v481
        %v1513 = vunpack.c.h.b16 %v481
        %v1514 = vunpack.c.l.b16 %v482
        %v1515 = vunpack.c.h.b16 %v482
        %v1516 = vunpack.c.l.b16 %v483
        %v1517 = vunpack.c.h.b16 %v483
        %v1518 = vunpack.c.l.b16 %v484
        %v1519 = vunpack.c.h.b16 %v484
        %v1520 = vunpack.c.l.b16 %v485
        %v1521 = vunpack.c.h.b16 %v485
        %v1522 = vunpack.c.l.b16 %v486
        %v1523 = vunpack.c.h.b16 %v486
        %v1524 = vunpack.c.l.b16 %v487
        %v1525 = vunpack.c.h.b16 %v487
        %v1526 = vunpack.c.l.b16 %v488
        %v1527 = vunpack.c.h.b16 %v488
        %v1528 = vunpack.c.l.b16 %v489
        %v1529 = vunpack.c.h.b16 %v489
        %v1530 = vunpack.c.l.b16 %v490
        %v1531 = vunpack.c.h.b16 %v490
        %v1532 = vunpack.c.l.b16 %v491
        %v1533 = vunpack.c.h.b16 %v491
        %v1534 = vunpack.c.l.b16 %v492
        %v1535 = vunpack.c.h.b16 %v492
        %v1536 = vunpack.c.l.b16 %v493
        %v1537 = vunpack.c.h.b16 %v493
        %v1538 = vunpack.c.l.b16 %v494
        %v1539 = vunpack.c.h.b16 %v494
        %v1540 = vunpack.c.l.b16 %v495
        %v1541 = vunpack.c.h.b16 %v495
        %v1542 = vunpack.c.l.b16 %v496
        %v1543 = vunpack.c.h.b16 %v496
        %v1544 = vunpack.c.l.b16 %v497
        %v1545 = vunpack.c.h.b16 %v497
        %v1546 = vunpack.c.l.b16 %v498
        %v1547 = vunpack.c.h.b16 %v498
        %v1548 = vunpack.c.l.b16 %v499
        %v1549 = vunpack.c.h.b16 %v499
        %v1550 = vunpack.c.l.b16 %v500
        %v1551 = vunpack.c.h.b16 %v500
        %v1552 = vunpack.c.l.b16 %v501
        %v1553 = vunpack.c.h.b16 %v501
        %v1554 = vunpack.c.l.b16 %v502
        %v1555 = vunpack.c.h.b16 %v502
        %v1556 = vunpack.c.l.b16 %v503
        %v1557 = vunpack.c.h.b16 %v503
        %v1558 = vunpack.c.l.b16 %v504
        %v1559 = vunpack.c.h.b16 %v504
        %v1560 = vunpack.c.l.b16 %v505
        %v1561 = vunpack.c.h.b16 %v505
        %v1562 = vunpack.c.l.b16 %v506
        %v1563 = vunpack.c.h.b16 %v506
        %v1564 = vunpack.c.l.b16 %v507
        %v1565 = vunpack.c.h.b16 %v507
        %v1566 = vunpack.c.l.b16 %v508
        %v1567 = vunpack.c.h.b16 %v508
        %v1568 = vunpack.c.l.b16 %v509
        %v1569 = vunpack.c.h.b16 %v509
        %v1570 = vunpack.c.l.b16 %v510
        %v1571 = vunpack.c.h.b16 %v510
        %v1572 = vunpack.c.l.b16 %v511
        %v1573 = vunpack.c.h.b16 %v511
        %v1574 = vunpack.c.l.b16 %v512
        %v1575 = vunpack.c.h.b16 %v512
        %v1576 = vunpack.c.l.b16 %v513
        %v1577 = vunpack.c.h.b16 %v513
        %v1578 = vunpack.c.l.b16 %v514
        %v1579 = vunpack.c.h.b16 %v514
        %v1580 = vunpack.c.l.b16 %v515
        %v1581 = vunpack.c.h.b16 %v515
        %v1582 = vunpack.c.l.b16 %v516
        %v1583 = vunpack.c.h.b16 %v516
        %v1584 = vunpack.c.l.b16 %v517
        %v1585 = vunpack.c.h.b16 %v517
        %v1586 = vunpack.c.l.b16 %v518
        %v1587 = vunpack.c.h.b16 %v518
        %v1588 = vunpack.c.l.b16 %v519
        %v1589 = vunpack.c.h.b16 %v519
        %v1590 = vunpack.c.l.b16 %v520
        %v1591 = vunpack.c.h.b16 %v520
        %v1592 = vunpack.c.l.b16 %v521
        %v1593 = vunpack.c.h.b16 %v521
        %v1594 = vunpack.c.l.b16 %v522
        %v1595 = vunpack.c.h.b16 %v522
        %v1596 = vunpack.c.l.b16 %v523
        %v1597 = vunpack.c.h.b16 %v523
        %v1598 = vunpack.c.l.b16 %v524
        %v1599 = vunpack.c.h.b16 %v524
        %v1600 = vunpack.c.l.b16 %v525
        %v1601 = vunpack.c.h.b16 %v525
        %v1602 = vunpack.c.l.b16 %v526
        %v1603 = vunpack.c.h.b16 %v526
        %v1604 = vunpack.c.l.b16 %v527
        %v1605 = vunpack.c.h.b16 %v527
        %v1606 = vunpack.c.l.b16 %v528
        %v1607 = vunpack.c.h.b16 %v528
        %v1608 = vunpack.c.l.b16 %v529
        %v1609 = vunpack.c.h.b16 %v529
        %v1610 = vunpack.c.l.b16 %v530
        %v1611 = vunpack.c.h.b16 %v530
        %v1612 = vunpack.c.l.b16 %v531
        %v1613 = vunpack.c.h.b16 %v531
        %v1614 = vunpack.c.l.b16 %v532
        %v1615 = vunpack.c.h.b16 %v532
        %v1616 = vunpack.c.l.b16 %v533
        %v1617 = vunpack.c.h.b16 %v533
        %v1618 = vunpack.c.l.b16 %v534
        %v1619 = vunpack.c.h.b16 %v534
        %v1620 = vunpack.c.l.b16 %v535
        %v1621 = vunpack.c.h.b16 %v535
        %v1622 = vunpack.c.l.b16 %v536
        %v1623 = vunpack.c.h.b16 %v536
        %v1624 = vunpack.c.l.b16 %v537
        %v1625 = vunpack.c.h.b16 %v537
        %v1626 = vunpack.c.l.b16 %v538
        %v1627 = vunpack.c.h.b16 %v538
        %v1628 = vunpack.c.l.b16 %v539
        %v1629 = vunpack.c.h.b16 %v539
        %v1630 = vunpack.c.l.b16 %v540
        %v1631 = vunpack.c.h.b16 %v540
        %v1632 = vunpack.c.l.b16 %v541
        %v1633 = vunpack.c.h.b16 %v541
        %v1634 = vunpack.c.l.b16 %v542
        %v1635 = vunpack.c.h.b16 %v542
        %v1636 = vunpack.c.l.b16 %v543
        %v1637 = vunpack.c.h.b16 %v543
        %v1638 = vunpack.c.l.b16 %v544
        %v1639 = vunpack.c.h.b16 %v544
        %v1640 = vunpack.c.l.b16 %v545
        %v1641 = vunpack.c.h.b16 %v545
        %v1642 = vunpack.c.l.b16 %v546
        %v1643 = vunpack.c.h.b16 %v546
        %v1644 = vunpack.c.l.b16 %v547
        %v1645 = vunpack.c.h.b16 %v547
        %v1646 = vunpack.c.l.b16 %v548
        %v1647 = vunpack.c.h.b16 %v548
        %v1648 = vunpack.c.l.b16 %v549
        %v1649 = vunpack.c.h.b16 %v549
        %v1650 = vunpack.c.l.b16 %v550
        %v1651 = vunpack.c.h.b16 %v550
        %v1652 = vunpack.c.l.b16 %v551
        %v1653 = vunpack.c.h.b16 %v551
        %v1654 = vunpack.c.l.b16 %v552
        %v1655 = vunpack.c.h.b16 %v552
        %v1656 = vunpack.c.l.b16 %v553
        %v1657 = vunpack.c.h.b16 %v553
        %v1658 = vunpack.c.l.b16 %v554
        %v1659 = vunpack.c.h.b16 %v554
        %v1660 = vunpack.c.l.b16 %v555
        %v1661 = vunpack.c.h.b16 %v555
        %v1662 = vunpack.c.l.b16 %v556
        %v1663 = vunpack.c.h.b16 %v556
        %v1664 = vunpack.c.l.b16 %v557
        %v1665 = vunpack.c.h.b16 %v557
        %v1666 = vunpack.c.l.b16 %v558
        %v1667 = vunpack.c.h.b16 %v558
        %v1668 = vunpack.c.l.b16 %v559
        %v1669 = vunpack.c.h.b16 %v559
        %v1670 = vunpack.c.l.b16 %v560
        %v1671 = vunpack.c.h.b16 %v560
        %v1672 = vunpack.c.l.b16 %v561
        %v1673 = vunpack.c.h.b16 %v561
        %v1674 = vunpack.c.l.b16 %v562
        %v1675 = vunpack.c.h.b16 %v562
        %v1676 = vunpack.c.l.b16 %v563
        %v1677 = vunpack.c.h.b16 %v563
        %v1678 = vunpack.c.l.b16 %v564
        %v1679 = vunpack.c.h.b16 %v564
        %v1680 = vunpack.c.l.b16 %v565
        %v1681 = vunpack.c.h.b16 %v565
        %v1682 = vunpack.c.l.b16 %v566
        %v1683 = vunpack.c.h.b16 %v566
        %v1684 = vunpack.c.l.b16 %v567
        %v1685 = vunpack.c.h.b16 %v567
        %v1686 = vunpack.c.l.b16 %v568
        %v1687 = vunpack.c.h.b16 %v568
        %v1688 = vunpack.c.l.b16 %v569
        %v1689 = vunpack.c.h.b16 %v569
        %v1690 = vunpack.c.l.b16 %v570
        %v1691 = vunpack.c.h.b16 %v570
        %v1692 = vunpack.c.l.b16 %v571
        %v1693 = vunpack.c.h.b16 %v571
        %v1694 = vunpack.c.l.b16 %v572
        %v1695 = vunpack.c.h.b16 %v572
        %v1696 = vunpack.c.l.b16 %v573
        %v1697 = vunpack.c.h.b16 %v573
        %v1698 = vunpack.c.l.b16 %v574
        %v1699 = vunpack.c.h.b16 %v574
        %v1700 = vunpack.c.l.b16 %v575
        %v1701 = vunpack.c.h.b16 %v575
        %v1702 = vunpack.c.l.b16 %v576
        %v1703 = vunpack.c.h.b16 %v576
        %v1704 = vunpack.c.l.b16 %v577
        %v1705 = vunpack.c.h.b16 %v577
        %v1706 = vunpack.c.l.b16 %v578
        %v1707 = vunpack.c.h.b16 %v578
        %v1708 = vunpack.c.l.b16 %v579
        %v1709 = vunpack.c.h.b16 %v579
        %v1710 = vunpack.c.l.b16 %v580
        %v1711 = vunpack.c.h.b16 %v580
        %v1712 = vunpack.c.l.b16 %v581
        %v1713 = vunpack.c.h.b16 %v581
        %v1714 = vunpack.c.l.b16 %v582
        %v1715 = vunpack.c.h.b16 %v582
        %v1716 = vunpack.c.l.b16 %v583
        %v1717 = vunpack.c.h.b16 %v583
        %v1718 = vunpack.c.l.b16 %v584
        %v1719 = vunpack.c.h.b16 %v584
        %v1720 = vunpack.c.l.b16 %v585
        %v1721 = vunpack.c.h.b16 %v585
        %v1722 = vunpack.c.l.b16 %v586
        %v1723 = vunpack.c.h.b16 %v586
        %v1724 = vunpack.c.l.b16 %v587
        %v1725 = vunpack.c.h.b16 %v587
        %v1726 = vunpack.c.l.b16 %v588
        %v1727 = vunpack.c.h.b16 %v588
        %v1728 = vunpack.c.l.b16 %v589
        %v1729 = vunpack.c.h.b16 %v589
        %v1730 = vunpack.c.l.b16 %v590
        %v1731 = vunpack.c.h.b16 %v590
        %v1732 = vunpack.c.l.b16 %v591
        %v1733 = vunpack.c.h.b16 %v591
        %v1734 = vunpack.c.l.b16 %v592
        %v1735 = vunpack.c.h.b16 %v592
        %v1736 = vunpack.c.l.b16 %v593
        %v1737 = vunpack.c.h.b16 %v593
        %v1738 = vunpack.c.l.b16 %v594
        %v1739 = vunpack.c.h.b16 %v594
        %v1740 = vunpack.c.l.b16 %v595
        %v1741 = vunpack.c.h.b16 %v595
        %v1742 = vunpack.c.l.b16 %v596
        %v1743 = vunpack.c.h.b16 %v596
        %v1744 = vunpack.c.l.b16 %v597
        %v1745 = vunpack.c.h.b16 %v597
        %v1746 = vunpack.c.l.b16 %v598
        %v1747 = vunpack.c.h.b16 %v598
        %v1748 = vunpack.c.l.b16 %v599
        %v1749 = vunpack.c.h.b16 %v599
        %v1750 = vunpack.c.l.b16 %v600
        %v1751 = vunpack.c.h.b16 %v600
        %v1752 = vunpack.c.l.b16 %v601
        %v1753 = vunpack.c.h.b16 %v601
        %v1754 = vpack.c.b16 %v998, %v986
        %v1755 = vpack.c.b16 %v999, %v987
        %v1756 = vpack.c.b16 %v1000, %v988
        %v1757 = vpack.c.b16 %v1001, %v989
        %v1758 = vpack.c.b16 %v1002, %v990
        %v1759 = vpack.c.b16 %v1003, %v991
        %v1760 = vpack.c.b16 %v1004, %v992
        %v1761 = vpack.c.b16 %v1005, %v993
        %v1762 = vpack.c.b16 %v1006, %v994
        %v1763 = vpack.c.b16 %v1007, %v995
        %v1764 = vpack.c.b16 %v1008, %v996
        %v1765 = vpack.c.b16 %v1009, %v997
        %v1766 = vpack.c.b16 %v1022, %v1010
        %v1767 = vpack.c.b16 %v1023, %v1011
        %v1768 = vpack.c.b16 %v1024, %v1012
        %v1769 = vpack.c.b16 %v1025, %v1013
        %v1770 = vpack.c.b16 %v1026, %v1014
        %v1771 = vpack.c.b16 %v1027, %v1015
        %v1772 = vpack.c.b16 %v1028, %v1016
        %v1773 = vpack.c.b16 %v1029, %v1017
        %v1774 = vpack.c.b16 %v1030, %v1018
        %v1775 = vpack.c.b16 %v1031, %v1019
        %v1776 = vpack.c.b16 %v1032, %v1020
        %v1777 = vpack.c.b16 %v1033, %v1021
        %v1778 = vpack.c.b16 %v1046, %v1034
        %v1779 = vpack.c.b16 %v1047, %v1035
        %v1780 = vpack.c.b16 %v1048, %v1036
        %v1781 = vpack.c.b16 %v1049, %v1037
        %v1782 = vpack.c.b16 %v1050, %v1038
        %v1783 = vpack.c.b16 %v1051, %v1039
        %v1784 = vpack.c.b16 %v1052, %v1040
        %v1785 = vpack.c.b16 %v1053, %v1041
        %v1786 = vpack.c.b16 %v1054, %v1042
        %v1787 = vpack.c.b16 %v1055, %v1043
        %v1788 = vpack.c.b16 %v1056, %v1044
        %v1789 = vpack.c.b16 %v1057, %v1045
        %v1790 = vpack.c.b16 %v1070, %v1058
        %v1791 = vpack.c.b16 %v1071, %v1059
        %v1792 = vpack.c.b16 %v1072, %v1060
        %v1793 = vpack.c.b16 %v1073, %v1061
        %v1794 = vpack.c.b16 %v1074, %v1062
        %v1795 = vpack.c.b16 %v1075, %v1063
        %v1796 = vpack.c.b16 %v1076, %v1064
        %v1797 = vpack.c.b16 %v1077, %v1065
        %v1798 = vpack.c.b16 %v1078, %v1066
        %v1799 = vpack.c.b16 %v1079, %v1067
        %v1800 = vpack.c.b16 %v1080, %v1068
        %v1801 = vpack.c.b16 %v1081, %v1069
        %v1802 = vpack.c.b16 %v1094, %v1082
        %v1803 = vpack.c.b16 %v1095, %v1083
        %v1804 = vpack.c.b16 %v1096, %v1084
        %v1805 = vpack.c.b16 %v1097, %v1085
        %v1806 = vpack.c.b16 %v1098, %v1086
        %v1807 = vpack.c.b16 %v1099, %v1087
        %v1808 = vpack.c.b16 %v1100, %v1088
        %v1809 = vpack.c.b16 %v1101, %v1089
        %v1810 = vpack.c.b16 %v1102, %v1090
        %v1811 = vpack.c.b16 %v1103, %v1091
        %v1812 = vpack.c.b16 %v1104, %v1092
        %v1813 = vpack.c.b16 %v1105, %v1093
        %v1814 = vpack.c.b16 %v1118, %v1106
        %v1815 = vpack.c.b16 %v1119, %v1107
        %v1816 = vpack.c.b16 %v1120, %v1108
        %v1817 = vpack.c.b16 %v1121, %v1109
        %v1818 = vpack.c.b16 %v1122, %v1110
        %v1819 = vpack.c.b16 %v1123, %v1111
        %v1820 = vpack.c.b16 %v1124, %v1112
        %v1821 = vpack.c.b16 %v1125, %v1113
        %v1822 = vpack.c.b16 %v1126, %v1114
        %v1823 = vpack.c.b16 %v1127, %v1115
        %v1824 = vpack.c.b16 %v1128, %v1116
        %v1825 = vpack.c.b16 %v1129, %v1117
        %v1826 = vpack.c.b16 %v1142, %v1130
        %v1827 = vpack.c.b16 %v1143, %v1131
        %v1828 = vpack.c.b16 %v1144, %v1132
        %v1829 = vpack.c.b16 %v1145, %v1133
        %v1830 = vpack.c.b16 %v1146, %v1134
        %v1831 = vpack.c.b16 %v1147, %v1135
        %v1832 = vpack.c.b16 %v1148, %v1136
        %v1833 = vpack.c.b16 %v1149, %v1137
        %v1834 = vpack.c.b16 %v1150, %v1138
        %v1835 = vpack.c.b16 %v1151, %v1139
        %v1836 = vpack.c.b16 %v1152, %v1140
        %v1837 = vpack.c.b16 %v1153, %v1141
        %v1838 = vpack.c.b16 %v1166, %v1154
        %v1839 = vpack.c.b16 %v1167, %v1155
        %v1840 = vpack.c.b16 %v1168, %v1156
        %v1841 = vpack.c.b16 %v1169, %v1157
        %v1842 = vpack.c.b16 %v1170, %v1158
        %v1843 = vpack.c.b16 %v1171, %v1159
        %v1844 = vpack.c.b16 %v1172, %v1160
        %v1845 = vpack.c.b16 %v1173, %v1161
        %v1846 = vpack.c.b16 %v1174, %v1162
        %v1847 = vpack.c.b16 %v1175, %v1163
        %v1848 = vpack.c.b16 %v1176, %v1164
        %v1849 = vpack.c.b16 %v1177, %v1165
        %v1850 = vpack.c.b16 %v1190, %v1178
        %v1851 = vpack.c.b16 %v1191, %v1179
        %v1852 = vpack.c.b16 %v1192, %v1180
        %v1853 = vpack.c.b16 %v1193, %v1181
        %v1854 = vpack.c.b16 %v1194, %v1182
        %v1855 = vpack.c.b16 %v1195, %v1183
        %v1856 = vpack.c.b16 %v1196, %v1184
        %v1857 = vpack.c.b16 %v1197, %v1185
        %v1858 = vpack.c.b16 %v1198, %v1186
        %v1859 = vpack.c.b16 %v1199, %v1187
        %v1860 = vpack.c.b16 %v1200, %v1188
        %v1861 = vpack.c.b16 %v1201, %v1189
        %v1862 = vpack.c.b16 %v1214, %v1202
        %v1863 = vpack.c.b16 %v1215, %v1203
        %v1864 = vpack.c.b16 %v1216, %v1204
        %v1865 = vpack.c.b16 %v1217, %v1205
        %v1866 = vpack.c.b16 %v1218, %v1206
        %v1867 = vpack.c.b16 %v1219, %v1207
        %v1868 = vpack.c.b16 %v1220, %v1208
        %v1869 = vpack.c.b16 %v1221, %v1209
        %v1870 = vpack.c.b16 %v1222, %v1210
        %v1871 = vpack.c.b16 %v1223, %v1211
        %v1872 = vpack.c.b16 %v1224, %v1212
        %v1873 = vpack.c.b16 %v1225, %v1213
        %v1874 = vpack.c.b16 %v1238, %v1226
        %v1875 = vpack.c.b16 %v1239, %v1227
        %v1876 = vpack.c.b16 %v1240, %v1228
        %v1877 = vpack.c.b16 %v1241, %v1229
        %v1878 = vpack.c.b16 %v1242, %v1230
        %v1879 = vpack.c.b16 %v1243, %v1231
        %v1880 = vpack.c.b16 %v1244, %v1232
        %v1881 = vpack.c.b16 %v1245, %v1233
        %v1882 = vpack.c.b16 %v1246, %v1234
        %v1883 = vpack.c.b16 %v1247, %v1235
        %v1884 = vpack.c.b16 %v1248, %v1236
        %v1885 = vpack.c.b16 %v1249, %v1237
        %v1886 = vpack.c.b16 %v1262, %v1250
        %v1887 = vpack.c.b16 %v1263, %v1251
        %v1888 = vpack.c.b16 %v1264, %v1252
        %v1889 = vpack.c.b16 %v1265, %v1253
        %v1890 = vpack.c.b16 %v1266, %v1254
        %v1891 = vpack.c.b16 %v1267, %v1255
        %v1892 = vpack.c.b16 %v1268, %v1256
        %v1893 = vpack.c.b16 %v1269, %v1257
        %v1894 = vpack.c.b16 %v1270, %v1258
        %v1895 = vpack.c.b16 %v1271, %v1259
        %v1896 = vpack.c.b16 %v1272, %v1260
        %v1897 = vpack.c.b16 %v1273, %v1261
        %v1898 = vpack.c.b16 %v1286, %v1274
        %v1899 = vpack.c.b16 %v1287, %v1275
        %v1900 = vpack.c.b16 %v1288, %v1276
        %v1901 = vpack.c.b16 %v1289, %v1277
        %v1902 = vpack.c.b16 %v1290, %v1278
        %v1903 = vpack.c.b16 %v1291, %v1279
        %v1904 = vpack.c.b16 %v1292, %v1280
        %v1905 = vpack.c.b16 %v1293, %v1281
        %v1906 = vpack.c.b16 %v1294, %v1282
        %v1907 = vpack.c.b16 %v1295, %v1283
        %v1908 = vpack.c.b16 %v1296, %v1284
        %v1909 = vpack.c.b16 %v1297, %v1285
        %v1910 = vpack.c.b16 %v1310, %v1298
        %v1911 = vpack.c.b16 %v1311, %v1299
        %v1912 = vpack.c.b16 %v1312, %v1300
        %v1913 = vpack.c.b16 %v1313, %v1301
        %v1914 = vpack.c.b16 %v1314, %v1302
        %v1915 = vpack.c.b16 %v1315, %v1303
        %v1916 = vpack.c.b16 %v1316, %v1304
        %v1917 = vpack.c.b16 %v1317, %v1305
        %v1918 = vpack.c.b16 %v1318, %v1306
        %v1919 = vpack.c.b16 %v1319, %v1307
        %v1920 = vpack.c.b16 %v1320, %v1308
        %v1921 = vpack.c.b16 %v1321, %v1309
        %v1922 = vpack.c.b16 %v1334, %v1322
        %v1923 = vpack.c.b16 %v1335, %v1323
        %v1924 = vpack.c.b16 %v1336, %v1324
        %v1925 = vpack.c.b16 %v1337, %v1325
        %v1926 = vpack.c.b16 %v1338, %v1326
        %v1927 = vpack.c.b16 %v1339, %v1327
        %v1928 = vpack.c.b16 %v1340, %v1328
        %v1929 = vpack.c.b16 %v1341, %v1329
        %v1930 = vpack.c.b16 %v1342, %v1330
        %v1931 = vpack.c.b16 %v1343, %v1331
        %v1932 = vpack.c.b16 %v1344, %v1332
        %v1933 = vpack.c.b16 %v1345, %v1333
        %v1934 = vpack.c.b16 %v1358, %v1346
        %v1935 = vpack.c.b16 %v1359, %v1347
        %v1936 = vpack.c.b16 %v1360, %v1348
        %v1937 = vpack.c.b16 %v1361, %v1349
        %v1938 = vpack.c.b16 %v1362, %v1350
        %v1939 = vpack.c.b16 %v1363, %v1351
        %v1940 = vpack.c.b16 %v1364, %v1352
        %v1941 = vpack.c.b16 %v1365, %v1353
        %v1942 = vpack.c.b16 %v1366, %v1354
        %v1943 = vpack.c.b16 %v1367, %v1355
        %v1944 = vpack.c.b16 %v1368, %v1356
        %v1945 = vpack.c.b16 %v1369, %v1357
        %v1946 = vpack.c.b16 %v1382, %v1370
        %v1947 = vpack.c.b16 %v1383, %v1371
        %v1948 = vpack.c.b16 %v1384, %v1372
        %v1949 = vpack.c.b16 %v1385, %v1373
        %v1950 = vpack.c.b16 %v1386, %v1374
        %v1951 = vpack.c.b16 %v1387, %v1375
        %v1952 = vpack.c.b16 %v1388, %v1376
        %v1953 = vpack.c.b16 %v1389, %v1377
        %v1954 = vpack.c.b16 %v1390, %v1378
        %v1955 = vpack.c.b16 %v1391, %v1379
        %v1956 = vpack.c.b16 %v1392, %v1380
        %v1957 = vpack.c.b16 %v1393, %v1381
        %v1958 = vpack.c.b16 %v1406, %v1394
        %v1959 = vpack.c.b16 %v1407, %v1395
        %v1960 = vpack.c.b16 %v1408, %v1396
        %v1961 = vpack.c.b16 %v1409, %v1397
        %v1962 = vpack.c.b16 %v1410, %v1398
        %v1963 = vpack.c.b16 %v1411, %v1399
        %v1964 = vpack.c.b16 %v1412, %v1400
        %v1965 = vpack.c.b16 %v1413, %v1401
        %v1966 = vpack.c.b16 %v1414, %v1402
        %v1967 = vpack.c.b16 %v1415, %v1403
        %v1968 = vpack.c.b16 %v1416, %v1404
        %v1969 = vpack.c.b16 %v1417, %v1405
        %v1970 = vpack.c.b16 %v1430, %v1418
        %v1971 = vpack.c.b16 %v1431, %v1419
        %v1972 = vpack.c.b16 %v1432, %v1420
        %v1973 = vpack.c.b16 %v1433, %v1421
        %v1974 = vpack.c.b16 %v1434, %v1422
        %v1975 = vpack.c.b16 %v1435, %v1423
        %v1976 = vpack.c.b16 %v1436, %v1424
        %v1977 = vpack.c.b16 %v1437, %v1425
        %v1978 = vpack.c.b16 %v1438, %v1426
        %v1979 = vpack.c.b16 %v1439, %v1427
        %v1980 = vpack.c.b16 %v1440, %v1428
        %v1981 = vpack.c.b16 %v1441, %v1429
        %v1982 = vpack.c.b16 %v1454, %v1442
        %v1983 = vpack.c.b16 %v1455, %v1443
        %v1984 = vpack.c.b16 %v1456, %v1444
        %v1985 = vpack.c.b16 %v1457, %v1445
        %v1986 = vpack.c.b16 %v1458, %v1446
        %v1987 = vpack.c.b16 %v1459, %v1447
        %v1988 = vpack.c.b16 %v1460, %v1448
        %v1989 = vpack.c.b16 %v1461, %v1449
        %v1990 = vpack.c.b16 %v1462, %v1450
        %v1991 = vpack.c.b16 %v1463, %v1451
        %v1992 = vpack.c.b16 %v1464, %v1452
        %v1993 = vpack.c.b16 %v1465, %v1453
        %v1994 = vpack.c.b16 %v1478, %v1466
        %v1995 = vpack.c.b16 %v1479, %v1467
        %v1996 = vpack.c.b16 %v1480, %v1468
        %v1997 = vpack.c.b16 %v1481, %v1469
        %v1998 = vpack.c.b16 %v1482, %v1470
        %v1999 = vpack.c.b16 %v1483, %v1471
        %v2000 = vpack.c.b16 %v1484, %v1472
        %v2001 = vpack.c.b16 %v1485, %v1473
        %v2002 = vpack.c.b16 %v1486, %v1474
        %v2003 = vpack.c.b16 %v1487, %v1475
        %v2004 = vpack.c.b16 %v1488, %v1476
        %v2005 = vpack.c.b16 %v1489, %v1477
        %v2006 = vpack.c.b16 %v1502, %v1490
        %v2007 = vpack.c.b16 %v1503, %v1491
        %v2008 = vpack.c.b16 %v1504, %v1492
        %v2009 = vpack.c.b16 %v1505, %v1493
        %v2010 = vpack.c.b16 %v1506, %v1494
        %v2011 = vpack.c.b16 %v1507, %v1495
        %v2012 = vpack.c.b16 %v1508, %v1496
        %v2013 = vpack.c.b16 %v1509, %v1497
        %v2014 = vpack.c.b16 %v1510, %v1498
        %v2015 = vpack.c.b16 %v1511, %v1499
        %v2016 = vpack.c.b16 %v1512, %v1500
        %v2017 = vpack.c.b16 %v1513, %v1501
        %v2018 = vpack.c.b16 %v1526, %v1514
        %v2019 = vpack.c.b16 %v1527, %v1515
        %v2020 = vpack.c.b16 %v1528, %v1516
        %v2021 = vpack.c.b16 %v1529, %v1517
        %v2022 = vpack.c.b16 %v1530, %v1518
        %v2023 = vpack.c.b16 %v1531, %v1519
        %v2024 = vpack.c.b16 %v1532, %v1520
        %v2025 = vpack.c.b16 %v1533, %v1521
        %v2026 = vpack.c.b16 %v1534, %v1522
        %v2027 = vpack.c.b16 %v1535, %v1523
        %v2028 = vpack.c.b16 %v1536, %v1524
        %v2029 = vpack.c.b16 %v1537, %v1525
        %v2030 = vpack.c.b16 %v1550, %v1538
        %v2031 = vpack.c.b16 %v1551, %v1539
        %v2032 = vpack.c.b16 %v1552, %v1540
        %v2033 = vpack.c.b16 %v1553, %v1541
        %v2034 = vpack.c.b16 %v1554, %v1542
        %v2035 = vpack.c.b16 %v1555, %v1543
        %v2036 = vpack.c.b16 %v1556, %v1544
        %v2037 = vpack.c.b16 %v1557, %v1545
        %v2038 = vpack.c.b16 %v1558, %v1546
        %v2039 = vpack.c.b16 %v1559, %v1547
        %v2040 = vpack.c.b16 %v1560, %v1548
        %v2041 = vpack.c.b16 %v1561, %v1549
        %v2042 = vpack.c.b16 %v1574, %v1562
        %v2043 = vpack.c.b16 %v1575, %v1563
        %v2044 = vpack.c.b16 %v1576, %v1564
        %v2045 = vpack.c.b16 %v1577, %v1565
        %v2046 = vpack.c.b16 %v1578, %v1566
        %v2047 = vpack.c.b16 %v1579, %v1567
        %v2048 = vpack.c.b16 %v1580, %v1568
        %v2049 = vpack.c.b16 %v1581, %v1569
        %v2050 = vpack.c.b16 %v1582, %v1570
        %v2051 = vpack.c.b16 %v1583, %v1571
        %v2052 = vpack.c.b16 %v1584, %v1572
        %v2053 = vpack.c.b16 %v1585, %v1573
        %v2054 = vpack.c.b16 %v1598, %v1586
        %v2055 = vpack.c.b16 %v1599, %v1587
        %v2056 = vpack.c.b16 %v1600, %v1588
        %v2057 = vpack.c.b16 %v1601, %v1589
        %v2058 = vpack.c.b16 %v1602, %v1590
        %v2059 = vpack.c.b16 %v1603, %v1591
        %v2060 = vpack.c.b16 %v1604, %v1592
        %v2061 = vpack.c.b16 %v1605, %v1593
        %v2062 = vpack.c.b16 %v1606, %v1594
        %v2063 = vpack.c.b16 %v1607, %v1595
        %v2064 = vpack.c.b16 %v1608, %v1596
        %v2065 = vpack.c.b16 %v1609, %v1597
        %v2066 = vpack.c.b16 %v1622, %v1610
        %v2067 = vpack.c.b16 %v1623, %v1611
        %v2068 = vpack.c.b16 %v1624, %v1612
        %v2069 = vpack.c.b16 %v1625, %v1613
        %v2070 = vpack.c.b16 %v1626, %v1614
        %v2071 = vpack.c.b16 %v1627, %v1615
        %v2072 = vpack.c.b16 %v1628, %v1616
        %v2073 = vpack.c.b16 %v1629, %v1617
        %v2074 = vpack.c.b16 %v1630, %v1618
        %v2075 = vpack.c.b16 %v1631, %v1619
        %v2076 = vpack.c.b16 %v1632, %v1620
        %v2077 = vpack.c.b16 %v1633, %v1621
        %v2078 = vpack.c.b16 %v1646, %v1634
        %v2079 = vpack.c.b16 %v1647, %v1635
        %v2080 = vpack.c.b16 %v1648, %v1636
        %v2081 = vpack.c.b16 %v1649, %v1637
        %v2082 = vpack.c.b16 %v1650, %v1638
        %v2083 = vpack.c.b16 %v1651, %v1639
        %v2084 = vpack.c.b16 %v1652, %v1640
        %v2085 = vpack.c.b16 %v1653, %v1641
        %v2086 = vpack.c.b16 %v1654, %v1642
        %v2087 = vpack.c.b16 %v1655, %v1643
        %v2088 = vpack.c.b16 %v1656, %v1644
        %v2089 = vpack.c.b16 %v1657, %v1645
        %v2090 = vpack.c.b16 %v1670, %v1658
        %v2091 = vpack.c.b16 %v1671, %v1659
        %v2092 = vpack.c.b16 %v1672, %v1660
        %v2093 = vpack.c.b16 %v1673, %v1661
        %v2094 = vpack.c.b16 %v1674, %v1662
        %v2095 = vpack.c.b16 %v1675, %v1663
        %v2096 = vpack.c.b16 %v1676, %v1664
        %v2097 = vpack.c.b16 %v1677, %v1665
        %v2098 = vpack.c.b16 %v1678, %v1666
        %v2099 = vpack.c.b16 %v1679, %v1667
        %v2100 = vpack.c.b16 %v1680, %v1668
        %v2101 = vpack.c.b16 %v1681, %v1669
        %v2102 = vpack.c.b16 %v1694, %v1682
        %v2103 = vpack.c.b16 %v1695, %v1683
        %v2104 = vpack.c.b16 %v1696, %v1684
        %v2105 = vpack.c.b16 %v1697, %v1685
        %v2106 = vpack.c.b16 %v1698, %v1686
        %v2107 = vpack.c.b16 %v1699, %v1687
        %v2108 = vpack.c.b16 %v1700, %v1688
        %v2109 = vpack.c.b16 %v1701, %v1689
        %v2110 = vpack.c.b16 %v1702, %v1690
        %v2111 = vpack.c.b16 %v1703, %v1691
        %v2112 = vpack.c.b16 %v1704, %v1692
        %v2113 = vpack.c.b16 %v1705, %v1693
        %v2114 = vpack.c.b16 %v1718, %v1706
        %v2115 = vpack.c.b16 %v1719, %v1707
        %v2116 = vpack.c.b16 %v1720, %v1708
        %v2117 = vpack.c.b16 %v1721, %v1709
        %v2118 = vpack.c.b16 %v1722, %v1710
        %v2119 = vpack.c.b16 %v1723, %v1711
        %v2120 = vpack.c.b16 %v1724, %v1712
        %v2121 = vpack.c.b16 %v1725, %v1713
        %v2122 = vpack.c.b16 %v1726, %v1714
        %v2123 = vpack.c.b16 %v1727, %v1715
        %v2124 = vpack.c.b16 %v1728, %v1716
        %v2125 = vpack.c.b16 %v1729, %v1717
        %v2126 = vpack.c.b16 %v1742, %v1730
        %v2127 = vpack.c.b16 %v1743, %v1731
        %v2128 = vpack.c.b16 %v1744, %v1732
        %v2129 = vpack.c.b16 %v1745, %v1733
        %v2130 = vpack.c.b16 %v1746, %v1734
        %v2131 = vpack.c.b16 %v1747, %v1735
        %v2132 = vpack.c.b16 %v1748, %v1736
        %v2133 = vpack.c.b16 %v1749, %v1737
        %v2134 = vpack.c.b16 %v1750, %v1738
        %v2135 = vpack.c.b16 %v1751, %v1739
        %v2136 = vpack.c.b16 %v1752, %v1740
        %v2137 = vpack.c.b16 %v1753, %v1741
        %2522 = vmatprep.subr.bf16.mxu0 %v1755
        %2523 = vmatpush1.bf16.msra.mxu0 %v1754
        %2524 = vmatprep.subr.bf16.mxu0 %v1767
        %2525 = vmatpush1.bf16.msra.mxu0 %v1766
        %2526 = vmatprep.subr.bf16.mxu0 %v1779
        %2527 = vmatpush1.bf16.msra.mxu0 %v1778
        %2528 = vmatprep.subr.bf16.mxu0 %v1791
        %2529 = vmatpush1.bf16.msra.mxu0 %v1790
        %2530 = vmatprep.subr.bf16.mxu0 %v1803
        %2531 = vmatpush1.bf16.msra.mxu0 %v1802
        %2532 = vmatprep.subr.bf16.mxu0 %v1815
        %2533 = vmatpush1.bf16.msra.mxu0 %v1814
        %2534 = vmatprep.subr.bf16.mxu0 %v1827
        %2535 = vmatpush1.bf16.msra.mxu0 %v1826
        %2536 = vmatprep.subr.bf16.mxu0 %v1839
        %2537 = vmatpush1.bf16.msra.mxu0 %v1838
        %2538 = vmatprep.subr.bf16.mxu0 %v1851
        %2539 = vmatpush1.bf16.msra.mxu0 %v1850
        %2540 = vmatprep.subr.bf16.mxu0 %v1863
        %2541 = vmatpush1.bf16.msra.mxu0 %v1862
        %2542 = vmatprep.subr.bf16.mxu0 %v1875
        %2543 = vmatpush1.bf16.msra.mxu0 %v1874
        %2544 = vmatprep.subr.bf16.mxu0 %v1887
        %2545 = vmatpush1.bf16.msra.mxu0 %v1886
        %2546 = vmatprep.subr.bf16.mxu0 %v1899
        %2547 = vmatpush1.bf16.msra.mxu0 %v1898
        %2548 = vmatprep.subr.bf16.mxu0 %v1911
        %2549 = vmatpush1.bf16.msra.mxu0 %v1910
        %2550 = vmatprep.subr.bf16.mxu0 %v1923
        %2551 = vmatpush1.bf16.msra.mxu0 %v1922
        %2552 = vmatprep.subr.bf16.mxu0 %v1935
        %2553 = vmatpush1.bf16.msra.mxu0 %v1934
        %2554 = vmatprep.mubr.bf16.mxu0 %v215
        %2555 = vmatmul.mubr.bf16.gmra.mrb[0].mxu0 %v214
        %v2556 = vpop.f32.mrb[0].mxu0
        %v2557 = vadd.f32 0.0, %v2556
        %v2558 = vpop.f32.mrb[0].mxu0
        %v2559 = vadd.f32 0.0, %v2558
        %v2560 = vpop.f32.mrb[0].mxu0
        %v2561 = vpop.f32.mrb[0].mxu0
        %2562 = vdwg.mxu0
        %2563 = vmatprep.subr.bf16.mxu0 %v1947
        %2564 = vmatpush1.bf16.msra.mxu0 %v1946
        %2565 = vmatprep.subr.bf16.mxu0 %v1959
        %2566 = vmatpush1.bf16.msra.mxu0 %v1958
        %2567 = vmatprep.subr.bf16.mxu0 %v1971
        %2568 = vmatpush1.bf16.msra.mxu0 %v1970
        %2569 = vmatprep.subr.bf16.mxu0 %v1983
        %2570 = vmatpush1.bf16.msra.mxu0 %v1982
        %2571 = vmatprep.subr.bf16.mxu0 %v1995
        %2572 = vmatpush1.bf16.msra.mxu0 %v1994
        %2573 = vmatprep.subr.bf16.mxu0 %v2007
        %2574 = vmatpush1.bf16.msra.mxu0 %v2006
        %2575 = vmatprep.subr.bf16.mxu0 %v2019
        %2576 = vmatpush1.bf16.msra.mxu0 %v2018
        %2577 = vmatprep.subr.bf16.mxu0 %v2031
        %2578 = vmatpush1.bf16.msra.mxu0 %v2030
        %2579 = vmatprep.subr.bf16.mxu0 %v2043
        %2580 = vmatpush1.bf16.msra.mxu0 %v2042
        %2581 = vmatprep.subr.bf16.mxu0 %v2055
        %2582 = vmatpush1.bf16.msra.mxu0 %v2054
        %2583 = vmatprep.subr.bf16.mxu0 %v2067
        %2584 = vmatpush1.bf16.msra.mxu0 %v2066
        %2585 = vmatprep.subr.bf16.mxu0 %v2079
        %2586 = vmatpush1.bf16.msra.mxu0 %v2078
        %2587 = vmatprep.subr.bf16.mxu0 %v2091
        %2588 = vmatpush1.bf16.msra.mxu0 %v2090
        %2589 = vmatprep.subr.bf16.mxu0 %v2103
        %2590 = vmatpush1.bf16.msra.mxu0 %v2102
        %2591 = vmatprep.subr.bf16.mxu0 %v2115
        %2592 = vmatpush1.bf16.msra.mxu0 %v2114
        %2593 = vmatprep.subr.bf16.mxu0 %v2127
        %2594 = vmatpush1.bf16.msra.mxu0 %v2126
        %2595 = vmatprep.mubr.bf16.mxu0 %v217
        %2596 = vmatmul.mubr.bf16.gmra.mrb[0].mxu0 %v216
        %v2597 = vpop.f32.mrb[0].mxu0
        %v2598 = vadd.f32 %v2557, %v2597
        %v2599 = vpop.f32.mrb[0].mxu0
        %v2600 = vadd.f32 %v2559, %v2599
        %v2601 = vpop.f32.mrb[0].mxu0
        %v2602 = vpop.f32.mrb[0].mxu0
        %2603 = vdwg.mxu0
        %2604 = vmatprep.subr.bf16.mxu0 %v1757
        %2605 = vmatpush1.bf16.msra.mxu0 %v1756
        %2606 = vmatprep.subr.bf16.mxu0 %v1769
        %2607 = vmatpush1.bf16.msra.mxu0 %v1768
        %2608 = vmatprep.subr.bf16.mxu0 %v1781
        %2609 = vmatpush1.bf16.msra.mxu0 %v1780
        %2610 = vmatprep.subr.bf16.mxu0 %v1793
        %2611 = vmatpush1.bf16.msra.mxu0 %v1792
        %2612 = vmatprep.subr.bf16.mxu0 %v1805
        %2613 = vmatpush1.bf16.msra.mxu0 %v1804
        %2614 = vmatprep.subr.bf16.mxu0 %v1817
        %2615 = vmatpush1.bf16.msra.mxu0 %v1816
        %2616 = vmatprep.subr.bf16.mxu0 %v1829
        %2617 = vmatpush1.bf16.msra.mxu0 %v1828
        %2618 = vmatprep.subr.bf16.mxu0 %v1841
        %2619 = vmatpush1.bf16.msra.mxu0 %v1840
        %2620 = vmatprep.subr.bf16.mxu0 %v1853
        %2621 = vmatpush1.bf16.msra.mxu0 %v1852
        %2622 = vmatprep.subr.bf16.mxu0 %v1865
        %2623 = vmatpush1.bf16.msra.mxu0 %v1864
        %2624 = vmatprep.subr.bf16.mxu0 %v1877
        %2625 = vmatpush1.bf16.msra.mxu0 %v1876
        %2626 = vmatprep.subr.bf16.mxu0 %v1889
        %2627 = vmatpush1.bf16.msra.mxu0 %v1888
        %2628 = vmatprep.subr.bf16.mxu0 %v1901
        %2629 = vmatpush1.bf16.msra.mxu0 %v1900
        %2630 = vmatprep.subr.bf16.mxu0 %v1913
        %2631 = vmatpush1.bf16.msra.mxu0 %v1912
        %2632 = vmatprep.subr.bf16.mxu0 %v1925
        %2633 = vmatpush1.bf16.msra.mxu0 %v1924
        %2634 = vmatprep.subr.bf16.mxu0 %v1937
        %2635 = vmatpush1.bf16.msra.mxu0 %v1936
        %2636 = vmatprep.mubr.bf16.mxu0 %v215
        %2637 = vmatmul.mubr.bf16.gmra.mrb[0].mxu0 %v214
        %v2638 = vpop.f32.mrb[0].mxu0
        %v2639 = vadd.f32 0.0, %v2638
        %v2640 = vpop.f32.mrb[0].mxu0
        %v2641 = vadd.f32 0.0, %v2640
        %v2642 = vpop.f32.mrb[0].mxu0
        %v2643 = vpop.f32.mrb[0].mxu0
        %2644 = vdwg.mxu0
        %2645 = vmatprep.subr.bf16.mxu0 %v1949
        %2646 = vmatpush1.bf16.msra.mxu0 %v1948
        %2647 = vmatprep.subr.bf16.mxu0 %v1961
        %2648 = vmatpush1.bf16.msra.mxu0 %v1960
        %2649 = vmatprep.subr.bf16.mxu0 %v1973
        %2650 = vmatpush1.bf16.msra.mxu0 %v1972
        %2651 = vmatprep.subr.bf16.mxu0 %v1985
        %2652 = vmatpush1.bf16.msra.mxu0 %v1984
        %2653 = vmatprep.subr.bf16.mxu0 %v1997
        %2654 = vmatpush1.bf16.msra.mxu0 %v1996
        %2655 = vmatprep.subr.bf16.mxu0 %v2009
        %2656 = vmatpush1.bf16.msra.mxu0 %v2008
        %2657 = vmatprep.subr.bf16.mxu0 %v2021
        %2658 = vmatpush1.bf16.msra.mxu0 %v2020
        %2659 = vmatprep.subr.bf16.mxu0 %v2033
        %2660 = vmatpush1.bf16.msra.mxu0 %v2032
        %2661 = vmatprep.subr.bf16.mxu0 %v2045
        %2662 = vmatpush1.bf16.msra.mxu0 %v2044
        %2663 = vmatprep.subr.bf16.mxu0 %v2057
        %2664 = vmatpush1.bf16.msra.mxu0 %v2056
        %2665 = vmatprep.subr.bf16.mxu0 %v2069
        %2666 = vmatpush1.bf16.msra.mxu0 %v2068
        %2667 = vmatprep.subr.bf16.mxu0 %v2081
        %2668 = vmatpush1.bf16.msra.mxu0 %v2080
        %2669 = vmatprep.subr.bf16.mxu0 %v2093
        %2670 = vmatpush1.bf16.msra.mxu0 %v2092
        %2671 = vmatprep.subr.bf16.mxu0 %v2105
        %2672 = vmatpush1.bf16.msra.mxu0 %v2104
        %2673 = vmatprep.subr.bf16.mxu0 %v2117
        %2674 = vmatpush1.bf16.msra.mxu0 %v2116
        %2675 = vmatprep.subr.bf16.mxu0 %v2129
        %2676 = vmatpush1.bf16.msra.mxu0 %v2128
        %2677 = vmatprep.mubr.bf16.mxu0 %v217
        %2678 = vmatmul.mubr.bf16.gmra.mrb[0].mxu0 %v216
        %v2679 = vpop.f32.mrb[0].mxu0
        %v2680 = vadd.f32 %v2639, %v2679
        %v2681 = vpop.f32.mrb[0].mxu0
        %v2682 = vadd.f32 %v2641, %v2681
        %v2683 = vpop.f32.mrb[0].mxu0
        %v2684 = vpop.f32.mrb[0].mxu0
        %2685 = vdwg.mxu0
        %2686 = vmatprep.subr.bf16.mxu0 %v1759
        %2687 = vmatpush1.bf16.msra.mxu0 %v1758
        %2688 = vmatprep.subr.bf16.mxu0 %v1771
        %2689 = vmatpush1.bf16.msra.mxu0 %v1770
        %2690 = vmatprep.subr.bf16.mxu0 %v1783
        %2691 = vmatpush1.bf16.msra.mxu0 %v1782
        %2692 = vmatprep.subr.bf16.mxu0 %v1795
        %2693 = vmatpush1.bf16.msra.mxu0 %v1794
        %2694 = vmatprep.subr.bf16.mxu0 %v1807
        %2695 = vmatpush1.bf16.msra.mxu0 %v1806
        %2696 = vmatprep.subr.bf16.mxu0 %v1819
        %2697 = vmatpush1.bf16.msra.mxu0 %v1818
        %2698 = vmatprep.subr.bf16.mxu0 %v1831
        %2699 = vmatpush1.bf16.msra.mxu0 %v1830
        %2700 = vmatprep.subr.bf16.mxu0 %v1843
        %2701 = vmatpush1.bf16.msra.mxu0 %v1842
        %2702 = vmatprep.subr.bf16.mxu0 %v1855
        %2703 = vmatpush1.bf16.msra.mxu0 %v1854
        %2704 = vmatprep.subr.bf16.mxu0 %v1867
        %2705 = vmatpush1.bf16.msra.mxu0 %v1866
        %2706 = vmatprep.subr.bf16.mxu0 %v1879
        %2707 = vmatpush1.bf16.msra.mxu0 %v1878
        %2708 = vmatprep.subr.bf16.mxu0 %v1891
        %2709 = vmatpush1.bf16.msra.mxu0 %v1890
        %2710 = vmatprep.subr.bf16.mxu0 %v1903
        %2711 = vmatpush1.bf16.msra.mxu0 %v1902
        %2712 = vmatprep.subr.bf16.mxu0 %v1915
        %2713 = vmatpush1.bf16.msra.mxu0 %v1914
        %2714 = vmatprep.subr.bf16.mxu0 %v1927
        %2715 = vmatpush1.bf16.msra.mxu0 %v1926
        %2716 = vmatprep.subr.bf16.mxu0 %v1939
        %2717 = vmatpush1.bf16.msra.mxu0 %v1938
        %2718 = vmatprep.mubr.bf16.mxu0 %v215
        %2719 = vmatmul.mubr.bf16.gmra.mrb[0].mxu0 %v214
        %v2720 = vpop.f32.mrb[0].mxu0
        %v2721 = vadd.f32 0.0, %v2720
        %v2722 = vpop.f32.mrb[0].mxu0
        %v2723 = vadd.f32 0.0, %v2722
        %v2724 = vpop.f32.mrb[0].mxu0
        %v2725 = vpop.f32.mrb[0].mxu0
        %2726 = vdwg.mxu0
        %2727 = vmatprep.subr.bf16.mxu0 %v1951
        %2728 = vmatpush1.bf16.msra.mxu0 %v1950
        %2729 = vmatprep.subr.bf16.mxu0 %v1963
        %2730 = vmatpush1.bf16.msra.mxu0 %v1962
        %2731 = vmatprep.subr.bf16.mxu0 %v1975
        %2732 = vmatpush1.bf16.msra.mxu0 %v1974
        %2733 = vmatprep.subr.bf16.mxu0 %v1987
        %2734 = vmatpush1.bf16.msra.mxu0 %v1986
        %2735 = vmatprep.subr.bf16.mxu0 %v1999
        %2736 = vmatpush1.bf16.msra.mxu0 %v1998
        %2737 = vmatprep.subr.bf16.mxu0 %v2011
        %2738 = vmatpush1.bf16.msra.mxu0 %v2010
        %2739 = vmatprep.subr.bf16.mxu0 %v2023
        %2740 = vmatpush1.bf16.msra.mxu0 %v2022
        %2741 = vmatprep.subr.bf16.mxu0 %v2035
        %2742 = vmatpush1.bf16.msra.mxu0 %v2034
        %2743 = vmatprep.subr.bf16.mxu0 %v2047
        %2744 = vmatpush1.bf16.msra.mxu0 %v2046
        %2745 = vmatprep.subr.bf16.mxu0 %v2059
        %2746 = vmatpush1.bf16.msra.mxu0 %v2058
        %2747 = vmatprep.subr.bf16.mxu0 %v2071
        %2748 = vmatpush1.bf16.msra.mxu0 %v2070
        %2749 = vmatprep.subr.bf16.mxu0 %v2083
        %2750 = vmatpush1.bf16.msra.mxu0 %v2082
        %2751 = vmatprep.subr.bf16.mxu0 %v2095
        %2752 = vmatpush1.bf16.msra.mxu0 %v2094
        %2753 = vmatprep.subr.bf16.mxu0 %v2107
        %2754 = vmatpush1.bf16.msra.mxu0 %v2106
        %2755 = vmatprep.subr.bf16.mxu0 %v2119
        %2756 = vmatpush1.bf16.msra.mxu0 %v2118
        %2757 = vmatprep.subr.bf16.mxu0 %v2131
        %2758 = vmatpush1.bf16.msra.mxu0 %v2130
        %2759 = vmatprep.mubr.bf16.mxu0 %v217
        %2760 = vmatmul.mubr.bf16.gmra.mrb[0].mxu0 %v216
        %v2761 = vpop.f32.mrb[0].mxu0
        %v2762 = vadd.f32 %v2721, %v2761
        %v2763 = vpop.f32.mrb[0].mxu0
        %v2764 = vadd.f32 %v2723, %v2763
        %v2765 = vpop.f32.mrb[0].mxu0
        %v2766 = vpop.f32.mrb[0].mxu0
        %2767 = vdwg.mxu0
        %2768 = vmatprep.subr.bf16.mxu0 %v1761
        %2769 = vmatpush1.bf16.msra.mxu0 %v1760
        %2770 = vmatprep.subr.bf16.mxu0 %v1773
        %2771 = vmatpush1.bf16.msra.mxu0 %v1772
        %2772 = vmatprep.subr.bf16.mxu0 %v1785
        %2773 = vmatpush1.bf16.msra.mxu0 %v1784
        %2774 = vmatprep.subr.bf16.mxu0 %v1797
        %2775 = vmatpush1.bf16.msra.mxu0 %v1796
        %2776 = vmatprep.subr.bf16.mxu0 %v1809
        %2777 = vmatpush1.bf16.msra.mxu0 %v1808
        %2778 = vmatprep.subr.bf16.mxu0 %v1821
        %2779 = vmatpush1.bf16.msra.mxu0 %v1820
        %2780 = vmatprep.subr.bf16.mxu0 %v1833
        %2781 = vmatpush1.bf16.msra.mxu0 %v1832
        %2782 = vmatprep.subr.bf16.mxu0 %v1845
        %2783 = vmatpush1.bf16.msra.mxu0 %v1844
        %2784 = vmatprep.subr.bf16.mxu0 %v1857
        %2785 = vmatpush1.bf16.msra.mxu0 %v1856
        %2786 = vmatprep.subr.bf16.mxu0 %v1869
        %2787 = vmatpush1.bf16.msra.mxu0 %v1868
        %2788 = vmatprep.subr.bf16.mxu0 %v1881
        %2789 = vmatpush1.bf16.msra.mxu0 %v1880
        %2790 = vmatprep.subr.bf16.mxu0 %v1893
        %2791 = vmatpush1.bf16.msra.mxu0 %v1892
        %2792 = vmatprep.subr.bf16.mxu0 %v1905
        %2793 = vmatpush1.bf16.msra.mxu0 %v1904
        %2794 = vmatprep.subr.bf16.mxu0 %v1917
        %2795 = vmatpush1.bf16.msra.mxu0 %v1916
        %2796 = vmatprep.subr.bf16.mxu0 %v1929
        %2797 = vmatpush1.bf16.msra.mxu0 %v1928
        %2798 = vmatprep.subr.bf16.mxu0 %v1941
        %2799 = vmatpush1.bf16.msra.mxu0 %v1940
        %2800 = vmatprep.mubr.bf16.mxu0 %v215
        %2801 = vmatmul.mubr.bf16.gmra.mrb[0].mxu0 %v214
        %v2802 = vpop.f32.mrb[0].mxu0
        %v2803 = vadd.f32 0.0, %v2802
        %v2804 = vpop.f32.mrb[0].mxu0
        %v2805 = vadd.f32 0.0, %v2804
        %v2806 = vpop.f32.mrb[0].mxu0
        %v2807 = vpop.f32.mrb[0].mxu0
        %2808 = vdwg.mxu0
        %2809 = vmatprep.subr.bf16.mxu0 %v1953
        %2810 = vmatpush1.bf16.msra.mxu0 %v1952
        %2811 = vmatprep.subr.bf16.mxu0 %v1965
        %2812 = vmatpush1.bf16.msra.mxu0 %v1964
        %2813 = vmatprep.subr.bf16.mxu0 %v1977
        %2814 = vmatpush1.bf16.msra.mxu0 %v1976
        %2815 = vmatprep.subr.bf16.mxu0 %v1989
        %2816 = vmatpush1.bf16.msra.mxu0 %v1988
        %2817 = vmatprep.subr.bf16.mxu0 %v2001
        %2818 = vmatpush1.bf16.msra.mxu0 %v2000
        %2819 = vmatprep.subr.bf16.mxu0 %v2013
        %2820 = vmatpush1.bf16.msra.mxu0 %v2012
        %2821 = vmatprep.subr.bf16.mxu0 %v2025
        %2822 = vmatpush1.bf16.msra.mxu0 %v2024
        %2823 = vmatprep.subr.bf16.mxu0 %v2037
        %2824 = vmatpush1.bf16.msra.mxu0 %v2036
        %2825 = vmatprep.subr.bf16.mxu0 %v2049
        %2826 = vmatpush1.bf16.msra.mxu0 %v2048
        %2827 = vmatprep.subr.bf16.mxu0 %v2061
        %2828 = vmatpush1.bf16.msra.mxu0 %v2060
        %2829 = vmatprep.subr.bf16.mxu0 %v2073
        %2830 = vmatpush1.bf16.msra.mxu0 %v2072
        %2831 = vmatprep.subr.bf16.mxu0 %v2085
        %2832 = vmatpush1.bf16.msra.mxu0 %v2084
        %2833 = vmatprep.subr.bf16.mxu0 %v2097
        %2834 = vmatpush1.bf16.msra.mxu0 %v2096
        %2835 = vmatprep.subr.bf16.mxu0 %v2109
        %2836 = vmatpush1.bf16.msra.mxu0 %v2108
        %2837 = vmatprep.subr.bf16.mxu0 %v2121
        %2838 = vmatpush1.bf16.msra.mxu0 %v2120
        %2839 = vmatprep.subr.bf16.mxu0 %v2133
        %2840 = vmatpush1.bf16.msra.mxu0 %v2132
        %2841 = vmatprep.mubr.bf16.mxu0 %v217
        %2842 = vmatmul.mubr.bf16.gmra.mrb[0].mxu0 %v216
        %v2843 = vpop.f32.mrb[0].mxu0
        %v2844 = vadd.f32 %v2803, %v2843
        %v2845 = vpop.f32.mrb[0].mxu0
        %v2846 = vadd.f32 %v2805, %v2845
        %v2847 = vpop.f32.mrb[0].mxu0
        %v2848 = vpop.f32.mrb[0].mxu0
        %2849 = vdwg.mxu0
        %2850 = vmatprep.subr.bf16.mxu0 %v1763
        %2851 = vmatpush1.bf16.msra.mxu0 %v1762
        %2852 = vmatprep.subr.bf16.mxu0 %v1775
        %2853 = vmatpush1.bf16.msra.mxu0 %v1774
        %2854 = vmatprep.subr.bf16.mxu0 %v1787
        %2855 = vmatpush1.bf16.msra.mxu0 %v1786
        %2856 = vmatprep.subr.bf16.mxu0 %v1799
        %2857 = vmatpush1.bf16.msra.mxu0 %v1798
        %2858 = vmatprep.subr.bf16.mxu0 %v1811
        %2859 = vmatpush1.bf16.msra.mxu0 %v1810
        %2860 = vmatprep.subr.bf16.mxu0 %v1823
        %2861 = vmatpush1.bf16.msra.mxu0 %v1822
        %2862 = vmatprep.subr.bf16.mxu0 %v1835
        %2863 = vmatpush1.bf16.msra.mxu0 %v1834
        %2864 = vmatprep.subr.bf16.mxu0 %v1847
        %2865 = vmatpush1.bf16.msra.mxu0 %v1846
        %2866 = vmatprep.subr.bf16.mxu0 %v1859
        %2867 = vmatpush1.bf16.msra.mxu0 %v1858
        %2868 = vmatprep.subr.bf16.mxu0 %v1871
        %2869 = vmatpush1.bf16.msra.mxu0 %v1870
        %2870 = vmatprep.subr.bf16.mxu0 %v1883
        %2871 = vmatpush1.bf16.msra.mxu0 %v1882
        %2872 = vmatprep.subr.bf16.mxu0 %v1895
        %2873 = vmatpush1.bf16.msra.mxu0 %v1894
        %2874 = vmatprep.subr.bf16.mxu0 %v1907
        %2875 = vmatpush1.bf16.msra.mxu0 %v1906
        %2876 = vmatprep.subr.bf16.mxu0 %v1919
        %2877 = vmatpush1.bf16.msra.mxu0 %v1918
        %2878 = vmatprep.subr.bf16.mxu0 %v1931
        %2879 = vmatpush1.bf16.msra.mxu0 %v1930
        %2880 = vmatprep.subr.bf16.mxu0 %v1943
        %2881 = vmatpush1.bf16.msra.mxu0 %v1942
        %2882 = vmatprep.mubr.bf16.mxu0 %v215
        %2883 = vmatmul.mubr.bf16.gmra.mrb[0].mxu0 %v214
        %v2884 = vpop.f32.mrb[0].mxu0
        %v2885 = vadd.f32 0.0, %v2884
        %v2886 = vpop.f32.mrb[0].mxu0
        %v2887 = vadd.f32 0.0, %v2886
        %v2888 = vpop.f32.mrb[0].mxu0
        %v2889 = vpop.f32.mrb[0].mxu0
        %2890 = vdwg.mxu0
        %2891 = vmatprep.subr.bf16.mxu0 %v1955
        %2892 = vmatpush1.bf16.msra.mxu0 %v1954
        %2893 = vmatprep.subr.bf16.mxu0 %v1967
        %2894 = vmatpush1.bf16.msra.mxu0 %v1966
        %2895 = vmatprep.subr.bf16.mxu0 %v1979
        %2896 = vmatpush1.bf16.msra.mxu0 %v1978
        %2897 = vmatprep.subr.bf16.mxu0 %v1991
        %2898 = vmatpush1.bf16.msra.mxu0 %v1990
        %2899 = vmatprep.subr.bf16.mxu0 %v2003
        %2900 = vmatpush1.bf16.msra.mxu0 %v2002
        %2901 = vmatprep.subr.bf16.mxu0 %v2015
        %2902 = vmatpush1.bf16.msra.mxu0 %v2014
        %2903 = vmatprep.subr.bf16.mxu0 %v2027
        %2904 = vmatpush1.bf16.msra.mxu0 %v2026
        %2905 = vmatprep.subr.bf16.mxu0 %v2039
        %2906 = vmatpush1.bf16.msra.mxu0 %v2038
        %2907 = vmatprep.subr.bf16.mxu0 %v2051
        %2908 = vmatpush1.bf16.msra.mxu0 %v2050
        %2909 = vmatprep.subr.bf16.mxu0 %v2063
        %2910 = vmatpush1.bf16.msra.mxu0 %v2062
        %2911 = vmatprep.subr.bf16.mxu0 %v2075
        %2912 = vmatpush1.bf16.msra.mxu0 %v2074
        %2913 = vmatprep.subr.bf16.mxu0 %v2087
        %2914 = vmatpush1.bf16.msra.mxu0 %v2086
        %2915 = vmatprep.subr.bf16.mxu0 %v2099
        %2916 = vmatpush1.bf16.msra.mxu0 %v2098
        %2917 = vmatprep.subr.bf16.mxu0 %v2111
        %2918 = vmatpush1.bf16.msra.mxu0 %v2110
        %2919 = vmatprep.subr.bf16.mxu0 %v2123
        %2920 = vmatpush1.bf16.msra.mxu0 %v2122
        %2921 = vmatprep.subr.bf16.mxu0 %v2135
        %2922 = vmatpush1.bf16.msra.mxu0 %v2134
        %2923 = vmatprep.mubr.bf16.mxu0 %v217
        %2924 = vmatmul.mubr.bf16.gmra.mrb[0].mxu0 %v216
        %v2925 = vpop.f32.mrb[0].mxu0
        %v2926 = vadd.f32 %v2885, %v2925
        %v2927 = vpop.f32.mrb[0].mxu0
        %v2928 = vadd.f32 %v2887, %v2927
        %v2929 = vpop.f32.mrb[0].mxu0
        %v2930 = vpop.f32.mrb[0].mxu0
        %2931 = vdwg.mxu0
        %2932 = vmatprep.subr.bf16.mxu0 %v1765
        %2933 = vmatpush1.bf16.msra.mxu0 %v1764
        %2934 = vmatprep.subr.bf16.mxu0 %v1777
        %2935 = vmatpush1.bf16.msra.mxu0 %v1776
        %2936 = vmatprep.subr.bf16.mxu0 %v1789
        %2937 = vmatpush1.bf16.msra.mxu0 %v1788
        %2938 = vmatprep.subr.bf16.mxu0 %v1801
        %2939 = vmatpush1.bf16.msra.mxu0 %v1800
        %2940 = vmatprep.subr.bf16.mxu0 %v1813
        %2941 = vmatpush1.bf16.msra.mxu0 %v1812
        %2942 = vmatprep.subr.bf16.mxu0 %v1825
        %2943 = vmatpush1.bf16.msra.mxu0 %v1824
        %2944 = vmatprep.subr.bf16.mxu0 %v1837
        %2945 = vmatpush1.bf16.msra.mxu0 %v1836
        %2946 = vmatprep.subr.bf16.mxu0 %v1849
        %2947 = vmatpush1.bf16.msra.mxu0 %v1848
        %2948 = vmatprep.subr.bf16.mxu0 %v1861
        %2949 = vmatpush1.bf16.msra.mxu0 %v1860
        %2950 = vmatprep.subr.bf16.mxu0 %v1873
        %2951 = vmatpush1.bf16.msra.mxu0 %v1872
        %2952 = vmatprep.subr.bf16.mxu0 %v1885
        %2953 = vmatpush1.bf16.msra.mxu0 %v1884
        %2954 = vmatprep.subr.bf16.mxu0 %v1897
        %2955 = vmatpush1.bf16.msra.mxu0 %v1896
        %2956 = vmatprep.subr.bf16.mxu0 %v1909
        %2957 = vmatpush1.bf16.msra.mxu0 %v1908
        %2958 = vmatprep.subr.bf16.mxu0 %v1921
        %2959 = vmatpush1.bf16.msra.mxu0 %v1920
        %2960 = vmatprep.subr.bf16.mxu0 %v1933
        %2961 = vmatpush1.bf16.msra.mxu0 %v1932
        %2962 = vmatprep.subr.bf16.mxu0 %v1945
        %2963 = vmatpush1.bf16.msra.mxu0 %v1944
        %2964 = vmatprep.mubr.bf16.mxu0 %v215
        %2965 = vmatmul.mubr.bf16.gmra.mrb[0].mxu0 %v214
        %v2966 = vpop.f32.mrb[0].mxu0
        %v2967 = vadd.f32 0.0, %v2966
        %v2968 = vpop.f32.mrb[0].mxu0
        %v2969 = vadd.f32 0.0, %v2968
        %v2970 = vpop.f32.mrb[0].mxu0
        %v2971 = vpop.f32.mrb[0].mxu0
        %2972 = vdwg.mxu0
        %2973 = vmatprep.subr.bf16.mxu0 %v1957
        %2974 = vmatpush1.bf16.msra.mxu0 %v1956
        %2975 = vmatprep.subr.bf16.mxu0 %v1969
        %2976 = vmatpush1.bf16.msra.mxu0 %v1968
        %2977 = vmatprep.subr.bf16.mxu0 %v1981
        %2978 = vmatpush1.bf16.msra.mxu0 %v1980
        %2979 = vmatprep.subr.bf16.mxu0 %v1993
        %2980 = vmatpush1.bf16.msra.mxu0 %v1992
        %2981 = vmatprep.subr.bf16.mxu0 %v2005
        %2982 = vmatpush1.bf16.msra.mxu0 %v2004
        %2983 = vmatprep.subr.bf16.mxu0 %v2017
        %2984 = vmatpush1.bf16.msra.mxu0 %v2016
        %2985 = vmatprep.subr.bf16.mxu0 %v2029
        %2986 = vmatpush1.bf16.msra.mxu0 %v2028
        %2987 = vmatprep.subr.bf16.mxu0 %v2041
        %2988 = vmatpush1.bf16.msra.mxu0 %v2040
        %2989 = vmatprep.subr.bf16.mxu0 %v2053
        %2990 = vmatpush1.bf16.msra.mxu0 %v2052
        %2991 = vmatprep.subr.bf16.mxu0 %v2065
        %2992 = vmatpush1.bf16.msra.mxu0 %v2064
        %2993 = vmatprep.subr.bf16.mxu0 %v2077
        %2994 = vmatpush1.bf16.msra.mxu0 %v2076
        %2995 = vmatprep.subr.bf16.mxu0 %v2089
        %2996 = vmatpush1.bf16.msra.mxu0 %v2088
        %2997 = vmatprep.subr.bf16.mxu0 %v2101
        %2998 = vmatpush1.bf16.msra.mxu0 %v2100
        %2999 = vmatprep.subr.bf16.mxu0 %v2113
        %3000 = vmatpush1.bf16.msra.mxu0 %v2112
        %3001 = vmatprep.subr.bf16.mxu0 %v2125
        %3002 = vmatpush1.bf16.msra.mxu0 %v2124
        %3003 = vmatprep.subr.bf16.mxu0 %v2137
        %3004 = vmatpush1.bf16.msra.mxu0 %v2136
        %3005 = vmatprep.mubr.bf16.mxu0 %v217
        %3006 = vmatmul.mubr.bf16.gmra.mrb[0].mxu0 %v216
        %v3007 = vpop.f32.mrb[0].mxu0
        %v3008 = vadd.f32 %v2967, %v3007
        %v3009 = vpop.f32.mrb[0].mxu0
        %v3010 = vadd.f32 %v2969, %v3009
        %v3011 = vpop.f32.mrb[0].mxu0
        %v3012 = vpop.f32.mrb[0].mxu0
        %3013 = vdwg.mxu0
        %v3014 = vmul.f32 %v2598, 0.125
        %v3015 = vpack.c.bf16 %v3014, %v3014
        %v3016 = vpack.c.bf16 %v2762, %v2762
        %v3017 = vpack.c.bf16 %v2926, %v2926
        %vm3018 = vcmask 523264
        %v3020 = vsel %vm3018, %v3015, 0
        %v3023 = vsel %vm3018, %v3016, 0
        %3025 = vmatprep.subr.bf16.mxu0 0
        %3026 = vmatpush1.bf16.xpose.msra.mxu0 %v3023
        %3027 = vmatprep.subr.bf16.mxu0 0
        %3028 = vmatpush1.bf16.xpose.msra.mxu0 0
        %3029 = vmatprep.subr.bf16.mxu0 0
        %3030 = vmatpush1.bf16.xpose.msra.mxu0 0
        %3031 = vmatprep.subr.bf16.mxu0 0
        %3032 = vmatpush1.bf16.xpose.msra.mxu0 0
        %3033 = vmatprep.subr.bf16.mxu0 0
        %3034 = vmatpush1.bf16.xpose.msra.mxu0 0
        %3035 = vmatprep.subr.bf16.mxu0 0
        %3036 = vmatpush1.bf16.xpose.msra.mxu0 0
        %3037 = vmatprep.subr.bf16.mxu0 0
        %3038 = vmatpush1.bf16.xpose.msra.mxu0 0
        %3039 = vmatprep.subr.bf16.mxu0 0
        %3040 = vmatpush1.bf16.xpose.msra.mxu0 0
        %3041 = vmatprep.subr.bf16.mxu0 0
        %3042 = vmatpush1.bf16.xpose.msra.mxu0 0
        %3043 = vmatprep.subr.bf16.mxu0 0
        %3044 = vmatpush1.bf16.xpose.msra.mxu0 0
        %3045 = vmatprep.subr.bf16.mxu0 0
        %3046 = vmatpush1.bf16.xpose.msra.mxu0 0
        %3047 = vmatprep.subr.bf16.mxu0 0
        %3048 = vmatpush1.bf16.xpose.msra.mxu0 0
        %3049 = vmatprep.subr.bf16.mxu0 0
        %3050 = vmatpush1.bf16.xpose.msra.mxu0 0
        %3051 = vmatprep.subr.bf16.mxu0 0
        %3052 = vmatpush1.bf16.xpose.msra.mxu0 0
        %3053 = vmatprep.subr.bf16.mxu0 0
        %3054 = vmatpush1.bf16.xpose.msra.mxu0 0
        %3055 = vmatprep.subr.bf16.mxu0 0
        %3056 = vmatpush1.bf16.xpose.msra.mxu0 0
        %3057 = vmatprep.mubr.bf16.mxu0 0
        %3058 = vmatmul.mubr.bf16.gmra.mrb[0].mxu0 %v3020
        %v3059 = vpop.f32.mrb[0].mxu0
        %v3060 = vadd.f32 0.0, %v3059
        %v3061 = vpop.f32.mrb[0].mxu0
        %v3062 = vpop.f32.mrb[0].mxu0
        %v3063 = vpop.f32.mrb[0].mxu0
        %3064 = vdwg.mxu0
        %vm3065 = vcmask 64512
        %v3066 = vsel %vm3065, %v3060, -inf
        %3067 = vmax.xlane.f32.xlu0 %v3066
        %v3068 = vpop.xlane.xlu0 %3067
        %v3069 = vsub.f32 %v3060, %v3068
        %v3070 = vmul.f32 %v3069, 1.442695
        %v3071 = vpow.pop %v3070
        %v3072 = vsel %vm3065, %v3071, 0.0
        %3073 = vadd.xlane.f32.xlu0 %v3072
        %v3074 = vpop.xlane.xlu0 %3073
        %v3075 = vrcp.pop %v3074
        %v3076 = vmul.f32 %v3071, %v3075
        %3077 = vst.msk [vmem:[%s198] sm:$0xff] %vm3065, %v3076
        %v3078 = vpack.c.bf16 %v3076, %v3076
        %v3080 = vsel %vm3065, %v3078, 0
        %vm3082 = vcmask 1043456
        %v3084 = vsel %vm3082, %v3017, 0
        %3086 = vmatprep.subr.bf16.mxu0 0
        %3087 = vmatpush1.bf16.msra.mxu0 %v3084
        %3088 = vmatprep.subr.bf16.mxu0 0
        %3089 = vmatpush1.bf16.msra.mxu0 0
        %3090 = vmatprep.subr.bf16.mxu0 0
        %3091 = vmatpush1.bf16.msra.mxu0 0
        %3092 = vmatprep.subr.bf16.mxu0 0
        %3093 = vmatpush1.bf16.msra.mxu0 0
        %3094 = vmatprep.subr.bf16.mxu0 0
        %3095 = vmatpush1.bf16.msra.mxu0 0
        %3096 = vmatprep.subr.bf16.mxu0 0
        %3097 = vmatpush1.bf16.msra.mxu0 0
        %3098 = vmatprep.subr.bf16.mxu0 0
        %3099 = vmatpush1.bf16.msra.mxu0 0
        %3100 = vmatprep.subr.bf16.mxu0 0
        %3101 = vmatpush1.bf16.msra.mxu0 0
        %3102 = vmatprep.subr.bf16.mxu0 0
        %3103 = vmatpush1.bf16.msra.mxu0 0
        %3104 = vmatprep.subr.bf16.mxu0 0
        %3105 = vmatpush1.bf16.msra.mxu0 0
        %3106 = vmatprep.subr.bf16.mxu0 0
        %3107 = vmatpush1.bf16.msra.mxu0 0
        %3108 = vmatprep.subr.bf16.mxu0 0
        %3109 = vmatpush1.bf16.msra.mxu0 0
        %3110 = vmatprep.subr.bf16.mxu0 0
        %3111 = vmatpush1.bf16.msra.mxu0 0
        %3112 = vmatprep.subr.bf16.mxu0 0
        %3113 = vmatpush1.bf16.msra.mxu0 0
        %3114 = vmatprep.subr.bf16.mxu0 0
        %3115 = vmatpush1.bf16.msra.mxu0 0
        %3116 = vmatprep.subr.bf16.mxu0 0
        %3117 = vmatpush1.bf16.msra.mxu0 0
        %3118 = vmatprep.mubr.bf16.mxu0 0
        %3119 = vmatmul.mubr.bf16.gmra.mrb[0].mxu0 %v3080
        %v3120 = vpop.f32.mrb[0].mxu0
        %v3121 = vadd.f32 0.0, %v3120
        %v3122 = vpop.f32.mrb[0].mxu0
        %v3123 = vpop.f32.mrb[0].mxu0
        %v3124 = vpop.f32.mrb[0].mxu0
        %3125 = vdwg.mxu0
        %3127 = vrot.lane.b32.xlu0 %v3015, 64
        %v3128 = vpop.permute.xlu0 %3127
        %3130 = vrot.lane.b32.xlu0 %v3016, 64
        %v3131 = vpop.permute.xlu0 %3130
        %v3133 = vsel %vm3018, %v3128, 0
        %v3136 = vsel %vm3018, %v3131, 0
        %3138 = vmatprep.subr.bf16.mxu0 0
        %3139 = vmatpush1.bf16.xpose.msra.mxu0 %v3136
        %3140 = vmatprep.subr.bf16.mxu0 0
        %3141 = vmatpush1.bf16.xpose.msra.mxu0 0
        %3142 = vmatprep.subr.bf16.mxu0 0
        %3143 = vmatpush1.bf16.xpose.msra.mxu0 0
        %3144 = vmatprep.subr.bf16.mxu0 0
        %3145 = vmatpush1.bf16.xpose.msra.mxu0 0
        %3146 = vmatprep.subr.bf16.mxu0 0
        %3147 = vmatpush1.bf16.xpose.msra.mxu0 0
        %3148 = vmatprep.subr.bf16.mxu0 0
        %3149 = vmatpush1.bf16.xpose.msra.mxu0 0
        %3150 = vmatprep.subr.bf16.mxu0 0
        %3151 = vmatpush1.bf16.xpose.msra.mxu0 0
        %3152 = vmatprep.subr.bf16.mxu0 0
        %3153 = vmatpush1.bf16.xpose.msra.mxu0 0
        %3154 = vmatprep.subr.bf16.mxu0 0
        %3155 = vmatpush1.bf16.xpose.msra.mxu0 0
        %3156 = vmatprep.subr.bf16.mxu0 0
        %3157 = vmatpush1.bf16.xpose.msra.mxu0 0
        %3158 = vmatprep.subr.bf16.mxu0 0
        %3159 = vmatpush1.bf16.xpose.msra.mxu0 0
        %3160 = vmatprep.subr.bf16.mxu0 0
        %3161 = vmatpush1.bf16.xpose.msra.mxu0 0
        %3162 = vmatprep.subr.bf16.mxu0 0
        %3163 = vmatpush1.bf16.xpose.msra.mxu0 0
        %3164 = vmatprep.subr.bf16.mxu0 0
        %3165 = vmatpush1.bf16.xpose.msra.mxu0 0
        %3166 = vmatprep.subr.bf16.mxu0 0
        %3167 = vmatpush1.bf16.xpose.msra.mxu0 0
        %3168 = vmatprep.subr.bf16.mxu0 0
        %3169 = vmatpush1.bf16.xpose.msra.mxu0 0
        %3170 = vmatprep.mubr.bf16.mxu0 0
        %3171 = vmatmul.mubr.bf16.gmra.mrb[0].mxu0 %v3133
        %v3172 = vpop.f32.mrb[0].mxu0
        %v3173 = vadd.f32 0.0, %v3172
        %v3174 = vpop.f32.mrb[0].mxu0
        %v3175 = vpop.f32.mrb[0].mxu0
        %v3176 = vpop.f32.mrb[0].mxu0
        %3177 = vdwg.mxu0
        %v3178 = vsel %vm3065, %v3173, -inf
        %3179 = vmax.xlane.f32.xlu0 %v3178
        %v3180 = vpop.xlane.xlu0 %3179
        %v3181 = vsub.f32 %v3173, %v3180
        %v3182 = vmul.f32 %v3181, 1.442695
        %v3183 = vpow.pop %v3182
        %v3184 = vsel %vm3065, %v3183, 0.0
        %3185 = vadd.xlane.f32.xlu0 %v3184
        %v3186 = vpop.xlane.xlu0 %3185
        %v3187 = vrcp.pop %v3186
        %v3188 = vmul.f32 %v3183, %v3187
        %s3189 = scalar_lea.vmem %s198, 8 [#allocation2]
        %3190 = vst.msk [vmem:[%s3189] sm:$0xff] %vm3065, %v3188
        %v3191 = vpack.c.bf16 %v3188, %v3188
        %3193 = vrot.lane.b32.xlu0 %v3017, 64
        %v3194 = vpop.permute.xlu0 %3193
        %v3196 = vsel %vm3065, %v3191, 0
        %v3199 = vsel %vm3082, %v3194, 0
        %3201 = vmatprep.subr.bf16.mxu0 0
        %3202 = vmatpush1.bf16.msra.mxu0 %v3199
        %3203 = vmatprep.subr.bf16.mxu0 0
        %3204 = vmatpush1.bf16.msra.mxu0 0
        %3205 = vmatprep.subr.bf16.mxu0 0
        %3206 = vmatpush1.bf16.msra.mxu0 0
        %3207 = vmatprep.subr.bf16.mxu0 0
        %3208 = vmatpush1.bf16.msra.mxu0 0
        %3209 = vmatprep.subr.bf16.mxu0 0
        %3210 = vmatpush1.bf16.msra.mxu0 0
        %3211 = vmatprep.subr.bf16.mxu0 0
        %3212 = vmatpush1.bf16.msra.mxu0 0
        %3213 = vmatprep.subr.bf16.mxu0 0
        %3214 = vmatpush1.bf16.msra.mxu0 0
        %3215 = vmatprep.subr.bf16.mxu0 0
        %3216 = vmatpush1.bf16.msra.mxu0 0
        %3217 = vmatprep.subr.bf16.mxu0 0
        %3218 = vmatpush1.bf16.msra.mxu0 0
        %3219 = vmatprep.subr.bf16.mxu0 0
        %3220 = vmatpush1.bf16.msra.mxu0 0
        %3221 = vmatprep.subr.bf16.mxu0 0
        %3222 = vmatpush1.bf16.msra.mxu0 0
        %3223 = vmatprep.subr.bf16.mxu0 0
        %3224 = vmatpush1.bf16.msra.mxu0 0
        %3225 = vmatprep.subr.bf16.mxu0 0
        %3226 = vmatpush1.bf16.msra.mxu0 0
        %3227 = vmatprep.subr.bf16.mxu0 0
        %3228 = vmatpush1.bf16.msra.mxu0 0
        %3229 = vmatprep.subr.bf16.mxu0 0
        %3230 = vmatpush1.bf16.msra.mxu0 0
        %3231 = vmatprep.subr.bf16.mxu0 0
        %3232 = vmatpush1.bf16.msra.mxu0 0
        %3233 = vmatprep.mubr.bf16.mxu0 0
        %3234 = vmatmul.mubr.bf16.gmra.mrb[0].mxu0 %v3196
        %v3235 = vpop.f32.mrb[0].mxu0
        %v3236 = vadd.f32 0.0, %v3235
        %v3237 = vpop.f32.mrb[0].mxu0
        %v3238 = vpop.f32.mrb[0].mxu0
        %v3239 = vpop.f32.mrb[0].mxu0
        %3240 = vdwg.mxu0
        %v3241 = vmul.f32 %v2600, 0.125
        %v3242 = vpack.c.bf16 %v3241, %v3241
        %v3243 = vpack.c.bf16 %v2764, %v2764
        %v3244 = vpack.c.bf16 %v2928, %v2928
        %v3246 = vsel %vm3018, %v3242, 0
        %v3249 = vsel %vm3018, %v3243, 0
        %3251 = vmatprep.subr.bf16.mxu0 0
        %3252 = vmatpush1.bf16.xpose.msra.mxu0 %v3249
        %3253 = vmatprep.subr.bf16.mxu0 0
        %3254 = vmatpush1.bf16.xpose.msra.mxu0 0
        %3255 = vmatprep.subr.bf16.mxu0 0
        %3256 = vmatpush1.bf16.xpose.msra.mxu0 0
        %3257 = vmatprep.subr.bf16.mxu0 0
        %3258 = vmatpush1.bf16.xpose.msra.mxu0 0
        %3259 = vmatprep.subr.bf16.mxu0 0
        %3260 = vmatpush1.bf16.xpose.msra.mxu0 0
        %3261 = vmatprep.subr.bf16.mxu0 0
        %3262 = vmatpush1.bf16.xpose.msra.mxu0 0
        %3263 = vmatprep.subr.bf16.mxu0 0
        %3264 = vmatpush1.bf16.xpose.msra.mxu0 0
        %3265 = vmatprep.subr.bf16.mxu0 0
        %3266 = vmatpush1.bf16.xpose.msra.mxu0 0
        %3267 = vmatprep.subr.bf16.mxu0 0
        %3268 = vmatpush1.bf16.xpose.msra.mxu0 0
        %3269 = vmatprep.subr.bf16.mxu0 0
        %3270 = vmatpush1.bf16.xpose.msra.mxu0 0
        %3271 = vmatprep.subr.bf16.mxu0 0
        %3272 = vmatpush1.bf16.xpose.msra.mxu0 0
        %3273 = vmatprep.subr.bf16.mxu0 0
        %3274 = vmatpush1.bf16.xpose.msra.mxu0 0
        %3275 = vmatprep.subr.bf16.mxu0 0
        %3276 = vmatpush1.bf16.xpose.msra.mxu0 0
        %3277 = vmatprep.subr.bf16.mxu0 0
        %3278 = vmatpush1.bf16.xpose.msra.mxu0 0
        %3279 = vmatprep.subr.bf16.mxu0 0
        %3280 = vmatpush1.bf16.xpose.msra.mxu0 0
        %3281 = vmatprep.subr.bf16.mxu0 0
        %3282 = vmatpush1.bf16.xpose.msra.mxu0 0
        %3283 = vmatprep.mubr.bf16.mxu0 0
        %3284 = vmatmul.mubr.bf16.gmra.mrb[0].mxu0 %v3246
        %v3285 = vpop.f32.mrb[0].mxu0
        %v3286 = vadd.f32 0.0, %v3285
        %v3287 = vpop.f32.mrb[0].mxu0
        %v3288 = vpop.f32.mrb[0].mxu0
        %v3289 = vpop.f32.mrb[0].mxu0
        %3290 = vdwg.mxu0
        %v3291 = vsel %vm3065, %v3286, -inf
        %3292 = vmax.xlane.f32.xlu0 %v3291
        %v3293 = vpop.xlane.xlu0 %3292
        %v3294 = vsub.f32 %v3286, %v3293
        %v3295 = vmul.f32 %v3294, 1.442695
        %v3296 = vpow.pop %v3295
        %v3297 = vsel %vm3065, %v3296, 0.0
        %3298 = vadd.xlane.f32.xlu0 %v3297
        %v3299 = vpop.xlane.xlu0 %3298
        %v3300 = vrcp.pop %v3299
        %v3301 = vmul.f32 %v3296, %v3300
        %s3302 = scalar_lea.vmem %s198, 16 [#allocation2]
        %3303 = vst.msk [vmem:[%s3302] sm:$0xff] %vm3065, %v3301
        %v3304 = vpack.c.bf16 %v3301, %v3301
        %v3306 = vsel %vm3065, %v3304, 0
        %v3309 = vsel %vm3082, %v3244, 0
        %3311 = vmatprep.subr.bf16.mxu0 0
        %3312 = vmatpush1.bf16.msra.mxu0 %v3309
        %3313 = vmatprep.subr.bf16.mxu0 0
        %3314 = vmatpush1.bf16.msra.mxu0 0
        %3315 = vmatprep.subr.bf16.mxu0 0
        %3316 = vmatpush1.bf16.msra.mxu0 0
        %3317 = vmatprep.subr.bf16.mxu0 0
        %3318 = vmatpush1.bf16.msra.mxu0 0
        %3319 = vmatprep.subr.bf16.mxu0 0
        %3320 = vmatpush1.bf16.msra.mxu0 0
        %3321 = vmatprep.subr.bf16.mxu0 0
        %3322 = vmatpush1.bf16.msra.mxu0 0
        %3323 = vmatprep.subr.bf16.mxu0 0
        %3324 = vmatpush1.bf16.msra.mxu0 0
        %3325 = vmatprep.subr.bf16.mxu0 0
        %3326 = vmatpush1.bf16.msra.mxu0 0
        %3327 = vmatprep.subr.bf16.mxu0 0
        %3328 = vmatpush1.bf16.msra.mxu0 0
        %3329 = vmatprep.subr.bf16.mxu0 0
        %3330 = vmatpush1.bf16.msra.mxu0 0
        %3331 = vmatprep.subr.bf16.mxu0 0
        %3332 = vmatpush1.bf16.msra.mxu0 0
        %3333 = vmatprep.subr.bf16.mxu0 0
        %3334 = vmatpush1.bf16.msra.mxu0 0
        %3335 = vmatprep.subr.bf16.mxu0 0
        %3336 = vmatpush1.bf16.msra.mxu0 0
        %3337 = vmatprep.subr.bf16.mxu0 0
        %3338 = vmatpush1.bf16.msra.mxu0 0
        %3339 = vmatprep.subr.bf16.mxu0 0
        %3340 = vmatpush1.bf16.msra.mxu0 0
        %3341 = vmatprep.subr.bf16.mxu0 0
        %3342 = vmatpush1.bf16.msra.mxu0 0
        %3343 = vmatprep.mubr.bf16.mxu0 0
        %3344 = vmatmul.mubr.bf16.gmra.mrb[0].mxu0 %v3306
        %v3345 = vpop.f32.mrb[0].mxu0
        %v3346 = vadd.f32 0.0, %v3345
        %v3347 = vpop.f32.mrb[0].mxu0
        %v3348 = vpop.f32.mrb[0].mxu0
        %v3349 = vpop.f32.mrb[0].mxu0
        %3350 = vdwg.mxu0
        %3352 = vrot.lane.b32.xlu0 %v3242, 64
        %v3353 = vpop.permute.xlu0 %3352
        %3355 = vrot.lane.b32.xlu0 %v3243, 64
        %v3356 = vpop.permute.xlu0 %3355
        %v3358 = vsel %vm3018, %v3353, 0
        %v3361 = vsel %vm3018, %v3356, 0
        %3363 = vmatprep.subr.bf16.mxu0 0
        %3364 = vmatpush1.bf16.xpose.msra.mxu0 %v3361
        %3365 = vmatprep.subr.bf16.mxu0 0
        %3366 = vmatpush1.bf16.xpose.msra.mxu0 0
        %3367 = vmatprep.subr.bf16.mxu0 0
        %3368 = vmatpush1.bf16.xpose.msra.mxu0 0
        %3369 = vmatprep.subr.bf16.mxu0 0
        %3370 = vmatpush1.bf16.xpose.msra.mxu0 0
        %3371 = vmatprep.subr.bf16.mxu0 0
        %3372 = vmatpush1.bf16.xpose.msra.mxu0 0
        %3373 = vmatprep.subr.bf16.mxu0 0
        %3374 = vmatpush1.bf16.xpose.msra.mxu0 0
        %3375 = vmatprep.subr.bf16.mxu0 0
        %3376 = vmatpush1.bf16.xpose.msra.mxu0 0
        %3377 = vmatprep.subr.bf16.mxu0 0
        %3378 = vmatpush1.bf16.xpose.msra.mxu0 0
        %3379 = vmatprep.subr.bf16.mxu0 0
        %3380 = vmatpush1.bf16.xpose.msra.mxu0 0
        %3381 = vmatprep.subr.bf16.mxu0 0
        %3382 = vmatpush1.bf16.xpose.msra.mxu0 0
        %3383 = vmatprep.subr.bf16.mxu0 0
        %3384 = vmatpush1.bf16.xpose.msra.mxu0 0
        %3385 = vmatprep.subr.bf16.mxu0 0
        %3386 = vmatpush1.bf16.xpose.msra.mxu0 0
        %3387 = vmatprep.subr.bf16.mxu0 0
        %3388 = vmatpush1.bf16.xpose.msra.mxu0 0
        %3389 = vmatprep.subr.bf16.mxu0 0
        %3390 = vmatpush1.bf16.xpose.msra.mxu0 0
        %3391 = vmatprep.subr.bf16.mxu0 0
        %3392 = vmatpush1.bf16.xpose.msra.mxu0 0
        %3393 = vmatprep.subr.bf16.mxu0 0
        %3394 = vmatpush1.bf16.xpose.msra.mxu0 0
        %3395 = vmatprep.mubr.bf16.mxu0 0
        %3396 = vmatmul.mubr.bf16.gmra.mrb[0].mxu0 %v3358
        %v3397 = vpop.f32.mrb[0].mxu0
        %v3398 = vadd.f32 0.0, %v3397
        %v3399 = vpop.f32.mrb[0].mxu0
        %v3400 = vpop.f32.mrb[0].mxu0
        %v3401 = vpop.f32.mrb[0].mxu0
        %3402 = vdwg.mxu0
        %v3403 = vsel %vm3065, %v3398, -inf
        %3404 = vmax.xlane.f32.xlu0 %v3403
        %v3405 = vpop.xlane.xlu0 %3404
        %v3406 = vsub.f32 %v3398, %v3405
        %v3407 = vmul.f32 %v3406, 1.442695
        %v3408 = vpow.pop %v3407
        %v3409 = vsel %vm3065, %v3408, 0.0
        %3410 = vadd.xlane.f32.xlu0 %v3409
        %v3411 = vpop.xlane.xlu0 %3410
        %v3412 = vrcp.pop %v3411
        %v3413 = vmul.f32 %v3408, %v3412
        %s3414 = scalar_lea.vmem %s198, 24 [#allocation2]
        %3415 = vst.msk [vmem:[%s3414] sm:$0xff] %vm3065, %v3413
        %v3416 = vpack.c.bf16 %v3413, %v3413
        %3418 = vrot.lane.b32.xlu0 %v3244, 64
        %v3419 = vpop.permute.xlu0 %3418
        %v3421 = vsel %vm3065, %v3416, 0
        %v3424 = vsel %vm3082, %v3419, 0
        %3426 = vmatprep.subr.bf16.mxu0 0
        %3427 = vmatpush1.bf16.msra.mxu0 %v3424
        %3428 = vmatprep.subr.bf16.mxu0 0
        %3429 = vmatpush1.bf16.msra.mxu0 0
        %3430 = vmatprep.subr.bf16.mxu0 0
        %3431 = vmatpush1.bf16.msra.mxu0 0
        %3432 = vmatprep.subr.bf16.mxu0 0
        %3433 = vmatpush1.bf16.msra.mxu0 0
        %3434 = vmatprep.subr.bf16.mxu0 0
        %3435 = vmatpush1.bf16.msra.mxu0 0
        %3436 = vmatprep.subr.bf16.mxu0 0
        %3437 = vmatpush1.bf16.msra.mxu0 0
        %3438 = vmatprep.subr.bf16.mxu0 0
        %3439 = vmatpush1.bf16.msra.mxu0 0
        %3440 = vmatprep.subr.bf16.mxu0 0
        %3441 = vmatpush1.bf16.msra.mxu0 0
        %3442 = vmatprep.subr.bf16.mxu0 0
        %3443 = vmatpush1.bf16.msra.mxu0 0
        %3444 = vmatprep.subr.bf16.mxu0 0
        %3445 = vmatpush1.bf16.msra.mxu0 0
        %3446 = vmatprep.subr.bf16.mxu0 0
        %3447 = vmatpush1.bf16.msra.mxu0 0
        %3448 = vmatprep.subr.bf16.mxu0 0
        %3449 = vmatpush1.bf16.msra.mxu0 0
        %3450 = vmatprep.subr.bf16.mxu0 0
        %3451 = vmatpush1.bf16.msra.mxu0 0
        %3452 = vmatprep.subr.bf16.mxu0 0
        %3453 = vmatpush1.bf16.msra.mxu0 0
        %3454 = vmatprep.subr.bf16.mxu0 0
        %3455 = vmatpush1.bf16.msra.mxu0 0
        %3456 = vmatprep.subr.bf16.mxu0 0
        %3457 = vmatpush1.bf16.msra.mxu0 0
        %3458 = vmatprep.mubr.bf16.mxu0 0
        %3459 = vmatmul.mubr.bf16.gmra.mrb[0].mxu0 %v3421
        %v3460 = vpop.f32.mrb[0].mxu0
        %v3461 = vadd.f32 0.0, %v3460
        %v3462 = vpop.f32.mrb[0].mxu0
        %v3463 = vpop.f32.mrb[0].mxu0
        %v3464 = vpop.f32.mrb[0].mxu0
        %3465 = vdwg.mxu0
        %v3466 = vmul.f32 %v2680, 0.125
        %v3467 = vpack.c.bf16 %v3466, %v3466
        %v3468 = vpack.c.bf16 %v2844, %v2844
        %v3469 = vpack.c.bf16 %v3008, %v3008
        %v3471 = vsel %vm3018, %v3467, 0
        %v3474 = vsel %vm3018, %v3468, 0
        %3476 = vmatprep.subr.bf16.mxu0 0
        %3477 = vmatpush1.bf16.xpose.msra.mxu0 %v3474
        %3478 = vmatprep.subr.bf16.mxu0 0
        %3479 = vmatpush1.bf16.xpose.msra.mxu0 0
        %3480 = vmatprep.subr.bf16.mxu0 0
        %3481 = vmatpush1.bf16.xpose.msra.mxu0 0
        %3482 = vmatprep.subr.bf16.mxu0 0
        %3483 = vmatpush1.bf16.xpose.msra.mxu0 0
        %3484 = vmatprep.subr.bf16.mxu0 0
        %3485 = vmatpush1.bf16.xpose.msra.mxu0 0
        %3486 = vmatprep.subr.bf16.mxu0 0
        %3487 = vmatpush1.bf16.xpose.msra.mxu0 0
        %3488 = vmatprep.subr.bf16.mxu0 0
        %3489 = vmatpush1.bf16.xpose.msra.mxu0 0
        %3490 = vmatprep.subr.bf16.mxu0 0
        %3491 = vmatpush1.bf16.xpose.msra.mxu0 0
        %3492 = vmatprep.subr.bf16.mxu0 0
        %3493 = vmatpush1.bf16.xpose.msra.mxu0 0
        %3494 = vmatprep.subr.bf16.mxu0 0
        %3495 = vmatpush1.bf16.xpose.msra.mxu0 0
        %3496 = vmatprep.subr.bf16.mxu0 0
        %3497 = vmatpush1.bf16.xpose.msra.mxu0 0
        %3498 = vmatprep.subr.bf16.mxu0 0
        %3499 = vmatpush1.bf16.xpose.msra.mxu0 0
        %3500 = vmatprep.subr.bf16.mxu0 0
        %3501 = vmatpush1.bf16.xpose.msra.mxu0 0
        %3502 = vmatprep.subr.bf16.mxu0 0
        %3503 = vmatpush1.bf16.xpose.msra.mxu0 0
        %3504 = vmatprep.subr.bf16.mxu0 0
        %3505 = vmatpush1.bf16.xpose.msra.mxu0 0
        %3506 = vmatprep.subr.bf16.mxu0 0
        %3507 = vmatpush1.bf16.xpose.msra.mxu0 0
        %3508 = vmatprep.mubr.bf16.mxu0 0
        %3509 = vmatmul.mubr.bf16.gmra.mrb[0].mxu0 %v3471
        %v3510 = vpop.f32.mrb[0].mxu0
        %v3511 = vadd.f32 0.0, %v3510
        %v3512 = vpop.f32.mrb[0].mxu0
        %v3513 = vpop.f32.mrb[0].mxu0
        %v3514 = vpop.f32.mrb[0].mxu0
        %3515 = vdwg.mxu0
        %v3516 = vsel %vm3065, %v3511, -inf
        %3517 = vmax.xlane.f32.xlu0 %v3516
        %v3518 = vpop.xlane.xlu0 %3517
        %v3519 = vsub.f32 %v3511, %v3518
        %v3520 = vmul.f32 %v3519, 1.442695
        %v3521 = vpow.pop %v3520
        %v3522 = vsel %vm3065, %v3521, 0.0
        %3523 = vadd.xlane.f32.xlu0 %v3522
        %v3524 = vpop.xlane.xlu0 %3523
        %v3525 = vrcp.pop %v3524
        %v3526 = vmul.f32 %v3521, %v3525
        %s3527 = scalar_lea.vmem %s198, 32 [#allocation2]
        %3528 = vst.msk [vmem:[%s3527] sm:$0xff] %vm3065, %v3526
        %v3529 = vpack.c.bf16 %v3526, %v3526
        %v3531 = vsel %vm3065, %v3529, 0
        %v3534 = vsel %vm3082, %v3469, 0
        %3536 = vmatprep.subr.bf16.mxu0 0
        %3537 = vmatpush1.bf16.msra.mxu0 %v3534
        %3538 = vmatprep.subr.bf16.mxu0 0
        %3539 = vmatpush1.bf16.msra.mxu0 0
        %3540 = vmatprep.subr.bf16.mxu0 0
        %3541 = vmatpush1.bf16.msra.mxu0 0
        %3542 = vmatprep.subr.bf16.mxu0 0
        %3543 = vmatpush1.bf16.msra.mxu0 0
        %3544 = vmatprep.subr.bf16.mxu0 0
        %3545 = vmatpush1.bf16.msra.mxu0 0
        %3546 = vmatprep.subr.bf16.mxu0 0
        %3547 = vmatpush1.bf16.msra.mxu0 0
        %3548 = vmatprep.subr.bf16.mxu0 0
        %3549 = vmatpush1.bf16.msra.mxu0 0
        %3550 = vmatprep.subr.bf16.mxu0 0
        %3551 = vmatpush1.bf16.msra.mxu0 0
        %3552 = vmatprep.subr.bf16.mxu0 0
        %3553 = vmatpush1.bf16.msra.mxu0 0
        %3554 = vmatprep.subr.bf16.mxu0 0
        %3555 = vmatpush1.bf16.msra.mxu0 0
        %3556 = vmatprep.subr.bf16.mxu0 0
        %3557 = vmatpush1.bf16.msra.mxu0 0
        %3558 = vmatprep.subr.bf16.mxu0 0
        %3559 = vmatpush1.bf16.msra.mxu0 0
        %3560 = vmatprep.subr.bf16.mxu0 0
        %3561 = vmatpush1.bf16.msra.mxu0 0
        %3562 = vmatprep.subr.bf16.mxu0 0
        %3563 = vmatpush1.bf16.msra.mxu0 0
        %3564 = vmatprep.subr.bf16.mxu0 0
        %3565 = vmatpush1.bf16.msra.mxu0 0
        %3566 = vmatprep.subr.bf16.mxu0 0
        %3567 = vmatpush1.bf16.msra.mxu0 0
        %3568 = vmatprep.mubr.bf16.mxu0 0
        %3569 = vmatmul.mubr.bf16.gmra.mrb[0].mxu0 %v3531
        %v3570 = vpop.f32.mrb[0].mxu0
        %v3571 = vadd.f32 0.0, %v3570
        %v3572 = vpop.f32.mrb[0].mxu0
        %v3573 = vpop.f32.mrb[0].mxu0
        %v3574 = vpop.f32.mrb[0].mxu0
        %3575 = vdwg.mxu0
        %3577 = vrot.lane.b32.xlu0 %v3467, 64
        %v3578 = vpop.permute.xlu0 %3577
        %3580 = vrot.lane.b32.xlu0 %v3468, 64
        %v3581 = vpop.permute.xlu0 %3580
        %v3583 = vsel %vm3018, %v3578, 0
        %v3586 = vsel %vm3018, %v3581, 0
        %3588 = vmatprep.subr.bf16.mxu0 0
        %3589 = vmatpush1.bf16.xpose.msra.mxu0 %v3586
        %3590 = vmatprep.subr.bf16.mxu0 0
        %3591 = vmatpush1.bf16.xpose.msra.mxu0 0
        %3592 = vmatprep.subr.bf16.mxu0 0
        %3593 = vmatpush1.bf16.xpose.msra.mxu0 0
        %3594 = vmatprep.subr.bf16.mxu0 0
        %3595 = vmatpush1.bf16.xpose.msra.mxu0 0
        %3596 = vmatprep.subr.bf16.mxu0 0
        %3597 = vmatpush1.bf16.xpose.msra.mxu0 0
        %3598 = vmatprep.subr.bf16.mxu0 0
        %3599 = vmatpush1.bf16.xpose.msra.mxu0 0
        %3600 = vmatprep.subr.bf16.mxu0 0
        %3601 = vmatpush1.bf16.xpose.msra.mxu0 0
        %3602 = vmatprep.subr.bf16.mxu0 0
        %3603 = vmatpush1.bf16.xpose.msra.mxu0 0
        %3604 = vmatprep.subr.bf16.mxu0 0
        %3605 = vmatpush1.bf16.xpose.msra.mxu0 0
        %3606 = vmatprep.subr.bf16.mxu0 0
        %3607 = vmatpush1.bf16.xpose.msra.mxu0 0
        %3608 = vmatprep.subr.bf16.mxu0 0
        %3609 = vmatpush1.bf16.xpose.msra.mxu0 0
        %3610 = vmatprep.subr.bf16.mxu0 0
        %3611 = vmatpush1.bf16.xpose.msra.mxu0 0
        %3612 = vmatprep.subr.bf16.mxu0 0
        %3613 = vmatpush1.bf16.xpose.msra.mxu0 0
        %3614 = vmatprep.subr.bf16.mxu0 0
        %3615 = vmatpush1.bf16.xpose.msra.mxu0 0
        %3616 = vmatprep.subr.bf16.mxu0 0
        %3617 = vmatpush1.bf16.xpose.msra.mxu0 0
        %3618 = vmatprep.subr.bf16.mxu0 0
        %3619 = vmatpush1.bf16.xpose.msra.mxu0 0
        %3620 = vmatprep.mubr.bf16.mxu0 0
        %3621 = vmatmul.mubr.bf16.gmra.mrb[0].mxu0 %v3583
        %v3622 = vpop.f32.mrb[0].mxu0
        %v3623 = vadd.f32 0.0, %v3622
        %v3624 = vpop.f32.mrb[0].mxu0
        %v3625 = vpop.f32.mrb[0].mxu0
        %v3626 = vpop.f32.mrb[0].mxu0
        %3627 = vdwg.mxu0
        %v3628 = vsel %vm3065, %v3623, -inf
        %3629 = vmax.xlane.f32.xlu0 %v3628
        %v3630 = vpop.xlane.xlu0 %3629
        %v3631 = vsub.f32 %v3623, %v3630
        %v3632 = vmul.f32 %v3631, 1.442695
        %v3633 = vpow.pop %v3632
        %v3634 = vsel %vm3065, %v3633, 0.0
        %3635 = vadd.xlane.f32.xlu0 %v3634
        %v3636 = vpop.xlane.xlu0 %3635
        %v3637 = vrcp.pop %v3636
        %v3638 = vmul.f32 %v3633, %v3637
        %s3639 = scalar_lea.vmem %s198, 40 [#allocation2]
        %3640 = vst.msk [vmem:[%s3639] sm:$0xff] %vm3065, %v3638
        %v3641 = vpack.c.bf16 %v3638, %v3638
        %3643 = vrot.lane.b32.xlu0 %v3469, 64
        %v3644 = vpop.permute.xlu0 %3643
        %v3646 = vsel %vm3065, %v3641, 0
        %v3649 = vsel %vm3082, %v3644, 0
        %3651 = vmatprep.subr.bf16.mxu0 0
        %3652 = vmatpush1.bf16.msra.mxu0 %v3649
        %3653 = vmatprep.subr.bf16.mxu0 0
        %3654 = vmatpush1.bf16.msra.mxu0 0
        %3655 = vmatprep.subr.bf16.mxu0 0
        %3656 = vmatpush1.bf16.msra.mxu0 0
        %3657 = vmatprep.subr.bf16.mxu0 0
        %3658 = vmatpush1.bf16.msra.mxu0 0
        %3659 = vmatprep.subr.bf16.mxu0 0
        %3660 = vmatpush1.bf16.msra.mxu0 0
        %3661 = vmatprep.subr.bf16.mxu0 0
        %3662 = vmatpush1.bf16.msra.mxu0 0
        %3663 = vmatprep.subr.bf16.mxu0 0
        %3664 = vmatpush1.bf16.msra.mxu0 0
        %3665 = vmatprep.subr.bf16.mxu0 0
        %3666 = vmatpush1.bf16.msra.mxu0 0
        %3667 = vmatprep.subr.bf16.mxu0 0
        %3668 = vmatpush1.bf16.msra.mxu0 0
        %3669 = vmatprep.subr.bf16.mxu0 0
        %3670 = vmatpush1.bf16.msra.mxu0 0
        %3671 = vmatprep.subr.bf16.mxu0 0
        %3672 = vmatpush1.bf16.msra.mxu0 0
        %3673 = vmatprep.subr.bf16.mxu0 0
        %3674 = vmatpush1.bf16.msra.mxu0 0
        %3675 = vmatprep.subr.bf16.mxu0 0
        %3676 = vmatpush1.bf16.msra.mxu0 0
        %3677 = vmatprep.subr.bf16.mxu0 0
        %3678 = vmatpush1.bf16.msra.mxu0 0
        %3679 = vmatprep.subr.bf16.mxu0 0
        %3680 = vmatpush1.bf16.msra.mxu0 0
        %3681 = vmatprep.subr.bf16.mxu0 0
        %3682 = vmatpush1.bf16.msra.mxu0 0
        %3683 = vmatprep.mubr.bf16.mxu0 0
        %3684 = vmatmul.mubr.bf16.gmra.mrb[0].mxu0 %v3646
        %v3685 = vpop.f32.mrb[0].mxu0
        %v3686 = vadd.f32 0.0, %v3685
        %v3687 = vpop.f32.mrb[0].mxu0
        %v3688 = vpop.f32.mrb[0].mxu0
        %v3689 = vpop.f32.mrb[0].mxu0
        %3690 = vdwg.mxu0
        %v3691 = vmul.f32 %v2682, 0.125
        %v3692 = vpack.c.bf16 %v3691, %v3691
        %v3693 = vpack.c.bf16 %v2846, %v2846
        %v3694 = vpack.c.bf16 %v3010, %v3010
        %v3696 = vsel %vm3018, %v3692, 0
        %v3699 = vsel %vm3018, %v3693, 0
        %3701 = vmatprep.subr.bf16.mxu0 0
        %3702 = vmatpush1.bf16.xpose.msra.mxu0 %v3699
        %3703 = vmatprep.subr.bf16.mxu0 0
        %3704 = vmatpush1.bf16.xpose.msra.mxu0 0
        %3705 = vmatprep.subr.bf16.mxu0 0
        %3706 = vmatpush1.bf16.xpose.msra.mxu0 0
        %3707 = vmatprep.subr.bf16.mxu0 0
        %3708 = vmatpush1.bf16.xpose.msra.mxu0 0
        %3709 = vmatprep.subr.bf16.mxu0 0
        %3710 = vmatpush1.bf16.xpose.msra.mxu0 0
        %3711 = vmatprep.subr.bf16.mxu0 0
        %3712 = vmatpush1.bf16.xpose.msra.mxu0 0
        %3713 = vmatprep.subr.bf16.mxu0 0
        %3714 = vmatpush1.bf16.xpose.msra.mxu0 0
        %3715 = vmatprep.subr.bf16.mxu0 0
        %3716 = vmatpush1.bf16.xpose.msra.mxu0 0
        %3717 = vmatprep.subr.bf16.mxu0 0
        %3718 = vmatpush1.bf16.xpose.msra.mxu0 0
        %3719 = vmatprep.subr.bf16.mxu0 0
        %3720 = vmatpush1.bf16.xpose.msra.mxu0 0
        %3721 = vmatprep.subr.bf16.mxu0 0
        %3722 = vmatpush1.bf16.xpose.msra.mxu0 0
        %3723 = vmatprep.subr.bf16.mxu0 0
        %3724 = vmatpush1.bf16.xpose.msra.mxu0 0
        %3725 = vmatprep.subr.bf16.mxu0 0
        %3726 = vmatpush1.bf16.xpose.msra.mxu0 0
        %3727 = vmatprep.subr.bf16.mxu0 0
        %3728 = vmatpush1.bf16.xpose.msra.mxu0 0
        %3729 = vmatprep.subr.bf16.mxu0 0
        %3730 = vmatpush1.bf16.xpose.msra.mxu0 0
        %3731 = vmatprep.subr.bf16.mxu0 0
        %3732 = vmatpush1.bf16.xpose.msra.mxu0 0
        %3733 = vmatprep.mubr.bf16.mxu0 0
        %3734 = vmatmul.mubr.bf16.gmra.mrb[0].mxu0 %v3696
        %v3735 = vpop.f32.mrb[0].mxu0
        %v3736 = vadd.f32 0.0, %v3735
        %v3737 = vpop.f32.mrb[0].mxu0
        %v3738 = vpop.f32.mrb[0].mxu0
        %v3739 = vpop.f32.mrb[0].mxu0
        %3740 = vdwg.mxu0
        %v3741 = vsel %vm3065, %v3736, -inf
        %3742 = vmax.xlane.f32.xlu0 %v3741
        %v3743 = vpop.xlane.xlu0 %3742
        %v3744 = vsub.f32 %v3736, %v3743
        %v3745 = vmul.f32 %v3744, 1.442695
        %v3746 = vpow.pop %v3745
        %v3747 = vsel %vm3065, %v3746, 0.0
        %3748 = vadd.xlane.f32.xlu0 %v3747
        %v3749 = vpop.xlane.xlu0 %3748
        %v3750 = vrcp.pop %v3749
        %v3751 = vmul.f32 %v3746, %v3750
        %s3752 = scalar_lea.vmem %s198, 48 [#allocation2]
        %3753 = vst.msk [vmem:[%s3752] sm:$0xff] %vm3065, %v3751
        %v3754 = vpack.c.bf16 %v3751, %v3751
        %v3756 = vsel %vm3065, %v3754, 0
        %v3759 = vsel %vm3082, %v3694, 0
        %3761 = vmatprep.subr.bf16.mxu0 0
        %3762 = vmatpush1.bf16.msra.mxu0 %v3759
        %3763 = vmatprep.subr.bf16.mxu0 0
        %3764 = vmatpush1.bf16.msra.mxu0 0
        %3765 = vmatprep.subr.bf16.mxu0 0
        %3766 = vmatpush1.bf16.msra.mxu0 0
        %3767 = vmatprep.subr.bf16.mxu0 0
        %3768 = vmatpush1.bf16.msra.mxu0 0
        %3769 = vmatprep.subr.bf16.mxu0 0
        %3770 = vmatpush1.bf16.msra.mxu0 0
        %3771 = vmatprep.subr.bf16.mxu0 0
        %3772 = vmatpush1.bf16.msra.mxu0 0
        %3773 = vmatprep.subr.bf16.mxu0 0
        %3774 = vmatpush1.bf16.msra.mxu0 0
        %3775 = vmatprep.subr.bf16.mxu0 0
        %3776 = vmatpush1.bf16.msra.mxu0 0
        %3777 = vmatprep.subr.bf16.mxu0 0
        %3778 = vmatpush1.bf16.msra.mxu0 0
        %3779 = vmatprep.subr.bf16.mxu0 0
        %3780 = vmatpush1.bf16.msra.mxu0 0
        %3781 = vmatprep.subr.bf16.mxu0 0
        %3782 = vmatpush1.bf16.msra.mxu0 0
        %3783 = vmatprep.subr.bf16.mxu0 0
        %3784 = vmatpush1.bf16.msra.mxu0 0
        %3785 = vmatprep.subr.bf16.mxu0 0
        %3786 = vmatpush1.bf16.msra.mxu0 0
        %3787 = vmatprep.subr.bf16.mxu0 0
        %3788 = vmatpush1.bf16.msra.mxu0 0
        %3789 = vmatprep.subr.bf16.mxu0 0
        %3790 = vmatpush1.bf16.msra.mxu0 0
        %3791 = vmatprep.subr.bf16.mxu0 0
        %3792 = vmatpush1.bf16.msra.mxu0 0
        %3793 = vmatprep.mubr.bf16.mxu0 0
        %3794 = vmatmul.mubr.bf16.gmra.mrb[0].mxu0 %v3756
        %v3795 = vpop.f32.mrb[0].mxu0
        %v3796 = vadd.f32 0.0, %v3795
        %v3797 = vpop.f32.mrb[0].mxu0
        %v3798 = vpop.f32.mrb[0].mxu0
        %v3799 = vpop.f32.mrb[0].mxu0
        %3800 = vdwg.mxu0
        %3802 = vrot.lane.b32.xlu0 %v3692, 64
        %v3803 = vpop.permute.xlu0 %3802
        %3805 = vrot.lane.b32.xlu0 %v3693, 64
        %v3806 = vpop.permute.xlu0 %3805
        %v3808 = vsel %vm3018, %v3803, 0
        %v3811 = vsel %vm3018, %v3806, 0
        %3813 = vmatprep.subr.bf16.mxu0 0
        %3814 = vmatpush1.bf16.xpose.msra.mxu0 %v3811
        %3815 = vmatprep.subr.bf16.mxu0 0
        %3816 = vmatpush1.bf16.xpose.msra.mxu0 0
        %3817 = vmatprep.subr.bf16.mxu0 0
        %3818 = vmatpush1.bf16.xpose.msra.mxu0 0
        %3819 = vmatprep.subr.bf16.mxu0 0
        %3820 = vmatpush1.bf16.xpose.msra.mxu0 0
        %3821 = vmatprep.subr.bf16.mxu0 0
        %3822 = vmatpush1.bf16.xpose.msra.mxu0 0
        %3823 = vmatprep.subr.bf16.mxu0 0
        %3824 = vmatpush1.bf16.xpose.msra.mxu0 0
        %3825 = vmatprep.subr.bf16.mxu0 0
        %3826 = vmatpush1.bf16.xpose.msra.mxu0 0
        %3827 = vmatprep.subr.bf16.mxu0 0
        %3828 = vmatpush1.bf16.xpose.msra.mxu0 0
        %3829 = vmatprep.subr.bf16.mxu0 0
        %3830 = vmatpush1.bf16.xpose.msra.mxu0 0
        %3831 = vmatprep.subr.bf16.mxu0 0
        %3832 = vmatpush1.bf16.xpose.msra.mxu0 0
        %3833 = vmatprep.subr.bf16.mxu0 0
        %3834 = vmatpush1.bf16.xpose.msra.mxu0 0
        %3835 = vmatprep.subr.bf16.mxu0 0
        %3836 = vmatpush1.bf16.xpose.msra.mxu0 0
        %3837 = vmatprep.subr.bf16.mxu0 0
        %3838 = vmatpush1.bf16.xpose.msra.mxu0 0
        %3839 = vmatprep.subr.bf16.mxu0 0
        %3840 = vmatpush1.bf16.xpose.msra.mxu0 0
        %3841 = vmatprep.subr.bf16.mxu0 0
        %3842 = vmatpush1.bf16.xpose.msra.mxu0 0
        %3843 = vmatprep.subr.bf16.mxu0 0
        %3844 = vmatpush1.bf16.xpose.msra.mxu0 0
        %3845 = vmatprep.mubr.bf16.mxu0 0
        %3846 = vmatmul.mubr.bf16.gmra.mrb[0].mxu0 %v3808
        %v3847 = vpop.f32.mrb[0].mxu0
        %v3848 = vadd.f32 0.0, %v3847
        %v3849 = vpop.f32.mrb[0].mxu0
        %v3850 = vpop.f32.mrb[0].mxu0
        %v3851 = vpop.f32.mrb[0].mxu0
        %3852 = vdwg.mxu0
        %v3853 = vsel %vm3065, %v3848, -inf
        %3854 = vmax.xlane.f32.xlu0 %v3853
        %v3855 = vpop.xlane.xlu0 %3854
        %v3856 = vsub.f32 %v3848, %v3855
        %v3857 = vmul.f32 %v3856, 1.442695
        %v3858 = vpow.pop %v3857
        %v3859 = vsel %vm3065, %v3858, 0.0
        %3860 = vadd.xlane.f32.xlu0 %v3859
        %v3861 = vpop.xlane.xlu0 %3860
        %v3862 = vrcp.pop %v3861
        %v3863 = vmul.f32 %v3858, %v3862
        %s3864 = scalar_lea.vmem %s198, 56 [#allocation2]
        %3865 = vst.msk [vmem:[%s3864] sm:$0xff] %vm3065, %v3863
        %v3866 = vpack.c.bf16 %v3863, %v3863
        %3868 = vrot.lane.b32.xlu0 %v3694, 64
        %v3869 = vpop.permute.xlu0 %3868
        %v3871 = vsel %vm3065, %v3866, 0
        %v3874 = vsel %vm3082, %v3869, 0
        %3876 = vmatprep.subr.bf16.mxu0 0
        %3877 = vmatpush1.bf16.msra.mxu0 %v3874
        %3878 = vmatprep.subr.bf16.mxu0 0
        %3879 = vmatpush1.bf16.msra.mxu0 0
        %3880 = vmatprep.subr.bf16.mxu0 0
        %3881 = vmatpush1.bf16.msra.mxu0 0
        %3882 = vmatprep.subr.bf16.mxu0 0
        %3883 = vmatpush1.bf16.msra.mxu0 0
        %3884 = vmatprep.subr.bf16.mxu0 0
        %3885 = vmatpush1.bf16.msra.mxu0 0
        %3886 = vmatprep.subr.bf16.mxu0 0
        %3887 = vmatpush1.bf16.msra.mxu0 0
        %3888 = vmatprep.subr.bf16.mxu0 0
        %3889 = vmatpush1.bf16.msra.mxu0 0
        %3890 = vmatprep.subr.bf16.mxu0 0
        %3891 = vmatpush1.bf16.msra.mxu0 0
        %3892 = vmatprep.subr.bf16.mxu0 0
        %3893 = vmatpush1.bf16.msra.mxu0 0
        %3894 = vmatprep.subr.bf16.mxu0 0
        %3895 = vmatpush1.bf16.msra.mxu0 0
        %3896 = vmatprep.subr.bf16.mxu0 0
        %3897 = vmatpush1.bf16.msra.mxu0 0
        %3898 = vmatprep.subr.bf16.mxu0 0
        %3899 = vmatpush1.bf16.msra.mxu0 0
        %3900 = vmatprep.subr.bf16.mxu0 0
        %3901 = vmatpush1.bf16.msra.mxu0 0
        %3902 = vmatprep.subr.bf16.mxu0 0
        %3903 = vmatpush1.bf16.msra.mxu0 0
        %3904 = vmatprep.subr.bf16.mxu0 0
        %3905 = vmatpush1.bf16.msra.mxu0 0
        %3906 = vmatprep.subr.bf16.mxu0 0
        %3907 = vmatpush1.bf16.msra.mxu0 0
        %3908 = vmatprep.mubr.bf16.mxu0 0
        %3909 = vmatmul.mubr.bf16.gmra.mrb[0].mxu0 %v3871
        %v3910 = vpop.f32.mrb[0].mxu0
        %v3911 = vadd.f32 0.0, %v3910
        %v3912 = vpop.f32.mrb[0].mxu0
        %v3913 = vpop.f32.mrb[0].mxu0
        %v3914 = vpop.f32.mrb[0].mxu0
        %3915 = vdwg.mxu0
        %3917 = vrot.lane.b32.xlu0 %v3236, 64
        %v3918 = vpop.permute.xlu0 %3917
        %3921 = vrot.lane.b32.xlu0 %v3461, 64
        %v3922 = vpop.permute.xlu0 %3921
        %3925 = vrot.lane.b32.xlu0 %v3686, 64
        %v3926 = vpop.permute.xlu0 %3925
        %3929 = vrot.lane.b32.xlu0 %v3911, 64
        %v3930 = vpop.permute.xlu0 %3929
        %v3932 = vsel %vm3018, %v3121, %v3918
        %v3933 = vsel %vm3018, %v3346, %v3922
        %v3934 = vsel %vm3018, %v3571, %v3926
        %v3935 = vsel %vm3018, %v3796, %v3930
        %v3936 = vpack.c.bf16 %v3932, %v3932
        %v3937 = vpack.c.bf16 %v3933, %v3933
        %v3938 = vpack.c.bf16 %v3934, %v3934
        %v3939 = vpack.c.bf16 %v3935, %v3935
        %v3940 = vld [vmem:[%s2] sm:$0xff]
        %v3941 = vld [vmem:[%s2 + $0x8] sm:$0xff]
        %v3942 = vld [vmem:[%s2 + $0x10] sm:$0xff]
        %v3943 = vld [vmem:[%s2 + $0x18] sm:$0xff]
        %v3944 = vld [vmem:[%s2 + $0x20] sm:$0xff]
        %v3945 = vld [vmem:[%s2 + $0x28] sm:$0xff]
        %v3946 = vld [vmem:[%s2 + $0x30] sm:$0xff]
        %v3947 = vld [vmem:[%s2 + $0x38] sm:$0xff]
        %v3948 = vld [vmem:[%s2 + $0x40] sm:$0xff]
        %v3949 = vld [vmem:[%s2 + $0x48] sm:$0xff]
        %v3950 = vld [vmem:[%s2 + $0x50] sm:$0xff]
        %v3951 = vld [vmem:[%s2 + $0x58] sm:$0xff]
        %v3952 = vld [vmem:[%s2 + $0x60] sm:$0xff]
        %v3953 = vld [vmem:[%s2 + $0x68] sm:$0xff]
        %v3954 = vld [vmem:[%s2 + $0x70] sm:$0xff]
        %v3955 = vld [vmem:[%s2 + $0x78] sm:$0xff]
        %v3956 = vld [vmem:[%s2 + $0x80] sm:$0xff]
        %v3957 = vld [vmem:[%s2 + $0x88] sm:$0xff]
        %v3958 = vld [vmem:[%s2 + $0x90] sm:$0xff]
        %v3959 = vld [vmem:[%s2 + $0x98] sm:$0xff]
        %v3960 = vld [vmem:[%s2 + $0xa0] sm:$0xff]
        %v3961 = vld [vmem:[%s2 + $0xa8] sm:$0xff]
        %v3962 = vld [vmem:[%s2 + $0xb0] sm:$0xff]
        %v3963 = vld [vmem:[%s2 + $0xb8] sm:$0xff]
        %v3964 = vld [vmem:[%s2 + $0xc0] sm:$0xff]
        %v3965 = vld [vmem:[%s2 + $0xc8] sm:$0xff]
        %v3966 = vld [vmem:[%s2 + $0xd0] sm:$0xff]
        %v3967 = vld [vmem:[%s2 + $0xd8] sm:$0xff]
        %v3968 = vld [vmem:[%s2 + $0xe0] sm:$0xff]
        %v3969 = vld [vmem:[%s2 + $0xe8] sm:$0xff]
        %v3970 = vld [vmem:[%s2 + $0xf0] sm:$0xff]
        %v3971 = vld [vmem:[%s2 + $0xf8] sm:$0xff]
        %v3972 = vld [vmem:[%s2 + $0x100] sm:$0xff]
        %v3973 = vld [vmem:[%s2 + $0x108] sm:$0xff]
        %v3974 = vld [vmem:[%s2 + $0x110] sm:$0xff]
        %v3975 = vld [vmem:[%s2 + $0x118] sm:$0xff]
        %v3976 = vld [vmem:[%s2 + $0x120] sm:$0xff]
        %v3977 = vld [vmem:[%s2 + $0x128] sm:$0xff]
        %v3978 = vld [vmem:[%s2 + $0x130] sm:$0xff]
        %v3979 = vld [vmem:[%s2 + $0x138] sm:$0xff]
        %v3980 = vld [vmem:[%s2 + $0x140] sm:$0xff]
        %v3981 = vld [vmem:[%s2 + $0x148] sm:$0xff]
        %v3982 = vld [vmem:[%s2 + $0x150] sm:$0xff]
        %v3983 = vld [vmem:[%s2 + $0x158] sm:$0xff]
        %v3984 = vld [vmem:[%s2 + $0x160] sm:$0xff]
        %v3985 = vld [vmem:[%s2 + $0x168] sm:$0xff]
        %v3986 = vld [vmem:[%s2 + $0x170] sm:$0xff]
        %v3987 = vld [vmem:[%s2 + $0x178] sm:$0xff]
        %v3988 = vld [vmem:[%s2 + $0x180] sm:$0xff]
        %v3989 = vld [vmem:[%s2 + $0x188] sm:$0xff]
        %v3990 = vld [vmem:[%s2 + $0x190] sm:$0xff]
        %v3991 = vld [vmem:[%s2 + $0x198] sm:$0xff]
        %v3992 = vld [vmem:[%s2 + $0x1a0] sm:$0xff]
        %v3993 = vld [vmem:[%s2 + $0x1a8] sm:$0xff]
        %v3994 = vld [vmem:[%s2 + $0x1b0] sm:$0xff]
        %v3995 = vld [vmem:[%s2 + $0x1b8] sm:$0xff]
        %v3996 = vld [vmem:[%s2 + $0x1c0] sm:$0xff]
        %v3997 = vld [vmem:[%s2 + $0x1c8] sm:$0xff]
        %v3998 = vld [vmem:[%s2 + $0x1d0] sm:$0xff]
        %v3999 = vld [vmem:[%s2 + $0x1d8] sm:$0xff]
        %v4000 = vld [vmem:[%s2 + $0x1e0] sm:$0xff]
        %v4001 = vld [vmem:[%s2 + $0x1e8] sm:$0xff]
        %v4002 = vld [vmem:[%s2 + $0x1f0] sm:$0xff]
        %v4003 = vld [vmem:[%s2 + $0x1f8] sm:$0xff]
        %v4004 = vld [vmem:[%s2 + $0x200] sm:$0xff]
        %v4005 = vld [vmem:[%s2 + $0x208] sm:$0xff]
        %v4006 = vld [vmem:[%s2 + $0x210] sm:$0xff]
        %v4007 = vld [vmem:[%s2 + $0x218] sm:$0xff]
        %v4008 = vld [vmem:[%s2 + $0x220] sm:$0xff]
        %v4009 = vld [vmem:[%s2 + $0x228] sm:$0xff]
        %v4010 = vld [vmem:[%s2 + $0x230] sm:$0xff]
        %v4011 = vld [vmem:[%s2 + $0x238] sm:$0xff]
        %v4012 = vld [vmem:[%s2 + $0x240] sm:$0xff]
        %v4013 = vld [vmem:[%s2 + $0x248] sm:$0xff]
        %v4014 = vld [vmem:[%s2 + $0x250] sm:$0xff]
        %v4015 = vld [vmem:[%s2 + $0x258] sm:$0xff]
        %v4016 = vld [vmem:[%s2 + $0x260] sm:$0xff]
        %v4017 = vld [vmem:[%s2 + $0x268] sm:$0xff]
        %v4018 = vld [vmem:[%s2 + $0x270] sm:$0xff]
        %v4019 = vld [vmem:[%s2 + $0x278] sm:$0xff]
        %v4020 = vld [vmem:[%s2 + $0x280] sm:$0xff]
        %v4021 = vld [vmem:[%s2 + $0x288] sm:$0xff]
        %v4022 = vld [vmem:[%s2 + $0x290] sm:$0xff]
        %v4023 = vld [vmem:[%s2 + $0x298] sm:$0xff]
        %v4024 = vld [vmem:[%s2 + $0x2a0] sm:$0xff]
        %v4025 = vld [vmem:[%s2 + $0x2a8] sm:$0xff]
        %v4026 = vld [vmem:[%s2 + $0x2b0] sm:$0xff]
        %v4027 = vld [vmem:[%s2 + $0x2b8] sm:$0xff]
        %v4028 = vld [vmem:[%s2 + $0x2c0] sm:$0xff]
        %v4029 = vld [vmem:[%s2 + $0x2c8] sm:$0xff]
        %v4030 = vld [vmem:[%s2 + $0x2d0] sm:$0xff]
        %v4031 = vld [vmem:[%s2 + $0x2d8] sm:$0xff]
        %v4032 = vld [vmem:[%s2 + $0x2e0] sm:$0xff]
        %v4033 = vld [vmem:[%s2 + $0x2e8] sm:$0xff]
        %v4034 = vld [vmem:[%s2 + $0x2f0] sm:$0xff]
        %v4035 = vld [vmem:[%s2 + $0x2f8] sm:$0xff]
        %v4036 = vld [vmem:[%s2 + $0x300] sm:$0xff]
        %v4037 = vld [vmem:[%s2 + $0x308] sm:$0xff]
        %v4038 = vld [vmem:[%s2 + $0x310] sm:$0xff]
        %v4039 = vld [vmem:[%s2 + $0x318] sm:$0xff]
        %v4040 = vld [vmem:[%s2 + $0x320] sm:$0xff]
        %v4041 = vld [vmem:[%s2 + $0x328] sm:$0xff]
        %v4042 = vld [vmem:[%s2 + $0x330] sm:$0xff]
        %v4043 = vld [vmem:[%s2 + $0x338] sm:$0xff]
        %v4044 = vld [vmem:[%s2 + $0x340] sm:$0xff]
        %v4045 = vld [vmem:[%s2 + $0x348] sm:$0xff]
        %v4046 = vld [vmem:[%s2 + $0x350] sm:$0xff]
        %v4047 = vld [vmem:[%s2 + $0x358] sm:$0xff]
        %v4048 = vld [vmem:[%s2 + $0x360] sm:$0xff]
        %v4049 = vld [vmem:[%s2 + $0x368] sm:$0xff]
        %v4050 = vld [vmem:[%s2 + $0x370] sm:$0xff]
        %v4051 = vld [vmem:[%s2 + $0x378] sm:$0xff]
        %v4052 = vld [vmem:[%s2 + $0x380] sm:$0xff]
        %v4053 = vld [vmem:[%s2 + $0x388] sm:$0xff]
        %v4054 = vld [vmem:[%s2 + $0x390] sm:$0xff]
        %v4055 = vld [vmem:[%s2 + $0x398] sm:$0xff]
        %v4056 = vld [vmem:[%s2 + $0x3a0] sm:$0xff]
        %v4057 = vld [vmem:[%s2 + $0x3a8] sm:$0xff]
        %v4058 = vld [vmem:[%s2 + $0x3b0] sm:$0xff]
        %v4059 = vld [vmem:[%s2 + $0x3b8] sm:$0xff]
        %v4060 = vld [vmem:[%s2 + $0x3c0] sm:$0xff]
        %v4061 = vld [vmem:[%s2 + $0x3c8] sm:$0xff]
        %v4062 = vld [vmem:[%s2 + $0x3d0] sm:$0xff]
        %v4063 = vld [vmem:[%s2 + $0x3d8] sm:$0xff]
        %v4064 = vld [vmem:[%s2 + $0x3e0] sm:$0xff]
        %v4065 = vld [vmem:[%s2 + $0x3e8] sm:$0xff]
        %v4066 = vld [vmem:[%s2 + $0x3f0] sm:$0xff]
        %v4067 = vld [vmem:[%s2 + $0x3f8] sm:$0xff]
        %v4196 = vunpack.c.l.b16 %v3940
        %v4197 = vunpack.c.h.b16 %v3940
        %v4198 = vunpack.c.l.b16 %v3941
        %v4199 = vunpack.c.h.b16 %v3941
        %v4200 = vunpack.c.l.b16 %v3942
        %v4201 = vunpack.c.h.b16 %v3942
        %v4202 = vunpack.c.l.b16 %v3943
        %v4203 = vunpack.c.h.b16 %v3943
        %v4204 = vunpack.c.l.b16 %v3944
        %v4205 = vunpack.c.h.b16 %v3944
        %v4206 = vunpack.c.l.b16 %v3945
        %v4207 = vunpack.c.h.b16 %v3945
        %v4208 = vunpack.c.l.b16 %v3946
        %v4209 = vunpack.c.h.b16 %v3946
        %v4210 = vunpack.c.l.b16 %v3947
        %v4211 = vunpack.c.h.b16 %v3947
        %v4212 = vunpack.c.l.b16 %v3948
        %v4213 = vunpack.c.h.b16 %v3948
        %v4214 = vunpack.c.l.b16 %v3949
        %v4215 = vunpack.c.h.b16 %v3949
        %v4216 = vunpack.c.l.b16 %v3950
        %v4217 = vunpack.c.h.b16 %v3950
        %v4218 = vunpack.c.l.b16 %v3951
        %v4219 = vunpack.c.h.b16 %v3951
        %v4220 = vunpack.c.l.b16 %v3952
        %v4221 = vunpack.c.h.b16 %v3952
        %v4222 = vunpack.c.l.b16 %v3953
        %v4223 = vunpack.c.h.b16 %v3953
        %v4224 = vunpack.c.l.b16 %v3954
        %v4225 = vunpack.c.h.b16 %v3954
        %v4226 = vunpack.c.l.b16 %v3955
        %v4227 = vunpack.c.h.b16 %v3955
        %v4228 = vunpack.c.l.b16 %v3956
        %v4229 = vunpack.c.h.b16 %v3956
        %v4230 = vunpack.c.l.b16 %v3957
        %v4231 = vunpack.c.h.b16 %v3957
        %v4232 = vunpack.c.l.b16 %v3958
        %v4233 = vunpack.c.h.b16 %v3958
        %v4234 = vunpack.c.l.b16 %v3959
        %v4235 = vunpack.c.h.b16 %v3959
        %v4236 = vunpack.c.l.b16 %v3960
        %v4237 = vunpack.c.h.b16 %v3960
        %v4238 = vunpack.c.l.b16 %v3961
        %v4239 = vunpack.c.h.b16 %v3961
        %v4240 = vunpack.c.l.b16 %v3962
        %v4241 = vunpack.c.h.b16 %v3962
        %v4242 = vunpack.c.l.b16 %v3963
        %v4243 = vunpack.c.h.b16 %v3963
        %v4244 = vunpack.c.l.b16 %v3964
        %v4245 = vunpack.c.h.b16 %v3964
        %v4246 = vunpack.c.l.b16 %v3965
        %v4247 = vunpack.c.h.b16 %v3965
        %v4248 = vunpack.c.l.b16 %v3966
        %v4249 = vunpack.c.h.b16 %v3966
        %v4250 = vunpack.c.l.b16 %v3967
        %v4251 = vunpack.c.h.b16 %v3967
        %v4252 = vunpack.c.l.b16 %v3968
        %v4253 = vunpack.c.h.b16 %v3968
        %v4254 = vunpack.c.l.b16 %v3969
        %v4255 = vunpack.c.h.b16 %v3969
        %v4256 = vunpack.c.l.b16 %v3970
        %v4257 = vunpack.c.h.b16 %v3970
        %v4258 = vunpack.c.l.b16 %v3971
        %v4259 = vunpack.c.h.b16 %v3971
        %v4260 = vunpack.c.l.b16 %v3972
        %v4261 = vunpack.c.h.b16 %v3972
        %v4262 = vunpack.c.l.b16 %v3973
        %v4263 = vunpack.c.h.b16 %v3973
        %v4264 = vunpack.c.l.b16 %v3974
        %v4265 = vunpack.c.h.b16 %v3974
        %v4266 = vunpack.c.l.b16 %v3975
        %v4267 = vunpack.c.h.b16 %v3975
        %v4268 = vunpack.c.l.b16 %v3976
        %v4269 = vunpack.c.h.b16 %v3976
        %v4270 = vunpack.c.l.b16 %v3977
        %v4271 = vunpack.c.h.b16 %v3977
        %v4272 = vunpack.c.l.b16 %v3978
        %v4273 = vunpack.c.h.b16 %v3978
        %v4274 = vunpack.c.l.b16 %v3979
        %v4275 = vunpack.c.h.b16 %v3979
        %v4276 = vunpack.c.l.b16 %v3980
        %v4277 = vunpack.c.h.b16 %v3980
        %v4278 = vunpack.c.l.b16 %v3981
        %v4279 = vunpack.c.h.b16 %v3981
        %v4280 = vunpack.c.l.b16 %v3982
        %v4281 = vunpack.c.h.b16 %v3982
        %v4282 = vunpack.c.l.b16 %v3983
        %v4283 = vunpack.c.h.b16 %v3983
        %v4284 = vunpack.c.l.b16 %v3984
        %v4285 = vunpack.c.h.b16 %v3984
        %v4286 = vunpack.c.l.b16 %v3985
        %v4287 = vunpack.c.h.b16 %v3985
        %v4288 = vunpack.c.l.b16 %v3986
        %v4289 = vunpack.c.h.b16 %v3986
        %v4290 = vunpack.c.l.b16 %v3987
        %v4291 = vunpack.c.h.b16 %v3987
        %v4292 = vunpack.c.l.b16 %v3988
        %v4293 = vunpack.c.h.b16 %v3988
        %v4294 = vunpack.c.l.b16 %v3989
        %v4295 = vunpack.c.h.b16 %v3989
        %v4296 = vunpack.c.l.b16 %v3990
        %v4297 = vunpack.c.h.b16 %v3990
        %v4298 = vunpack.c.l.b16 %v3991
        %v4299 = vunpack.c.h.b16 %v3991
        %v4300 = vunpack.c.l.b16 %v3992
        %v4301 = vunpack.c.h.b16 %v3992
        %v4302 = vunpack.c.l.b16 %v3993
        %v4303 = vunpack.c.h.b16 %v3993
        %v4304 = vunpack.c.l.b16 %v3994
        %v4305 = vunpack.c.h.b16 %v3994
        %v4306 = vunpack.c.l.b16 %v3995
        %v4307 = vunpack.c.h.b16 %v3995
        %v4308 = vunpack.c.l.b16 %v3996
        %v4309 = vunpack.c.h.b16 %v3996
        %v4310 = vunpack.c.l.b16 %v3997
        %v4311 = vunpack.c.h.b16 %v3997
        %v4312 = vunpack.c.l.b16 %v3998
        %v4313 = vunpack.c.h.b16 %v3998
        %v4314 = vunpack.c.l.b16 %v3999
        %v4315 = vunpack.c.h.b16 %v3999
        %v4316 = vunpack.c.l.b16 %v4000
        %v4317 = vunpack.c.h.b16 %v4000
        %v4318 = vunpack.c.l.b16 %v4001
        %v4319 = vunpack.c.h.b16 %v4001
        %v4320 = vunpack.c.l.b16 %v4002
        %v4321 = vunpack.c.h.b16 %v4002
        %v4322 = vunpack.c.l.b16 %v4003
        %v4323 = vunpack.c.h.b16 %v4003
        %v4324 = vunpack.c.l.b16 %v4004
        %v4325 = vunpack.c.h.b16 %v4004
        %v4326 = vunpack.c.l.b16 %v4005
        %v4327 = vunpack.c.h.b16 %v4005
        %v4328 = vunpack.c.l.b16 %v4006
        %v4329 = vunpack.c.h.b16 %v4006
        %v4330 = vunpack.c.l.b16 %v4007
        %v4331 = vunpack.c.h.b16 %v4007
        %v4332 = vunpack.c.l.b16 %v4008
        %v4333 = vunpack.c.h.b16 %v4008
        %v4334 = vunpack.c.l.b16 %v4009
        %v4335 = vunpack.c.h.b16 %v4009
        %v4336 = vunpack.c.l.b16 %v4010
        %v4337 = vunpack.c.h.b16 %v4010
        %v4338 = vunpack.c.l.b16 %v4011
        %v4339 = vunpack.c.h.b16 %v4011
        %v4340 = vunpack.c.l.b16 %v4012
        %v4341 = vunpack.c.h.b16 %v4012
        %v4342 = vunpack.c.l.b16 %v4013
        %v4343 = vunpack.c.h.b16 %v4013
        %v4344 = vunpack.c.l.b16 %v4014
        %v4345 = vunpack.c.h.b16 %v4014
        %v4346 = vunpack.c.l.b16 %v4015
        %v4347 = vunpack.c.h.b16 %v4015
        %v4348 = vunpack.c.l.b16 %v4016
        %v4349 = vunpack.c.h.b16 %v4016
        %v4350 = vunpack.c.l.b16 %v4017
        %v4351 = vunpack.c.h.b16 %v4017
        %v4352 = vunpack.c.l.b16 %v4018
        %v4353 = vunpack.c.h.b16 %v4018
        %v4354 = vunpack.c.l.b16 %v4019
        %v4355 = vunpack.c.h.b16 %v4019
        %v4356 = vunpack.c.l.b16 %v4020
        %v4357 = vunpack.c.h.b16 %v4020
        %v4358 = vunpack.c.l.b16 %v4021
        %v4359 = vunpack.c.h.b16 %v4021
        %v4360 = vunpack.c.l.b16 %v4022
        %v4361 = vunpack.c.h.b16 %v4022
        %v4362 = vunpack.c.l.b16 %v4023
        %v4363 = vunpack.c.h.b16 %v4023
        %v4364 = vunpack.c.l.b16 %v4024
        %v4365 = vunpack.c.h.b16 %v4024
        %v4366 = vunpack.c.l.b16 %v4025
        %v4367 = vunpack.c.h.b16 %v4025
        %v4368 = vunpack.c.l.b16 %v4026
        %v4369 = vunpack.c.h.b16 %v4026
        %v4370 = vunpack.c.l.b16 %v4027
        %v4371 = vunpack.c.h.b16 %v4027
        %v4372 = vunpack.c.l.b16 %v4028
        %v4373 = vunpack.c.h.b16 %v4028
        %v4374 = vunpack.c.l.b16 %v4029
        %v4375 = vunpack.c.h.b16 %v4029
        %v4376 = vunpack.c.l.b16 %v4030
        %v4377 = vunpack.c.h.b16 %v4030
        %v4378 = vunpack.c.l.b16 %v4031
        %v4379 = vunpack.c.h.b16 %v4031
        %v4380 = vunpack.c.l.b16 %v4032
        %v4381 = vunpack.c.h.b16 %v4032
        %v4382 = vunpack.c.l.b16 %v4033
        %v4383 = vunpack.c.h.b16 %v4033
        %v4384 = vunpack.c.l.b16 %v4034
        %v4385 = vunpack.c.h.b16 %v4034
        %v4386 = vunpack.c.l.b16 %v4035
        %v4387 = vunpack.c.h.b16 %v4035
        %v4388 = vunpack.c.l.b16 %v4036
        %v4389 = vunpack.c.h.b16 %v4036
        %v4390 = vunpack.c.l.b16 %v4037
        %v4391 = vunpack.c.h.b16 %v4037
        %v4392 = vunpack.c.l.b16 %v4038
        %v4393 = vunpack.c.h.b16 %v4038
        %v4394 = vunpack.c.l.b16 %v4039
        %v4395 = vunpack.c.h.b16 %v4039
        %v4396 = vunpack.c.l.b16 %v4040
        %v4397 = vunpack.c.h.b16 %v4040
        %v4398 = vunpack.c.l.b16 %v4041
        %v4399 = vunpack.c.h.b16 %v4041
        %v4400 = vunpack.c.l.b16 %v4042
        %v4401 = vunpack.c.h.b16 %v4042
        %v4402 = vunpack.c.l.b16 %v4043
        %v4403 = vunpack.c.h.b16 %v4043
        %v4404 = vunpack.c.l.b16 %v4044
        %v4405 = vunpack.c.h.b16 %v4044
        %v4406 = vunpack.c.l.b16 %v4045
        %v4407 = vunpack.c.h.b16 %v4045
        %v4408 = vunpack.c.l.b16 %v4046
        %v4409 = vunpack.c.h.b16 %v4046
        %v4410 = vunpack.c.l.b16 %v4047
        %v4411 = vunpack.c.h.b16 %v4047
        %v4412 = vunpack.c.l.b16 %v4048
        %v4413 = vunpack.c.h.b16 %v4048
        %v4414 = vunpack.c.l.b16 %v4049
        %v4415 = vunpack.c.h.b16 %v4049
        %v4416 = vunpack.c.l.b16 %v4050
        %v4417 = vunpack.c.h.b16 %v4050
        %v4418 = vunpack.c.l.b16 %v4051
        %v4419 = vunpack.c.h.b16 %v4051
        %v4420 = vunpack.c.l.b16 %v4052
        %v4421 = vunpack.c.h.b16 %v4052
        %v4422 = vunpack.c.l.b16 %v4053
        %v4423 = vunpack.c.h.b16 %v4053
        %v4424 = vunpack.c.l.b16 %v4054
        %v4425 = vunpack.c.h.b16 %v4054
        %v4426 = vunpack.c.l.b16 %v4055
        %v4427 = vunpack.c.h.b16 %v4055
        %v4428 = vunpack.c.l.b16 %v4056
        %v4429 = vunpack.c.h.b16 %v4056
        %v4430 = vunpack.c.l.b16 %v4057
        %v4431 = vunpack.c.h.b16 %v4057
        %v4432 = vunpack.c.l.b16 %v4058
        %v4433 = vunpack.c.h.b16 %v4058
        %v4434 = vunpack.c.l.b16 %v4059
        %v4435 = vunpack.c.h.b16 %v4059
        %v4436 = vunpack.c.l.b16 %v4060
        %v4437 = vunpack.c.h.b16 %v4060
        %v4438 = vunpack.c.l.b16 %v4061
        %v4439 = vunpack.c.h.b16 %v4061
        %v4440 = vunpack.c.l.b16 %v4062
        %v4441 = vunpack.c.h.b16 %v4062
        %v4442 = vunpack.c.l.b16 %v4063
        %v4443 = vunpack.c.h.b16 %v4063
        %v4444 = vunpack.c.l.b16 %v4064
        %v4445 = vunpack.c.h.b16 %v4064
        %v4446 = vunpack.c.l.b16 %v4065
        %v4447 = vunpack.c.h.b16 %v4065
        %v4448 = vunpack.c.l.b16 %v4066
        %v4449 = vunpack.c.h.b16 %v4066
        %v4450 = vunpack.c.l.b16 %v4067
        %v4451 = vunpack.c.h.b16 %v4067
        %v4452 = vpack.c.b16 %v4200, %v4196
        %v4453 = vpack.c.b16 %v4201, %v4197
        %v4454 = vpack.c.b16 %v4202, %v4198
        %v4455 = vpack.c.b16 %v4203, %v4199
        %v4456 = vpack.c.b16 %v4208, %v4204
        %v4457 = vpack.c.b16 %v4209, %v4205
        %v4458 = vpack.c.b16 %v4210, %v4206
        %v4459 = vpack.c.b16 %v4211, %v4207
        %v4460 = vpack.c.b16 %v4216, %v4212
        %v4461 = vpack.c.b16 %v4217, %v4213
        %v4462 = vpack.c.b16 %v4218, %v4214
        %v4463 = vpack.c.b16 %v4219, %v4215
        %v4464 = vpack.c.b16 %v4224, %v4220
        %v4465 = vpack.c.b16 %v4225, %v4221
        %v4466 = vpack.c.b16 %v4226, %v4222
        %v4467 = vpack.c.b16 %v4227, %v4223
        %v4468 = vpack.c.b16 %v4232, %v4228
        %v4469 = vpack.c.b16 %v4233, %v4229
        %v4470 = vpack.c.b16 %v4234, %v4230
        %v4471 = vpack.c.b16 %v4235, %v4231
        %v4472 = vpack.c.b16 %v4240, %v4236
        %v4473 = vpack.c.b16 %v4241, %v4237
        %v4474 = vpack.c.b16 %v4242, %v4238
        %v4475 = vpack.c.b16 %v4243, %v4239
        %v4476 = vpack.c.b16 %v4248, %v4244
        %v4477 = vpack.c.b16 %v4249, %v4245
        %v4478 = vpack.c.b16 %v4250, %v4246
        %v4479 = vpack.c.b16 %v4251, %v4247
        %v4480 = vpack.c.b16 %v4256, %v4252
        %v4481 = vpack.c.b16 %v4257, %v4253
        %v4482 = vpack.c.b16 %v4258, %v4254
        %v4483 = vpack.c.b16 %v4259, %v4255
        %v4484 = vpack.c.b16 %v4264, %v4260
        %v4485 = vpack.c.b16 %v4265, %v4261
        %v4486 = vpack.c.b16 %v4266, %v4262
        %v4487 = vpack.c.b16 %v4267, %v4263
        %v4488 = vpack.c.b16 %v4272, %v4268
        %v4489 = vpack.c.b16 %v4273, %v4269
        %v4490 = vpack.c.b16 %v4274, %v4270
        %v4491 = vpack.c.b16 %v4275, %v4271
        %v4492 = vpack.c.b16 %v4280, %v4276
        %v4493 = vpack.c.b16 %v4281, %v4277
        %v4494 = vpack.c.b16 %v4282, %v4278
        %v4495 = vpack.c.b16 %v4283, %v4279
        %v4496 = vpack.c.b16 %v4288, %v4284
        %v4497 = vpack.c.b16 %v4289, %v4285
        %v4498 = vpack.c.b16 %v4290, %v4286
        %v4499 = vpack.c.b16 %v4291, %v4287
        %v4500 = vpack.c.b16 %v4296, %v4292
        %v4501 = vpack.c.b16 %v4297, %v4293
        %v4502 = vpack.c.b16 %v4298, %v4294
        %v4503 = vpack.c.b16 %v4299, %v4295
        %v4504 = vpack.c.b16 %v4304, %v4300
        %v4505 = vpack.c.b16 %v4305, %v4301
        %v4506 = vpack.c.b16 %v4306, %v4302
        %v4507 = vpack.c.b16 %v4307, %v4303
        %v4508 = vpack.c.b16 %v4312, %v4308
        %v4509 = vpack.c.b16 %v4313, %v4309
        %v4510 = vpack.c.b16 %v4314, %v4310
        %v4511 = vpack.c.b16 %v4315, %v4311
        %v4512 = vpack.c.b16 %v4320, %v4316
        %v4513 = vpack.c.b16 %v4321, %v4317
        %v4514 = vpack.c.b16 %v4322, %v4318
        %v4515 = vpack.c.b16 %v4323, %v4319
        %v4516 = vpack.c.b16 %v4328, %v4324
        %v4517 = vpack.c.b16 %v4329, %v4325
        %v4518 = vpack.c.b16 %v4330, %v4326
        %v4519 = vpack.c.b16 %v4331, %v4327
        %v4520 = vpack.c.b16 %v4336, %v4332
        %v4521 = vpack.c.b16 %v4337, %v4333
        %v4522 = vpack.c.b16 %v4338, %v4334
        %v4523 = vpack.c.b16 %v4339, %v4335
        %v4524 = vpack.c.b16 %v4344, %v4340
        %v4525 = vpack.c.b16 %v4345, %v4341
        %v4526 = vpack.c.b16 %v4346, %v4342
        %v4527 = vpack.c.b16 %v4347, %v4343
        %v4528 = vpack.c.b16 %v4352, %v4348
        %v4529 = vpack.c.b16 %v4353, %v4349
        %v4530 = vpack.c.b16 %v4354, %v4350
        %v4531 = vpack.c.b16 %v4355, %v4351
        %v4532 = vpack.c.b16 %v4360, %v4356
        %v4533 = vpack.c.b16 %v4361, %v4357
        %v4534 = vpack.c.b16 %v4362, %v4358
        %v4535 = vpack.c.b16 %v4363, %v4359
        %v4536 = vpack.c.b16 %v4368, %v4364
        %v4537 = vpack.c.b16 %v4369, %v4365
        %v4538 = vpack.c.b16 %v4370, %v4366
        %v4539 = vpack.c.b16 %v4371, %v4367
        %v4540 = vpack.c.b16 %v4376, %v4372
        %v4541 = vpack.c.b16 %v4377, %v4373
        %v4542 = vpack.c.b16 %v4378, %v4374
        %v4543 = vpack.c.b16 %v4379, %v4375
        %v4544 = vpack.c.b16 %v4384, %v4380
        %v4545 = vpack.c.b16 %v4385, %v4381
        %v4546 = vpack.c.b16 %v4386, %v4382
        %v4547 = vpack.c.b16 %v4387, %v4383
        %v4548 = vpack.c.b16 %v4392, %v4388
        %v4549 = vpack.c.b16 %v4393, %v4389
        %v4550 = vpack.c.b16 %v4394, %v4390
        %v4551 = vpack.c.b16 %v4395, %v4391
        %v4552 = vpack.c.b16 %v4400, %v4396
        %v4553 = vpack.c.b16 %v4401, %v4397
        %v4554 = vpack.c.b16 %v4402, %v4398
        %v4555 = vpack.c.b16 %v4403, %v4399
        %v4556 = vpack.c.b16 %v4408, %v4404
        %v4557 = vpack.c.b16 %v4409, %v4405
        %v4558 = vpack.c.b16 %v4410, %v4406
        %v4559 = vpack.c.b16 %v4411, %v4407
        %v4560 = vpack.c.b16 %v4416, %v4412
        %v4561 = vpack.c.b16 %v4417, %v4413
        %v4562 = vpack.c.b16 %v4418, %v4414
        %v4563 = vpack.c.b16 %v4419, %v4415
        %v4564 = vpack.c.b16 %v4424, %v4420
        %v4565 = vpack.c.b16 %v4425, %v4421
        %v4566 = vpack.c.b16 %v4426, %v4422
        %v4567 = vpack.c.b16 %v4427, %v4423
        %v4568 = vpack.c.b16 %v4432, %v4428
        %v4569 = vpack.c.b16 %v4433, %v4429
        %v4570 = vpack.c.b16 %v4434, %v4430
        %v4571 = vpack.c.b16 %v4435, %v4431
        %v4572 = vpack.c.b16 %v4440, %v4436
        %v4573 = vpack.c.b16 %v4441, %v4437
        %v4574 = vpack.c.b16 %v4442, %v4438
        %v4575 = vpack.c.b16 %v4443, %v4439
        %v4576 = vpack.c.b16 %v4448, %v4444
        %v4577 = vpack.c.b16 %v4449, %v4445
        %v4578 = vpack.c.b16 %v4450, %v4446
        %v4579 = vpack.c.b16 %v4451, %v4447
        %4708 = vmatprep.subr.bf16.mxu0 %v4453
        %4709 = vmatpush1.bf16.msra.mxu0 %v4452
        %4710 = vmatprep.subr.bf16.mxu0 %v4457
        %4711 = vmatpush1.bf16.msra.mxu0 %v4456
        %4712 = vmatprep.subr.bf16.mxu0 %v4461
        %4713 = vmatpush1.bf16.msra.mxu0 %v4460
        %4714 = vmatprep.subr.bf16.mxu0 %v4465
        %4715 = vmatpush1.bf16.msra.mxu0 %v4464
        %4716 = vmatprep.subr.bf16.mxu0 %v4469
        %4717 = vmatpush1.bf16.msra.mxu0 %v4468
        %4718 = vmatprep.subr.bf16.mxu0 %v4473
        %4719 = vmatpush1.bf16.msra.mxu0 %v4472
        %4720 = vmatprep.subr.bf16.mxu0 %v4477
        %4721 = vmatpush1.bf16.msra.mxu0 %v4476
        %4722 = vmatprep.subr.bf16.mxu0 %v4481
        %4723 = vmatpush1.bf16.msra.mxu0 %v4480
        %4724 = vmatprep.subr.bf16.mxu0 %v4485
        %4725 = vmatpush1.bf16.msra.mxu0 %v4484
        %4726 = vmatprep.subr.bf16.mxu0 %v4489
        %4727 = vmatpush1.bf16.msra.mxu0 %v4488
        %4728 = vmatprep.subr.bf16.mxu0 %v4493
        %4729 = vmatpush1.bf16.msra.mxu0 %v4492
        %4730 = vmatprep.subr.bf16.mxu0 %v4497
        %4731 = vmatpush1.bf16.msra.mxu0 %v4496
        %4732 = vmatprep.subr.bf16.mxu0 %v4501
        %4733 = vmatpush1.bf16.msra.mxu0 %v4500
        %4734 = vmatprep.subr.bf16.mxu0 %v4505
        %4735 = vmatpush1.bf16.msra.mxu0 %v4504
        %4736 = vmatprep.subr.bf16.mxu0 %v4509
        %4737 = vmatpush1.bf16.msra.mxu0 %v4508
        %4738 = vmatprep.subr.bf16.mxu0 %v4513
        %4739 = vmatpush1.bf16.msra.mxu0 %v4512
        %4740 = vmatprep.mubr.bf16.mxu0 %v3937
        %4741 = vmatmul.mubr.bf16.gmra.mrb[0].mxu0 %v3936
        %v4742 = vpop.f32.mrb[0].mxu0
        %v4743 = vadd.f32 %v210, %v4742
        %v4744 = vpop.f32.mrb[0].mxu0
        %v4745 = vadd.f32 %v211, %v4744
        %v4746 = vpop.f32.mrb[0].mxu0
        %v4747 = vpop.f32.mrb[0].mxu0
        %4748 = vdwg.mxu0
        %4749 = vmatprep.subr.bf16.mxu0 %v4517
        %4750 = vmatpush1.bf16.msra.mxu0 %v4516
        %4751 = vmatprep.subr.bf16.mxu0 %v4521
        %4752 = vmatpush1.bf16.msra.mxu0 %v4520
        %4753 = vmatprep.subr.bf16.mxu0 %v4525
        %4754 = vmatpush1.bf16.msra.mxu0 %v4524
        %4755 = vmatprep.subr.bf16.mxu0 %v4529
        %4756 = vmatpush1.bf16.msra.mxu0 %v4528
        %4757 = vmatprep.subr.bf16.mxu0 %v4533
        %4758 = vmatpush1.bf16.msra.mxu0 %v4532
        %4759 = vmatprep.subr.bf16.mxu0 %v4537
        %4760 = vmatpush1.bf16.msra.mxu0 %v4536
        %4761 = vmatprep.subr.bf16.mxu0 %v4541
        %4762 = vmatpush1.bf16.msra.mxu0 %v4540
        %4763 = vmatprep.subr.bf16.mxu0 %v4545
        %4764 = vmatpush1.bf16.msra.mxu0 %v4544
        %4765 = vmatprep.subr.bf16.mxu0 %v4549
        %4766 = vmatpush1.bf16.msra.mxu0 %v4548
        %4767 = vmatprep.subr.bf16.mxu0 %v4553
        %4768 = vmatpush1.bf16.msra.mxu0 %v4552
        %4769 = vmatprep.subr.bf16.mxu0 %v4557
        %4770 = vmatpush1.bf16.msra.mxu0 %v4556
        %4771 = vmatprep.subr.bf16.mxu0 %v4561
        %4772 = vmatpush1.bf16.msra.mxu0 %v4560
        %4773 = vmatprep.subr.bf16.mxu0 %v4565
        %4774 = vmatpush1.bf16.msra.mxu0 %v4564
        %4775 = vmatprep.subr.bf16.mxu0 %v4569
        %4776 = vmatpush1.bf16.msra.mxu0 %v4568
        %4777 = vmatprep.subr.bf16.mxu0 %v4573
        %4778 = vmatpush1.bf16.msra.mxu0 %v4572
        %4779 = vmatprep.subr.bf16.mxu0 %v4577
        %4780 = vmatpush1.bf16.msra.mxu0 %v4576
        %4781 = vmatprep.mubr.bf16.mxu0 %v3939
        %4782 = vmatmul.mubr.bf16.gmra.mrb[0].mxu0 %v3938
        %v4783 = vpop.f32.mrb[0].mxu0
        %v4784 = vadd.f32 %v4743, %v4783
        %v4785 = vpop.f32.mrb[0].mxu0
        %v4786 = vadd.f32 %v4745, %v4785
        %v4787 = vpop.f32.mrb[0].mxu0
        %v4788 = vpop.f32.mrb[0].mxu0
        %4789 = vdwg.mxu0
        %4790 = vmatprep.subr.bf16.mxu0 %v4455
        %4791 = vmatpush1.bf16.msra.mxu0 %v4454
        %4792 = vmatprep.subr.bf16.mxu0 %v4459
        %4793 = vmatpush1.bf16.msra.mxu0 %v4458
        %4794 = vmatprep.subr.bf16.mxu0 %v4463
        %4795 = vmatpush1.bf16.msra.mxu0 %v4462
        %4796 = vmatprep.subr.bf16.mxu0 %v4467
        %4797 = vmatpush1.bf16.msra.mxu0 %v4466
        %4798 = vmatprep.subr.bf16.mxu0 %v4471
        %4799 = vmatpush1.bf16.msra.mxu0 %v4470
        %4800 = vmatprep.subr.bf16.mxu0 %v4475
        %4801 = vmatpush1.bf16.msra.mxu0 %v4474
        %4802 = vmatprep.subr.bf16.mxu0 %v4479
        %4803 = vmatpush1.bf16.msra.mxu0 %v4478
        %4804 = vmatprep.subr.bf16.mxu0 %v4483
        %4805 = vmatpush1.bf16.msra.mxu0 %v4482
        %4806 = vmatprep.subr.bf16.mxu0 %v4487
        %4807 = vmatpush1.bf16.msra.mxu0 %v4486
        %4808 = vmatprep.subr.bf16.mxu0 %v4491
        %4809 = vmatpush1.bf16.msra.mxu0 %v4490
        %4810 = vmatprep.subr.bf16.mxu0 %v4495
        %4811 = vmatpush1.bf16.msra.mxu0 %v4494
        %4812 = vmatprep.subr.bf16.mxu0 %v4499
        %4813 = vmatpush1.bf16.msra.mxu0 %v4498
        %4814 = vmatprep.subr.bf16.mxu0 %v4503
        %4815 = vmatpush1.bf16.msra.mxu0 %v4502
        %4816 = vmatprep.subr.bf16.mxu0 %v4507
        %4817 = vmatpush1.bf16.msra.mxu0 %v4506
        %4818 = vmatprep.subr.bf16.mxu0 %v4511
        %4819 = vmatpush1.bf16.msra.mxu0 %v4510
        %4820 = vmatprep.subr.bf16.mxu0 %v4515
        %4821 = vmatpush1.bf16.msra.mxu0 %v4514
        %4822 = vmatprep.mubr.bf16.mxu0 %v3937
        %4823 = vmatmul.mubr.bf16.gmra.mrb[0].mxu0 %v3936
        %v4824 = vpop.f32.mrb[0].mxu0
        %v4825 = vadd.f32 %v212, %v4824
        %v4826 = vpop.f32.mrb[0].mxu0
        %v4827 = vadd.f32 %v213, %v4826
        %v4828 = vpop.f32.mrb[0].mxu0
        %v4829 = vpop.f32.mrb[0].mxu0
        %4830 = vdwg.mxu0
        %4831 = vmatprep.subr.bf16.mxu0 %v4519
        %4832 = vmatpush1.bf16.msra.mxu0 %v4518
        %4833 = vmatprep.subr.bf16.mxu0 %v4523
        %4834 = vmatpush1.bf16.msra.mxu0 %v4522
        %4835 = vmatprep.subr.bf16.mxu0 %v4527
        %4836 = vmatpush1.bf16.msra.mxu0 %v4526
        %4837 = vmatprep.subr.bf16.mxu0 %v4531
        %4838 = vmatpush1.bf16.msra.mxu0 %v4530
        %4839 = vmatprep.subr.bf16.mxu0 %v4535
        %4840 = vmatpush1.bf16.msra.mxu0 %v4534
        %4841 = vmatprep.subr.bf16.mxu0 %v4539
        %4842 = vmatpush1.bf16.msra.mxu0 %v4538
        %4843 = vmatprep.subr.bf16.mxu0 %v4543
        %4844 = vmatpush1.bf16.msra.mxu0 %v4542
        %4845 = vmatprep.subr.bf16.mxu0 %v4547
        %4846 = vmatpush1.bf16.msra.mxu0 %v4546
        %4847 = vmatprep.subr.bf16.mxu0 %v4551
        %4848 = vmatpush1.bf16.msra.mxu0 %v4550
        %4849 = vmatprep.subr.bf16.mxu0 %v4555
        %4850 = vmatpush1.bf16.msra.mxu0 %v4554
        %4851 = vmatprep.subr.bf16.mxu0 %v4559
        %4852 = vmatpush1.bf16.msra.mxu0 %v4558
        %4853 = vmatprep.subr.bf16.mxu0 %v4563
        %4854 = vmatpush1.bf16.msra.mxu0 %v4562
        %4855 = vmatprep.subr.bf16.mxu0 %v4567
        %4856 = vmatpush1.bf16.msra.mxu0 %v4566
        %4857 = vmatprep.subr.bf16.mxu0 %v4571
        %4858 = vmatpush1.bf16.msra.mxu0 %v4570
        %4859 = vmatprep.subr.bf16.mxu0 %v4575
        %4860 = vmatpush1.bf16.msra.mxu0 %v4574
        %4861 = vmatprep.subr.bf16.mxu0 %v4579
        %4862 = vmatpush1.bf16.msra.mxu0 %v4578
        %4863 = vmatprep.mubr.bf16.mxu0 %v3939
        %4864 = vmatmul.mubr.bf16.gmra.mrb[0].mxu0 %v3938
        %v4865 = vpop.f32.mrb[0].mxu0
        %v4866 = vadd.f32 %v4825, %v4865
        %v4867 = vpop.f32.mrb[0].mxu0
        %v4868 = vadd.f32 %v4827, %v4867
        %v4869 = vpop.f32.mrb[0].mxu0
        %v4870 = vpop.f32.mrb[0].mxu0
        %4871 = vdwg.mxu0
        %v4872 = vadd.f32 %v4784, %v4786
        %v4873 = vadd.f32 %v4872, %v4866
        %v4874 = vadd.f32 %v4873, %v4868
        %4875 = vadd.xlane.f32.xlu0 %v4874
        %v4876 = vpop.xlane.xlu0 %4875
        %v4877 = vrcp.pop 512.0
        %v4878 = vmul.f32 %v4876, %v4877
        %v4879 = vsub.f32 %v4784, %v4878
        %v4880 = vsub.f32 %v4786, %v4878
        %v4881 = vsub.f32 %v4866, %v4878
        %v4882 = vsub.f32 %v4868, %v4878
        %v4883 = vmul.f32 %v4879, %v4879
        %v4884 = vmul.f32 %v4880, %v4880
        %v4885 = vmul.f32 %v4881, %v4881
        %v4886 = vmul.f32 %v4882, %v4882
        %v4887 = vadd.f32 %v4883, %v4884
        %v4888 = vadd.f32 %v4887, %v4885
        %v4889 = vadd.f32 %v4888, %v4886
        %4890 = vadd.xlane.f32.xlu0 %v4889
        %v4891 = vpop.xlane.xlu0 %4890
        %v4892 = vmul.f32 %v4891, %v4877
        %v4893 = vadd.f32 %v4892, 1e-05
        %v4894 = vrsqrt.pop %v4893
        %v4895 = vmul.f32 %v4879, %v4894
        %v4896 = vmul.f32 %v4880, %v4894
        %v4897 = vmul.f32 %v4881, %v4894
        %v4898 = vmul.f32 %v4882, %v4894
        %4899 = vst [vmem:[%s208] sm:$0xff] %v4895
        %4900 = vst [vmem:[%s208 + $0x8] sm:$0xff] %v4896
        %4901 = vst [vmem:[%s208 + $0x10] sm:$0xff] %v4897
        %4902 = vst [vmem:[%s208 + $0x18] sm:$0xff] %v4898
        %p4903 = scmp.lt.s32.totalorder %s19, 1
        %s4904 = scalar_select %p4903, %s19, 1
        %s4905 = smul.addr %s4904, 4
        %s4906 = smul.addr %s4905, 8
        %s4907 = scalar_lea.vmem %s3, %s4906
        %s4908 = sand.u32 %s121, 1
        %s4909 = scalar_lea.sflag [#allocation3], %s4908
        %s4910 = sand.u32 %s121, 1
        %s4911 = smul.addr %s4910, 64
        %s4912 = scalar_lea.vmem [#allocation2], %s4911
        // Predicated region
        $region33: #{encoder_layer.2} parent=31 // pred_check
          %p4913 = pneg %p105
        $region34: #{encoder_layer.2} parent=31 // pred_check_branch
          %4915 = sbr.rel (%p4913) target = $region36
        $region35: #{encoder_layer.2} parent=31 // pred_region
          _
        $region36: #{encoder_layer.2} parent=31 // pred_fallthru
          _
        // Predicated region
        $region37: #{encoder_layer.2} parent=31 // pred_check
          %p4916 = pneg %p131
        $region38: #{encoder_layer.2} parent=31 // pred_check_branch
          %4918 = sbr.rel (%p4916) target = $region40
        $region39: #{encoder_layer.2} parent=31 // pred_region
          %s4920 = ssub.s32 1024, 1024
          %4921 = vsyncadd %s4909, %s4920
          %s4922 = smul.addr %s19, 8
          %s4923 = smul.addr %s4922, 128
          %s4924 = scalar_lea.hbm %s4, %s4923
          %s4925 = sshll.u32 %s4912, 4
          %s4926 = int_to_ptr.vmem [resolvable:$true] %s4925
          %4931 = dma.vmem_to_hbm [thread:$0]  %s4926, 1024, %s4924, %s4909, 128, 128, 8
        $region40: #{encoder_layer.2} parent=31 // pred_fallthru
          _
      $region32: #{encoder_layer.2} parent=5 // pred_fallthru
        _
      %p4932 = scmp.le.s32.totalorder 2, %s14
      // Predicated region
      $region41: #{encoder_layer.2} parent=5 // pred_check
        %p4933 = pneg %p4932
      $region42: #{encoder_layer.2} parent=5 // pred_check_branch
        %4935 = sbr.rel (%p4933) target = $region44
      $region43: #{encoder_layer.2} parent=5 // pred_region
        %s4936 = ssub.s32 %s14, 2
        // Predicated region
        $region45: #{encoder_layer.2} parent=43 // pred_check
          %p4937 = pneg %p111
        $region46: #{encoder_layer.2} parent=43 // pred_check_branch
          %4939 = sbr.rel (%p4937) target = $region48
        $region47: #{encoder_layer.2} parent=43 // pred_region
          %p4940 = scmp.lt.s32.totalorder %s20, 1
          %s4941 = scalar_select %p4940, %s20, 1
          %s4942 = smul.addr %s4941, 4
          %s4943 = smul.addr %s4942, 8
          %s4944 = scalar_lea.vmem %s3, %s4943
        $region48: #{encoder_layer.2} parent=43 // pred_fallthru
          _
        // Predicated region
        $region49: #{encoder_layer.2} parent=43 // pred_check
          %p4945 = pneg %p137
        $region50: #{encoder_layer.2} parent=43 // pred_check_branch
          %4947 = sbr.rel (%p4945) target = $region52
        $region51: #{encoder_layer.2} parent=43 // pred_region
          %s4948 = sand.u32 %s122, 1
          %s4949 = scalar_lea.sflag [#allocation3], %s4948
          %s4950 = sand.u32 %s122, 1
          %s4951 = smul.addr %s4950, 64
          %s4952 = scalar_lea.vmem [#allocation2], %s4951
          %4953 = dma.done %s4949, 1024
        $region52: #{encoder_layer.2} parent=43 // pred_fallthru
          _
      $region44: #{encoder_layer.2} parent=5 // pred_fallthru
        _
    $region6: #{encoder_layer.2} parent=1 // loop_footer
      %s18 = sadd.s32 1, %s14
    $region7: #{encoder_layer.2} parent=1 // loop_footer_branch
      %13 = sbr.rel target = $region3
    $region8: #{encoder_layer.2} parent=1 // loop_exit
      _
    %4954 = vsyncpa [#allocation3], 1
    %s4955 = scalar_lea.sflag [#allocation3], 1
    %4956 = vsyncpa %s4955, 1

// kernel: encoder_layer.3
$region0: #{encoder_layer.3}
  #allocation0 [shape = 'u32[]', space=smem, size = 0x4, offset = 0x4, fixed_abs, tag = 'smem constant byte address 0x4 - core index']
  #allocation1 [shape = 'u32[144,128]{1,0:T(1,128)}', space=vmem, size = 0x12000, scoped, tag = 'internal scratch']
  %s0 = inlined_call_operand.vmem [shape: f32[16,512], index: 0, kind: input, shape index: {}]
  %s1 = inlined_call_operand.vmem [shape: bf16[512,2048], index: 1, kind: input, shape index: {}]
  %s2 = inlined_call_operand.vmem [shape: bf16[2048,512], index: 2, kind: input, shape index: {}]
  %s3 = inlined_call_operand.hbm [shape: f32[16,512], index: 3, kind: output, shape index: {}]
  %s4 = sld [smem:[#allocation0]]
  $region22: #{encoder_layer.3} parent=0
    _
  %s6 = ssub.s32 1, %s4
  %s7 = scalar_select 0, %s6, %s4
  $region1: #{encoder_layer.3} parent=0
    #allocation2 [shape = 'u8[32768]{0}', space=vmem, size = 0x8000, scoped, tag = 'output window, operand 0, single buffered']
    #allocation3 [shape = 's32[1]{0}', space=sflag, size = 0x4, scoped, tag = 'scoped memory for encoder_layer.3']
    %8 = vsyncpa [#allocation3], 0
    // Predicated region
    $region2: #{encoder_layer.3} parent=1 // pred_check
      _
    $region3: #{encoder_layer.3} parent=1 // pred_check_branch
      %10 = sbr.rel (0) target = $region5
    $region4: #{encoder_layer.3} parent=1 // pred_region
      _
    $region5: #{encoder_layer.3} parent=1 // pred_fallthru
      _
    // Predicated region
    $region6: #{encoder_layer.3} parent=1 // pred_check
      _
    $region7: #{encoder_layer.3} parent=1 // pred_check_branch
      %12 = sbr.rel (0) target = $region9
    $region8: #{encoder_layer.3} parent=1 // pred_region
      _
    $region9: #{encoder_layer.3} parent=1 // pred_fallthru
      _
    // Predicated region
    $region10: #{encoder_layer.3} parent=1 // pred_check
      _
    $region11: #{encoder_layer.3} parent=1 // pred_check_branch
      %14 = sbr.rel (0) target = $region13
    $region12: #{encoder_layer.3} parent=1 // pred_region
      _
    $region13: #{encoder_layer.3} parent=1 // pred_fallthru
      _
    %v15 = vld [vmem:[%s0] sm:$0xff]
    %v16 = vld [vmem:[%s0 + $0x8] sm:$0xff]
    %v17 = vld [vmem:[%s0 + $0x10] sm:$0xff]
    %v18 = vld [vmem:[%s0 + $0x18] sm:$0xff]
    %v19 = vld [vmem:[%s0 + $0x20] sm:$0xff]
    %v20 = vld [vmem:[%s0 + $0x28] sm:$0xff]
    %v21 = vld [vmem:[%s0 + $0x30] sm:$0xff]
    %v22 = vld [vmem:[%s0 + $0x38] sm:$0xff]
    %v23 = vpack.c.bf16 %v19, %v15
    %v24 = vpack.c.bf16 %v20, %v16
    %v25 = vpack.c.bf16 %v21, %v17
    %v26 = vpack.c.bf16 %v22, %v18
    %v27 = vld [vmem:[%s1] sm:$0xff]
    %v28 = vld [vmem:[%s1 + $0x8] sm:$0xff]
    %v29 = vld [vmem:[%s1 + $0x10] sm:$0xff]
    %v30 = vld [vmem:[%s1 + $0x18] sm:$0xff]
    %v31 = vld [vmem:[%s1 + $0x20] sm:$0xff]
    %v32 = vld [vmem:[%s1 + $0x28] sm:$0xff]
    %v33 = vld [vmem:[%s1 + $0x30] sm:$0xff]
    %v34 = vld [vmem:[%s1 + $0x38] sm:$0xff]
    %v35 = vld [vmem:[%s1 + $0x40] sm:$0xff]
    %v36 = vld [vmem:[%s1 + $0x48] sm:$0xff]
    %v37 = vld [vmem:[%s1 + $0x50] sm:$0xff]
    %v38 = vld [vmem:[%s1 + $0x58] sm:$0xff]
    %v39 = vld [vmem:[%s1 + $0x60] sm:$0xff]
    %v40 = vld [vmem:[%s1 + $0x68] sm:$0xff]
    %v41 = vld [vmem:[%s1 + $0x70] sm:$0xff]
    %v42 = vld [vmem:[%s1 + $0x78] sm:$0xff]
    %v43 = vld [vmem:[%s1 + $0x80] sm:$0xff]
    %v44 = vld [vmem:[%s1 + $0x88] sm:$0xff]
    %v45 = vld [vmem:[%s1 + $0x90] sm:$0xff]
    %v46 = vld [vmem:[%s1 + $0x98] sm:$0xff]
    %v47 = vld [vmem:[%s1 + $0xa0] sm:$0xff]
    %v48 = vld [vmem:[%s1 + $0xa8] sm:$0xff]
    %v49 = vld [vmem:[%s1 + $0xb0] sm:$0xff]
    %v50 = vld [vmem:[%s1 + $0xb8] sm:$0xff]
    %v51 = vld [vmem:[%s1 + $0xc0] sm:$0xff]
    %v52 = vld [vmem:[%s1 + $0xc8] sm:$0xff]
    %v53 = vld [vmem:[%s1 + $0xd0] sm:$0xff]
    %v54 = vld [vmem:[%s1 + $0xd8] sm:$0xff]
    %v55 = vld [vmem:[%s1 + $0xe0] sm:$0xff]
    %v56 = vld [vmem:[%s1 + $0xe8] sm:$0xff]
    %v57 = vld [vmem:[%s1 + $0xf0] sm:$0xff]
    %v58 = vld [vmem:[%s1 + $0xf8] sm:$0xff]
    %v59 = vld [vmem:[%s1 + $0x100] sm:$0xff]
    %v60 = vld [vmem:[%s1 + $0x108] sm:$0xff]
    %v61 = vld [vmem:[%s1 + $0x110] sm:$0xff]
    %v62 = vld [vmem:[%s1 + $0x118] sm:$0xff]
    %v63 = vld [vmem:[%s1 + $0x120] sm:$0xff]
    %v64 = vld [vmem:[%s1 + $0x128] sm:$0xff]
    %v65 = vld [vmem:[%s1 + $0x130] sm:$0xff]
    %v66 = vld [vmem:[%s1 + $0x138] sm:$0xff]
    %v67 = vld [vmem:[%s1 + $0x140] sm:$0xff]
    %v68 = vld [vmem:[%s1 + $0x148] sm:$0xff]
    %v69 = vld [vmem:[%s1 + $0x150] sm:$0xff]
    %v70 = vld [vmem:[%s1 + $0x158] sm:$0xff]
    %v71 = vld [vmem:[%s1 + $0x160] sm:$0xff]
    %v72 = vld [vmem:[%s1 + $0x168] sm:$0xff]
    %v73 = vld [vmem:[%s1 + $0x170] sm:$0xff]
    %v74 = vld [vmem:[%s1 + $0x178] sm:$0xff]
    %v75 = vld [vmem:[%s1 + $0x180] sm:$0xff]
    %v76 = vld [vmem:[%s1 + $0x188] sm:$0xff]
    %v77 = vld [vmem:[%s1 + $0x190] sm:$0xff]
    %v78 = vld [vmem:[%s1 + $0x198] sm:$0xff]
    %v79 = vld [vmem:[%s1 + $0x1a0] sm:$0xff]
    %v80 = vld [vmem:[%s1 + $0x1a8] sm:$0xff]
    %v81 = vld [vmem:[%s1 + $0x1b0] sm:$0xff]
    %v82 = vld [vmem:[%s1 + $0x1b8] sm:$0xff]
    %v83 = vld [vmem:[%s1 + $0x1c0] sm:$0xff]
    %v84 = vld [vmem:[%s1 + $0x1c8] sm:$0xff]
    %v85 = vld [vmem:[%s1 + $0x1d0] sm:$0xff]
    %v86 = vld [vmem:[%s1 + $0x1d8] sm:$0xff]
    %v87 = vld [vmem:[%s1 + $0x1e0] sm:$0xff]
    %v88 = vld [vmem:[%s1 + $0x1e8] sm:$0xff]
    %v89 = vld [vmem:[%s1 + $0x1f0] sm:$0xff]
    %v90 = vld [vmem:[%s1 + $0x1f8] sm:$0xff]
    %v91 = vld [vmem:[%s1 + $0x200] sm:$0xff]
    %v92 = vld [vmem:[%s1 + $0x208] sm:$0xff]
    %v93 = vld [vmem:[%s1 + $0x210] sm:$0xff]
    %v94 = vld [vmem:[%s1 + $0x218] sm:$0xff]
    %v95 = vld [vmem:[%s1 + $0x220] sm:$0xff]
    %v96 = vld [vmem:[%s1 + $0x228] sm:$0xff]
    %v97 = vld [vmem:[%s1 + $0x230] sm:$0xff]
    %v98 = vld [vmem:[%s1 + $0x238] sm:$0xff]
    %v99 = vld [vmem:[%s1 + $0x240] sm:$0xff]
    %v100 = vld [vmem:[%s1 + $0x248] sm:$0xff]
    %v101 = vld [vmem:[%s1 + $0x250] sm:$0xff]
    %v102 = vld [vmem:[%s1 + $0x258] sm:$0xff]
    %v103 = vld [vmem:[%s1 + $0x260] sm:$0xff]
    %v104 = vld [vmem:[%s1 + $0x268] sm:$0xff]
    %v105 = vld [vmem:[%s1 + $0x270] sm:$0xff]
    %v106 = vld [vmem:[%s1 + $0x278] sm:$0xff]
    %v107 = vld [vmem:[%s1 + $0x280] sm:$0xff]
    %v108 = vld [vmem:[%s1 + $0x288] sm:$0xff]
    %v109 = vld [vmem:[%s1 + $0x290] sm:$0xff]
    %v110 = vld [vmem:[%s1 + $0x298] sm:$0xff]
    %v111 = vld [vmem:[%s1 + $0x2a0] sm:$0xff]
    %v112 = vld [vmem:[%s1 + $0x2a8] sm:$0xff]
    %v113 = vld [vmem:[%s1 + $0x2b0] sm:$0xff]
    %v114 = vld [vmem:[%s1 + $0x2b8] sm:$0xff]
    %v115 = vld [vmem:[%s1 + $0x2c0] sm:$0xff]
    %v116 = vld [vmem:[%s1 + $0x2c8] sm:$0xff]
    %v117 = vld [vmem:[%s1 + $0x2d0] sm:$0xff]
    %v118 = vld [vmem:[%s1 + $0x2d8] sm:$0xff]
    %v119 = vld [vmem:[%s1 + $0x2e0] sm:$0xff]
    %v120 = vld [vmem:[%s1 + $0x2e8] sm:$0xff]
    %v121 = vld [vmem:[%s1 + $0x2f0] sm:$0xff]
    %v122 = vld [vmem:[%s1 + $0x2f8] sm:$0xff]
    %v123 = vld [vmem:[%s1 + $0x300] sm:$0xff]
    %v124 = vld [vmem:[%s1 + $0x308] sm:$0xff]
    %v125 = vld [vmem:[%s1 + $0x310] sm:$0xff]
    %v126 = vld [vmem:[%s1 + $0x318] sm:$0xff]
    %v127 = vld [vmem:[%s1 + $0x320] sm:$0xff]
    %v128 = vld [vmem:[%s1 + $0x328] sm:$0xff]
    %v129 = vld [vmem:[%s1 + $0x330] sm:$0xff]
    %v130 = vld [vmem:[%s1 + $0x338] sm:$0xff]
    %v131 = vld [vmem:[%s1 + $0x340] sm:$0xff]
    %v132 = vld [vmem:[%s1 + $0x348] sm:$0xff]
    %v133 = vld [vmem:[%s1 + $0x350] sm:$0xff]
    %v134 = vld [vmem:[%s1 + $0x358] sm:$0xff]
    %v135 = vld [vmem:[%s1 + $0x360] sm:$0xff]
    %v136 = vld [vmem:[%s1 + $0x368] sm:$0xff]
    %v137 = vld [vmem:[%s1 + $0x370] sm:$0xff]
    %v138 = vld [vmem:[%s1 + $0x378] sm:$0xff]
    %v139 = vld [vmem:[%s1 + $0x380] sm:$0xff]
    %v140 = vld [vmem:[%s1 + $0x388] sm:$0xff]
    %v141 = vld [vmem:[%s1 + $0x390] sm:$0xff]
    %v142 = vld [vmem:[%s1 + $0x398] sm:$0xff]
    %v143 = vld [vmem:[%s1 + $0x3a0] sm:$0xff]
    %v144 = vld [vmem:[%s1 + $0x3a8] sm:$0xff]
    %v145 = vld [vmem:[%s1 + $0x3b0] sm:$0xff]
    %v146 = vld [vmem:[%s1 + $0x3b8] sm:$0xff]
    %v147 = vld [vmem:[%s1 + $0x3c0] sm:$0xff]
    %v148 = vld [vmem:[%s1 + $0x3c8] sm:$0xff]
    %v149 = vld [vmem:[%s1 + $0x3d0] sm:$0xff]
    %v150 = vld [vmem:[%s1 + $0x3d8] sm:$0xff]
    %v151 = vld [vmem:[%s1 + $0x3e0] sm:$0xff]
    %v152 = vld [vmem:[%s1 + $0x3e8] sm:$0xff]
    %v153 = vld [vmem:[%s1 + $0x3f0] sm:$0xff]
    %v154 = vld [vmem:[%s1 + $0x3f8] sm:$0xff]
    %v155 = vld [vmem:[%s1 + $0x400] sm:$0xff]
    %v156 = vld [vmem:[%s1 + $0x408] sm:$0xff]
    %v157 = vld [vmem:[%s1 + $0x410] sm:$0xff]
    %v158 = vld [vmem:[%s1 + $0x418] sm:$0xff]
    %v159 = vld [vmem:[%s1 + $0x420] sm:$0xff]
    %v160 = vld [vmem:[%s1 + $0x428] sm:$0xff]
    %v161 = vld [vmem:[%s1 + $0x430] sm:$0xff]
    %v162 = vld [vmem:[%s1 + $0x438] sm:$0xff]
    %v163 = vld [vmem:[%s1 + $0x440] sm:$0xff]
    %v164 = vld [vmem:[%s1 + $0x448] sm:$0xff]
    %v165 = vld [vmem:[%s1 + $0x450] sm:$0xff]
    %v166 = vld [vmem:[%s1 + $0x458] sm:$0xff]
    %v167 = vld [vmem:[%s1 + $0x460] sm:$0xff]
    %v168 = vld [vmem:[%s1 + $0x468] sm:$0xff]
    %v169 = vld [vmem:[%s1 + $0x470] sm:$0xff]
    %v170 = vld [vmem:[%s1 + $0x478] sm:$0xff]
    %v171 = vld [vmem:[%s1 + $0x480] sm:$0xff]
    %v172 = vld [vmem:[%s1 + $0x488] sm:$0xff]
    %v173 = vld [vmem:[%s1 + $0x490] sm:$0xff]
    %v174 = vld [vmem:[%s1 + $0x498] sm:$0xff]
    %v175 = vld [vmem:[%s1 + $0x4a0] sm:$0xff]
    %v176 = vld [vmem:[%s1 + $0x4a8] sm:$0xff]
    %v177 = vld [vmem:[%s1 + $0x4b0] sm:$0xff]
    %v178 = vld [vmem:[%s1 + $0x4b8] sm:$0xff]
    %v179 = vld [vmem:[%s1 + $0x4c0] sm:$0xff]
    %v180 = vld [vmem:[%s1 + $0x4c8] sm:$0xff]
    %v181 = vld [vmem:[%s1 + $0x4d0] sm:$0xff]
    %v182 = vld [vmem:[%s1 + $0x4d8] sm:$0xff]
    %v183 = vld [vmem:[%s1 + $0x4e0] sm:$0xff]
    %v184 = vld [vmem:[%s1 + $0x4e8] sm:$0xff]
    %v185 = vld [vmem:[%s1 + $0x4f0] sm:$0xff]
    %v186 = vld [vmem:[%s1 + $0x4f8] sm:$0xff]
    %v187 = vld [vmem:[%s1 + $0x500] sm:$0xff]
    %v188 = vld [vmem:[%s1 + $0x508] sm:$0xff]
    %v189 = vld [vmem:[%s1 + $0x510] sm:$0xff]
    %v190 = vld [vmem:[%s1 + $0x518] sm:$0xff]
    %v191 = vld [vmem:[%s1 + $0x520] sm:$0xff]
    %v192 = vld [vmem:[%s1 + $0x528] sm:$0xff]
    %v193 = vld [vmem:[%s1 + $0x530] sm:$0xff]
    %v194 = vld [vmem:[%s1 + $0x538] sm:$0xff]
    %v195 = vld [vmem:[%s1 + $0x540] sm:$0xff]
    %v196 = vld [vmem:[%s1 + $0x548] sm:$0xff]
    %v197 = vld [vmem:[%s1 + $0x550] sm:$0xff]
    %v198 = vld [vmem:[%s1 + $0x558] sm:$0xff]
    %v199 = vld [vmem:[%s1 + $0x560] sm:$0xff]
    %v200 = vld [vmem:[%s1 + $0x568] sm:$0xff]
    %v201 = vld [vmem:[%s1 + $0x570] sm:$0xff]
    %v202 = vld [vmem:[%s1 + $0x578] sm:$0xff]
    %v203 = vld [vmem:[%s1 + $0x580] sm:$0xff]
    %v204 = vld [vmem:[%s1 + $0x588] sm:$0xff]
    %v205 = vld [vmem:[%s1 + $0x590] sm:$0xff]
    %v206 = vld [vmem:[%s1 + $0x598] sm:$0xff]
    %v207 = vld [vmem:[%s1 + $0x5a0] sm:$0xff]
    %v208 = vld [vmem:[%s1 + $0x5a8] sm:$0xff]
    %v209 = vld [vmem:[%s1 + $0x5b0] sm:$0xff]
    %v210 = vld [vmem:[%s1 + $0x5b8] sm:$0xff]
    %v211 = vld [vmem:[%s1 + $0x5c0] sm:$0xff]
    %v212 = vld [vmem:[%s1 + $0x5c8] sm:$0xff]
    %v213 = vld [vmem:[%s1 + $0x5d0] sm:$0xff]
    %v214 = vld [vmem:[%s1 + $0x5d8] sm:$0xff]
    %v215 = vld [vmem:[%s1 + $0x5e0] sm:$0xff]
    %v216 = vld [vmem:[%s1 + $0x5e8] sm:$0xff]
    %v217 = vld [vmem:[%s1 + $0x5f0] sm:$0xff]
    %v218 = vld [vmem:[%s1 + $0x5f8] sm:$0xff]
    %v219 = vld [vmem:[%s1 + $0x600] sm:$0xff]
    %v220 = vld [vmem:[%s1 + $0x608] sm:$0xff]
    %v221 = vld [vmem:[%s1 + $0x610] sm:$0xff]
    %v222 = vld [vmem:[%s1 + $0x618] sm:$0xff]
    %v223 = vld [vmem:[%s1 + $0x620] sm:$0xff]
    %v224 = vld [vmem:[%s1 + $0x628] sm:$0xff]
    %v225 = vld [vmem:[%s1 + $0x630] sm:$0xff]
    %v226 = vld [vmem:[%s1 + $0x638] sm:$0xff]
    %v227 = vld [vmem:[%s1 + $0x640] sm:$0xff]
    %v228 = vld [vmem:[%s1 + $0x648] sm:$0xff]
    %v229 = vld [vmem:[%s1 + $0x650] sm:$0xff]
    %v230 = vld [vmem:[%s1 + $0x658] sm:$0xff]
    %v231 = vld [vmem:[%s1 + $0x660] sm:$0xff]
    %v232 = vld [vmem:[%s1 + $0x668] sm:$0xff]
    %v233 = vld [vmem:[%s1 + $0x670] sm:$0xff]
    %v234 = vld [vmem:[%s1 + $0x678] sm:$0xff]
    %v235 = vld [vmem:[%s1 + $0x680] sm:$0xff]
    %v236 = vld [vmem:[%s1 + $0x688] sm:$0xff]
    %v237 = vld [vmem:[%s1 + $0x690] sm:$0xff]
    %v238 = vld [vmem:[%s1 + $0x698] sm:$0xff]
    %v239 = vld [vmem:[%s1 + $0x6a0] sm:$0xff]
    %v240 = vld [vmem:[%s1 + $0x6a8] sm:$0xff]
    %v241 = vld [vmem:[%s1 + $0x6b0] sm:$0xff]
    %v242 = vld [vmem:[%s1 + $0x6b8] sm:$0xff]
    %v243 = vld [vmem:[%s1 + $0x6c0] sm:$0xff]
    %v244 = vld [vmem:[%s1 + $0x6c8] sm:$0xff]
    %v245 = vld [vmem:[%s1 + $0x6d0] sm:$0xff]
    %v246 = vld [vmem:[%s1 + $0x6d8] sm:$0xff]
    %v247 = vld [vmem:[%s1 + $0x6e0] sm:$0xff]
    %v248 = vld [vmem:[%s1 + $0x6e8] sm:$0xff]
    %v249 = vld [vmem:[%s1 + $0x6f0] sm:$0xff]
    %v250 = vld [vmem:[%s1 + $0x6f8] sm:$0xff]
    %v251 = vld [vmem:[%s1 + $0x700] sm:$0xff]
    %v252 = vld [vmem:[%s1 + $0x708] sm:$0xff]
    %v253 = vld [vmem:[%s1 + $0x710] sm:$0xff]
    %v254 = vld [vmem:[%s1 + $0x718] sm:$0xff]
    %v255 = vld [vmem:[%s1 + $0x720] sm:$0xff]
    %v256 = vld [vmem:[%s1 + $0x728] sm:$0xff]
    %v257 = vld [vmem:[%s1 + $0x730] sm:$0xff]
    %v258 = vld [vmem:[%s1 + $0x738] sm:$0xff]
    %v259 = vld [vmem:[%s1 + $0x740] sm:$0xff]
    %v260 = vld [vmem:[%s1 + $0x748] sm:$0xff]
    %v261 = vld [vmem:[%s1 + $0x750] sm:$0xff]
    %v262 = vld [vmem:[%s1 + $0x758] sm:$0xff]
    %v263 = vld [vmem:[%s1 + $0x760] sm:$0xff]
    %v264 = vld [vmem:[%s1 + $0x768] sm:$0xff]
    %v265 = vld [vmem:[%s1 + $0x770] sm:$0xff]
    %v266 = vld [vmem:[%s1 + $0x778] sm:$0xff]
    %v267 = vld [vmem:[%s1 + $0x780] sm:$0xff]
    %v268 = vld [vmem:[%s1 + $0x788] sm:$0xff]
    %v269 = vld [vmem:[%s1 + $0x790] sm:$0xff]
    %v270 = vld [vmem:[%s1 + $0x798] sm:$0xff]
    %v271 = vld [vmem:[%s1 + $0x7a0] sm:$0xff]
    %v272 = vld [vmem:[%s1 + $0x7a8] sm:$0xff]
    %v273 = vld [vmem:[%s1 + $0x7b0] sm:$0xff]
    %v274 = vld [vmem:[%s1 + $0x7b8] sm:$0xff]
    %v275 = vld [vmem:[%s1 + $0x7c0] sm:$0xff]
    %v276 = vld [vmem:[%s1 + $0x7c8] sm:$0xff]
    %v277 = vld [vmem:[%s1 + $0x7d0] sm:$0xff]
    %v278 = vld [vmem:[%s1 + $0x7d8] sm:$0xff]
    %v279 = vld [vmem:[%s1 + $0x7e0] sm:$0xff]
    %v280 = vld [vmem:[%s1 + $0x7e8] sm:$0xff]
    %v281 = vld [vmem:[%s1 + $0x7f0] sm:$0xff]
    %v282 = vld [vmem:[%s1 + $0x7f8] sm:$0xff]
    %v283 = vld [vmem:[%s1 + $0x800] sm:$0xff]
    %v284 = vld [vmem:[%s1 + $0x808] sm:$0xff]
    %v285 = vld [vmem:[%s1 + $0x810] sm:$0xff]
    %v286 = vld [vmem:[%s1 + $0x818] sm:$0xff]
    %v287 = vld [vmem:[%s1 + $0x820] sm:$0xff]
    %v288 = vld [vmem:[%s1 + $0x828] sm:$0xff]
    %v289 = vld [vmem:[%s1 + $0x830] sm:$0xff]
    %v290 = vld [vmem:[%s1 + $0x838] sm:$0xff]
    %v291 = vld [vmem:[%s1 + $0x840] sm:$0xff]
    %v292 = vld [vmem:[%s1 + $0x848] sm:$0xff]
    %v293 = vld [vmem:[%s1 + $0x850] sm:$0xff]
    %v294 = vld [vmem:[%s1 + $0x858] sm:$0xff]
    %v295 = vld [vmem:[%s1 + $0x860] sm:$0xff]
    %v296 = vld [vmem:[%s1 + $0x868] sm:$0xff]
    %v297 = vld [vmem:[%s1 + $0x870] sm:$0xff]
    %v298 = vld [vmem:[%s1 + $0x878] sm:$0xff]
    %v299 = vld [vmem:[%s1 + $0x880] sm:$0xff]
    %v300 = vld [vmem:[%s1 + $0x888] sm:$0xff]
    %v301 = vld [vmem:[%s1 + $0x890] sm:$0xff]
    %v302 = vld [vmem:[%s1 + $0x898] sm:$0xff]
    %v303 = vld [vmem:[%s1 + $0x8a0] sm:$0xff]
    %v304 = vld [vmem:[%s1 + $0x8a8] sm:$0xff]
    %v305 = vld [vmem:[%s1 + $0x8b0] sm:$0xff]
    %v306 = vld [vmem:[%s1 + $0x8b8] sm:$0xff]
    %v307 = vld [vmem:[%s1 + $0x8c0] sm:$0xff]
    %v308 = vld [vmem:[%s1 + $0x8c8] sm:$0xff]
    %v309 = vld [vmem:[%s1 + $0x8d0] sm:$0xff]
    %v310 = vld [vmem:[%s1 + $0x8d8] sm:$0xff]
    %v311 = vld [vmem:[%s1 + $0x8e0] sm:$0xff]
    %v312 = vld [vmem:[%s1 + $0x8e8] sm:$0xff]
    %v313 = vld [vmem:[%s1 + $0x8f0] sm:$0xff]
    %v314 = vld [vmem:[%s1 + $0x8f8] sm:$0xff]
    %v315 = vld [vmem:[%s1 + $0x900] sm:$0xff]
    %v316 = vld [vmem:[%s1 + $0x908] sm:$0xff]
    %v317 = vld [vmem:[%s1 + $0x910] sm:$0xff]
    %v318 = vld [vmem:[%s1 + $0x918] sm:$0xff]
    %v319 = vld [vmem:[%s1 + $0x920] sm:$0xff]
    %v320 = vld [vmem:[%s1 + $0x928] sm:$0xff]
    %v321 = vld [vmem:[%s1 + $0x930] sm:$0xff]
    %v322 = vld [vmem:[%s1 + $0x938] sm:$0xff]
    %v323 = vld [vmem:[%s1 + $0x940] sm:$0xff]
    %v324 = vld [vmem:[%s1 + $0x948] sm:$0xff]
    %v325 = vld [vmem:[%s1 + $0x950] sm:$0xff]
    %v326 = vld [vmem:[%s1 + $0x958] sm:$0xff]
    %v327 = vld [vmem:[%s1 + $0x960] sm:$0xff]
    %v328 = vld [vmem:[%s1 + $0x968] sm:$0xff]
    %v329 = vld [vmem:[%s1 + $0x970] sm:$0xff]
    %v330 = vld [vmem:[%s1 + $0x978] sm:$0xff]
    %v331 = vld [vmem:[%s1 + $0x980] sm:$0xff]
    %v332 = vld [vmem:[%s1 + $0x988] sm:$0xff]
    %v333 = vld [vmem:[%s1 + $0x990] sm:$0xff]
    %v334 = vld [vmem:[%s1 + $0x998] sm:$0xff]
    %v335 = vld [vmem:[%s1 + $0x9a0] sm:$0xff]
    %v336 = vld [vmem:[%s1 + $0x9a8] sm:$0xff]
    %v337 = vld [vmem:[%s1 + $0x9b0] sm:$0xff]
    %v338 = vld [vmem:[%s1 + $0x9b8] sm:$0xff]
    %v339 = vld [vmem:[%s1 + $0x9c0] sm:$0xff]
    %v340 = vld [vmem:[%s1 + $0x9c8] sm:$0xff]
    %v341 = vld [vmem:[%s1 + $0x9d0] sm:$0xff]
    %v342 = vld [vmem:[%s1 + $0x9d8] sm:$0xff]
    %v343 = vld [vmem:[%s1 + $0x9e0] sm:$0xff]
    %v344 = vld [vmem:[%s1 + $0x9e8] sm:$0xff]
    %v345 = vld [vmem:[%s1 + $0x9f0] sm:$0xff]
    %v346 = vld [vmem:[%s1 + $0x9f8] sm:$0xff]
    %v347 = vld [vmem:[%s1 + $0xa00] sm:$0xff]
    %v348 = vld [vmem:[%s1 + $0xa08] sm:$0xff]
    %v349 = vld [vmem:[%s1 + $0xa10] sm:$0xff]
    %v350 = vld [vmem:[%s1 + $0xa18] sm:$0xff]
    %v351 = vld [vmem:[%s1 + $0xa20] sm:$0xff]
    %v352 = vld [vmem:[%s1 + $0xa28] sm:$0xff]
    %v353 = vld [vmem:[%s1 + $0xa30] sm:$0xff]
    %v354 = vld [vmem:[%s1 + $0xa38] sm:$0xff]
    %v355 = vld [vmem:[%s1 + $0xa40] sm:$0xff]
    %v356 = vld [vmem:[%s1 + $0xa48] sm:$0xff]
    %v357 = vld [vmem:[%s1 + $0xa50] sm:$0xff]
    %v358 = vld [vmem:[%s1 + $0xa58] sm:$0xff]
    %v359 = vld [vmem:[%s1 + $0xa60] sm:$0xff]
    %v360 = vld [vmem:[%s1 + $0xa68] sm:$0xff]
    %v361 = vld [vmem:[%s1 + $0xa70] sm:$0xff]
    %v362 = vld [vmem:[%s1 + $0xa78] sm:$0xff]
    %v363 = vld [vmem:[%s1 + $0xa80] sm:$0xff]
    %v364 = vld [vmem:[%s1 + $0xa88] sm:$0xff]
    %v365 = vld [vmem:[%s1 + $0xa90] sm:$0xff]
    %v366 = vld [vmem:[%s1 + $0xa98] sm:$0xff]
    %v367 = vld [vmem:[%s1 + $0xaa0] sm:$0xff]
    %v368 = vld [vmem:[%s1 + $0xaa8] sm:$0xff]
    %v369 = vld [vmem:[%s1 + $0xab0] sm:$0xff]
    %v370 = vld [vmem:[%s1 + $0xab8] sm:$0xff]
    %v371 = vld [vmem:[%s1 + $0xac0] sm:$0xff]
    %v372 = vld [vmem:[%s1 + $0xac8] sm:$0xff]
    %v373 = vld [vmem:[%s1 + $0xad0] sm:$0xff]
    %v374 = vld [vmem:[%s1 + $0xad8] sm:$0xff]
    %v375 = vld [vmem:[%s1 + $0xae0] sm:$0xff]
    %v376 = vld [vmem:[%s1 + $0xae8] sm:$0xff]
    %v377 = vld [vmem:[%s1 + $0xaf0] sm:$0xff]
    %v378 = vld [vmem:[%s1 + $0xaf8] sm:$0xff]
    %v379 = vld [vmem:[%s1 + $0xb00] sm:$0xff]
    %v380 = vld [vmem:[%s1 + $0xb08] sm:$0xff]
    %v381 = vld [vmem:[%s1 + $0xb10] sm:$0xff]
    %v382 = vld [vmem:[%s1 + $0xb18] sm:$0xff]
    %v383 = vld [vmem:[%s1 + $0xb20] sm:$0xff]
    %v384 = vld [vmem:[%s1 + $0xb28] sm:$0xff]
    %v385 = vld [vmem:[%s1 + $0xb30] sm:$0xff]
    %v386 = vld [vmem:[%s1 + $0xb38] sm:$0xff]
    %v387 = vld [vmem:[%s1 + $0xb40] sm:$0xff]
    %v388 = vld [vmem:[%s1 + $0xb48] sm:$0xff]
    %v389 = vld [vmem:[%s1 + $0xb50] sm:$0xff]
    %v390 = vld [vmem:[%s1 + $0xb58] sm:$0xff]
    %v391 = vld [vmem:[%s1 + $0xb60] sm:$0xff]
    %v392 = vld [vmem:[%s1 + $0xb68] sm:$0xff]
    %v393 = vld [vmem:[%s1 + $0xb70] sm:$0xff]
    %v394 = vld [vmem:[%s1 + $0xb78] sm:$0xff]
    %v395 = vld [vmem:[%s1 + $0xb80] sm:$0xff]
    %v396 = vld [vmem:[%s1 + $0xb88] sm:$0xff]
    %v397 = vld [vmem:[%s1 + $0xb90] sm:$0xff]
    %v398 = vld [vmem:[%s1 + $0xb98] sm:$0xff]
    %v399 = vld [vmem:[%s1 + $0xba0] sm:$0xff]
    %v400 = vld [vmem:[%s1 + $0xba8] sm:$0xff]
    %v401 = vld [vmem:[%s1 + $0xbb0] sm:$0xff]
    %v402 = vld [vmem:[%s1 + $0xbb8] sm:$0xff]
    %v403 = vld [vmem:[%s1 + $0xbc0] sm:$0xff]
    %v404 = vld [vmem:[%s1 + $0xbc8] sm:$0xff]
    %v405 = vld [vmem:[%s1 + $0xbd0] sm:$0xff]
    %v406 = vld [vmem:[%s1 + $0xbd8] sm:$0xff]
    %v407 = vld [vmem:[%s1 + $0xbe0] sm:$0xff]
    %v408 = vld [vmem:[%s1 + $0xbe8] sm:$0xff]
    %v409 = vld [vmem:[%s1 + $0xbf0] sm:$0xff]
    %v410 = vld [vmem:[%s1 + $0xbf8] sm:$0xff]
    %v411 = vld [vmem:[%s1 + $0xc00] sm:$0xff]
    %v412 = vld [vmem:[%s1 + $0xc08] sm:$0xff]
    %v413 = vld [vmem:[%s1 + $0xc10] sm:$0xff]
    %v414 = vld [vmem:[%s1 + $0xc18] sm:$0xff]
    %v415 = vld [vmem:[%s1 + $0xc20] sm:$0xff]
    %v416 = vld [vmem:[%s1 + $0xc28] sm:$0xff]
    %v417 = vld [vmem:[%s1 + $0xc30] sm:$0xff]
    %v418 = vld [vmem:[%s1 + $0xc38] sm:$0xff]
    %v419 = vld [vmem:[%s1 + $0xc40] sm:$0xff]
    %v420 = vld [vmem:[%s1 + $0xc48] sm:$0xff]
    %v421 = vld [vmem:[%s1 + $0xc50] sm:$0xff]
    %v422 = vld [vmem:[%s1 + $0xc58] sm:$0xff]
    %v423 = vld [vmem:[%s1 + $0xc60] sm:$0xff]
    %v424 = vld [vmem:[%s1 + $0xc68] sm:$0xff]
    %v425 = vld [vmem:[%s1 + $0xc70] sm:$0xff]
    %v426 = vld [vmem:[%s1 + $0xc78] sm:$0xff]
    %v427 = vld [vmem:[%s1 + $0xc80] sm:$0xff]
    %v428 = vld [vmem:[%s1 + $0xc88] sm:$0xff]
    %v429 = vld [vmem:[%s1 + $0xc90] sm:$0xff]
    %v430 = vld [vmem:[%s1 + $0xc98] sm:$0xff]
    %v431 = vld [vmem:[%s1 + $0xca0] sm:$0xff]
    %v432 = vld [vmem:[%s1 + $0xca8] sm:$0xff]
    %v433 = vld [vmem:[%s1 + $0xcb0] sm:$0xff]
    %v434 = vld [vmem:[%s1 + $0xcb8] sm:$0xff]
    %v435 = vld [vmem:[%s1 + $0xcc0] sm:$0xff]
    %v436 = vld [vmem:[%s1 + $0xcc8] sm:$0xff]
    %v437 = vld [vmem:[%s1 + $0xcd0] sm:$0xff]
    %v438 = vld [vmem:[%s1 + $0xcd8] sm:$0xff]
    %v439 = vld [vmem:[%s1 + $0xce0] sm:$0xff]
    %v440 = vld [vmem:[%s1 + $0xce8] sm:$0xff]
    %v441 = vld [vmem:[%s1 + $0xcf0] sm:$0xff]
    %v442 = vld [vmem:[%s1 + $0xcf8] sm:$0xff]
    %v443 = vld [vmem:[%s1 + $0xd00] sm:$0xff]
    %v444 = vld [vmem:[%s1 + $0xd08] sm:$0xff]
    %v445 = vld [vmem:[%s1 + $0xd10] sm:$0xff]
    %v446 = vld [vmem:[%s1 + $0xd18] sm:$0xff]
    %v447 = vld [vmem:[%s1 + $0xd20] sm:$0xff]
    %v448 = vld [vmem:[%s1 + $0xd28] sm:$0xff]
    %v449 = vld [vmem:[%s1 + $0xd30] sm:$0xff]
    %v450 = vld [vmem:[%s1 + $0xd38] sm:$0xff]
    %v451 = vld [vmem:[%s1 + $0xd40] sm:$0xff]
    %v452 = vld [vmem:[%s1 + $0xd48] sm:$0xff]
    %v453 = vld [vmem:[%s1 + $0xd50] sm:$0xff]
    %v454 = vld [vmem:[%s1 + $0xd58] sm:$0xff]
    %v455 = vld [vmem:[%s1 + $0xd60] sm:$0xff]
    %v456 = vld [vmem:[%s1 + $0xd68] sm:$0xff]
    %v457 = vld [vmem:[%s1 + $0xd70] sm:$0xff]
    %v458 = vld [vmem:[%s1 + $0xd78] sm:$0xff]
    %v459 = vld [vmem:[%s1 + $0xd80] sm:$0xff]
    %v460 = vld [vmem:[%s1 + $0xd88] sm:$0xff]
    %v461 = vld [vmem:[%s1 + $0xd90] sm:$0xff]
    %v462 = vld [vmem:[%s1 + $0xd98] sm:$0xff]
    %v463 = vld [vmem:[%s1 + $0xda0] sm:$0xff]
    %v464 = vld [vmem:[%s1 + $0xda8] sm:$0xff]
    %v465 = vld [vmem:[%s1 + $0xdb0] sm:$0xff]
    %v466 = vld [vmem:[%s1 + $0xdb8] sm:$0xff]
    %v467 = vld [vmem:[%s1 + $0xdc0] sm:$0xff]
    %v468 = vld [vmem:[%s1 + $0xdc8] sm:$0xff]
    %v469 = vld [vmem:[%s1 + $0xdd0] sm:$0xff]
    %v470 = vld [vmem:[%s1 + $0xdd8] sm:$0xff]
    %v471 = vld [vmem:[%s1 + $0xde0] sm:$0xff]
    %v472 = vld [vmem:[%s1 + $0xde8] sm:$0xff]
    %v473 = vld [vmem:[%s1 + $0xdf0] sm:$0xff]
    %v474 = vld [vmem:[%s1 + $0xdf8] sm:$0xff]
    %v475 = vld [vmem:[%s1 + $0xe00] sm:$0xff]
    %v476 = vld [vmem:[%s1 + $0xe08] sm:$0xff]
    %v477 = vld [vmem:[%s1 + $0xe10] sm:$0xff]
    %v478 = vld [vmem:[%s1 + $0xe18] sm:$0xff]
    %v479 = vld [vmem:[%s1 + $0xe20] sm:$0xff]
    %v480 = vld [vmem:[%s1 + $0xe28] sm:$0xff]
    %v481 = vld [vmem:[%s1 + $0xe30] sm:$0xff]
    %v482 = vld [vmem:[%s1 + $0xe38] sm:$0xff]
    %v483 = vld [vmem:[%s1 + $0xe40] sm:$0xff]
    %v484 = vld [vmem:[%s1 + $0xe48] sm:$0xff]
    %v485 = vld [vmem:[%s1 + $0xe50] sm:$0xff]
    %v486 = vld [vmem:[%s1 + $0xe58] sm:$0xff]
    %v487 = vld [vmem:[%s1 + $0xe60] sm:$0xff]
    %v488 = vld [vmem:[%s1 + $0xe68] sm:$0xff]
    %v489 = vld [vmem:[%s1 + $0xe70] sm:$0xff]
    %v490 = vld [vmem:[%s1 + $0xe78] sm:$0xff]
    %v491 = vld [vmem:[%s1 + $0xe80] sm:$0xff]
    %v492 = vld [vmem:[%s1 + $0xe88] sm:$0xff]
    %v493 = vld [vmem:[%s1 + $0xe90] sm:$0xff]
    %v494 = vld [vmem:[%s1 + $0xe98] sm:$0xff]
    %v495 = vld [vmem:[%s1 + $0xea0] sm:$0xff]
    %v496 = vld [vmem:[%s1 + $0xea8] sm:$0xff]
    %v497 = vld [vmem:[%s1 + $0xeb0] sm:$0xff]
    %v498 = vld [vmem:[%s1 + $0xeb8] sm:$0xff]
    %v499 = vld [vmem:[%s1 + $0xec0] sm:$0xff]
    %v500 = vld [vmem:[%s1 + $0xec8] sm:$0xff]
    %v501 = vld [vmem:[%s1 + $0xed0] sm:$0xff]
    %v502 = vld [vmem:[%s1 + $0xed8] sm:$0xff]
    %v503 = vld [vmem:[%s1 + $0xee0] sm:$0xff]
    %v504 = vld [vmem:[%s1 + $0xee8] sm:$0xff]
    %v505 = vld [vmem:[%s1 + $0xef0] sm:$0xff]
    %v506 = vld [vmem:[%s1 + $0xef8] sm:$0xff]
    %v507 = vld [vmem:[%s1 + $0xf00] sm:$0xff]
    %v508 = vld [vmem:[%s1 + $0xf08] sm:$0xff]
    %v509 = vld [vmem:[%s1 + $0xf10] sm:$0xff]
    %v510 = vld [vmem:[%s1 + $0xf18] sm:$0xff]
    %v511 = vld [vmem:[%s1 + $0xf20] sm:$0xff]
    %v512 = vld [vmem:[%s1 + $0xf28] sm:$0xff]
    %v513 = vld [vmem:[%s1 + $0xf30] sm:$0xff]
    %v514 = vld [vmem:[%s1 + $0xf38] sm:$0xff]
    %v515 = vld [vmem:[%s1 + $0xf40] sm:$0xff]
    %v516 = vld [vmem:[%s1 + $0xf48] sm:$0xff]
    %v517 = vld [vmem:[%s1 + $0xf50] sm:$0xff]
    %v518 = vld [vmem:[%s1 + $0xf58] sm:$0xff]
    %v519 = vld [vmem:[%s1 + $0xf60] sm:$0xff]
    %v520 = vld [vmem:[%s1 + $0xf68] sm:$0xff]
    %v521 = vld [vmem:[%s1 + $0xf70] sm:$0xff]
    %v522 = vld [vmem:[%s1 + $0xf78] sm:$0xff]
    %v523 = vld [vmem:[%s1 + $0xf80] sm:$0xff]
    %v524 = vld [vmem:[%s1 + $0xf88] sm:$0xff]
    %v525 = vld [vmem:[%s1 + $0xf90] sm:$0xff]
    %v526 = vld [vmem:[%s1 + $0xf98] sm:$0xff]
    %v527 = vld [vmem:[%s1 + $0xfa0] sm:$0xff]
    %v528 = vld [vmem:[%s1 + $0xfa8] sm:$0xff]
    %v529 = vld [vmem:[%s1 + $0xfb0] sm:$0xff]
    %v530 = vld [vmem:[%s1 + $0xfb8] sm:$0xff]
    %v531 = vld [vmem:[%s1 + $0xfc0] sm:$0xff]
    %v532 = vld [vmem:[%s1 + $0xfc8] sm:$0xff]
    %v533 = vld [vmem:[%s1 + $0xfd0] sm:$0xff]
    %v534 = vld [vmem:[%s1 + $0xfd8] sm:$0xff]
    %v535 = vld [vmem:[%s1 + $0xfe0] sm:$0xff]
    %v536 = vld [vmem:[%s1 + $0xfe8] sm:$0xff]
    %v537 = vld [vmem:[%s1 + $0xff0] sm:$0xff]
    %v538 = vld [vmem:[%s1 + $0xff8] sm:$0xff]
    %v1051 = vunpack.c.l.b16 %v27
    %v1052 = vunpack.c.h.b16 %v27
    %v1053 = vunpack.c.l.b16 %v28
    %v1054 = vunpack.c.h.b16 %v28
    %v1055 = vunpack.c.l.b16 %v29
    %v1056 = vunpack.c.h.b16 %v29
    %v1057 = vunpack.c.l.b16 %v30
    %v1058 = vunpack.c.h.b16 %v30
    %v1059 = vunpack.c.l.b16 %v31
    %v1060 = vunpack.c.h.b16 %v31
    %v1061 = vunpack.c.l.b16 %v32
    %v1062 = vunpack.c.h.b16 %v32
    %v1063 = vunpack.c.l.b16 %v33
    %v1064 = vunpack.c.h.b16 %v33
    %v1065 = vunpack.c.l.b16 %v34
    %v1066 = vunpack.c.h.b16 %v34
    %v1067 = vunpack.c.l.b16 %v35
    %v1068 = vunpack.c.h.b16 %v35
    %v1069 = vunpack.c.l.b16 %v36
    %v1070 = vunpack.c.h.b16 %v36
    %v1071 = vunpack.c.l.b16 %v37
    %v1072 = vunpack.c.h.b16 %v37
    %v1073 = vunpack.c.l.b16 %v38
    %v1074 = vunpack.c.h.b16 %v38
    %v1075 = vunpack.c.l.b16 %v39
    %v1076 = vunpack.c.h.b16 %v39
    %v1077 = vunpack.c.l.b16 %v40
    %v1078 = vunpack.c.h.b16 %v40
    %v1079 = vunpack.c.l.b16 %v41
    %v1080 = vunpack.c.h.b16 %v41
    %v1081 = vunpack.c.l.b16 %v42
    %v1082 = vunpack.c.h.b16 %v42
    %v1083 = vunpack.c.l.b16 %v43
    %v1084 = vunpack.c.h.b16 %v43
    %v1085 = vunpack.c.l.b16 %v44
    %v1086 = vunpack.c.h.b16 %v44
    %v1087 = vunpack.c.l.b16 %v45
    %v1088 = vunpack.c.h.b16 %v45
    %v1089 = vunpack.c.l.b16 %v46
    %v1090 = vunpack.c.h.b16 %v46
    %v1091 = vunpack.c.l.b16 %v47
    %v1092 = vunpack.c.h.b16 %v47
    %v1093 = vunpack.c.l.b16 %v48
    %v1094 = vunpack.c.h.b16 %v48
    %v1095 = vunpack.c.l.b16 %v49
    %v1096 = vunpack.c.h.b16 %v49
    %v1097 = vunpack.c.l.b16 %v50
    %v1098 = vunpack.c.h.b16 %v50
    %v1099 = vunpack.c.l.b16 %v51
    %v1100 = vunpack.c.h.b16 %v51
    %v1101 = vunpack.c.l.b16 %v52
    %v1102 = vunpack.c.h.b16 %v52
    %v1103 = vunpack.c.l.b16 %v53
    %v1104 = vunpack.c.h.b16 %v53
    %v1105 = vunpack.c.l.b16 %v54
    %v1106 = vunpack.c.h.b16 %v54
    %v1107 = vunpack.c.l.b16 %v55
    %v1108 = vunpack.c.h.b16 %v55
    %v1109 = vunpack.c.l.b16 %v56
    %v1110 = vunpack.c.h.b16 %v56
    %v1111 = vunpack.c.l.b16 %v57
    %v1112 = vunpack.c.h.b16 %v57
    %v1113 = vunpack.c.l.b16 %v58
    %v1114 = vunpack.c.h.b16 %v58
    %v1115 = vunpack.c.l.b16 %v59
    %v1116 = vunpack.c.h.b16 %v59
    %v1117 = vunpack.c.l.b16 %v60
    %v1118 = vunpack.c.h.b16 %v60
    %v1119 = vunpack.c.l.b16 %v61
    %v1120 = vunpack.c.h.b16 %v61
    %v1121 = vunpack.c.l.b16 %v62
    %v1122 = vunpack.c.h.b16 %v62
    %v1123 = vunpack.c.l.b16 %v63
    %v1124 = vunpack.c.h.b16 %v63
    %v1125 = vunpack.c.l.b16 %v64
    %v1126 = vunpack.c.h.b16 %v64
    %v1127 = vunpack.c.l.b16 %v65
    %v1128 = vunpack.c.h.b16 %v65
    %v1129 = vunpack.c.l.b16 %v66
    %v1130 = vunpack.c.h.b16 %v66
    %v1131 = vunpack.c.l.b16 %v67
    %v1132 = vunpack.c.h.b16 %v67
    %v1133 = vunpack.c.l.b16 %v68
    %v1134 = vunpack.c.h.b16 %v68
    %v1135 = vunpack.c.l.b16 %v69
    %v1136 = vunpack.c.h.b16 %v69
    %v1137 = vunpack.c.l.b16 %v70
    %v1138 = vunpack.c.h.b16 %v70
    %v1139 = vunpack.c.l.b16 %v71
    %v1140 = vunpack.c.h.b16 %v71
    %v1141 = vunpack.c.l.b16 %v72
    %v1142 = vunpack.c.h.b16 %v72
    %v1143 = vunpack.c.l.b16 %v73
    %v1144 = vunpack.c.h.b16 %v73
    %v1145 = vunpack.c.l.b16 %v74
    %v1146 = vunpack.c.h.b16 %v74
    %v1147 = vunpack.c.l.b16 %v75
    %v1148 = vunpack.c.h.b16 %v75
    %v1149 = vunpack.c.l.b16 %v76
    %v1150 = vunpack.c.h.b16 %v76
    %v1151 = vunpack.c.l.b16 %v77
    %v1152 = vunpack.c.h.b16 %v77
    %v1153 = vunpack.c.l.b16 %v78
    %v1154 = vunpack.c.h.b16 %v78
    %v1155 = vunpack.c.l.b16 %v79
    %v1156 = vunpack.c.h.b16 %v79
    %v1157 = vunpack.c.l.b16 %v80
    %v1158 = vunpack.c.h.b16 %v80
    %v1159 = vunpack.c.l.b16 %v81
    %v1160 = vunpack.c.h.b16 %v81
    %v1161 = vunpack.c.l.b16 %v82
    %v1162 = vunpack.c.h.b16 %v82
    %v1163 = vunpack.c.l.b16 %v83
    %v1164 = vunpack.c.h.b16 %v83
    %v1165 = vunpack.c.l.b16 %v84
    %v1166 = vunpack.c.h.b16 %v84
    %v1167 = vunpack.c.l.b16 %v85
    %v1168 = vunpack.c.h.b16 %v85
    %v1169 = vunpack.c.l.b16 %v86
    %v1170 = vunpack.c.h.b16 %v86
    %v1171 = vunpack.c.l.b16 %v87
    %v1172 = vunpack.c.h.b16 %v87
    %v1173 = vunpack.c.l.b16 %v88
    %v1174 = vunpack.c.h.b16 %v88
    %v1175 = vunpack.c.l.b16 %v89
    %v1176 = vunpack.c.h.b16 %v89
    %v1177 = vunpack.c.l.b16 %v90
    %v1178 = vunpack.c.h.b16 %v90
    %v1179 = vunpack.c.l.b16 %v91
    %v1180 = vunpack.c.h.b16 %v91
    %v1181 = vunpack.c.l.b16 %v92
    %v1182 = vunpack.c.h.b16 %v92
    %v1183 = vunpack.c.l.b16 %v93
    %v1184 = vunpack.c.h.b16 %v93
    %v1185 = vunpack.c.l.b16 %v94
    %v1186 = vunpack.c.h.b16 %v94
    %v1187 = vunpack.c.l.b16 %v95
    %v1188 = vunpack.c.h.b16 %v95
    %v1189 = vunpack.c.l.b16 %v96
    %v1190 = vunpack.c.h.b16 %v96
    %v1191 = vunpack.c.l.b16 %v97
    %v1192 = vunpack.c.h.b16 %v97
    %v1193 = vunpack.c.l.b16 %v98
    %v1194 = vunpack.c.h.b16 %v98
    %v1195 = vunpack.c.l.b16 %v99
    %v1196 = vunpack.c.h.b16 %v99
    %v1197 = vunpack.c.l.b16 %v100
    %v1198 = vunpack.c.h.b16 %v100
    %v1199 = vunpack.c.l.b16 %v101
    %v1200 = vunpack.c.h.b16 %v101
    %v1201 = vunpack.c.l.b16 %v102
    %v1202 = vunpack.c.h.b16 %v102
    %v1203 = vunpack.c.l.b16 %v103
    %v1204 = vunpack.c.h.b16 %v103
    %v1205 = vunpack.c.l.b16 %v104
    %v1206 = vunpack.c.h.b16 %v104
    %v1207 = vunpack.c.l.b16 %v105
    %v1208 = vunpack.c.h.b16 %v105
    %v1209 = vunpack.c.l.b16 %v106
    %v1210 = vunpack.c.h.b16 %v106
    %v1211 = vunpack.c.l.b16 %v107
    %v1212 = vunpack.c.h.b16 %v107
    %v1213 = vunpack.c.l.b16 %v108
    %v1214 = vunpack.c.h.b16 %v108
    %v1215 = vunpack.c.l.b16 %v109
    %v1216 = vunpack.c.h.b16 %v109
    %v1217 = vunpack.c.l.b16 %v110
    %v1218 = vunpack.c.h.b16 %v110
    %v1219 = vunpack.c.l.b16 %v111
    %v1220 = vunpack.c.h.b16 %v111
    %v1221 = vunpack.c.l.b16 %v112
    %v1222 = vunpack.c.h.b16 %v112
    %v1223 = vunpack.c.l.b16 %v113
    %v1224 = vunpack.c.h.b16 %v113
    %v1225 = vunpack.c.l.b16 %v114
    %v1226 = vunpack.c.h.b16 %v114
    %v1227 = vunpack.c.l.b16 %v115
    %v1228 = vunpack.c.h.b16 %v115
    %v1229 = vunpack.c.l.b16 %v116
    %v1230 = vunpack.c.h.b16 %v116
    %v1231 = vunpack.c.l.b16 %v117
    %v1232 = vunpack.c.h.b16 %v117
    %v1233 = vunpack.c.l.b16 %v118
    %v1234 = vunpack.c.h.b16 %v118
    %v1235 = vunpack.c.l.b16 %v119
    %v1236 = vunpack.c.h.b16 %v119
    %v1237 = vunpack.c.l.b16 %v120
    %v1238 = vunpack.c.h.b16 %v120
    %v1239 = vunpack.c.l.b16 %v121
    %v1240 = vunpack.c.h.b16 %v121
    %v1241 = vunpack.c.l.b16 %v122
    %v1242 = vunpack.c.h.b16 %v122
    %v1243 = vunpack.c.l.b16 %v123
    %v1244 = vunpack.c.h.b16 %v123
    %v1245 = vunpack.c.l.b16 %v124
    %v1246 = vunpack.c.h.b16 %v124
    %v1247 = vunpack.c.l.b16 %v125
    %v1248 = vunpack.c.h.b16 %v125
    %v1249 = vunpack.c.l.b16 %v126
    %v1250 = vunpack.c.h.b16 %v126
    %v1251 = vunpack.c.l.b16 %v127
    %v1252 = vunpack.c.h.b16 %v127
    %v1253 = vunpack.c.l.b16 %v128
    %v1254 = vunpack.c.h.b16 %v128
    %v1255 = vunpack.c.l.b16 %v129
    %v1256 = vunpack.c.h.b16 %v129
    %v1257 = vunpack.c.l.b16 %v130
    %v1258 = vunpack.c.h.b16 %v130
    %v1259 = vunpack.c.l.b16 %v131
    %v1260 = vunpack.c.h.b16 %v131
    %v1261 = vunpack.c.l.b16 %v132
    %v1262 = vunpack.c.h.b16 %v132
    %v1263 = vunpack.c.l.b16 %v133
    %v1264 = vunpack.c.h.b16 %v133
    %v1265 = vunpack.c.l.b16 %v134
    %v1266 = vunpack.c.h.b16 %v134
    %v1267 = vunpack.c.l.b16 %v135
    %v1268 = vunpack.c.h.b16 %v135
    %v1269 = vunpack.c.l.b16 %v136
    %v1270 = vunpack.c.h.b16 %v136
    %v1271 = vunpack.c.l.b16 %v137
    %v1272 = vunpack.c.h.b16 %v137
    %v1273 = vunpack.c.l.b16 %v138
    %v1274 = vunpack.c.h.b16 %v138
    %v1275 = vunpack.c.l.b16 %v139
    %v1276 = vunpack.c.h.b16 %v139
    %v1277 = vunpack.c.l.b16 %v140
    %v1278 = vunpack.c.h.b16 %v140
    %v1279 = vunpack.c.l.b16 %v141
    %v1280 = vunpack.c.h.b16 %v141
    %v1281 = vunpack.c.l.b16 %v142
    %v1282 = vunpack.c.h.b16 %v142
    %v1283 = vunpack.c.l.b16 %v143
    %v1284 = vunpack.c.h.b16 %v143
    %v1285 = vunpack.c.l.b16 %v144
    %v1286 = vunpack.c.h.b16 %v144
    %v1287 = vunpack.c.l.b16 %v145
    %v1288 = vunpack.c.h.b16 %v145
    %v1289 = vunpack.c.l.b16 %v146
    %v1290 = vunpack.c.h.b16 %v146
    %v1291 = vunpack.c.l.b16 %v147
    %v1292 = vunpack.c.h.b16 %v147
    %v1293 = vunpack.c.l.b16 %v148
    %v1294 = vunpack.c.h.b16 %v148
    %v1295 = vunpack.c.l.b16 %v149
    %v1296 = vunpack.c.h.b16 %v149
    %v1297 = vunpack.c.l.b16 %v150
    %v1298 = vunpack.c.h.b16 %v150
    %v1299 = vunpack.c.l.b16 %v151
    %v1300 = vunpack.c.h.b16 %v151
    %v1301 = vunpack.c.l.b16 %v152
    %v1302 = vunpack.c.h.b16 %v152
    %v1303 = vunpack.c.l.b16 %v153
    %v1304 = vunpack.c.h.b16 %v153
    %v1305 = vunpack.c.l.b16 %v154
    %v1306 = vunpack.c.h.b16 %v154
    %v1307 = vunpack.c.l.b16 %v155
    %v1308 = vunpack.c.h.b16 %v155
    %v1309 = vunpack.c.l.b16 %v156
    %v1310 = vunpack.c.h.b16 %v156
    %v1311 = vunpack.c.l.b16 %v157
    %v1312 = vunpack.c.h.b16 %v157
    %v1313 = vunpack.c.l.b16 %v158
    %v1314 = vunpack.c.h.b16 %v158
    %v1315 = vunpack.c.l.b16 %v159
    %v1316 = vunpack.c.h.b16 %v159
    %v1317 = vunpack.c.l.b16 %v160
    %v1318 = vunpack.c.h.b16 %v160
    %v1319 = vunpack.c.l.b16 %v161
    %v1320 = vunpack.c.h.b16 %v161
    %v1321 = vunpack.c.l.b16 %v162
    %v1322 = vunpack.c.h.b16 %v162
    %v1323 = vunpack.c.l.b16 %v163
    %v1324 = vunpack.c.h.b16 %v163
    %v1325 = vunpack.c.l.b16 %v164
    %v1326 = vunpack.c.h.b16 %v164
    %v1327 = vunpack.c.l.b16 %v165
    %v1328 = vunpack.c.h.b16 %v165
    %v1329 = vunpack.c.l.b16 %v166
    %v1330 = vunpack.c.h.b16 %v166
    %v1331 = vunpack.c.l.b16 %v167
    %v1332 = vunpack.c.h.b16 %v167
    %v1333 = vunpack.c.l.b16 %v168
    %v1334 = vunpack.c.h.b16 %v168
    %v1335 = vunpack.c.l.b16 %v169
    %v1336 = vunpack.c.h.b16 %v169
    %v1337 = vunpack.c.l.b16 %v170
    %v1338 = vunpack.c.h.b16 %v170
    %v1339 = vunpack.c.l.b16 %v171
    %v1340 = vunpack.c.h.b16 %v171
    %v1341 = vunpack.c.l.b16 %v172
    %v1342 = vunpack.c.h.b16 %v172
    %v1343 = vunpack.c.l.b16 %v173
    %v1344 = vunpack.c.h.b16 %v173
    %v1345 = vunpack.c.l.b16 %v174
    %v1346 = vunpack.c.h.b16 %v174
    %v1347 = vunpack.c.l.b16 %v175
    %v1348 = vunpack.c.h.b16 %v175
    %v1349 = vunpack.c.l.b16 %v176
    %v1350 = vunpack.c.h.b16 %v176
    %v1351 = vunpack.c.l.b16 %v177
    %v1352 = vunpack.c.h.b16 %v177
    %v1353 = vunpack.c.l.b16 %v178
    %v1354 = vunpack.c.h.b16 %v178
    %v1355 = vunpack.c.l.b16 %v179
    %v1356 = vunpack.c.h.b16 %v179
    %v1357 = vunpack.c.l.b16 %v180
    %v1358 = vunpack.c.h.b16 %v180
    %v1359 = vunpack.c.l.b16 %v181
    %v1360 = vunpack.c.h.b16 %v181
    %v1361 = vunpack.c.l.b16 %v182
    %v1362 = vunpack.c.h.b16 %v182
    %v1363 = vunpack.c.l.b16 %v183
    %v1364 = vunpack.c.h.b16 %v183
    %v1365 = vunpack.c.l.b16 %v184
    %v1366 = vunpack.c.h.b16 %v184
    %v1367 = vunpack.c.l.b16 %v185
    %v1368 = vunpack.c.h.b16 %v185
    %v1369 = vunpack.c.l.b16 %v186
    %v1370 = vunpack.c.h.b16 %v186
    %v1371 = vunpack.c.l.b16 %v187
    %v1372 = vunpack.c.h.b16 %v187
    %v1373 = vunpack.c.l.b16 %v188
    %v1374 = vunpack.c.h.b16 %v188
    %v1375 = vunpack.c.l.b16 %v189
    %v1376 = vunpack.c.h.b16 %v189
    %v1377 = vunpack.c.l.b16 %v190
    %v1378 = vunpack.c.h.b16 %v190
    %v1379 = vunpack.c.l.b16 %v191
    %v1380 = vunpack.c.h.b16 %v191
    %v1381 = vunpack.c.l.b16 %v192
    %v1382 = vunpack.c.h.b16 %v192
    %v1383 = vunpack.c.l.b16 %v193
    %v1384 = vunpack.c.h.b16 %v193
    %v1385 = vunpack.c.l.b16 %v194
    %v1386 = vunpack.c.h.b16 %v194
    %v1387 = vunpack.c.l.b16 %v195
    %v1388 = vunpack.c.h.b16 %v195
    %v1389 = vunpack.c.l.b16 %v196
    %v1390 = vunpack.c.h.b16 %v196
    %v1391 = vunpack.c.l.b16 %v197
    %v1392 = vunpack.c.h.b16 %v197
    %v1393 = vunpack.c.l.b16 %v198
    %v1394 = vunpack.c.h.b16 %v198
    %v1395 = vunpack.c.l.b16 %v199
    %v1396 = vunpack.c.h.b16 %v199
    %v1397 = vunpack.c.l.b16 %v200
    %v1398 = vunpack.c.h.b16 %v200
    %v1399 = vunpack.c.l.b16 %v201
    %v1400 = vunpack.c.h.b16 %v201
    %v1401 = vunpack.c.l.b16 %v202
    %v1402 = vunpack.c.h.b16 %v202
    %v1403 = vunpack.c.l.b16 %v203
    %v1404 = vunpack.c.h.b16 %v203
    %v1405 = vunpack.c.l.b16 %v204
    %v1406 = vunpack.c.h.b16 %v204
    %v1407 = vunpack.c.l.b16 %v205
    %v1408 = vunpack.c.h.b16 %v205
    %v1409 = vunpack.c.l.b16 %v206
    %v1410 = vunpack.c.h.b16 %v206
    %v1411 = vunpack.c.l.b16 %v207
    %v1412 = vunpack.c.h.b16 %v207
    %v1413 = vunpack.c.l.b16 %v208
    %v1414 = vunpack.c.h.b16 %v208
    %v1415 = vunpack.c.l.b16 %v209
    %v1416 = vunpack.c.h.b16 %v209
    %v1417 = vunpack.c.l.b16 %v210
    %v1418 = vunpack.c.h.b16 %v210
    %v1419 = vunpack.c.l.b16 %v211
    %v1420 = vunpack.c.h.b16 %v211
    %v1421 = vunpack.c.l.b16 %v212
    %v1422 = vunpack.c.h.b16 %v212
    %v1423 = vunpack.c.l.b16 %v213
    %v1424 = vunpack.c.h.b16 %v213
    %v1425 = vunpack.c.l.b16 %v214
    %v1426 = vunpack.c.h.b16 %v214
    %v1427 = vunpack.c.l.b16 %v215
    %v1428 = vunpack.c.h.b16 %v215
    %v1429 = vunpack.c.l.b16 %v216
    %v1430 = vunpack.c.h.b16 %v216
    %v1431 = vunpack.c.l.b16 %v217
    %v1432 = vunpack.c.h.b16 %v217
    %v1433 = vunpack.c.l.b16 %v218
    %v1434 = vunpack.c.h.b16 %v218
    %v1435 = vunpack.c.l.b16 %v219
    %v1436 = vunpack.c.h.b16 %v219
    %v1437 = vunpack.c.l.b16 %v220
    %v1438 = vunpack.c.h.b16 %v220
    %v1439 = vunpack.c.l.b16 %v221
    %v1440 = vunpack.c.h.b16 %v221
    %v1441 = vunpack.c.l.b16 %v222
    %v1442 = vunpack.c.h.b16 %v222
    %v1443 = vunpack.c.l.b16 %v223
    %v1444 = vunpack.c.h.b16 %v223
    %v1445 = vunpack.c.l.b16 %v224
    %v1446 = vunpack.c.h.b16 %v224
    %v1447 = vunpack.c.l.b16 %v225
    %v1448 = vunpack.c.h.b16 %v225
    %v1449 = vunpack.c.l.b16 %v226
    %v1450 = vunpack.c.h.b16 %v226
    %v1451 = vunpack.c.l.b16 %v227
    %v1452 = vunpack.c.h.b16 %v227
    %v1453 = vunpack.c.l.b16 %v228
    %v1454 = vunpack.c.h.b16 %v228
    %v1455 = vunpack.c.l.b16 %v229
    %v1456 = vunpack.c.h.b16 %v229
    %v1457 = vunpack.c.l.b16 %v230
    %v1458 = vunpack.c.h.b16 %v230
    %v1459 = vunpack.c.l.b16 %v231
    %v1460 = vunpack.c.h.b16 %v231
    %v1461 = vunpack.c.l.b16 %v232
    %v1462 = vunpack.c.h.b16 %v232
    %v1463 = vunpack.c.l.b16 %v233
    %v1464 = vunpack.c.h.b16 %v233
    %v1465 = vunpack.c.l.b16 %v234
    %v1466 = vunpack.c.h.b16 %v234
    %v1467 = vunpack.c.l.b16 %v235
    %v1468 = vunpack.c.h.b16 %v235
    %v1469 = vunpack.c.l.b16 %v236
    %v1470 = vunpack.c.h.b16 %v236
    %v1471 = vunpack.c.l.b16 %v237
    %v1472 = vunpack.c.h.b16 %v237
    %v1473 = vunpack.c.l.b16 %v238
    %v1474 = vunpack.c.h.b16 %v238
    %v1475 = vunpack.c.l.b16 %v239
    %v1476 = vunpack.c.h.b16 %v239
    %v1477 = vunpack.c.l.b16 %v240
    %v1478 = vunpack.c.h.b16 %v240
    %v1479 = vunpack.c.l.b16 %v241
    %v1480 = vunpack.c.h.b16 %v241
    %v1481 = vunpack.c.l.b16 %v242
    %v1482 = vunpack.c.h.b16 %v242
    %v1483 = vunpack.c.l.b16 %v243
    %v1484 = vunpack.c.h.b16 %v243
    %v1485 = vunpack.c.l.b16 %v244
    %v1486 = vunpack.c.h.b16 %v244
    %v1487 = vunpack.c.l.b16 %v245
    %v1488 = vunpack.c.h.b16 %v245
    %v1489 = vunpack.c.l.b16 %v246
    %v1490 = vunpack.c.h.b16 %v246
    %v1491 = vunpack.c.l.b16 %v247
    %v1492 = vunpack.c.h.b16 %v247
    %v1493 = vunpack.c.l.b16 %v248
    %v1494 = vunpack.c.h.b16 %v248
    %v1495 = vunpack.c.l.b16 %v249
    %v1496 = vunpack.c.h.b16 %v249
    %v1497 = vunpack.c.l.b16 %v250
    %v1498 = vunpack.c.h.b16 %v250
    %v1499 = vunpack.c.l.b16 %v251
    %v1500 = vunpack.c.h.b16 %v251
    %v1501 = vunpack.c.l.b16 %v252
    %v1502 = vunpack.c.h.b16 %v252
    %v1503 = vunpack.c.l.b16 %v253
    %v1504 = vunpack.c.h.b16 %v253
    %v1505 = vunpack.c.l.b16 %v254
    %v1506 = vunpack.c.h.b16 %v254
    %v1507 = vunpack.c.l.b16 %v255
    %v1508 = vunpack.c.h.b16 %v255
    %v1509 = vunpack.c.l.b16 %v256
    %v1510 = vunpack.c.h.b16 %v256
    %v1511 = vunpack.c.l.b16 %v257
    %v1512 = vunpack.c.h.b16 %v257
    %v1513 = vunpack.c.l.b16 %v258
    %v1514 = vunpack.c.h.b16 %v258
    %v1515 = vunpack.c.l.b16 %v259
    %v1516 = vunpack.c.h.b16 %v259
    %v1517 = vunpack.c.l.b16 %v260
    %v1518 = vunpack.c.h.b16 %v260
    %v1519 = vunpack.c.l.b16 %v261
    %v1520 = vunpack.c.h.b16 %v261
    %v1521 = vunpack.c.l.b16 %v262
    %v1522 = vunpack.c.h.b16 %v262
    %v1523 = vunpack.c.l.b16 %v263
    %v1524 = vunpack.c.h.b16 %v263
    %v1525 = vunpack.c.l.b16 %v264
    %v1526 = vunpack.c.h.b16 %v264
    %v1527 = vunpack.c.l.b16 %v265
    %v1528 = vunpack.c.h.b16 %v265
    %v1529 = vunpack.c.l.b16 %v266
    %v1530 = vunpack.c.h.b16 %v266
    %v1531 = vunpack.c.l.b16 %v267
    %v1532 = vunpack.c.h.b16 %v267
    %v1533 = vunpack.c.l.b16 %v268
    %v1534 = vunpack.c.h.b16 %v268
    %v1535 = vunpack.c.l.b16 %v269
    %v1536 = vunpack.c.h.b16 %v269
    %v1537 = vunpack.c.l.b16 %v270
    %v1538 = vunpack.c.h.b16 %v270
    %v1539 = vunpack.c.l.b16 %v271
    %v1540 = vunpack.c.h.b16 %v271
    %v1541 = vunpack.c.l.b16 %v272
    %v1542 = vunpack.c.h.b16 %v272
    %v1543 = vunpack.c.l.b16 %v273
    %v1544 = vunpack.c.h.b16 %v273
    %v1545 = vunpack.c.l.b16 %v274
    %v1546 = vunpack.c.h.b16 %v274
    %v1547 = vunpack.c.l.b16 %v275
    %v1548 = vunpack.c.h.b16 %v275
    %v1549 = vunpack.c.l.b16 %v276
    %v1550 = vunpack.c.h.b16 %v276
    %v1551 = vunpack.c.l.b16 %v277
    %v1552 = vunpack.c.h.b16 %v277
    %v1553 = vunpack.c.l.b16 %v278
    %v1554 = vunpack.c.h.b16 %v278
    %v1555 = vunpack.c.l.b16 %v279
    %v1556 = vunpack.c.h.b16 %v279
    %v1557 = vunpack.c.l.b16 %v280
    %v1558 = vunpack.c.h.b16 %v280
    %v1559 = vunpack.c.l.b16 %v281
    %v1560 = vunpack.c.h.b16 %v281
    %v1561 = vunpack.c.l.b16 %v282
    %v1562 = vunpack.c.h.b16 %v282
    %v1563 = vunpack.c.l.b16 %v283
    %v1564 = vunpack.c.h.b16 %v283
    %v1565 = vunpack.c.l.b16 %v284
    %v1566 = vunpack.c.h.b16 %v284
    %v1567 = vunpack.c.l.b16 %v285
    %v1568 = vunpack.c.h.b16 %v285
    %v1569 = vunpack.c.l.b16 %v286
    %v1570 = vunpack.c.h.b16 %v286
    %v1571 = vunpack.c.l.b16 %v287
    %v1572 = vunpack.c.h.b16 %v287
    %v1573 = vunpack.c.l.b16 %v288
    %v1574 = vunpack.c.h.b16 %v288
    %v1575 = vunpack.c.l.b16 %v289
    %v1576 = vunpack.c.h.b16 %v289
    %v1577 = vunpack.c.l.b16 %v290
    %v1578 = vunpack.c.h.b16 %v290
    %v1579 = vunpack.c.l.b16 %v291
    %v1580 = vunpack.c.h.b16 %v291
    %v1581 = vunpack.c.l.b16 %v292
    %v1582 = vunpack.c.h.b16 %v292
    %v1583 = vunpack.c.l.b16 %v293
    %v1584 = vunpack.c.h.b16 %v293
    %v1585 = vunpack.c.l.b16 %v294
    %v1586 = vunpack.c.h.b16 %v294
    %v1587 = vunpack.c.l.b16 %v295
    %v1588 = vunpack.c.h.b16 %v295
    %v1589 = vunpack.c.l.b16 %v296
    %v1590 = vunpack.c.h.b16 %v296
    %v1591 = vunpack.c.l.b16 %v297
    %v1592 = vunpack.c.h.b16 %v297
    %v1593 = vunpack.c.l.b16 %v298
    %v1594 = vunpack.c.h.b16 %v298
    %v1595 = vunpack.c.l.b16 %v299
    %v1596 = vunpack.c.h.b16 %v299
    %v1597 = vunpack.c.l.b16 %v300
    %v1598 = vunpack.c.h.b16 %v300
    %v1599 = vunpack.c.l.b16 %v301
    %v1600 = vunpack.c.h.b16 %v301
    %v1601 = vunpack.c.l.b16 %v302
    %v1602 = vunpack.c.h.b16 %v302
    %v1603 = vunpack.c.l.b16 %v303
    %v1604 = vunpack.c.h.b16 %v303
    %v1605 = vunpack.c.l.b16 %v304
    %v1606 = vunpack.c.h.b16 %v304
    %v1607 = vunpack.c.l.b16 %v305
    %v1608 = vunpack.c.h.b16 %v305
    %v1609 = vunpack.c.l.b16 %v306
    %v1610 = vunpack.c.h.b16 %v306
    %v1611 = vunpack.c.l.b16 %v307
    %v1612 = vunpack.c.h.b16 %v307
    %v1613 = vunpack.c.l.b16 %v308
    %v1614 = vunpack.c.h.b16 %v308
    %v1615 = vunpack.c.l.b16 %v309
    %v1616 = vunpack.c.h.b16 %v309
    %v1617 = vunpack.c.l.b16 %v310
    %v1618 = vunpack.c.h.b16 %v310
    %v1619 = vunpack.c.l.b16 %v311
    %v1620 = vunpack.c.h.b16 %v311
    %v1621 = vunpack.c.l.b16 %v312
    %v1622 = vunpack.c.h.b16 %v312
    %v1623 = vunpack.c.l.b16 %v313
    %v1624 = vunpack.c.h.b16 %v313
    %v1625 = vunpack.c.l.b16 %v314
    %v1626 = vunpack.c.h.b16 %v314
    %v1627 = vunpack.c.l.b16 %v315
    %v1628 = vunpack.c.h.b16 %v315
    %v1629 = vunpack.c.l.b16 %v316
    %v1630 = vunpack.c.h.b16 %v316
    %v1631 = vunpack.c.l.b16 %v317
    %v1632 = vunpack.c.h.b16 %v317
    %v1633 = vunpack.c.l.b16 %v318
    %v1634 = vunpack.c.h.b16 %v318
    %v1635 = vunpack.c.l.b16 %v319
    %v1636 = vunpack.c.h.b16 %v319
    %v1637 = vunpack.c.l.b16 %v320
    %v1638 = vunpack.c.h.b16 %v320
    %v1639 = vunpack.c.l.b16 %v321
    %v1640 = vunpack.c.h.b16 %v321
    %v1641 = vunpack.c.l.b16 %v322
    %v1642 = vunpack.c.h.b16 %v322
    %v1643 = vunpack.c.l.b16 %v323
    %v1644 = vunpack.c.h.b16 %v323
    %v1645 = vunpack.c.l.b16 %v324
    %v1646 = vunpack.c.h.b16 %v324
    %v1647 = vunpack.c.l.b16 %v325
    %v1648 = vunpack.c.h.b16 %v325
    %v1649 = vunpack.c.l.b16 %v326
    %v1650 = vunpack.c.h.b16 %v326
    %v1651 = vunpack.c.l.b16 %v327
    %v1652 = vunpack.c.h.b16 %v327
    %v1653 = vunpack.c.l.b16 %v328
    %v1654 = vunpack.c.h.b16 %v328
    %v1655 = vunpack.c.l.b16 %v329
    %v1656 = vunpack.c.h.b16 %v329
    %v1657 = vunpack.c.l.b16 %v330
    %v1658 = vunpack.c.h.b16 %v330
    %v1659 = vunpack.c.l.b16 %v331
    %v1660 = vunpack.c.h.b16 %v331
    %v1661 = vunpack.c.l.b16 %v332
    %v1662 = vunpack.c.h.b16 %v332
    %v1663 = vunpack.c.l.b16 %v333
    %v1664 = vunpack.c.h.b16 %v333
    %v1665 = vunpack.c.l.b16 %v334
    %v1666 = vunpack.c.h.b16 %v334
    %v1667 = vunpack.c.l.b16 %v335
    %v1668 = vunpack.c.h.b16 %v335
    %v1669 = vunpack.c.l.b16 %v336
    %v1670 = vunpack.c.h.b16 %v336
    %v1671 = vunpack.c.l.b16 %v337
    %v1672 = vunpack.c.h.b16 %v337
    %v1673 = vunpack.c.l.b16 %v338
    %v1674 = vunpack.c.h.b16 %v338
    %v1675 = vunpack.c.l.b16 %v339
    %v1676 = vunpack.c.h.b16 %v339
    %v1677 = vunpack.c.l.b16 %v340
    %v1678 = vunpack.c.h.b16 %v340
    %v1679 = vunpack.c.l.b16 %v341
    %v1680 = vunpack.c.h.b16 %v341
    %v1681 = vunpack.c.l.b16 %v342
    %v1682 = vunpack.c.h.b16 %v342
    %v1683 = vunpack.c.l.b16 %v343
    %v1684 = vunpack.c.h.b16 %v343
    %v1685 = vunpack.c.l.b16 %v344
    %v1686 = vunpack.c.h.b16 %v344
    %v1687 = vunpack.c.l.b16 %v345
    %v1688 = vunpack.c.h.b16 %v345
    %v1689 = vunpack.c.l.b16 %v346
    %v1690 = vunpack.c.h.b16 %v346
    %v1691 = vunpack.c.l.b16 %v347
    %v1692 = vunpack.c.h.b16 %v347
    %v1693 = vunpack.c.l.b16 %v348
    %v1694 = vunpack.c.h.b16 %v348
    %v1695 = vunpack.c.l.b16 %v349
    %v1696 = vunpack.c.h.b16 %v349
    %v1697 = vunpack.c.l.b16 %v350
    %v1698 = vunpack.c.h.b16 %v350
    %v1699 = vunpack.c.l.b16 %v351
    %v1700 = vunpack.c.h.b16 %v351
    %v1701 = vunpack.c.l.b16 %v352
    %v1702 = vunpack.c.h.b16 %v352
    %v1703 = vunpack.c.l.b16 %v353
    %v1704 = vunpack.c.h.b16 %v353
    %v1705 = vunpack.c.l.b16 %v354
    %v1706 = vunpack.c.h.b16 %v354
    %v1707 = vunpack.c.l.b16 %v355
    %v1708 = vunpack.c.h.b16 %v355
    %v1709 = vunpack.c.l.b16 %v356
    %v1710 = vunpack.c.h.b16 %v356
    %v1711 = vunpack.c.l.b16 %v357
    %v1712 = vunpack.c.h.b16 %v357
    %v1713 = vunpack.c.l.b16 %v358
    %v1714 = vunpack.c.h.b16 %v358
    %v1715 = vunpack.c.l.b16 %v359
    %v1716 = vunpack.c.h.b16 %v359
    %v1717 = vunpack.c.l.b16 %v360
    %v1718 = vunpack.c.h.b16 %v360
    %v1719 = vunpack.c.l.b16 %v361
    %v1720 = vunpack.c.h.b16 %v361
    %v1721 = vunpack.c.l.b16 %v362
    %v1722 = vunpack.c.h.b16 %v362
    %v1723 = vunpack.c.l.b16 %v363
    %v1724 = vunpack.c.h.b16 %v363
    %v1725 = vunpack.c.l.b16 %v364
    %v1726 = vunpack.c.h.b16 %v364
    %v1727 = vunpack.c.l.b16 %v365
    %v1728 = vunpack.c.h.b16 %v365
    %v1729 = vunpack.c.l.b16 %v366
    %v1730 = vunpack.c.h.b16 %v366
    %v1731 = vunpack.c.l.b16 %v367
    %v1732 = vunpack.c.h.b16 %v367
    %v1733 = vunpack.c.l.b16 %v368
    %v1734 = vunpack.c.h.b16 %v368
    %v1735 = vunpack.c.l.b16 %v369
    %v1736 = vunpack.c.h.b16 %v369
    %v1737 = vunpack.c.l.b16 %v370
    %v1738 = vunpack.c.h.b16 %v370
    %v1739 = vunpack.c.l.b16 %v371
    %v1740 = vunpack.c.h.b16 %v371
    %v1741 = vunpack.c.l.b16 %v372
    %v1742 = vunpack.c.h.b16 %v372
    %v1743 = vunpack.c.l.b16 %v373
    %v1744 = vunpack.c.h.b16 %v373
    %v1745 = vunpack.c.l.b16 %v374
    %v1746 = vunpack.c.h.b16 %v374
    %v1747 = vunpack.c.l.b16 %v375
    %v1748 = vunpack.c.h.b16 %v375
    %v1749 = vunpack.c.l.b16 %v376
    %v1750 = vunpack.c.h.b16 %v376
    %v1751 = vunpack.c.l.b16 %v377
    %v1752 = vunpack.c.h.b16 %v377
    %v1753 = vunpack.c.l.b16 %v378
    %v1754 = vunpack.c.h.b16 %v378
    %v1755 = vunpack.c.l.b16 %v379
    %v1756 = vunpack.c.h.b16 %v379
    %v1757 = vunpack.c.l.b16 %v380
    %v1758 = vunpack.c.h.b16 %v380
    %v1759 = vunpack.c.l.b16 %v381
    %v1760 = vunpack.c.h.b16 %v381
    %v1761 = vunpack.c.l.b16 %v382
    %v1762 = vunpack.c.h.b16 %v382
    %v1763 = vunpack.c.l.b16 %v383
    %v1764 = vunpack.c.h.b16 %v383
    %v1765 = vunpack.c.l.b16 %v384
    %v1766 = vunpack.c.h.b16 %v384
    %v1767 = vunpack.c.l.b16 %v385
    %v1768 = vunpack.c.h.b16 %v385
    %v1769 = vunpack.c.l.b16 %v386
    %v1770 = vunpack.c.h.b16 %v386
    %v1771 = vunpack.c.l.b16 %v387
    %v1772 = vunpack.c.h.b16 %v387
    %v1773 = vunpack.c.l.b16 %v388
    %v1774 = vunpack.c.h.b16 %v388
    %v1775 = vunpack.c.l.b16 %v389
    %v1776 = vunpack.c.h.b16 %v389
    %v1777 = vunpack.c.l.b16 %v390
    %v1778 = vunpack.c.h.b16 %v390
    %v1779 = vunpack.c.l.b16 %v391
    %v1780 = vunpack.c.h.b16 %v391
    %v1781 = vunpack.c.l.b16 %v392
    %v1782 = vunpack.c.h.b16 %v392
    %v1783 = vunpack.c.l.b16 %v393
    %v1784 = vunpack.c.h.b16 %v393
    %v1785 = vunpack.c.l.b16 %v394
    %v1786 = vunpack.c.h.b16 %v394
    %v1787 = vunpack.c.l.b16 %v395
    %v1788 = vunpack.c.h.b16 %v395
    %v1789 = vunpack.c.l.b16 %v396
    %v1790 = vunpack.c.h.b16 %v396
    %v1791 = vunpack.c.l.b16 %v397
    %v1792 = vunpack.c.h.b16 %v397
    %v1793 = vunpack.c.l.b16 %v398
    %v1794 = vunpack.c.h.b16 %v398
    %v1795 = vunpack.c.l.b16 %v399
    %v1796 = vunpack.c.h.b16 %v399
    %v1797 = vunpack.c.l.b16 %v400
    %v1798 = vunpack.c.h.b16 %v400
    %v1799 = vunpack.c.l.b16 %v401
    %v1800 = vunpack.c.h.b16 %v401
    %v1801 = vunpack.c.l.b16 %v402
    %v1802 = vunpack.c.h.b16 %v402
    %v1803 = vunpack.c.l.b16 %v403
    %v1804 = vunpack.c.h.b16 %v403
    %v1805 = vunpack.c.l.b16 %v404
    %v1806 = vunpack.c.h.b16 %v404
    %v1807 = vunpack.c.l.b16 %v405
    %v1808 = vunpack.c.h.b16 %v405
    %v1809 = vunpack.c.l.b16 %v406
    %v1810 = vunpack.c.h.b16 %v406
    %v1811 = vunpack.c.l.b16 %v407
    %v1812 = vunpack.c.h.b16 %v407
    %v1813 = vunpack.c.l.b16 %v408
    %v1814 = vunpack.c.h.b16 %v408
    %v1815 = vunpack.c.l.b16 %v409
    %v1816 = vunpack.c.h.b16 %v409
    %v1817 = vunpack.c.l.b16 %v410
    %v1818 = vunpack.c.h.b16 %v410
    %v1819 = vunpack.c.l.b16 %v411
    %v1820 = vunpack.c.h.b16 %v411
    %v1821 = vunpack.c.l.b16 %v412
    %v1822 = vunpack.c.h.b16 %v412
    %v1823 = vunpack.c.l.b16 %v413
    %v1824 = vunpack.c.h.b16 %v413
    %v1825 = vunpack.c.l.b16 %v414
    %v1826 = vunpack.c.h.b16 %v414
    %v1827 = vunpack.c.l.b16 %v415
    %v1828 = vunpack.c.h.b16 %v415
    %v1829 = vunpack.c.l.b16 %v416
    %v1830 = vunpack.c.h.b16 %v416
    %v1831 = vunpack.c.l.b16 %v417
    %v1832 = vunpack.c.h.b16 %v417
    %v1833 = vunpack.c.l.b16 %v418
    %v1834 = vunpack.c.h.b16 %v418
    %v1835 = vunpack.c.l.b16 %v419
    %v1836 = vunpack.c.h.b16 %v419
    %v1837 = vunpack.c.l.b16 %v420
    %v1838 = vunpack.c.h.b16 %v420
    %v1839 = vunpack.c.l.b16 %v421
    %v1840 = vunpack.c.h.b16 %v421
    %v1841 = vunpack.c.l.b16 %v422
    %v1842 = vunpack.c.h.b16 %v422
    %v1843 = vunpack.c.l.b16 %v423
    %v1844 = vunpack.c.h.b16 %v423
    %v1845 = vunpack.c.l.b16 %v424
    %v1846 = vunpack.c.h.b16 %v424
    %v1847 = vunpack.c.l.b16 %v425
    %v1848 = vunpack.c.h.b16 %v425
    %v1849 = vunpack.c.l.b16 %v426
    %v1850 = vunpack.c.h.b16 %v426
    %v1851 = vunpack.c.l.b16 %v427
    %v1852 = vunpack.c.h.b16 %v427
    %v1853 = vunpack.c.l.b16 %v428
    %v1854 = vunpack.c.h.b16 %v428
    %v1855 = vunpack.c.l.b16 %v429
    %v1856 = vunpack.c.h.b16 %v429
    %v1857 = vunpack.c.l.b16 %v430
    %v1858 = vunpack.c.h.b16 %v430
    %v1859 = vunpack.c.l.b16 %v431
    %v1860 = vunpack.c.h.b16 %v431
    %v1861 = vunpack.c.l.b16 %v432
    %v1862 = vunpack.c.h.b16 %v432
    %v1863 = vunpack.c.l.b16 %v433
    %v1864 = vunpack.c.h.b16 %v433
    %v1865 = vunpack.c.l.b16 %v434
    %v1866 = vunpack.c.h.b16 %v434
    %v1867 = vunpack.c.l.b16 %v435
    %v1868 = vunpack.c.h.b16 %v435
    %v1869 = vunpack.c.l.b16 %v436
    %v1870 = vunpack.c.h.b16 %v436
    %v1871 = vunpack.c.l.b16 %v437
    %v1872 = vunpack.c.h.b16 %v437
    %v1873 = vunpack.c.l.b16 %v438
    %v1874 = vunpack.c.h.b16 %v438
    %v1875 = vunpack.c.l.b16 %v439
    %v1876 = vunpack.c.h.b16 %v439
    %v1877 = vunpack.c.l.b16 %v440
    %v1878 = vunpack.c.h.b16 %v440
    %v1879 = vunpack.c.l.b16 %v441
    %v1880 = vunpack.c.h.b16 %v441
    %v1881 = vunpack.c.l.b16 %v442
    %v1882 = vunpack.c.h.b16 %v442
    %v1883 = vunpack.c.l.b16 %v443
    %v1884 = vunpack.c.h.b16 %v443
    %v1885 = vunpack.c.l.b16 %v444
    %v1886 = vunpack.c.h.b16 %v444
    %v1887 = vunpack.c.l.b16 %v445
    %v1888 = vunpack.c.h.b16 %v445
    %v1889 = vunpack.c.l.b16 %v446
    %v1890 = vunpack.c.h.b16 %v446
    %v1891 = vunpack.c.l.b16 %v447
    %v1892 = vunpack.c.h.b16 %v447
    %v1893 = vunpack.c.l.b16 %v448
    %v1894 = vunpack.c.h.b16 %v448
    %v1895 = vunpack.c.l.b16 %v449
    %v1896 = vunpack.c.h.b16 %v449
    %v1897 = vunpack.c.l.b16 %v450
    %v1898 = vunpack.c.h.b16 %v450
    %v1899 = vunpack.c.l.b16 %v451
    %v1900 = vunpack.c.h.b16 %v451
    %v1901 = vunpack.c.l.b16 %v452
    %v1902 = vunpack.c.h.b16 %v452
    %v1903 = vunpack.c.l.b16 %v453
    %v1904 = vunpack.c.h.b16 %v453
    %v1905 = vunpack.c.l.b16 %v454
    %v1906 = vunpack.c.h.b16 %v454
    %v1907 = vunpack.c.l.b16 %v455
    %v1908 = vunpack.c.h.b16 %v455
    %v1909 = vunpack.c.l.b16 %v456
    %v1910 = vunpack.c.h.b16 %v456
    %v1911 = vunpack.c.l.b16 %v457
    %v1912 = vunpack.c.h.b16 %v457
    %v1913 = vunpack.c.l.b16 %v458
    %v1914 = vunpack.c.h.b16 %v458
    %v1915 = vunpack.c.l.b16 %v459
    %v1916 = vunpack.c.h.b16 %v459
    %v1917 = vunpack.c.l.b16 %v460
    %v1918 = vunpack.c.h.b16 %v460
    %v1919 = vunpack.c.l.b16 %v461
    %v1920 = vunpack.c.h.b16 %v461
    %v1921 = vunpack.c.l.b16 %v462
    %v1922 = vunpack.c.h.b16 %v462
    %v1923 = vunpack.c.l.b16 %v463
    %v1924 = vunpack.c.h.b16 %v463
    %v1925 = vunpack.c.l.b16 %v464
    %v1926 = vunpack.c.h.b16 %v464
    %v1927 = vunpack.c.l.b16 %v465
    %v1928 = vunpack.c.h.b16 %v465
    %v1929 = vunpack.c.l.b16 %v466
    %v1930 = vunpack.c.h.b16 %v466
    %v1931 = vunpack.c.l.b16 %v467
    %v1932 = vunpack.c.h.b16 %v467
    %v1933 = vunpack.c.l.b16 %v468
    %v1934 = vunpack.c.h.b16 %v468
    %v1935 = vunpack.c.l.b16 %v469
    %v1936 = vunpack.c.h.b16 %v469
    %v1937 = vunpack.c.l.b16 %v470
    %v1938 = vunpack.c.h.b16 %v470
    %v1939 = vunpack.c.l.b16 %v471
    %v1940 = vunpack.c.h.b16 %v471
    %v1941 = vunpack.c.l.b16 %v472
    %v1942 = vunpack.c.h.b16 %v472
    %v1943 = vunpack.c.l.b16 %v473
    %v1944 = vunpack.c.h.b16 %v473
    %v1945 = vunpack.c.l.b16 %v474
    %v1946 = vunpack.c.h.b16 %v474
    %v1947 = vunpack.c.l.b16 %v475
    %v1948 = vunpack.c.h.b16 %v475
    %v1949 = vunpack.c.l.b16 %v476
    %v1950 = vunpack.c.h.b16 %v476
    %v1951 = vunpack.c.l.b16 %v477
    %v1952 = vunpack.c.h.b16 %v477
    %v1953 = vunpack.c.l.b16 %v478
    %v1954 = vunpack.c.h.b16 %v478
    %v1955 = vunpack.c.l.b16 %v479
    %v1956 = vunpack.c.h.b16 %v479
    %v1957 = vunpack.c.l.b16 %v480
    %v1958 = vunpack.c.h.b16 %v480
    %v1959 = vunpack.c.l.b16 %v481
    %v1960 = vunpack.c.h.b16 %v481
    %v1961 = vunpack.c.l.b16 %v482
    %v1962 = vunpack.c.h.b16 %v482
    %v1963 = vunpack.c.l.b16 %v483
    %v1964 = vunpack.c.h.b16 %v483
    %v1965 = vunpack.c.l.b16 %v484
    %v1966 = vunpack.c.h.b16 %v484
    %v1967 = vunpack.c.l.b16 %v485
    %v1968 = vunpack.c.h.b16 %v485
    %v1969 = vunpack.c.l.b16 %v486
    %v1970 = vunpack.c.h.b16 %v486
    %v1971 = vunpack.c.l.b16 %v487
    %v1972 = vunpack.c.h.b16 %v487
    %v1973 = vunpack.c.l.b16 %v488
    %v1974 = vunpack.c.h.b16 %v488
    %v1975 = vunpack.c.l.b16 %v489
    %v1976 = vunpack.c.h.b16 %v489
    %v1977 = vunpack.c.l.b16 %v490
    %v1978 = vunpack.c.h.b16 %v490
    %v1979 = vunpack.c.l.b16 %v491
    %v1980 = vunpack.c.h.b16 %v491
    %v1981 = vunpack.c.l.b16 %v492
    %v1982 = vunpack.c.h.b16 %v492
    %v1983 = vunpack.c.l.b16 %v493
    %v1984 = vunpack.c.h.b16 %v493
    %v1985 = vunpack.c.l.b16 %v494
    %v1986 = vunpack.c.h.b16 %v494
    %v1987 = vunpack.c.l.b16 %v495
    %v1988 = vunpack.c.h.b16 %v495
    %v1989 = vunpack.c.l.b16 %v496
    %v1990 = vunpack.c.h.b16 %v496
    %v1991 = vunpack.c.l.b16 %v497
    %v1992 = vunpack.c.h.b16 %v497
    %v1993 = vunpack.c.l.b16 %v498
    %v1994 = vunpack.c.h.b16 %v498
    %v1995 = vunpack.c.l.b16 %v499
    %v1996 = vunpack.c.h.b16 %v499
    %v1997 = vunpack.c.l.b16 %v500
    %v1998 = vunpack.c.h.b16 %v500
    %v1999 = vunpack.c.l.b16 %v501
    %v2000 = vunpack.c.h.b16 %v501
    %v2001 = vunpack.c.l.b16 %v502
    %v2002 = vunpack.c.h.b16 %v502
    %v2003 = vunpack.c.l.b16 %v503
    %v2004 = vunpack.c.h.b16 %v503
    %v2005 = vunpack.c.l.b16 %v504
    %v2006 = vunpack.c.h.b16 %v504
    %v2007 = vunpack.c.l.b16 %v505
    %v2008 = vunpack.c.h.b16 %v505
    %v2009 = vunpack.c.l.b16 %v506
    %v2010 = vunpack.c.h.b16 %v506
    %v2011 = vunpack.c.l.b16 %v507
    %v2012 = vunpack.c.h.b16 %v507
    %v2013 = vunpack.c.l.b16 %v508
    %v2014 = vunpack.c.h.b16 %v508
    %v2015 = vunpack.c.l.b16 %v509
    %v2016 = vunpack.c.h.b16 %v509
    %v2017 = vunpack.c.l.b16 %v510
    %v2018 = vunpack.c.h.b16 %v510
    %v2019 = vunpack.c.l.b16 %v511
    %v2020 = vunpack.c.h.b16 %v511
    %v2021 = vunpack.c.l.b16 %v512
    %v2022 = vunpack.c.h.b16 %v512
    %v2023 = vunpack.c.l.b16 %v513
    %v2024 = vunpack.c.h.b16 %v513
    %v2025 = vunpack.c.l.b16 %v514
    %v2026 = vunpack.c.h.b16 %v514
    %v2027 = vunpack.c.l.b16 %v515
    %v2028 = vunpack.c.h.b16 %v515
    %v2029 = vunpack.c.l.b16 %v516
    %v2030 = vunpack.c.h.b16 %v516
    %v2031 = vunpack.c.l.b16 %v517
    %v2032 = vunpack.c.h.b16 %v517
    %v2033 = vunpack.c.l.b16 %v518
    %v2034 = vunpack.c.h.b16 %v518
    %v2035 = vunpack.c.l.b16 %v519
    %v2036 = vunpack.c.h.b16 %v519
    %v2037 = vunpack.c.l.b16 %v520
    %v2038 = vunpack.c.h.b16 %v520
    %v2039 = vunpack.c.l.b16 %v521
    %v2040 = vunpack.c.h.b16 %v521
    %v2041 = vunpack.c.l.b16 %v522
    %v2042 = vunpack.c.h.b16 %v522
    %v2043 = vunpack.c.l.b16 %v523
    %v2044 = vunpack.c.h.b16 %v523
    %v2045 = vunpack.c.l.b16 %v524
    %v2046 = vunpack.c.h.b16 %v524
    %v2047 = vunpack.c.l.b16 %v525
    %v2048 = vunpack.c.h.b16 %v525
    %v2049 = vunpack.c.l.b16 %v526
    %v2050 = vunpack.c.h.b16 %v526
    %v2051 = vunpack.c.l.b16 %v527
    %v2052 = vunpack.c.h.b16 %v527
    %v2053 = vunpack.c.l.b16 %v528
    %v2054 = vunpack.c.h.b16 %v528
    %v2055 = vunpack.c.l.b16 %v529
    %v2056 = vunpack.c.h.b16 %v529
    %v2057 = vunpack.c.l.b16 %v530
    %v2058 = vunpack.c.h.b16 %v530
    %v2059 = vunpack.c.l.b16 %v531
    %v2060 = vunpack.c.h.b16 %v531
    %v2061 = vunpack.c.l.b16 %v532
    %v2062 = vunpack.c.h.b16 %v532
    %v2063 = vunpack.c.l.b16 %v533
    %v2064 = vunpack.c.h.b16 %v533
    %v2065 = vunpack.c.l.b16 %v534
    %v2066 = vunpack.c.h.b16 %v534
    %v2067 = vunpack.c.l.b16 %v535
    %v2068 = vunpack.c.h.b16 %v535
    %v2069 = vunpack.c.l.b16 %v536
    %v2070 = vunpack.c.h.b16 %v536
    %v2071 = vunpack.c.l.b16 %v537
    %v2072 = vunpack.c.h.b16 %v537
    %v2073 = vunpack.c.l.b16 %v538
    %v2074 = vunpack.c.h.b16 %v538
    %v2075 = vpack.c.b16 %v1067, %v1051
    %v2076 = vpack.c.b16 %v1068, %v1052
    %v2077 = vpack.c.b16 %v1069, %v1053
    %v2078 = vpack.c.b16 %v1070, %v1054
    %v2079 = vpack.c.b16 %v1071, %v1055
    %v2080 = vpack.c.b16 %v1072, %v1056
    %v2081 = vpack.c.b16 %v1073, %v1057
    %v2082 = vpack.c.b16 %v1074, %v1058
    %v2083 = vpack.c.b16 %v1075, %v1059
    %v2084 = vpack.c.b16 %v1076, %v1060
    %v2085 = vpack.c.b16 %v1077, %v1061
    %v2086 = vpack.c.b16 %v1078, %v1062
    %v2087 = vpack.c.b16 %v1079, %v1063
    %v2088 = vpack.c.b16 %v1080, %v1064
    %v2089 = vpack.c.b16 %v1081, %v1065
    %v2090 = vpack.c.b16 %v1082, %v1066
    %v2091 = vpack.c.b16 %v1099, %v1083
    %v2092 = vpack.c.b16 %v1100, %v1084
    %v2093 = vpack.c.b16 %v1101, %v1085
    %v2094 = vpack.c.b16 %v1102, %v1086
    %v2095 = vpack.c.b16 %v1103, %v1087
    %v2096 = vpack.c.b16 %v1104, %v1088
    %v2097 = vpack.c.b16 %v1105, %v1089
    %v2098 = vpack.c.b16 %v1106, %v1090
    %v2099 = vpack.c.b16 %v1107, %v1091
    %v2100 = vpack.c.b16 %v1108, %v1092
    %v2101 = vpack.c.b16 %v1109, %v1093
    %v2102 = vpack.c.b16 %v1110, %v1094
    %v2103 = vpack.c.b16 %v1111, %v1095
    %v2104 = vpack.c.b16 %v1112, %v1096
    %v2105 = vpack.c.b16 %v1113, %v1097
    %v2106 = vpack.c.b16 %v1114, %v1098
    %v2107 = vpack.c.b16 %v1131, %v1115
    %v2108 = vpack.c.b16 %v1132, %v1116
    %v2109 = vpack.c.b16 %v1133, %v1117
    %v2110 = vpack.c.b16 %v1134, %v1118
    %v2111 = vpack.c.b16 %v1135, %v1119
    %v2112 = vpack.c.b16 %v1136, %v1120
    %v2113 = vpack.c.b16 %v1137, %v1121
    %v2114 = vpack.c.b16 %v1138, %v1122
    %v2115 = vpack.c.b16 %v1139, %v1123
    %v2116 = vpack.c.b16 %v1140, %v1124
    %v2117 = vpack.c.b16 %v1141, %v1125
    %v2118 = vpack.c.b16 %v1142, %v1126
    %v2119 = vpack.c.b16 %v1143, %v1127
    %v2120 = vpack.c.b16 %v1144, %v1128
    %v2121 = vpack.c.b16 %v1145, %v1129
    %v2122 = vpack.c.b16 %v1146, %v1130
    %v2123 = vpack.c.b16 %v1163, %v1147
    %v2124 = vpack.c.b16 %v1164, %v1148
    %v2125 = vpack.c.b16 %v1165, %v1149
    %v2126 = vpack.c.b16 %v1166, %v1150
    %v2127 = vpack.c.b16 %v1167, %v1151
    %v2128 = vpack.c.b16 %v1168, %v1152
    %v2129 = vpack.c.b16 %v1169, %v1153
    %v2130 = vpack.c.b16 %v1170, %v1154
    %v2131 = vpack.c.b16 %v1171, %v1155
    %v2132 = vpack.c.b16 %v1172, %v1156
    %v2133 = vpack.c.b16 %v1173, %v1157
    %v2134 = vpack.c.b16 %v1174, %v1158
    %v2135 = vpack.c.b16 %v1175, %v1159
    %v2136 = vpack.c.b16 %v1176, %v1160
    %v2137 = vpack.c.b16 %v1177, %v1161
    %v2138 = vpack.c.b16 %v1178, %v1162
    %v2139 = vpack.c.b16 %v1195, %v1179
    %v2140 = vpack.c.b16 %v1196, %v1180
    %v2141 = vpack.c.b16 %v1197, %v1181
    %v2142 = vpack.c.b16 %v1198, %v1182
    %v2143 = vpack.c.b16 %v1199, %v1183
    %v2144 = vpack.c.b16 %v1200, %v1184
    %v2145 = vpack.c.b16 %v1201, %v1185
    %v2146 = vpack.c.b16 %v1202, %v1186
    %v2147 = vpack.c.b16 %v1203, %v1187
    %v2148 = vpack.c.b16 %v1204, %v1188
    %v2149 = vpack.c.b16 %v1205, %v1189
    %v2150 = vpack.c.b16 %v1206, %v1190
    %v2151 = vpack.c.b16 %v1207, %v1191
    %v2152 = vpack.c.b16 %v1208, %v1192
    %v2153 = vpack.c.b16 %v1209, %v1193
    %v2154 = vpack.c.b16 %v1210, %v1194
    %v2155 = vpack.c.b16 %v1227, %v1211
    %v2156 = vpack.c.b16 %v1228, %v1212
    %v2157 = vpack.c.b16 %v1229, %v1213
    %v2158 = vpack.c.b16 %v1230, %v1214
    %v2159 = vpack.c.b16 %v1231, %v1215
    %v2160 = vpack.c.b16 %v1232, %v1216
    %v2161 = vpack.c.b16 %v1233, %v1217
    %v2162 = vpack.c.b16 %v1234, %v1218
    %v2163 = vpack.c.b16 %v1235, %v1219
    %v2164 = vpack.c.b16 %v1236, %v1220
    %v2165 = vpack.c.b16 %v1237, %v1221
    %v2166 = vpack.c.b16 %v1238, %v1222
    %v2167 = vpack.c.b16 %v1239, %v1223
    %v2168 = vpack.c.b16 %v1240, %v1224
    %v2169 = vpack.c.b16 %v1241, %v1225
    %v2170 = vpack.c.b16 %v1242, %v1226
    %v2171 = vpack.c.b16 %v1259, %v1243
    %v2172 = vpack.c.b16 %v1260, %v1244
    %v2173 = vpack.c.b16 %v1261, %v1245
    %v2174 = vpack.c.b16 %v1262, %v1246
    %v2175 = vpack.c.b16 %v1263, %v1247
    %v2176 = vpack.c.b16 %v1264, %v1248
    %v2177 = vpack.c.b16 %v1265, %v1249
    %v2178 = vpack.c.b16 %v1266, %v1250
    %v2179 = vpack.c.b16 %v1267, %v1251
    %v2180 = vpack.c.b16 %v1268, %v1252
    %v2181 = vpack.c.b16 %v1269, %v1253
    %v2182 = vpack.c.b16 %v1270, %v1254
    %v2183 = vpack.c.b16 %v1271, %v1255
    %v2184 = vpack.c.b16 %v1272, %v1256
    %v2185 = vpack.c.b16 %v1273, %v1257
    %v2186 = vpack.c.b16 %v1274, %v1258
    %v2187 = vpack.c.b16 %v1291, %v1275
    %v2188 = vpack.c.b16 %v1292, %v1276
    %v2189 = vpack.c.b16 %v1293, %v1277
    %v2190 = vpack.c.b16 %v1294, %v1278
    %v2191 = vpack.c.b16 %v1295, %v1279
    %v2192 = vpack.c.b16 %v1296, %v1280
    %v2193 = vpack.c.b16 %v1297, %v1281
    %v2194 = vpack.c.b16 %v1298, %v1282
    %v2195 = vpack.c.b16 %v1299, %v1283
    %v2196 = vpack.c.b16 %v1300, %v1284
    %v2197 = vpack.c.b16 %v1301, %v1285
    %v2198 = vpack.c.b16 %v1302, %v1286
    %v2199 = vpack.c.b16 %v1303, %v1287
    %v2200 = vpack.c.b16 %v1304, %v1288
    %v2201 = vpack.c.b16 %v1305, %v1289
    %v2202 = vpack.c.b16 %v1306, %v1290
    %v2203 = vpack.c.b16 %v1323, %v1307
    %v2204 = vpack.c.b16 %v1324, %v1308
    %v2205 = vpack.c.b16 %v1325, %v1309
    %v2206 = vpack.c.b16 %v1326, %v1310
    %v2207 = vpack.c.b16 %v1327, %v1311
    %v2208 = vpack.c.b16 %v1328, %v1312
    %v2209 = vpack.c.b16 %v1329, %v1313
    %v2210 = vpack.c.b16 %v1330, %v1314
    %v2211 = vpack.c.b16 %v1331, %v1315
    %v2212 = vpack.c.b16 %v1332, %v1316
    %v2213 = vpack.c.b16 %v1333, %v1317
    %v2214 = vpack.c.b16 %v1334, %v1318
    %v2215 = vpack.c.b16 %v1335, %v1319
    %v2216 = vpack.c.b16 %v1336, %v1320
    %v2217 = vpack.c.b16 %v1337, %v1321
    %v2218 = vpack.c.b16 %v1338, %v1322
    %v2219 = vpack.c.b16 %v1355, %v1339
    %v2220 = vpack.c.b16 %v1356, %v1340
    %v2221 = vpack.c.b16 %v1357, %v1341
    %v2222 = vpack.c.b16 %v1358, %v1342
    %v2223 = vpack.c.b16 %v1359, %v1343
    %v2224 = vpack.c.b16 %v1360, %v1344
    %v2225 = vpack.c.b16 %v1361, %v1345
    %v2226 = vpack.c.b16 %v1362, %v1346
    %v2227 = vpack.c.b16 %v1363, %v1347
    %v2228 = vpack.c.b16 %v1364, %v1348
    %v2229 = vpack.c.b16 %v1365, %v1349
    %v2230 = vpack.c.b16 %v1366, %v1350
    %v2231 = vpack.c.b16 %v1367, %v1351
    %v2232 = vpack.c.b16 %v1368, %v1352
    %v2233 = vpack.c.b16 %v1369, %v1353
    %v2234 = vpack.c.b16 %v1370, %v1354
    %v2235 = vpack.c.b16 %v1387, %v1371
    %v2236 = vpack.c.b16 %v1388, %v1372
    %v2237 = vpack.c.b16 %v1389, %v1373
    %v2238 = vpack.c.b16 %v1390, %v1374
    %v2239 = vpack.c.b16 %v1391, %v1375
    %v2240 = vpack.c.b16 %v1392, %v1376
    %v2241 = vpack.c.b16 %v1393, %v1377
    %v2242 = vpack.c.b16 %v1394, %v1378
    %v2243 = vpack.c.b16 %v1395, %v1379
    %v2244 = vpack.c.b16 %v1396, %v1380
    %v2245 = vpack.c.b16 %v1397, %v1381
    %v2246 = vpack.c.b16 %v1398, %v1382
    %v2247 = vpack.c.b16 %v1399, %v1383
    %v2248 = vpack.c.b16 %v1400, %v1384
    %v2249 = vpack.c.b16 %v1401, %v1385
    %v2250 = vpack.c.b16 %v1402, %v1386
    %v2251 = vpack.c.b16 %v1419, %v1403
    %v2252 = vpack.c.b16 %v1420, %v1404
    %v2253 = vpack.c.b16 %v1421, %v1405
    %v2254 = vpack.c.b16 %v1422, %v1406
    %v2255 = vpack.c.b16 %v1423, %v1407
    %v2256 = vpack.c.b16 %v1424, %v1408
    %v2257 = vpack.c.b16 %v1425, %v1409
    %v2258 = vpack.c.b16 %v1426, %v1410
    %v2259 = vpack.c.b16 %v1427, %v1411
    %v2260 = vpack.c.b16 %v1428, %v1412
    %v2261 = vpack.c.b16 %v1429, %v1413
    %v2262 = vpack.c.b16 %v1430, %v1414
    %v2263 = vpack.c.b16 %v1431, %v1415
    %v2264 = vpack.c.b16 %v1432, %v1416
    %v2265 = vpack.c.b16 %v1433, %v1417
    %v2266 = vpack.c.b16 %v1434, %v1418
    %v2267 = vpack.c.b16 %v1451, %v1435
    %v2268 = vpack.c.b16 %v1452, %v1436
    %v2269 = vpack.c.b16 %v1453, %v1437
    %v2270 = vpack.c.b16 %v1454, %v1438
    %v2271 = vpack.c.b16 %v1455, %v1439
    %v2272 = vpack.c.b16 %v1456, %v1440
    %v2273 = vpack.c.b16 %v1457, %v1441
    %v2274 = vpack.c.b16 %v1458, %v1442
    %v2275 = vpack.c.b16 %v1459, %v1443
    %v2276 = vpack.c.b16 %v1460, %v1444
    %v2277 = vpack.c.b16 %v1461, %v1445
    %v2278 = vpack.c.b16 %v1462, %v1446
    %v2279 = vpack.c.b16 %v1463, %v1447
    %v2280 = vpack.c.b16 %v1464, %v1448
    %v2281 = vpack.c.b16 %v1465, %v1449
    %v2282 = vpack.c.b16 %v1466, %v1450
    %v2283 = vpack.c.b16 %v1483, %v1467
    %v2284 = vpack.c.b16 %v1484, %v1468
    %v2285 = vpack.c.b16 %v1485, %v1469
    %v2286 = vpack.c.b16 %v1486, %v1470
    %v2287 = vpack.c.b16 %v1487, %v1471
    %v2288 = vpack.c.b16 %v1488, %v1472
    %v2289 = vpack.c.b16 %v1489, %v1473
    %v2290 = vpack.c.b16 %v1490, %v1474
    %v2291 = vpack.c.b16 %v1491, %v1475
    %v2292 = vpack.c.b16 %v1492, %v1476
    %v2293 = vpack.c.b16 %v1493, %v1477
    %v2294 = vpack.c.b16 %v1494, %v1478
    %v2295 = vpack.c.b16 %v1495, %v1479
    %v2296 = vpack.c.b16 %v1496, %v1480
    %v2297 = vpack.c.b16 %v1497, %v1481
    %v2298 = vpack.c.b16 %v1498, %v1482
    %v2299 = vpack.c.b16 %v1515, %v1499
    %v2300 = vpack.c.b16 %v1516, %v1500
    %v2301 = vpack.c.b16 %v1517, %v1501
    %v2302 = vpack.c.b16 %v1518, %v1502
    %v2303 = vpack.c.b16 %v1519, %v1503
    %v2304 = vpack.c.b16 %v1520, %v1504
    %v2305 = vpack.c.b16 %v1521, %v1505
    %v2306 = vpack.c.b16 %v1522, %v1506
    %v2307 = vpack.c.b16 %v1523, %v1507
    %v2308 = vpack.c.b16 %v1524, %v1508
    %v2309 = vpack.c.b16 %v1525, %v1509
    %v2310 = vpack.c.b16 %v1526, %v1510
    %v2311 = vpack.c.b16 %v1527, %v1511
    %v2312 = vpack.c.b16 %v1528, %v1512
    %v2313 = vpack.c.b16 %v1529, %v1513
    %v2314 = vpack.c.b16 %v1530, %v1514
    %v2315 = vpack.c.b16 %v1547, %v1531
    %v2316 = vpack.c.b16 %v1548, %v1532
    %v2317 = vpack.c.b16 %v1549, %v1533
    %v2318 = vpack.c.b16 %v1550, %v1534
    %v2319 = vpack.c.b16 %v1551, %v1535
    %v2320 = vpack.c.b16 %v1552, %v1536
    %v2321 = vpack.c.b16 %v1553, %v1537
    %v2322 = vpack.c.b16 %v1554, %v1538
    %v2323 = vpack.c.b16 %v1555, %v1539
    %v2324 = vpack.c.b16 %v1556, %v1540
    %v2325 = vpack.c.b16 %v1557, %v1541
    %v2326 = vpack.c.b16 %v1558, %v1542
    %v2327 = vpack.c.b16 %v1559, %v1543
    %v2328 = vpack.c.b16 %v1560, %v1544
    %v2329 = vpack.c.b16 %v1561, %v1545
    %v2330 = vpack.c.b16 %v1562, %v1546
    %v2331 = vpack.c.b16 %v1579, %v1563
    %v2332 = vpack.c.b16 %v1580, %v1564
    %v2333 = vpack.c.b16 %v1581, %v1565
    %v2334 = vpack.c.b16 %v1582, %v1566
    %v2335 = vpack.c.b16 %v1583, %v1567
    %v2336 = vpack.c.b16 %v1584, %v1568
    %v2337 = vpack.c.b16 %v1585, %v1569
    %v2338 = vpack.c.b16 %v1586, %v1570
    %v2339 = vpack.c.b16 %v1587, %v1571
    %v2340 = vpack.c.b16 %v1588, %v1572
    %v2341 = vpack.c.b16 %v1589, %v1573
    %v2342 = vpack.c.b16 %v1590, %v1574
    %v2343 = vpack.c.b16 %v1591, %v1575
    %v2344 = vpack.c.b16 %v1592, %v1576
    %v2345 = vpack.c.b16 %v1593, %v1577
    %v2346 = vpack.c.b16 %v1594, %v1578
    %v2347 = vpack.c.b16 %v1611, %v1595
    %v2348 = vpack.c.b16 %v1612, %v1596
    %v2349 = vpack.c.b16 %v1613, %v1597
    %v2350 = vpack.c.b16 %v1614, %v1598
    %v2351 = vpack.c.b16 %v1615, %v1599
    %v2352 = vpack.c.b16 %v1616, %v1600
    %v2353 = vpack.c.b16 %v1617, %v1601
    %v2354 = vpack.c.b16 %v1618, %v1602
    %v2355 = vpack.c.b16 %v1619, %v1603
    %v2356 = vpack.c.b16 %v1620, %v1604
    %v2357 = vpack.c.b16 %v1621, %v1605
    %v2358 = vpack.c.b16 %v1622, %v1606
    %v2359 = vpack.c.b16 %v1623, %v1607
    %v2360 = vpack.c.b16 %v1624, %v1608
    %v2361 = vpack.c.b16 %v1625, %v1609
    %v2362 = vpack.c.b16 %v1626, %v1610
    %v2363 = vpack.c.b16 %v1643, %v1627
    %v2364 = vpack.c.b16 %v1644, %v1628
    %v2365 = vpack.c.b16 %v1645, %v1629
    %v2366 = vpack.c.b16 %v1646, %v1630
    %v2367 = vpack.c.b16 %v1647, %v1631
    %v2368 = vpack.c.b16 %v1648, %v1632
    %v2369 = vpack.c.b16 %v1649, %v1633
    %v2370 = vpack.c.b16 %v1650, %v1634
    %v2371 = vpack.c.b16 %v1651, %v1635
    %v2372 = vpack.c.b16 %v1652, %v1636
    %v2373 = vpack.c.b16 %v1653, %v1637
    %v2374 = vpack.c.b16 %v1654, %v1638
    %v2375 = vpack.c.b16 %v1655, %v1639
    %v2376 = vpack.c.b16 %v1656, %v1640
    %v2377 = vpack.c.b16 %v1657, %v1641
    %v2378 = vpack.c.b16 %v1658, %v1642
    %v2379 = vpack.c.b16 %v1675, %v1659
    %v2380 = vpack.c.b16 %v1676, %v1660
    %v2381 = vpack.c.b16 %v1677, %v1661
    %v2382 = vpack.c.b16 %v1678, %v1662
    %v2383 = vpack.c.b16 %v1679, %v1663
    %v2384 = vpack.c.b16 %v1680, %v1664
    %v2385 = vpack.c.b16 %v1681, %v1665
    %v2386 = vpack.c.b16 %v1682, %v1666
    %v2387 = vpack.c.b16 %v1683, %v1667
    %v2388 = vpack.c.b16 %v1684, %v1668
    %v2389 = vpack.c.b16 %v1685, %v1669
    %v2390 = vpack.c.b16 %v1686, %v1670
    %v2391 = vpack.c.b16 %v1687, %v1671
    %v2392 = vpack.c.b16 %v1688, %v1672
    %v2393 = vpack.c.b16 %v1689, %v1673
    %v2394 = vpack.c.b16 %v1690, %v1674
    %v2395 = vpack.c.b16 %v1707, %v1691
    %v2396 = vpack.c.b16 %v1708, %v1692
    %v2397 = vpack.c.b16 %v1709, %v1693
    %v2398 = vpack.c.b16 %v1710, %v1694
    %v2399 = vpack.c.b16 %v1711, %v1695
    %v2400 = vpack.c.b16 %v1712, %v1696
    %v2401 = vpack.c.b16 %v1713, %v1697
    %v2402 = vpack.c.b16 %v1714, %v1698
    %v2403 = vpack.c.b16 %v1715, %v1699
    %v2404 = vpack.c.b16 %v1716, %v1700
    %v2405 = vpack.c.b16 %v1717, %v1701
    %v2406 = vpack.c.b16 %v1718, %v1702
    %v2407 = vpack.c.b16 %v1719, %v1703
    %v2408 = vpack.c.b16 %v1720, %v1704
    %v2409 = vpack.c.b16 %v1721, %v1705
    %v2410 = vpack.c.b16 %v1722, %v1706
    %v2411 = vpack.c.b16 %v1739, %v1723
    %v2412 = vpack.c.b16 %v1740, %v1724
    %v2413 = vpack.c.b16 %v1741, %v1725
    %v2414 = vpack.c.b16 %v1742, %v1726
    %v2415 = vpack.c.b16 %v1743, %v1727
    %v2416 = vpack.c.b16 %v1744, %v1728
    %v2417 = vpack.c.b16 %v1745, %v1729
    %v2418 = vpack.c.b16 %v1746, %v1730
    %v2419 = vpack.c.b16 %v1747, %v1731
    %v2420 = vpack.c.b16 %v1748, %v1732
    %v2421 = vpack.c.b16 %v1749, %v1733
    %v2422 = vpack.c.b16 %v1750, %v1734
    %v2423 = vpack.c.b16 %v1751, %v1735
    %v2424 = vpack.c.b16 %v1752, %v1736
    %v2425 = vpack.c.b16 %v1753, %v1737
    %v2426 = vpack.c.b16 %v1754, %v1738
    %v2427 = vpack.c.b16 %v1771, %v1755
    %v2428 = vpack.c.b16 %v1772, %v1756
    %v2429 = vpack.c.b16 %v1773, %v1757
    %v2430 = vpack.c.b16 %v1774, %v1758
    %v2431 = vpack.c.b16 %v1775, %v1759
    %v2432 = vpack.c.b16 %v1776, %v1760
    %v2433 = vpack.c.b16 %v1777, %v1761
    %v2434 = vpack.c.b16 %v1778, %v1762
    %v2435 = vpack.c.b16 %v1779, %v1763
    %v2436 = vpack.c.b16 %v1780, %v1764
    %v2437 = vpack.c.b16 %v1781, %v1765
    %v2438 = vpack.c.b16 %v1782, %v1766
    %v2439 = vpack.c.b16 %v1783, %v1767
    %v2440 = vpack.c.b16 %v1784, %v1768
    %v2441 = vpack.c.b16 %v1785, %v1769
    %v2442 = vpack.c.b16 %v1786, %v1770
    %v2443 = vpack.c.b16 %v1803, %v1787
    %v2444 = vpack.c.b16 %v1804, %v1788
    %v2445 = vpack.c.b16 %v1805, %v1789
    %v2446 = vpack.c.b16 %v1806, %v1790
    %v2447 = vpack.c.b16 %v1807, %v1791
    %v2448 = vpack.c.b16 %v1808, %v1792
    %v2449 = vpack.c.b16 %v1809, %v1793
    %v2450 = vpack.c.b16 %v1810, %v1794
    %v2451 = vpack.c.b16 %v1811, %v1795
    %v2452 = vpack.c.b16 %v1812, %v1796
    %v2453 = vpack.c.b16 %v1813, %v1797
    %v2454 = vpack.c.b16 %v1814, %v1798
    %v2455 = vpack.c.b16 %v1815, %v1799
    %v2456 = vpack.c.b16 %v1816, %v1800
    %v2457 = vpack.c.b16 %v1817, %v1801
    %v2458 = vpack.c.b16 %v1818, %v1802
    %v2459 = vpack.c.b16 %v1835, %v1819
    %v2460 = vpack.c.b16 %v1836, %v1820
    %v2461 = vpack.c.b16 %v1837, %v1821
    %v2462 = vpack.c.b16 %v1838, %v1822
    %v2463 = vpack.c.b16 %v1839, %v1823
    %v2464 = vpack.c.b16 %v1840, %v1824
    %v2465 = vpack.c.b16 %v1841, %v1825
    %v2466 = vpack.c.b16 %v1842, %v1826
    %v2467 = vpack.c.b16 %v1843, %v1827
    %v2468 = vpack.c.b16 %v1844, %v1828
    %v2469 = vpack.c.b16 %v1845, %v1829
    %v2470 = vpack.c.b16 %v1846, %v1830
    %v2471 = vpack.c.b16 %v1847, %v1831
    %v2472 = vpack.c.b16 %v1848, %v1832
    %v2473 = vpack.c.b16 %v1849, %v1833
    %v2474 = vpack.c.b16 %v1850, %v1834
    %v2475 = vpack.c.b16 %v1867, %v1851
    %v2476 = vpack.c.b16 %v1868, %v1852
    %v2477 = vpack.c.b16 %v1869, %v1853
    %v2478 = vpack.c.b16 %v1870, %v1854
    %v2479 = vpack.c.b16 %v1871, %v1855
    %v2480 = vpack.c.b16 %v1872, %v1856
    %v2481 = vpack.c.b16 %v1873, %v1857
    %v2482 = vpack.c.b16 %v1874, %v1858
    %v2483 = vpack.c.b16 %v1875, %v1859
    %v2484 = vpack.c.b16 %v1876, %v1860
    %v2485 = vpack.c.b16 %v1877, %v1861
    %v2486 = vpack.c.b16 %v1878, %v1862
    %v2487 = vpack.c.b16 %v1879, %v1863
    %v2488 = vpack.c.b16 %v1880, %v1864
    %v2489 = vpack.c.b16 %v1881, %v1865
    %v2490 = vpack.c.b16 %v1882, %v1866
    %v2491 = vpack.c.b16 %v1899, %v1883
    %v2492 = vpack.c.b16 %v1900, %v1884
    %v2493 = vpack.c.b16 %v1901, %v1885
    %v2494 = vpack.c.b16 %v1902, %v1886
    %v2495 = vpack.c.b16 %v1903, %v1887
    %v2496 = vpack.c.b16 %v1904, %v1888
    %v2497 = vpack.c.b16 %v1905, %v1889
    %v2498 = vpack.c.b16 %v1906, %v1890
    %v2499 = vpack.c.b16 %v1907, %v1891
    %v2500 = vpack.c.b16 %v1908, %v1892
    %v2501 = vpack.c.b16 %v1909, %v1893
    %v2502 = vpack.c.b16 %v1910, %v1894
    %v2503 = vpack.c.b16 %v1911, %v1895
    %v2504 = vpack.c.b16 %v1912, %v1896
    %v2505 = vpack.c.b16 %v1913, %v1897
    %v2506 = vpack.c.b16 %v1914, %v1898
    %v2507 = vpack.c.b16 %v1931, %v1915
    %v2508 = vpack.c.b16 %v1932, %v1916
    %v2509 = vpack.c.b16 %v1933, %v1917
    %v2510 = vpack.c.b16 %v1934, %v1918
    %v2511 = vpack.c.b16 %v1935, %v1919
    %v2512 = vpack.c.b16 %v1936, %v1920
    %v2513 = vpack.c.b16 %v1937, %v1921
    %v2514 = vpack.c.b16 %v1938, %v1922
    %v2515 = vpack.c.b16 %v1939, %v1923
    %v2516 = vpack.c.b16 %v1940, %v1924
    %v2517 = vpack.c.b16 %v1941, %v1925
    %v2518 = vpack.c.b16 %v1942, %v1926
    %v2519 = vpack.c.b16 %v1943, %v1927
    %v2520 = vpack.c.b16 %v1944, %v1928
    %v2521 = vpack.c.b16 %v1945, %v1929
    %v2522 = vpack.c.b16 %v1946, %v1930
    %v2523 = vpack.c.b16 %v1963, %v1947
    %v2524 = vpack.c.b16 %v1964, %v1948
    %v2525 = vpack.c.b16 %v1965, %v1949
    %v2526 = vpack.c.b16 %v1966, %v1950
    %v2527 = vpack.c.b16 %v1967, %v1951
    %v2528 = vpack.c.b16 %v1968, %v1952
    %v2529 = vpack.c.b16 %v1969, %v1953
    %v2530 = vpack.c.b16 %v1970, %v1954
    %v2531 = vpack.c.b16 %v1971, %v1955
    %v2532 = vpack.c.b16 %v1972, %v1956
    %v2533 = vpack.c.b16 %v1973, %v1957
    %v2534 = vpack.c.b16 %v1974, %v1958
    %v2535 = vpack.c.b16 %v1975, %v1959
    %v2536 = vpack.c.b16 %v1976, %v1960
    %v2537 = vpack.c.b16 %v1977, %v1961
    %v2538 = vpack.c.b16 %v1978, %v1962
    %v2539 = vpack.c.b16 %v1995, %v1979
    %v2540 = vpack.c.b16 %v1996, %v1980
    %v2541 = vpack.c.b16 %v1997, %v1981
    %v2542 = vpack.c.b16 %v1998, %v1982
    %v2543 = vpack.c.b16 %v1999, %v1983
    %v2544 = vpack.c.b16 %v2000, %v1984
    %v2545 = vpack.c.b16 %v2001, %v1985
    %v2546 = vpack.c.b16 %v2002, %v1986
    %v2547 = vpack.c.b16 %v2003, %v1987
    %v2548 = vpack.c.b16 %v2004, %v1988
    %v2549 = vpack.c.b16 %v2005, %v1989
    %v2550 = vpack.c.b16 %v2006, %v1990
    %v2551 = vpack.c.b16 %v2007, %v1991
    %v2552 = vpack.c.b16 %v2008, %v1992
    %v2553 = vpack.c.b16 %v2009, %v1993
    %v2554 = vpack.c.b16 %v2010, %v1994
    %v2555 = vpack.c.b16 %v2027, %v2011
    %v2556 = vpack.c.b16 %v2028, %v2012
    %v2557 = vpack.c.b16 %v2029, %v2013
    %v2558 = vpack.c.b16 %v2030, %v2014
    %v2559 = vpack.c.b16 %v2031, %v2015
    %v2560 = vpack.c.b16 %v2032, %v2016
    %v2561 = vpack.c.b16 %v2033, %v2017
    %v2562 = vpack.c.b16 %v2034, %v2018
    %v2563 = vpack.c.b16 %v2035, %v2019
    %v2564 = vpack.c.b16 %v2036, %v2020
    %v2565 = vpack.c.b16 %v2037, %v2021
    %v2566 = vpack.c.b16 %v2038, %v2022
    %v2567 = vpack.c.b16 %v2039, %v2023
    %v2568 = vpack.c.b16 %v2040, %v2024
    %v2569 = vpack.c.b16 %v2041, %v2025
    %v2570 = vpack.c.b16 %v2042, %v2026
    %v2571 = vpack.c.b16 %v2059, %v2043
    %v2572 = vpack.c.b16 %v2060, %v2044
    %v2573 = vpack.c.b16 %v2061, %v2045
    %v2574 = vpack.c.b16 %v2062, %v2046
    %v2575 = vpack.c.b16 %v2063, %v2047
    %v2576 = vpack.c.b16 %v2064, %v2048
    %v2577 = vpack.c.b16 %v2065, %v2049
    %v2578 = vpack.c.b16 %v2066, %v2050
    %v2579 = vpack.c.b16 %v2067, %v2051
    %v2580 = vpack.c.b16 %v2068, %v2052
    %v2581 = vpack.c.b16 %v2069, %v2053
    %v2582 = vpack.c.b16 %v2070, %v2054
    %v2583 = vpack.c.b16 %v2071, %v2055
    %v2584 = vpack.c.b16 %v2072, %v2056
    %v2585 = vpack.c.b16 %v2073, %v2057
    %v2586 = vpack.c.b16 %v2074, %v2058
    %3099 = vmatprep.subr.bf16.mxu0 %v2076
    %3100 = vmatpush1.bf16.msra.mxu0 %v2075
    %3101 = vmatprep.subr.bf16.mxu0 %v2092
    %3102 = vmatpush1.bf16.msra.mxu0 %v2091
    %3103 = vmatprep.subr.bf16.mxu0 %v2108
    %3104 = vmatpush1.bf16.msra.mxu0 %v2107
    %3105 = vmatprep.subr.bf16.mxu0 %v2124
    %3106 = vmatpush1.bf16.msra.mxu0 %v2123
    %3107 = vmatprep.subr.bf16.mxu0 %v2140
    %3108 = vmatpush1.bf16.msra.mxu0 %v2139
    %3109 = vmatprep.subr.bf16.mxu0 %v2156
    %3110 = vmatpush1.bf16.msra.mxu0 %v2155
    %3111 = vmatprep.subr.bf16.mxu0 %v2172
    %3112 = vmatpush1.bf16.msra.mxu0 %v2171
    %3113 = vmatprep.subr.bf16.mxu0 %v2188
    %3114 = vmatpush1.bf16.msra.mxu0 %v2187
    %3115 = vmatprep.subr.bf16.mxu0 %v2204
    %3116 = vmatpush1.bf16.msra.mxu0 %v2203
    %3117 = vmatprep.subr.bf16.mxu0 %v2220
    %3118 = vmatpush1.bf16.msra.mxu0 %v2219
    %3119 = vmatprep.subr.bf16.mxu0 %v2236
    %3120 = vmatpush1.bf16.msra.mxu0 %v2235
    %3121 = vmatprep.subr.bf16.mxu0 %v2252
    %3122 = vmatpush1.bf16.msra.mxu0 %v2251
    %3123 = vmatprep.subr.bf16.mxu0 %v2268
    %3124 = vmatpush1.bf16.msra.mxu0 %v2267
    %3125 = vmatprep.subr.bf16.mxu0 %v2284
    %3126 = vmatpush1.bf16.msra.mxu0 %v2283
    %3127 = vmatprep.subr.bf16.mxu0 %v2300
    %3128 = vmatpush1.bf16.msra.mxu0 %v2299
    %3129 = vmatprep.subr.bf16.mxu0 %v2316
    %3130 = vmatpush1.bf16.msra.mxu0 %v2315
    %3131 = vmatprep.mubr.bf16.mxu0 %v24
    %3132 = vmatmul.mubr.bf16.gmra.mrb[0].mxu0 %v23
    %v3133 = vpop.f32.mrb[0].mxu0
    %v3134 = vadd.f32 0.0, %v3133
    %v3135 = vpop.f32.mrb[0].mxu0
    %v3136 = vadd.f32 0.0, %v3135
    %v3137 = vpop.f32.mrb[0].mxu0
    %v3138 = vadd.f32 0.0, %v3137
    %v3139 = vpop.f32.mrb[0].mxu0
    %v3140 = vadd.f32 0.0, %v3139
    %3141 = vdwg.mxu0
    %3142 = vmatprep.subr.bf16.mxu0 %v2332
    %3143 = vmatpush1.bf16.msra.mxu0 %v2331
    %3144 = vmatprep.subr.bf16.mxu0 %v2348
    %3145 = vmatpush1.bf16.msra.mxu0 %v2347
    %3146 = vmatprep.subr.bf16.mxu0 %v2364
    %3147 = vmatpush1.bf16.msra.mxu0 %v2363
    %3148 = vmatprep.subr.bf16.mxu0 %v2380
    %3149 = vmatpush1.bf16.msra.mxu0 %v2379
    %3150 = vmatprep.subr.bf16.mxu0 %v2396
    %3151 = vmatpush1.bf16.msra.mxu0 %v2395
    %3152 = vmatprep.subr.bf16.mxu0 %v2412
    %3153 = vmatpush1.bf16.msra.mxu0 %v2411
    %3154 = vmatprep.subr.bf16.mxu0 %v2428
    %3155 = vmatpush1.bf16.msra.mxu0 %v2427
    %3156 = vmatprep.subr.bf16.mxu0 %v2444
    %3157 = vmatpush1.bf16.msra.mxu0 %v2443
    %3158 = vmatprep.subr.bf16.mxu0 %v2460
    %3159 = vmatpush1.bf16.msra.mxu0 %v2459
    %3160 = vmatprep.subr.bf16.mxu0 %v2476
    %3161 = vmatpush1.bf16.msra.mxu0 %v2475
    %3162 = vmatprep.subr.bf16.mxu0 %v2492
    %3163 = vmatpush1.bf16.msra.mxu0 %v2491
    %3164 = vmatprep.subr.bf16.mxu0 %v2508
    %3165 = vmatpush1.bf16.msra.mxu0 %v2507
    %3166 = vmatprep.subr.bf16.mxu0 %v2524
    %3167 = vmatpush1.bf16.msra.mxu0 %v2523
    %3168 = vmatprep.subr.bf16.mxu0 %v2540
    %3169 = vmatpush1.bf16.msra.mxu0 %v2539
    %3170 = vmatprep.subr.bf16.mxu0 %v2556
    %3171 = vmatpush1.bf16.msra.mxu0 %v2555
    %3172 = vmatprep.subr.bf16.mxu0 %v2572
    %3173 = vmatpush1.bf16.msra.mxu0 %v2571
    %3174 = vmatprep.mubr.bf16.mxu0 %v26
    %3175 = vmatmul.mubr.bf16.gmra.mrb[0].mxu0 %v25
    %v3176 = vpop.f32.mrb[0].mxu0
    %v3177 = vadd.f32 %v3134, %v3176
    %v3178 = vpop.f32.mrb[0].mxu0
    %v3179 = vadd.f32 %v3136, %v3178
    %v3180 = vpop.f32.mrb[0].mxu0
    %v3181 = vadd.f32 %v3138, %v3180
    %v3182 = vpop.f32.mrb[0].mxu0
    %v3183 = vadd.f32 %v3140, %v3182
    %3184 = vdwg.mxu0
    %3185 = vmatprep.subr.bf16.mxu0 %v2078
    %3186 = vmatpush1.bf16.msra.mxu0 %v2077
    %3187 = vmatprep.subr.bf16.mxu0 %v2094
    %3188 = vmatpush1.bf16.msra.mxu0 %v2093
    %3189 = vmatprep.subr.bf16.mxu0 %v2110
    %3190 = vmatpush1.bf16.msra.mxu0 %v2109
    %3191 = vmatprep.subr.bf16.mxu0 %v2126
    %3192 = vmatpush1.bf16.msra.mxu0 %v2125
    %3193 = vmatprep.subr.bf16.mxu0 %v2142
    %3194 = vmatpush1.bf16.msra.mxu0 %v2141
    %3195 = vmatprep.subr.bf16.mxu0 %v2158
    %3196 = vmatpush1.bf16.msra.mxu0 %v2157
    %3197 = vmatprep.subr.bf16.mxu0 %v2174
    %3198 = vmatpush1.bf16.msra.mxu0 %v2173
    %3199 = vmatprep.subr.bf16.mxu0 %v2190
    %3200 = vmatpush1.bf16.msra.mxu0 %v2189
    %3201 = vmatprep.subr.bf16.mxu0 %v2206
    %3202 = vmatpush1.bf16.msra.mxu0 %v2205
    %3203 = vmatprep.subr.bf16.mxu0 %v2222
    %3204 = vmatpush1.bf16.msra.mxu0 %v2221
    %3205 = vmatprep.subr.bf16.mxu0 %v2238
    %3206 = vmatpush1.bf16.msra.mxu0 %v2237
    %3207 = vmatprep.subr.bf16.mxu0 %v2254
    %3208 = vmatpush1.bf16.msra.mxu0 %v2253
    %3209 = vmatprep.subr.bf16.mxu0 %v2270
    %3210 = vmatpush1.bf16.msra.mxu0 %v2269
    %3211 = vmatprep.subr.bf16.mxu0 %v2286
    %3212 = vmatpush1.bf16.msra.mxu0 %v2285
    %3213 = vmatprep.subr.bf16.mxu0 %v2302
    %3214 = vmatpush1.bf16.msra.mxu0 %v2301
    %3215 = vmatprep.subr.bf16.mxu0 %v2318
    %3216 = vmatpush1.bf16.msra.mxu0 %v2317
    %3217 = vmatprep.mubr.bf16.mxu0 %v24
    %3218 = vmatmul.mubr.bf16.gmra.mrb[0].mxu0 %v23
    %v3219 = vpop.f32.mrb[0].mxu0
    %v3220 = vadd.f32 0.0, %v3219
    %v3221 = vpop.f32.mrb[0].mxu0
    %v3222 = vadd.f32 0.0, %v3221
    %v3223 = vpop.f32.mrb[0].mxu0
    %v3224 = vadd.f32 0.0, %v3223
    %v3225 = vpop.f32.mrb[0].mxu0
    %v3226 = vadd.f32 0.0, %v3225
    %3227 = vdwg.mxu0
    %3228 = vmatprep.subr.bf16.mxu0 %v2334
    %3229 = vmatpush1.bf16.msra.mxu0 %v2333
    %3230 = vmatprep.subr.bf16.mxu0 %v2350
    %3231 = vmatpush1.bf16.msra.mxu0 %v2349
    %3232 = vmatprep.subr.bf16.mxu0 %v2366
    %3233 = vmatpush1.bf16.msra.mxu0 %v2365
    %3234 = vmatprep.subr.bf16.mxu0 %v2382
    %3235 = vmatpush1.bf16.msra.mxu0 %v2381
    %3236 = vmatprep.subr.bf16.mxu0 %v2398
    %3237 = vmatpush1.bf16.msra.mxu0 %v2397
    %3238 = vmatprep.subr.bf16.mxu0 %v2414
    %3239 = vmatpush1.bf16.msra.mxu0 %v2413
    %3240 = vmatprep.subr.bf16.mxu0 %v2430
    %3241 = vmatpush1.bf16.msra.mxu0 %v2429
    %3242 = vmatprep.subr.bf16.mxu0 %v2446
    %3243 = vmatpush1.bf16.msra.mxu0 %v2445
    %3244 = vmatprep.subr.bf16.mxu0 %v2462
    %3245 = vmatpush1.bf16.msra.mxu0 %v2461
    %3246 = vmatprep.subr.bf16.mxu0 %v2478
    %3247 = vmatpush1.bf16.msra.mxu0 %v2477
    %3248 = vmatprep.subr.bf16.mxu0 %v2494
    %3249 = vmatpush1.bf16.msra.mxu0 %v2493
    %3250 = vmatprep.subr.bf16.mxu0 %v2510
    %3251 = vmatpush1.bf16.msra.mxu0 %v2509
    %3252 = vmatprep.subr.bf16.mxu0 %v2526
    %3253 = vmatpush1.bf16.msra.mxu0 %v2525
    %3254 = vmatprep.subr.bf16.mxu0 %v2542
    %3255 = vmatpush1.bf16.msra.mxu0 %v2541
    %3256 = vmatprep.subr.bf16.mxu0 %v2558
    %3257 = vmatpush1.bf16.msra.mxu0 %v2557
    %3258 = vmatprep.subr.bf16.mxu0 %v2574
    %3259 = vmatpush1.bf16.msra.mxu0 %v2573
    %3260 = vmatprep.mubr.bf16.mxu0 %v26
    %3261 = vmatmul.mubr.bf16.gmra.mrb[0].mxu0 %v25
    %v3262 = vpop.f32.mrb[0].mxu0
    %v3263 = vadd.f32 %v3220, %v3262
    %v3264 = vpop.f32.mrb[0].mxu0
    %v3265 = vadd.f32 %v3222, %v3264
    %v3266 = vpop.f32.mrb[0].mxu0
    %v3267 = vadd.f32 %v3224, %v3266
    %v3268 = vpop.f32.mrb[0].mxu0
    %v3269 = vadd.f32 %v3226, %v3268
    %3270 = vdwg.mxu0
    %3271 = vmatprep.subr.bf16.mxu0 %v2080
    %3272 = vmatpush1.bf16.msra.mxu0 %v2079
    %3273 = vmatprep.subr.bf16.mxu0 %v2096
    %3274 = vmatpush1.bf16.msra.mxu0 %v2095
    %3275 = vmatprep.subr.bf16.mxu0 %v2112
    %3276 = vmatpush1.bf16.msra.mxu0 %v2111
    %3277 = vmatprep.subr.bf16.mxu0 %v2128
    %3278 = vmatpush1.bf16.msra.mxu0 %v2127
    %3279 = vmatprep.subr.bf16.mxu0 %v2144
    %3280 = vmatpush1.bf16.msra.mxu0 %v2143
    %3281 = vmatprep.subr.bf16.mxu0 %v2160
    %3282 = vmatpush1.bf16.msra.mxu0 %v2159
    %3283 = vmatprep.subr.bf16.mxu0 %v2176
    %3284 = vmatpush1.bf16.msra.mxu0 %v2175
    %3285 = vmatprep.subr.bf16.mxu0 %v2192
    %3286 = vmatpush1.bf16.msra.mxu0 %v2191
    %3287 = vmatprep.subr.bf16.mxu0 %v2208
    %3288 = vmatpush1.bf16.msra.mxu0 %v2207
    %3289 = vmatprep.subr.bf16.mxu0 %v2224
    %3290 = vmatpush1.bf16.msra.mxu0 %v2223
    %3291 = vmatprep.subr.bf16.mxu0 %v2240
    %3292 = vmatpush1.bf16.msra.mxu0 %v2239
    %3293 = vmatprep.subr.bf16.mxu0 %v2256
    %3294 = vmatpush1.bf16.msra.mxu0 %v2255
    %3295 = vmatprep.subr.bf16.mxu0 %v2272
    %3296 = vmatpush1.bf16.msra.mxu0 %v2271
    %3297 = vmatprep.subr.bf16.mxu0 %v2288
    %3298 = vmatpush1.bf16.msra.mxu0 %v2287
    %3299 = vmatprep.subr.bf16.mxu0 %v2304
    %3300 = vmatpush1.bf16.msra.mxu0 %v2303
    %3301 = vmatprep.subr.bf16.mxu0 %v2320
    %3302 = vmatpush1.bf16.msra.mxu0 %v2319
    %3303 = vmatprep.mubr.bf16.mxu0 %v24
    %3304 = vmatmul.mubr.bf16.gmra.mrb[0].mxu0 %v23
    %v3305 = vpop.f32.mrb[0].mxu0
    %v3306 = vadd.f32 0.0, %v3305
    %v3307 = vpop.f32.mrb[0].mxu0
    %v3308 = vadd.f32 0.0, %v3307
    %v3309 = vpop.f32.mrb[0].mxu0
    %v3310 = vadd.f32 0.0, %v3309
    %v3311 = vpop.f32.mrb[0].mxu0
    %v3312 = vadd.f32 0.0, %v3311
    %3313 = vdwg.mxu0
    %3314 = vmatprep.subr.bf16.mxu0 %v2336
    %3315 = vmatpush1.bf16.msra.mxu0 %v2335
    %3316 = vmatprep.subr.bf16.mxu0 %v2352
    %3317 = vmatpush1.bf16.msra.mxu0 %v2351
    %3318 = vmatprep.subr.bf16.mxu0 %v2368
    %3319 = vmatpush1.bf16.msra.mxu0 %v2367
    %3320 = vmatprep.subr.bf16.mxu0 %v2384
    %3321 = vmatpush1.bf16.msra.mxu0 %v2383
    %3322 = vmatprep.subr.bf16.mxu0 %v2400
    %3323 = vmatpush1.bf16.msra.mxu0 %v2399
    %3324 = vmatprep.subr.bf16.mxu0 %v2416
    %3325 = vmatpush1.bf16.msra.mxu0 %v2415
    %3326 = vmatprep.subr.bf16.mxu0 %v2432
    %3327 = vmatpush1.bf16.msra.mxu0 %v2431
    %3328 = vmatprep.subr.bf16.mxu0 %v2448
    %3329 = vmatpush1.bf16.msra.mxu0 %v2447
    %3330 = vmatprep.subr.bf16.mxu0 %v2464
    %3331 = vmatpush1.bf16.msra.mxu0 %v2463
    %3332 = vmatprep.subr.bf16.mxu0 %v2480
    %3333 = vmatpush1.bf16.msra.mxu0 %v2479
    %3334 = vmatprep.subr.bf16.mxu0 %v2496
    %3335 = vmatpush1.bf16.msra.mxu0 %v2495
    %3336 = vmatprep.subr.bf16.mxu0 %v2512
    %3337 = vmatpush1.bf16.msra.mxu0 %v2511
    %3338 = vmatprep.subr.bf16.mxu0 %v2528
    %3339 = vmatpush1.bf16.msra.mxu0 %v2527
    %3340 = vmatprep.subr.bf16.mxu0 %v2544
    %3341 = vmatpush1.bf16.msra.mxu0 %v2543
    %3342 = vmatprep.subr.bf16.mxu0 %v2560
    %3343 = vmatpush1.bf16.msra.mxu0 %v2559
    %3344 = vmatprep.subr.bf16.mxu0 %v2576
    %3345 = vmatpush1.bf16.msra.mxu0 %v2575
    %3346 = vmatprep.mubr.bf16.mxu0 %v26
    %3347 = vmatmul.mubr.bf16.gmra.mrb[0].mxu0 %v25
    %v3348 = vpop.f32.mrb[0].mxu0
    %v3349 = vadd.f32 %v3306, %v3348
    %v3350 = vpop.f32.mrb[0].mxu0
    %v3351 = vadd.f32 %v3308, %v3350
    %v3352 = vpop.f32.mrb[0].mxu0
    %v3353 = vadd.f32 %v3310, %v3352
    %v3354 = vpop.f32.mrb[0].mxu0
    %v3355 = vadd.f32 %v3312, %v3354
    %3356 = vdwg.mxu0
    %3357 = vmatprep.subr.bf16.mxu0 %v2082
    %3358 = vmatpush1.bf16.msra.mxu0 %v2081
    %3359 = vmatprep.subr.bf16.mxu0 %v2098
    %3360 = vmatpush1.bf16.msra.mxu0 %v2097
    %3361 = vmatprep.subr.bf16.mxu0 %v2114
    %3362 = vmatpush1.bf16.msra.mxu0 %v2113
    %3363 = vmatprep.subr.bf16.mxu0 %v2130
    %3364 = vmatpush1.bf16.msra.mxu0 %v2129
    %3365 = vmatprep.subr.bf16.mxu0 %v2146
    %3366 = vmatpush1.bf16.msra.mxu0 %v2145
    %3367 = vmatprep.subr.bf16.mxu0 %v2162
    %3368 = vmatpush1.bf16.msra.mxu0 %v2161
    %3369 = vmatprep.subr.bf16.mxu0 %v2178
    %3370 = vmatpush1.bf16.msra.mxu0 %v2177
    %3371 = vmatprep.subr.bf16.mxu0 %v2194
    %3372 = vmatpush1.bf16.msra.mxu0 %v2193
    %3373 = vmatprep.subr.bf16.mxu0 %v2210
    %3374 = vmatpush1.bf16.msra.mxu0 %v2209
    %3375 = vmatprep.subr.bf16.mxu0 %v2226
    %3376 = vmatpush1.bf16.msra.mxu0 %v2225
    %3377 = vmatprep.subr.bf16.mxu0 %v2242
    %3378 = vmatpush1.bf16.msra.mxu0 %v2241
    %3379 = vmatprep.subr.bf16.mxu0 %v2258
    %3380 = vmatpush1.bf16.msra.mxu0 %v2257
    %3381 = vmatprep.subr.bf16.mxu0 %v2274
    %3382 = vmatpush1.bf16.msra.mxu0 %v2273
    %3383 = vmatprep.subr.bf16.mxu0 %v2290
    %3384 = vmatpush1.bf16.msra.mxu0 %v2289
    %3385 = vmatprep.subr.bf16.mxu0 %v2306
    %3386 = vmatpush1.bf16.msra.mxu0 %v2305
    %3387 = vmatprep.subr.bf16.mxu0 %v2322
    %3388 = vmatpush1.bf16.msra.mxu0 %v2321
    %3389 = vmatprep.mubr.bf16.mxu0 %v24
    %3390 = vmatmul.mubr.bf16.gmra.mrb[0].mxu0 %v23
    %v3391 = vpop.f32.mrb[0].mxu0
    %v3392 = vadd.f32 0.0, %v3391
    %v3393 = vpop.f32.mrb[0].mxu0
    %v3394 = vadd.f32 0.0, %v3393
    %v3395 = vpop.f32.mrb[0].mxu0
    %v3396 = vadd.f32 0.0, %v3395
    %v3397 = vpop.f32.mrb[0].mxu0
    %v3398 = vadd.f32 0.0, %v3397
    %3399 = vdwg.mxu0
    %3400 = vmatprep.subr.bf16.mxu0 %v2338
    %3401 = vmatpush1.bf16.msra.mxu0 %v2337
    %3402 = vmatprep.subr.bf16.mxu0 %v2354
    %3403 = vmatpush1.bf16.msra.mxu0 %v2353
    %3404 = vmatprep.subr.bf16.mxu0 %v2370
    %3405 = vmatpush1.bf16.msra.mxu0 %v2369
    %3406 = vmatprep.subr.bf16.mxu0 %v2386
    %3407 = vmatpush1.bf16.msra.mxu0 %v2385
    %3408 = vmatprep.subr.bf16.mxu0 %v2402
    %3409 = vmatpush1.bf16.msra.mxu0 %v2401
    %3410 = vmatprep.subr.bf16.mxu0 %v2418
    %3411 = vmatpush1.bf16.msra.mxu0 %v2417
    %3412 = vmatprep.subr.bf16.mxu0 %v2434
    %3413 = vmatpush1.bf16.msra.mxu0 %v2433
    %3414 = vmatprep.subr.bf16.mxu0 %v2450
    %3415 = vmatpush1.bf16.msra.mxu0 %v2449
    %3416 = vmatprep.subr.bf16.mxu0 %v2466
    %3417 = vmatpush1.bf16.msra.mxu0 %v2465
    %3418 = vmatprep.subr.bf16.mxu0 %v2482
    %3419 = vmatpush1.bf16.msra.mxu0 %v2481
    %3420 = vmatprep.subr.bf16.mxu0 %v2498
    %3421 = vmatpush1.bf16.msra.mxu0 %v2497
    %3422 = vmatprep.subr.bf16.mxu0 %v2514
    %3423 = vmatpush1.bf16.msra.mxu0 %v2513
    %3424 = vmatprep.subr.bf16.mxu0 %v2530
    %3425 = vmatpush1.bf16.msra.mxu0 %v2529
    %3426 = vmatprep.subr.bf16.mxu0 %v2546
    %3427 = vmatpush1.bf16.msra.mxu0 %v2545
    %3428 = vmatprep.subr.bf16.mxu0 %v2562
    %3429 = vmatpush1.bf16.msra.mxu0 %v2561
    %3430 = vmatprep.subr.bf16.mxu0 %v2578
    %3431 = vmatpush1.bf16.msra.mxu0 %v2577
    %3432 = vmatprep.mubr.bf16.mxu0 %v26
    %3433 = vmatmul.mubr.bf16.gmra.mrb[0].mxu0 %v25
    %v3434 = vpop.f32.mrb[0].mxu0
    %v3435 = vadd.f32 %v3392, %v3434
    %v3436 = vpop.f32.mrb[0].mxu0
    %v3437 = vadd.f32 %v3394, %v3436
    %v3438 = vpop.f32.mrb[0].mxu0
    %v3439 = vadd.f32 %v3396, %v3438
    %v3440 = vpop.f32.mrb[0].mxu0
    %v3441 = vadd.f32 %v3398, %v3440
    %3442 = vdwg.mxu0
    %3443 = vmatprep.subr.bf16.mxu0 %v2084
    %3444 = vmatpush1.bf16.msra.mxu0 %v2083
    %3445 = vmatprep.subr.bf16.mxu0 %v2100
    %3446 = vmatpush1.bf16.msra.mxu0 %v2099
    %3447 = vmatprep.subr.bf16.mxu0 %v2116
    %3448 = vmatpush1.bf16.msra.mxu0 %v2115
    %3449 = vmatprep.subr.bf16.mxu0 %v2132
    %3450 = vmatpush1.bf16.msra.mxu0 %v2131
    %3451 = vmatprep.subr.bf16.mxu0 %v2148
    %3452 = vmatpush1.bf16.msra.mxu0 %v2147
    %3453 = vmatprep.subr.bf16.mxu0 %v2164
    %3454 = vmatpush1.bf16.msra.mxu0 %v2163
    %3455 = vmatprep.subr.bf16.mxu0 %v2180
    %3456 = vmatpush1.bf16.msra.mxu0 %v2179
    %3457 = vmatprep.subr.bf16.mxu0 %v2196
    %3458 = vmatpush1.bf16.msra.mxu0 %v2195
    %3459 = vmatprep.subr.bf16.mxu0 %v2212
    %3460 = vmatpush1.bf16.msra.mxu0 %v2211
    %3461 = vmatprep.subr.bf16.mxu0 %v2228
    %3462 = vmatpush1.bf16.msra.mxu0 %v2227
    %3463 = vmatprep.subr.bf16.mxu0 %v2244
    %3464 = vmatpush1.bf16.msra.mxu0 %v2243
    %3465 = vmatprep.subr.bf16.mxu0 %v2260
    %3466 = vmatpush1.bf16.msra.mxu0 %v2259
    %3467 = vmatprep.subr.bf16.mxu0 %v2276
    %3468 = vmatpush1.bf16.msra.mxu0 %v2275
    %3469 = vmatprep.subr.bf16.mxu0 %v2292
    %3470 = vmatpush1.bf16.msra.mxu0 %v2291
    %3471 = vmatprep.subr.bf16.mxu0 %v2308
    %3472 = vmatpush1.bf16.msra.mxu0 %v2307
    %3473 = vmatprep.subr.bf16.mxu0 %v2324
    %3474 = vmatpush1.bf16.msra.mxu0 %v2323
    %3475 = vmatprep.mubr.bf16.mxu0 %v24
    %3476 = vmatmul.mubr.bf16.gmra.mrb[0].mxu0 %v23
    %v3477 = vpop.f32.mrb[0].mxu0
    %v3478 = vadd.f32 0.0, %v3477
    %v3479 = vpop.f32.mrb[0].mxu0
    %v3480 = vadd.f32 0.0, %v3479
    %v3481 = vpop.f32.mrb[0].mxu0
    %v3482 = vadd.f32 0.0, %v3481
    %v3483 = vpop.f32.mrb[0].mxu0
    %v3484 = vadd.f32 0.0, %v3483
    %3485 = vdwg.mxu0
    %3486 = vmatprep.subr.bf16.mxu0 %v2340
    %3487 = vmatpush1.bf16.msra.mxu0 %v2339
    %3488 = vmatprep.subr.bf16.mxu0 %v2356
    %3489 = vmatpush1.bf16.msra.mxu0 %v2355
    %3490 = vmatprep.subr.bf16.mxu0 %v2372
    %3491 = vmatpush1.bf16.msra.mxu0 %v2371
    %3492 = vmatprep.subr.bf16.mxu0 %v2388
    %3493 = vmatpush1.bf16.msra.mxu0 %v2387
    %3494 = vmatprep.subr.bf16.mxu0 %v2404
    %3495 = vmatpush1.bf16.msra.mxu0 %v2403
    %3496 = vmatprep.subr.bf16.mxu0 %v2420
    %3497 = vmatpush1.bf16.msra.mxu0 %v2419
    %3498 = vmatprep.subr.bf16.mxu0 %v2436
    %3499 = vmatpush1.bf16.msra.mxu0 %v2435
    %3500 = vmatprep.subr.bf16.mxu0 %v2452
    %3501 = vmatpush1.bf16.msra.mxu0 %v2451
    %3502 = vmatprep.subr.bf16.mxu0 %v2468
    %3503 = vmatpush1.bf16.msra.mxu0 %v2467
    %3504 = vmatprep.subr.bf16.mxu0 %v2484
    %3505 = vmatpush1.bf16.msra.mxu0 %v2483
    %3506 = vmatprep.subr.bf16.mxu0 %v2500
    %3507 = vmatpush1.bf16.msra.mxu0 %v2499
    %3508 = vmatprep.subr.bf16.mxu0 %v2516
    %3509 = vmatpush1.bf16.msra.mxu0 %v2515
    %3510 = vmatprep.subr.bf16.mxu0 %v2532
    %3511 = vmatpush1.bf16.msra.mxu0 %v2531
    %3512 = vmatprep.subr.bf16.mxu0 %v2548
    %3513 = vmatpush1.bf16.msra.mxu0 %v2547
    %3514 = vmatprep.subr.bf16.mxu0 %v2564
    %3515 = vmatpush1.bf16.msra.mxu0 %v2563
    %3516 = vmatprep.subr.bf16.mxu0 %v2580
    %3517 = vmatpush1.bf16.msra.mxu0 %v2579
    %3518 = vmatprep.mubr.bf16.mxu0 %v26
    %3519 = vmatmul.mubr.bf16.gmra.mrb[0].mxu0 %v25
    %v3520 = vpop.f32.mrb[0].mxu0
    %v3521 = vadd.f32 %v3478, %v3520
    %v3522 = vpop.f32.mrb[0].mxu0
    %v3523 = vadd.f32 %v3480, %v3522
    %v3524 = vpop.f32.mrb[0].mxu0
    %v3525 = vadd.f32 %v3482, %v3524
    %v3526 = vpop.f32.mrb[0].mxu0
    %v3527 = vadd.f32 %v3484, %v3526
    %3528 = vdwg.mxu0
    %3529 = vmatprep.subr.bf16.mxu0 %v2086
    %3530 = vmatpush1.bf16.msra.mxu0 %v2085
    %3531 = vmatprep.subr.bf16.mxu0 %v2102
    %3532 = vmatpush1.bf16.msra.mxu0 %v2101
    %3533 = vmatprep.subr.bf16.mxu0 %v2118
    %3534 = vmatpush1.bf16.msra.mxu0 %v2117
    %3535 = vmatprep.subr.bf16.mxu0 %v2134
    %3536 = vmatpush1.bf16.msra.mxu0 %v2133
    %3537 = vmatprep.subr.bf16.mxu0 %v2150
    %3538 = vmatpush1.bf16.msra.mxu0 %v2149
    %3539 = vmatprep.subr.bf16.mxu0 %v2166
    %3540 = vmatpush1.bf16.msra.mxu0 %v2165
    %3541 = vmatprep.subr.bf16.mxu0 %v2182
    %3542 = vmatpush1.bf16.msra.mxu0 %v2181
    %3543 = vmatprep.subr.bf16.mxu0 %v2198
    %3544 = vmatpush1.bf16.msra.mxu0 %v2197
    %3545 = vmatprep.subr.bf16.mxu0 %v2214
    %3546 = vmatpush1.bf16.msra.mxu0 %v2213
    %3547 = vmatprep.subr.bf16.mxu0 %v2230
    %3548 = vmatpush1.bf16.msra.mxu0 %v2229
    %3549 = vmatprep.subr.bf16.mxu0 %v2246
    %3550 = vmatpush1.bf16.msra.mxu0 %v2245
    %3551 = vmatprep.subr.bf16.mxu0 %v2262
    %3552 = vmatpush1.bf16.msra.mxu0 %v2261
    %3553 = vmatprep.subr.bf16.mxu0 %v2278
    %3554 = vmatpush1.bf16.msra.mxu0 %v2277
    %3555 = vmatprep.subr.bf16.mxu0 %v2294
    %3556 = vmatpush1.bf16.msra.mxu0 %v2293
    %3557 = vmatprep.subr.bf16.mxu0 %v2310
    %3558 = vmatpush1.bf16.msra.mxu0 %v2309
    %3559 = vmatprep.subr.bf16.mxu0 %v2326
    %3560 = vmatpush1.bf16.msra.mxu0 %v2325
    %3561 = vmatprep.mubr.bf16.mxu0 %v24
    %3562 = vmatmul.mubr.bf16.gmra.mrb[0].mxu0 %v23
    %v3563 = vpop.f32.mrb[0].mxu0
    %v3564 = vadd.f32 0.0, %v3563
    %v3565 = vpop.f32.mrb[0].mxu0
    %v3566 = vadd.f32 0.0, %v3565
    %v3567 = vpop.f32.mrb[0].mxu0
    %v3568 = vadd.f32 0.0, %v3567
    %v3569 = vpop.f32.mrb[0].mxu0
    %v3570 = vadd.f32 0.0, %v3569
    %3571 = vdwg.mxu0
    %3572 = vmatprep.subr.bf16.mxu0 %v2342
    %3573 = vmatpush1.bf16.msra.mxu0 %v2341
    %3574 = vmatprep.subr.bf16.mxu0 %v2358
    %3575 = vmatpush1.bf16.msra.mxu0 %v2357
    %3576 = vmatprep.subr.bf16.mxu0 %v2374
    %3577 = vmatpush1.bf16.msra.mxu0 %v2373
    %3578 = vmatprep.subr.bf16.mxu0 %v2390
    %3579 = vmatpush1.bf16.msra.mxu0 %v2389
    %3580 = vmatprep.subr.bf16.mxu0 %v2406
    %3581 = vmatpush1.bf16.msra.mxu0 %v2405
    %3582 = vmatprep.subr.bf16.mxu0 %v2422
    %3583 = vmatpush1.bf16.msra.mxu0 %v2421
    %3584 = vmatprep.subr.bf16.mxu0 %v2438
    %3585 = vmatpush1.bf16.msra.mxu0 %v2437
    %3586 = vmatprep.subr.bf16.mxu0 %v2454
    %3587 = vmatpush1.bf16.msra.mxu0 %v2453
    %3588 = vmatprep.subr.bf16.mxu0 %v2470
    %3589 = vmatpush1.bf16.msra.mxu0 %v2469
    %3590 = vmatprep.subr.bf16.mxu0 %v2486
    %3591 = vmatpush1.bf16.msra.mxu0 %v2485
    %3592 = vmatprep.subr.bf16.mxu0 %v2502
    %3593 = vmatpush1.bf16.msra.mxu0 %v2501
    %3594 = vmatprep.subr.bf16.mxu0 %v2518
    %3595 = vmatpush1.bf16.msra.mxu0 %v2517
    %3596 = vmatprep.subr.bf16.mxu0 %v2534
    %3597 = vmatpush1.bf16.msra.mxu0 %v2533
    %3598 = vmatprep.subr.bf16.mxu0 %v2550
    %3599 = vmatpush1.bf16.msra.mxu0 %v2549
    %3600 = vmatprep.subr.bf16.mxu0 %v2566
    %3601 = vmatpush1.bf16.msra.mxu0 %v2565
    %3602 = vmatprep.subr.bf16.mxu0 %v2582
    %3603 = vmatpush1.bf16.msra.mxu0 %v2581
    %3604 = vmatprep.mubr.bf16.mxu0 %v26
    %3605 = vmatmul.mubr.bf16.gmra.mrb[0].mxu0 %v25
    %v3606 = vpop.f32.mrb[0].mxu0
    %v3607 = vadd.f32 %v3564, %v3606
    %v3608 = vpop.f32.mrb[0].mxu0
    %v3609 = vadd.f32 %v3566, %v3608
    %v3610 = vpop.f32.mrb[0].mxu0
    %v3611 = vadd.f32 %v3568, %v3610
    %v3612 = vpop.f32.mrb[0].mxu0
    %v3613 = vadd.f32 %v3570, %v3612
    %3614 = vdwg.mxu0
    %3615 = vmatprep.subr.bf16.mxu0 %v2088
    %3616 = vmatpush1.bf16.msra.mxu0 %v2087
    %3617 = vmatprep.subr.bf16.mxu0 %v2104
    %3618 = vmatpush1.bf16.msra.mxu0 %v2103
    %3619 = vmatprep.subr.bf16.mxu0 %v2120
    %3620 = vmatpush1.bf16.msra.mxu0 %v2119
    %3621 = vmatprep.subr.bf16.mxu0 %v2136
    %3622 = vmatpush1.bf16.msra.mxu0 %v2135
    %3623 = vmatprep.subr.bf16.mxu0 %v2152
    %3624 = vmatpush1.bf16.msra.mxu0 %v2151
    %3625 = vmatprep.subr.bf16.mxu0 %v2168
    %3626 = vmatpush1.bf16.msra.mxu0 %v2167
    %3627 = vmatprep.subr.bf16.mxu0 %v2184
    %3628 = vmatpush1.bf16.msra.mxu0 %v2183
    %3629 = vmatprep.subr.bf16.mxu0 %v2200
    %3630 = vmatpush1.bf16.msra.mxu0 %v2199
    %3631 = vmatprep.subr.bf16.mxu0 %v2216
    %3632 = vmatpush1.bf16.msra.mxu0 %v2215
    %3633 = vmatprep.subr.bf16.mxu0 %v2232
    %3634 = vmatpush1.bf16.msra.mxu0 %v2231
    %3635 = vmatprep.subr.bf16.mxu0 %v2248
    %3636 = vmatpush1.bf16.msra.mxu0 %v2247
    %3637 = vmatprep.subr.bf16.mxu0 %v2264
    %3638 = vmatpush1.bf16.msra.mxu0 %v2263
    %3639 = vmatprep.subr.bf16.mxu0 %v2280
    %3640 = vmatpush1.bf16.msra.mxu0 %v2279
    %3641 = vmatprep.subr.bf16.mxu0 %v2296
    %3642 = vmatpush1.bf16.msra.mxu0 %v2295
    %3643 = vmatprep.subr.bf16.mxu0 %v2312
    %3644 = vmatpush1.bf16.msra.mxu0 %v2311
    %3645 = vmatprep.subr.bf16.mxu0 %v2328
    %3646 = vmatpush1.bf16.msra.mxu0 %v2327
    %3647 = vmatprep.mubr.bf16.mxu0 %v24
    %3648 = vmatmul.mubr.bf16.gmra.mrb[0].mxu0 %v23
    %v3649 = vpop.f32.mrb[0].mxu0
    %v3650 = vadd.f32 0.0, %v3649
    %v3651 = vpop.f32.mrb[0].mxu0
    %v3652 = vadd.f32 0.0, %v3651
    %v3653 = vpop.f32.mrb[0].mxu0
    %v3654 = vadd.f32 0.0, %v3653
    %v3655 = vpop.f32.mrb[0].mxu0
    %v3656 = vadd.f32 0.0, %v3655
    %3657 = vdwg.mxu0
    %3658 = vmatprep.subr.bf16.mxu0 %v2344
    %3659 = vmatpush1.bf16.msra.mxu0 %v2343
    %3660 = vmatprep.subr.bf16.mxu0 %v2360
    %3661 = vmatpush1.bf16.msra.mxu0 %v2359
    %3662 = vmatprep.subr.bf16.mxu0 %v2376
    %3663 = vmatpush1.bf16.msra.mxu0 %v2375
    %3664 = vmatprep.subr.bf16.mxu0 %v2392
    %3665 = vmatpush1.bf16.msra.mxu0 %v2391
    %3666 = vmatprep.subr.bf16.mxu0 %v2408
    %3667 = vmatpush1.bf16.msra.mxu0 %v2407
    %3668 = vmatprep.subr.bf16.mxu0 %v2424
    %3669 = vmatpush1.bf16.msra.mxu0 %v2423
    %3670 = vmatprep.subr.bf16.mxu0 %v2440
    %3671 = vmatpush1.bf16.msra.mxu0 %v2439
    %3672 = vmatprep.subr.bf16.mxu0 %v2456
    %3673 = vmatpush1.bf16.msra.mxu0 %v2455
    %3674 = vmatprep.subr.bf16.mxu0 %v2472
    %3675 = vmatpush1.bf16.msra.mxu0 %v2471
    %3676 = vmatprep.subr.bf16.mxu0 %v2488
    %3677 = vmatpush1.bf16.msra.mxu0 %v2487
    %3678 = vmatprep.subr.bf16.mxu0 %v2504
    %3679 = vmatpush1.bf16.msra.mxu0 %v2503
    %3680 = vmatprep.subr.bf16.mxu0 %v2520
    %3681 = vmatpush1.bf16.msra.mxu0 %v2519
    %3682 = vmatprep.subr.bf16.mxu0 %v2536
    %3683 = vmatpush1.bf16.msra.mxu0 %v2535
    %3684 = vmatprep.subr.bf16.mxu0 %v2552
    %3685 = vmatpush1.bf16.msra.mxu0 %v2551
    %3686 = vmatprep.subr.bf16.mxu0 %v2568
    %3687 = vmatpush1.bf16.msra.mxu0 %v2567
    %3688 = vmatprep.subr.bf16.mxu0 %v2584
    %3689 = vmatpush1.bf16.msra.mxu0 %v2583
    %3690 = vmatprep.mubr.bf16.mxu0 %v26
    %3691 = vmatmul.mubr.bf16.gmra.mrb[0].mxu0 %v25
    %v3692 = vpop.f32.mrb[0].mxu0
    %v3693 = vadd.f32 %v3650, %v3692
    %v3694 = vpop.f32.mrb[0].mxu0
    %v3695 = vadd.f32 %v3652, %v3694
    %v3696 = vpop.f32.mrb[0].mxu0
    %v3697 = vadd.f32 %v3654, %v3696
    %v3698 = vpop.f32.mrb[0].mxu0
    %v3699 = vadd.f32 %v3656, %v3698
    %3700 = vdwg.mxu0
    %3701 = vmatprep.subr.bf16.mxu0 %v2090
    %3702 = vmatpush1.bf16.msra.mxu0 %v2089
    %3703 = vmatprep.subr.bf16.mxu0 %v2106
    %3704 = vmatpush1.bf16.msra.mxu0 %v2105
    %3705 = vmatprep.subr.bf16.mxu0 %v2122
    %3706 = vmatpush1.bf16.msra.mxu0 %v2121
    %3707 = vmatprep.subr.bf16.mxu0 %v2138
    %3708 = vmatpush1.bf16.msra.mxu0 %v2137
    %3709 = vmatprep.subr.bf16.mxu0 %v2154
    %3710 = vmatpush1.bf16.msra.mxu0 %v2153
    %3711 = vmatprep.subr.bf16.mxu0 %v2170
    %3712 = vmatpush1.bf16.msra.mxu0 %v2169
    %3713 = vmatprep.subr.bf16.mxu0 %v2186
    %3714 = vmatpush1.bf16.msra.mxu0 %v2185
    %3715 = vmatprep.subr.bf16.mxu0 %v2202
    %3716 = vmatpush1.bf16.msra.mxu0 %v2201
    %3717 = vmatprep.subr.bf16.mxu0 %v2218
    %3718 = vmatpush1.bf16.msra.mxu0 %v2217
    %3719 = vmatprep.subr.bf16.mxu0 %v2234
    %3720 = vmatpush1.bf16.msra.mxu0 %v2233
    %3721 = vmatprep.subr.bf16.mxu0 %v2250
    %3722 = vmatpush1.bf16.msra.mxu0 %v2249
    %3723 = vmatprep.subr.bf16.mxu0 %v2266
    %3724 = vmatpush1.bf16.msra.mxu0 %v2265
    %3725 = vmatprep.subr.bf16.mxu0 %v2282
    %3726 = vmatpush1.bf16.msra.mxu0 %v2281
    %3727 = vmatprep.subr.bf16.mxu0 %v2298
    %3728 = vmatpush1.bf16.msra.mxu0 %v2297
    %3729 = vmatprep.subr.bf16.mxu0 %v2314
    %3730 = vmatpush1.bf16.msra.mxu0 %v2313
    %3731 = vmatprep.subr.bf16.mxu0 %v2330
    %3732 = vmatpush1.bf16.msra.mxu0 %v2329
    %3733 = vmatprep.mubr.bf16.mxu0 %v24
    %3734 = vmatmul.mubr.bf16.gmra.mrb[0].mxu0 %v23
    %v3735 = vpop.f32.mrb[0].mxu0
    %v3736 = vadd.f32 0.0, %v3735
    %v3737 = vpop.f32.mrb[0].mxu0
    %v3738 = vadd.f32 0.0, %v3737
    %v3739 = vpop.f32.mrb[0].mxu0
    %v3740 = vadd.f32 0.0, %v3739
    %v3741 = vpop.f32.mrb[0].mxu0
    %v3742 = vadd.f32 0.0, %v3741
    %3743 = vdwg.mxu0
    %3744 = vmatprep.subr.bf16.mxu0 %v2346
    %3745 = vmatpush1.bf16.msra.mxu0 %v2345
    %3746 = vmatprep.subr.bf16.mxu0 %v2362
    %3747 = vmatpush1.bf16.msra.mxu0 %v2361
    %3748 = vmatprep.subr.bf16.mxu0 %v2378
    %3749 = vmatpush1.bf16.msra.mxu0 %v2377
    %3750 = vmatprep.subr.bf16.mxu0 %v2394
    %3751 = vmatpush1.bf16.msra.mxu0 %v2393
    %3752 = vmatprep.subr.bf16.mxu0 %v2410
    %3753 = vmatpush1.bf16.msra.mxu0 %v2409
    %3754 = vmatprep.subr.bf16.mxu0 %v2426
    %3755 = vmatpush1.bf16.msra.mxu0 %v2425
    %3756 = vmatprep.subr.bf16.mxu0 %v2442
    %3757 = vmatpush1.bf16.msra.mxu0 %v2441
    %3758 = vmatprep.subr.bf16.mxu0 %v2458
    %3759 = vmatpush1.bf16.msra.mxu0 %v2457
    %3760 = vmatprep.subr.bf16.mxu0 %v2474
    %3761 = vmatpush1.bf16.msra.mxu0 %v2473
    %3762 = vmatprep.subr.bf16.mxu0 %v2490
    %3763 = vmatpush1.bf16.msra.mxu0 %v2489
    %3764 = vmatprep.subr.bf16.mxu0 %v2506
    %3765 = vmatpush1.bf16.msra.mxu0 %v2505
    %3766 = vmatprep.subr.bf16.mxu0 %v2522
    %3767 = vmatpush1.bf16.msra.mxu0 %v2521
    %3768 = vmatprep.subr.bf16.mxu0 %v2538
    %3769 = vmatpush1.bf16.msra.mxu0 %v2537
    %3770 = vmatprep.subr.bf16.mxu0 %v2554
    %3771 = vmatpush1.bf16.msra.mxu0 %v2553
    %3772 = vmatprep.subr.bf16.mxu0 %v2570
    %3773 = vmatpush1.bf16.msra.mxu0 %v2569
    %3774 = vmatprep.subr.bf16.mxu0 %v2586
    %3775 = vmatpush1.bf16.msra.mxu0 %v2585
    %3776 = vmatprep.mubr.bf16.mxu0 %v26
    %3777 = vmatmul.mubr.bf16.gmra.mrb[0].mxu0 %v25
    %v3778 = vpop.f32.mrb[0].mxu0
    %v3779 = vadd.f32 %v3736, %v3778
    %v3780 = vpop.f32.mrb[0].mxu0
    %v3781 = vadd.f32 %v3738, %v3780
    %v3782 = vpop.f32.mrb[0].mxu0
    %v3783 = vadd.f32 %v3740, %v3782
    %v3784 = vpop.f32.mrb[0].mxu0
    %v3785 = vadd.f32 %v3742, %v3784
    %3786 = vdwg.mxu0
    %v3787 = vmax.f32 %v3177, 0.0
    %v3788 = vmax.f32 %v3179, 0.0
    %v3789 = vmax.f32 %v3263, 0.0
    %v3790 = vmax.f32 %v3265, 0.0
    %v3791 = vmax.f32 %v3349, 0.0
    %v3792 = vmax.f32 %v3351, 0.0
    %v3793 = vmax.f32 %v3435, 0.0
    %v3794 = vmax.f32 %v3437, 0.0
    %v3795 = vmax.f32 %v3521, 0.0
    %v3796 = vmax.f32 %v3523, 0.0
    %v3797 = vmax.f32 %v3607, 0.0
    %v3798 = vmax.f32 %v3609, 0.0
    %v3799 = vmax.f32 %v3693, 0.0
    %v3800 = vmax.f32 %v3695, 0.0
    %v3801 = vmax.f32 %v3779, 0.0
    %v3802 = vmax.f32 %v3781, 0.0
    %v3803 = vmax.f32 %v3181, 0.0
    %v3804 = vmax.f32 %v3183, 0.0
    %v3805 = vmax.f32 %v3267, 0.0
    %v3806 = vmax.f32 %v3269, 0.0
    %v3807 = vmax.f32 %v3353, 0.0
    %v3808 = vmax.f32 %v3355, 0.0
    %v3809 = vmax.f32 %v3439, 0.0
    %v3810 = vmax.f32 %v3441, 0.0
    %v3811 = vmax.f32 %v3525, 0.0
    %v3812 = vmax.f32 %v3527, 0.0
    %v3813 = vmax.f32 %v3611, 0.0
    %v3814 = vmax.f32 %v3613, 0.0
    %v3815 = vmax.f32 %v3697, 0.0
    %v3816 = vmax.f32 %v3699, 0.0
    %v3817 = vmax.f32 %v3783, 0.0
    %v3818 = vmax.f32 %v3785, 0.0
    %v3819 = vpack.c.bf16 %v3803, %v3787
    %v3820 = vpack.c.bf16 %v3804, %v3788
    %v3821 = vpack.c.bf16 %v3805, %v3789
    %v3822 = vpack.c.bf16 %v3806, %v3790
    %v3823 = vpack.c.bf16 %v3807, %v3791
    %v3824 = vpack.c.bf16 %v3808, %v3792
    %v3825 = vpack.c.bf16 %v3809, %v3793
    %v3826 = vpack.c.bf16 %v3810, %v3794
    %v3827 = vpack.c.bf16 %v3811, %v3795
    %v3828 = vpack.c.bf16 %v3812, %v3796
    %v3829 = vpack.c.bf16 %v3813, %v3797
    %v3830 = vpack.c.bf16 %v3814, %v3798
    %v3831 = vpack.c.bf16 %v3815, %v3799
    %v3832 = vpack.c.bf16 %v3816, %v3800
    %v3833 = vpack.c.bf16 %v3817, %v3801
    %v3834 = vpack.c.bf16 %v3818, %v3802
    %v3835 = vld [vmem:[%s2] sm:$0xff]
    %v3836 = vld [vmem:[%s2 + $0x8] sm:$0xff]
    %v3837 = vld [vmem:[%s2 + $0x10] sm:$0xff]
    %v3838 = vld [vmem:[%s2 + $0x18] sm:$0xff]
    %v3839 = vld [vmem:[%s2 + $0x20] sm:$0xff]
    %v3840 = vld [vmem:[%s2 + $0x28] sm:$0xff]
    %v3841 = vld [vmem:[%s2 + $0x30] sm:$0xff]
    %v3842 = vld [vmem:[%s2 + $0x38] sm:$0xff]
    %v3843 = vld [vmem:[%s2 + $0x40] sm:$0xff]
    %v3844 = vld [vmem:[%s2 + $0x48] sm:$0xff]
    %v3845 = vld [vmem:[%s2 + $0x50] sm:$0xff]
    %v3846 = vld [vmem:[%s2 + $0x58] sm:$0xff]
    %v3847 = vld [vmem:[%s2 + $0x60] sm:$0xff]
    %v3848 = vld [vmem:[%s2 + $0x68] sm:$0xff]
    %v3849 = vld [vmem:[%s2 + $0x70] sm:$0xff]
    %v3850 = vld [vmem:[%s2 + $0x78] sm:$0xff]
    %v3851 = vld [vmem:[%s2 + $0x80] sm:$0xff]
    %v3852 = vld [vmem:[%s2 + $0x88] sm:$0xff]
    %v3853 = vld [vmem:[%s2 + $0x90] sm:$0xff]
    %v3854 = vld [vmem:[%s2 + $0x98] sm:$0xff]
    %v3855 = vld [vmem:[%s2 + $0xa0] sm:$0xff]
    %v3856 = vld [vmem:[%s2 + $0xa8] sm:$0xff]
    %v3857 = vld [vmem:[%s2 + $0xb0] sm:$0xff]
    %v3858 = vld [vmem:[%s2 + $0xb8] sm:$0xff]
    %v3859 = vld [vmem:[%s2 + $0xc0] sm:$0xff]
    %v3860 = vld [vmem:[%s2 + $0xc8] sm:$0xff]
    %v3861 = vld [vmem:[%s2 + $0xd0] sm:$0xff]
    %v3862 = vld [vmem:[%s2 + $0xd8] sm:$0xff]
    %v3863 = vld [vmem:[%s2 + $0xe0] sm:$0xff]
    %v3864 = vld [vmem:[%s2 + $0xe8] sm:$0xff]
    %v3865 = vld [vmem:[%s2 + $0xf0] sm:$0xff]
    %v3866 = vld [vmem:[%s2 + $0xf8] sm:$0xff]
    %v3867 = vld [vmem:[%s2 + $0x100] sm:$0xff]
    %v3868 = vld [vmem:[%s2 + $0x108] sm:$0xff]
    %v3869 = vld [vmem:[%s2 + $0x110] sm:$0xff]
    %v3870 = vld [vmem:[%s2 + $0x118] sm:$0xff]
    %v3871 = vld [vmem:[%s2 + $0x120] sm:$0xff]
    %v3872 = vld [vmem:[%s2 + $0x128] sm:$0xff]
    %v3873 = vld [vmem:[%s2 + $0x130] sm:$0xff]
    %v3874 = vld [vmem:[%s2 + $0x138] sm:$0xff]
    %v3875 = vld [vmem:[%s2 + $0x140] sm:$0xff]
    %v3876 = vld [vmem:[%s2 + $0x148] sm:$0xff]
    %v3877 = vld [vmem:[%s2 + $0x150] sm:$0xff]
    %v3878 = vld [vmem:[%s2 + $0x158] sm:$0xff]
    %v3879 = vld [vmem:[%s2 + $0x160] sm:$0xff]
    %v3880 = vld [vmem:[%s2 + $0x168] sm:$0xff]
    %v3881 = vld [vmem:[%s2 + $0x170] sm:$0xff]
    %v3882 = vld [vmem:[%s2 + $0x178] sm:$0xff]
    %v3883 = vld [vmem:[%s2 + $0x180] sm:$0xff]
    %v3884 = vld [vmem:[%s2 + $0x188] sm:$0xff]
    %v3885 = vld [vmem:[%s2 + $0x190] sm:$0xff]
    %v3886 = vld [vmem:[%s2 + $0x198] sm:$0xff]
    %v3887 = vld [vmem:[%s2 + $0x1a0] sm:$0xff]
    %v3888 = vld [vmem:[%s2 + $0x1a8] sm:$0xff]
    %v3889 = vld [vmem:[%s2 + $0x1b0] sm:$0xff]
    %v3890 = vld [vmem:[%s2 + $0x1b8] sm:$0xff]
    %v3891 = vld [vmem:[%s2 + $0x1c0] sm:$0xff]
    %v3892 = vld [vmem:[%s2 + $0x1c8] sm:$0xff]
    %v3893 = vld [vmem:[%s2 + $0x1d0] sm:$0xff]
    %v3894 = vld [vmem:[%s2 + $0x1d8] sm:$0xff]
    %v3895 = vld [vmem:[%s2 + $0x1e0] sm:$0xff]
    %v3896 = vld [vmem:[%s2 + $0x1e8] sm:$0xff]
    %v3897 = vld [vmem:[%s2 + $0x1f0] sm:$0xff]
    %v3898 = vld [vmem:[%s2 + $0x1f8] sm:$0xff]
    %v3899 = vld [vmem:[%s2 + $0x200] sm:$0xff]
    %v3900 = vld [vmem:[%s2 + $0x208] sm:$0xff]
    %v3901 = vld [vmem:[%s2 + $0x210] sm:$0xff]
    %v3902 = vld [vmem:[%s2 + $0x218] sm:$0xff]
    %v3903 = vld [vmem:[%s2 + $0x220] sm:$0xff]
    %v3904 = vld [vmem:[%s2 + $0x228] sm:$0xff]
    %v3905 = vld [vmem:[%s2 + $0x230] sm:$0xff]
    %v3906 = vld [vmem:[%s2 + $0x238] sm:$0xff]
    %v3907 = vld [vmem:[%s2 + $0x240] sm:$0xff]
    %v3908 = vld [vmem:[%s2 + $0x248] sm:$0xff]
    %v3909 = vld [vmem:[%s2 + $0x250] sm:$0xff]
    %v3910 = vld [vmem:[%s2 + $0x258] sm:$0xff]
    %v3911 = vld [vmem:[%s2 + $0x260] sm:$0xff]
    %v3912 = vld [vmem:[%s2 + $0x268] sm:$0xff]
    %v3913 = vld [vmem:[%s2 + $0x270] sm:$0xff]
    %v3914 = vld [vmem:[%s2 + $0x278] sm:$0xff]
    %v3915 = vld [vmem:[%s2 + $0x280] sm:$0xff]
    %v3916 = vld [vmem:[%s2 + $0x288] sm:$0xff]
    %v3917 = vld [vmem:[%s2 + $0x290] sm:$0xff]
    %v3918 = vld [vmem:[%s2 + $0x298] sm:$0xff]
    %v3919 = vld [vmem:[%s2 + $0x2a0] sm:$0xff]
    %v3920 = vld [vmem:[%s2 + $0x2a8] sm:$0xff]
    %v3921 = vld [vmem:[%s2 + $0x2b0] sm:$0xff]
    %v3922 = vld [vmem:[%s2 + $0x2b8] sm:$0xff]
    %v3923 = vld [vmem:[%s2 + $0x2c0] sm:$0xff]
    %v3924 = vld [vmem:[%s2 + $0x2c8] sm:$0xff]
    %v3925 = vld [vmem:[%s2 + $0x2d0] sm:$0xff]
    %v3926 = vld [vmem:[%s2 + $0x2d8] sm:$0xff]
    %v3927 = vld [vmem:[%s2 + $0x2e0] sm:$0xff]
    %v3928 = vld [vmem:[%s2 + $0x2e8] sm:$0xff]
    %v3929 = vld [vmem:[%s2 + $0x2f0] sm:$0xff]
    %v3930 = vld [vmem:[%s2 + $0x2f8] sm:$0xff]
    %v3931 = vld [vmem:[%s2 + $0x300] sm:$0xff]
    %v3932 = vld [vmem:[%s2 + $0x308] sm:$0xff]
    %v3933 = vld [vmem:[%s2 + $0x310] sm:$0xff]
    %v3934 = vld [vmem:[%s2 + $0x318] sm:$0xff]
    %v3935 = vld [vmem:[%s2 + $0x320] sm:$0xff]
    %v3936 = vld [vmem:[%s2 + $0x328] sm:$0xff]
    %v3937 = vld [vmem:[%s2 + $0x330] sm:$0xff]
    %v3938 = vld [vmem:[%s2 + $0x338] sm:$0xff]
    %v3939 = vld [vmem:[%s2 + $0x340] sm:$0xff]
    %v3940 = vld [vmem:[%s2 + $0x348] sm:$0xff]
    %v3941 = vld [vmem:[%s2 + $0x350] sm:$0xff]
    %v3942 = vld [vmem:[%s2 + $0x358] sm:$0xff]
    %v3943 = vld [vmem:[%s2 + $0x360] sm:$0xff]
    %v3944 = vld [vmem:[%s2 + $0x368] sm:$0xff]
    %v3945 = vld [vmem:[%s2 + $0x370] sm:$0xff]
    %v3946 = vld [vmem:[%s2 + $0x378] sm:$0xff]
    %v3947 = vld [vmem:[%s2 + $0x380] sm:$0xff]
    %v3948 = vld [vmem:[%s2 + $0x388] sm:$0xff]
    %v3949 = vld [vmem:[%s2 + $0x390] sm:$0xff]
    %v3950 = vld [vmem:[%s2 + $0x398] sm:$0xff]
    %v3951 = vld [vmem:[%s2 + $0x3a0] sm:$0xff]
    %v3952 = vld [vmem:[%s2 + $0x3a8] sm:$0xff]
    %v3953 = vld [vmem:[%s2 + $0x3b0] sm:$0xff]
    %v3954 = vld [vmem:[%s2 + $0x3b8] sm:$0xff]
    %v3955 = vld [vmem:[%s2 + $0x3c0] sm:$0xff]
    %v3956 = vld [vmem:[%s2 + $0x3c8] sm:$0xff]
    %v3957 = vld [vmem:[%s2 + $0x3d0] sm:$0xff]
    %v3958 = vld [vmem:[%s2 + $0x3d8] sm:$0xff]
    %v3959 = vld [vmem:[%s2 + $0x3e0] sm:$0xff]
    %v3960 = vld [vmem:[%s2 + $0x3e8] sm:$0xff]
    %v3961 = vld [vmem:[%s2 + $0x3f0] sm:$0xff]
    %v3962 = vld [vmem:[%s2 + $0x3f8] sm:$0xff]
    %v3963 = vld [vmem:[%s2 + $0x400] sm:$0xff]
    %v3964 = vld [vmem:[%s2 + $0x408] sm:$0xff]
    %v3965 = vld [vmem:[%s2 + $0x410] sm:$0xff]
    %v3966 = vld [vmem:[%s2 + $0x418] sm:$0xff]
    %v3967 = vld [vmem:[%s2 + $0x420] sm:$0xff]
    %v3968 = vld [vmem:[%s2 + $0x428] sm:$0xff]
    %v3969 = vld [vmem:[%s2 + $0x430] sm:$0xff]
    %v3970 = vld [vmem:[%s2 + $0x438] sm:$0xff]
    %v3971 = vld [vmem:[%s2 + $0x440] sm:$0xff]
    %v3972 = vld [vmem:[%s2 + $0x448] sm:$0xff]
    %v3973 = vld [vmem:[%s2 + $0x450] sm:$0xff]
    %v3974 = vld [vmem:[%s2 + $0x458] sm:$0xff]
    %v3975 = vld [vmem:[%s2 + $0x460] sm:$0xff]
    %v3976 = vld [vmem:[%s2 + $0x468] sm:$0xff]
    %v3977 = vld [vmem:[%s2 + $0x470] sm:$0xff]
    %v3978 = vld [vmem:[%s2 + $0x478] sm:$0xff]
    %v3979 = vld [vmem:[%s2 + $0x480] sm:$0xff]
    %v3980 = vld [vmem:[%s2 + $0x488] sm:$0xff]
    %v3981 = vld [vmem:[%s2 + $0x490] sm:$0xff]
    %v3982 = vld [vmem:[%s2 + $0x498] sm:$0xff]
    %v3983 = vld [vmem:[%s2 + $0x4a0] sm:$0xff]
    %v3984 = vld [vmem:[%s2 + $0x4a8] sm:$0xff]
    %v3985 = vld [vmem:[%s2 + $0x4b0] sm:$0xff]
    %v3986 = vld [vmem:[%s2 + $0x4b8] sm:$0xff]
    %v3987 = vld [vmem:[%s2 + $0x4c0] sm:$0xff]
    %v3988 = vld [vmem:[%s2 + $0x4c8] sm:$0xff]
    %v3989 = vld [vmem:[%s2 + $0x4d0] sm:$0xff]
    %v3990 = vld [vmem:[%s2 + $0x4d8] sm:$0xff]
    %v3991 = vld [vmem:[%s2 + $0x4e0] sm:$0xff]
    %v3992 = vld [vmem:[%s2 + $0x4e8] sm:$0xff]
    %v3993 = vld [vmem:[%s2 + $0x4f0] sm:$0xff]
    %v3994 = vld [vmem:[%s2 + $0x4f8] sm:$0xff]
    %v3995 = vld [vmem:[%s2 + $0x500] sm:$0xff]
    %v3996 = vld [vmem:[%s2 + $0x508] sm:$0xff]
    %v3997 = vld [vmem:[%s2 + $0x510] sm:$0xff]
    %v3998 = vld [vmem:[%s2 + $0x518] sm:$0xff]
    %v3999 = vld [vmem:[%s2 + $0x520] sm:$0xff]
    %v4000 = vld [vmem:[%s2 + $0x528] sm:$0xff]
    %v4001 = vld [vmem:[%s2 + $0x530] sm:$0xff]
    %v4002 = vld [vmem:[%s2 + $0x538] sm:$0xff]
    %v4003 = vld [vmem:[%s2 + $0x540] sm:$0xff]
    %v4004 = vld [vmem:[%s2 + $0x548] sm:$0xff]
    %v4005 = vld [vmem:[%s2 + $0x550] sm:$0xff]
    %v4006 = vld [vmem:[%s2 + $0x558] sm:$0xff]
    %v4007 = vld [vmem:[%s2 + $0x560] sm:$0xff]
    %v4008 = vld [vmem:[%s2 + $0x568] sm:$0xff]
    %v4009 = vld [vmem:[%s2 + $0x570] sm:$0xff]
    %v4010 = vld [vmem:[%s2 + $0x578] sm:$0xff]
    %v4011 = vld [vmem:[%s2 + $0x580] sm:$0xff]
    %v4012 = vld [vmem:[%s2 + $0x588] sm:$0xff]
    %v4013 = vld [vmem:[%s2 + $0x590] sm:$0xff]
    %v4014 = vld [vmem:[%s2 + $0x598] sm:$0xff]
    %v4015 = vld [vmem:[%s2 + $0x5a0] sm:$0xff]
    %v4016 = vld [vmem:[%s2 + $0x5a8] sm:$0xff]
    %v4017 = vld [vmem:[%s2 + $0x5b0] sm:$0xff]
    %v4018 = vld [vmem:[%s2 + $0x5b8] sm:$0xff]
    %v4019 = vld [vmem:[%s2 + $0x5c0] sm:$0xff]
    %v4020 = vld [vmem:[%s2 + $0x5c8] sm:$0xff]
    %v4021 = vld [vmem:[%s2 + $0x5d0] sm:$0xff]
    %v4022 = vld [vmem:[%s2 + $0x5d8] sm:$0xff]
    %v4023 = vld [vmem:[%s2 + $0x5e0] sm:$0xff]
    %v4024 = vld [vmem:[%s2 + $0x5e8] sm:$0xff]
    %v4025 = vld [vmem:[%s2 + $0x5f0] sm:$0xff]
    %v4026 = vld [vmem:[%s2 + $0x5f8] sm:$0xff]
    %v4027 = vld [vmem:[%s2 + $0x600] sm:$0xff]
    %v4028 = vld [vmem:[%s2 + $0x608] sm:$0xff]
    %v4029 = vld [vmem:[%s2 + $0x610] sm:$0xff]
    %v4030 = vld [vmem:[%s2 + $0x618] sm:$0xff]
    %v4031 = vld [vmem:[%s2 + $0x620] sm:$0xff]
    %v4032 = vld [vmem:[%s2 + $0x628] sm:$0xff]
    %v4033 = vld [vmem:[%s2 + $0x630] sm:$0xff]
    %v4034 = vld [vmem:[%s2 + $0x638] sm:$0xff]
    %v4035 = vld [vmem:[%s2 + $0x640] sm:$0xff]
    %v4036 = vld [vmem:[%s2 + $0x648] sm:$0xff]
    %v4037 = vld [vmem:[%s2 + $0x650] sm:$0xff]
    %v4038 = vld [vmem:[%s2 + $0x658] sm:$0xff]
    %v4039 = vld [vmem:[%s2 + $0x660] sm:$0xff]
    %v4040 = vld [vmem:[%s2 + $0x668] sm:$0xff]
    %v4041 = vld [vmem:[%s2 + $0x670] sm:$0xff]
    %v4042 = vld [vmem:[%s2 + $0x678] sm:$0xff]
    %v4043 = vld [vmem:[%s2 + $0x680] sm:$0xff]
    %v4044 = vld [vmem:[%s2 + $0x688] sm:$0xff]
    %v4045 = vld [vmem:[%s2 + $0x690] sm:$0xff]
    %v4046 = vld [vmem:[%s2 + $0x698] sm:$0xff]
    %v4047 = vld [vmem:[%s2 + $0x6a0] sm:$0xff]
    %v4048 = vld [vmem:[%s2 + $0x6a8] sm:$0xff]
    %v4049 = vld [vmem:[%s2 + $0x6b0] sm:$0xff]
    %v4050 = vld [vmem:[%s2 + $0x6b8] sm:$0xff]
    %v4051 = vld [vmem:[%s2 + $0x6c0] sm:$0xff]
    %v4052 = vld [vmem:[%s2 + $0x6c8] sm:$0xff]
    %v4053 = vld [vmem:[%s2 + $0x6d0] sm:$0xff]
    %v4054 = vld [vmem:[%s2 + $0x6d8] sm:$0xff]
    %v4055 = vld [vmem:[%s2 + $0x6e0] sm:$0xff]
    %v4056 = vld [vmem:[%s2 + $0x6e8] sm:$0xff]
    %v4057 = vld [vmem:[%s2 + $0x6f0] sm:$0xff]
    %v4058 = vld [vmem:[%s2 + $0x6f8] sm:$0xff]
    %v4059 = vld [vmem:[%s2 + $0x700] sm:$0xff]
    %v4060 = vld [vmem:[%s2 + $0x708] sm:$0xff]
    %v4061 = vld [vmem:[%s2 + $0x710] sm:$0xff]
    %v4062 = vld [vmem:[%s2 + $0x718] sm:$0xff]
    %v4063 = vld [vmem:[%s2 + $0x720] sm:$0xff]
    %v4064 = vld [vmem:[%s2 + $0x728] sm:$0xff]
    %v4065 = vld [vmem:[%s2 + $0x730] sm:$0xff]
    %v4066 = vld [vmem:[%s2 + $0x738] sm:$0xff]
    %v4067 = vld [vmem:[%s2 + $0x740] sm:$0xff]
    %v4068 = vld [vmem:[%s2 + $0x748] sm:$0xff]
    %v4069 = vld [vmem:[%s2 + $0x750] sm:$0xff]
    %v4070 = vld [vmem:[%s2 + $0x758] sm:$0xff]
    %v4071 = vld [vmem:[%s2 + $0x760] sm:$0xff]
    %v4072 = vld [vmem:[%s2 + $0x768] sm:$0xff]
    %v4073 = vld [vmem:[%s2 + $0x770] sm:$0xff]
    %v4074 = vld [vmem:[%s2 + $0x778] sm:$0xff]
    %v4075 = vld [vmem:[%s2 + $0x780] sm:$0xff]
    %v4076 = vld [vmem:[%s2 + $0x788] sm:$0xff]
    %v4077 = vld [vmem:[%s2 + $0x790] sm:$0xff]
    %v4078 = vld [vmem:[%s2 + $0x798] sm:$0xff]
    %v4079 = vld [vmem:[%s2 + $0x7a0] sm:$0xff]
    %v4080 = vld [vmem:[%s2 + $0x7a8] sm:$0xff]
    %v4081 = vld [vmem:[%s2 + $0x7b0] sm:$0xff]
    %v4082 = vld [vmem:[%s2 + $0x7b8] sm:$0xff]
    %v4083 = vld [vmem:[%s2 + $0x7c0] sm:$0xff]
    %v4084 = vld [vmem:[%s2 + $0x7c8] sm:$0xff]
    %v4085 = vld [vmem:[%s2 + $0x7d0] sm:$0xff]
    %v4086 = vld [vmem:[%s2 + $0x7d8] sm:$0xff]
    %v4087 = vld [vmem:[%s2 + $0x7e0] sm:$0xff]
    %v4088 = vld [vmem:[%s2 + $0x7e8] sm:$0xff]
    %v4089 = vld [vmem:[%s2 + $0x7f0] sm:$0xff]
    %v4090 = vld [vmem:[%s2 + $0x7f8] sm:$0xff]
    %v4091 = vld [vmem:[%s2 + $0x800] sm:$0xff]
    %v4092 = vld [vmem:[%s2 + $0x808] sm:$0xff]
    %v4093 = vld [vmem:[%s2 + $0x810] sm:$0xff]
    %v4094 = vld [vmem:[%s2 + $0x818] sm:$0xff]
    %v4095 = vld [vmem:[%s2 + $0x820] sm:$0xff]
    %v4096 = vld [vmem:[%s2 + $0x828] sm:$0xff]
    %v4097 = vld [vmem:[%s2 + $0x830] sm:$0xff]
    %v4098 = vld [vmem:[%s2 + $0x838] sm:$0xff]
    %v4099 = vld [vmem:[%s2 + $0x840] sm:$0xff]
    %v4100 = vld [vmem:[%s2 + $0x848] sm:$0xff]
    %v4101 = vld [vmem:[%s2 + $0x850] sm:$0xff]
    %v4102 = vld [vmem:[%s2 + $0x858] sm:$0xff]
    %v4103 = vld [vmem:[%s2 + $0x860] sm:$0xff]
    %v4104 = vld [vmem:[%s2 + $0x868] sm:$0xff]
    %v4105 = vld [vmem:[%s2 + $0x870] sm:$0xff]
    %v4106 = vld [vmem:[%s2 + $0x878] sm:$0xff]
    %v4107 = vld [vmem:[%s2 + $0x880] sm:$0xff]
    %v4108 = vld [vmem:[%s2 + $0x888] sm:$0xff]
    %v4109 = vld [vmem:[%s2 + $0x890] sm:$0xff]
    %v4110 = vld [vmem:[%s2 + $0x898] sm:$0xff]
    %v4111 = vld [vmem:[%s2 + $0x8a0] sm:$0xff]
    %v4112 = vld [vmem:[%s2 + $0x8a8] sm:$0xff]
    %v4113 = vld [vmem:[%s2 + $0x8b0] sm:$0xff]
    %v4114 = vld [vmem:[%s2 + $0x8b8] sm:$0xff]
    %v4115 = vld [vmem:[%s2 + $0x8c0] sm:$0xff]
    %v4116 = vld [vmem:[%s2 + $0x8c8] sm:$0xff]
    %v4117 = vld [vmem:[%s2 + $0x8d0] sm:$0xff]
    %v4118 = vld [vmem:[%s2 + $0x8d8] sm:$0xff]
    %v4119 = vld [vmem:[%s2 + $0x8e0] sm:$0xff]
    %v4120 = vld [vmem:[%s2 + $0x8e8] sm:$0xff]
    %v4121 = vld [vmem:[%s2 + $0x8f0] sm:$0xff]
    %v4122 = vld [vmem:[%s2 + $0x8f8] sm:$0xff]
    %v4123 = vld [vmem:[%s2 + $0x900] sm:$0xff]
    %v4124 = vld [vmem:[%s2 + $0x908] sm:$0xff]
    %v4125 = vld [vmem:[%s2 + $0x910] sm:$0xff]
    %v4126 = vld [vmem:[%s2 + $0x918] sm:$0xff]
    %v4127 = vld [vmem:[%s2 + $0x920] sm:$0xff]
    %v4128 = vld [vmem:[%s2 + $0x928] sm:$0xff]
    %v4129 = vld [vmem:[%s2 + $0x930] sm:$0xff]
    %v4130 = vld [vmem:[%s2 + $0x938] sm:$0xff]
    %v4131 = vld [vmem:[%s2 + $0x940] sm:$0xff]
    %v4132 = vld [vmem:[%s2 + $0x948] sm:$0xff]
    %v4133 = vld [vmem:[%s2 + $0x950] sm:$0xff]
    %v4134 = vld [vmem:[%s2 + $0x958] sm:$0xff]
    %v4135 = vld [vmem:[%s2 + $0x960] sm:$0xff]
    %v4136 = vld [vmem:[%s2 + $0x968] sm:$0xff]
    %v4137 = vld [vmem:[%s2 + $0x970] sm:$0xff]
    %v4138 = vld [vmem:[%s2 + $0x978] sm:$0xff]
    %v4139 = vld [vmem:[%s2 + $0x980] sm:$0xff]
    %v4140 = vld [vmem:[%s2 + $0x988] sm:$0xff]
    %v4141 = vld [vmem:[%s2 + $0x990] sm:$0xff]
    %v4142 = vld [vmem:[%s2 + $0x998] sm:$0xff]
    %v4143 = vld [vmem:[%s2 + $0x9a0] sm:$0xff]
    %v4144 = vld [vmem:[%s2 + $0x9a8] sm:$0xff]
    %v4145 = vld [vmem:[%s2 + $0x9b0] sm:$0xff]
    %v4146 = vld [vmem:[%s2 + $0x9b8] sm:$0xff]
    %v4147 = vld [vmem:[%s2 + $0x9c0] sm:$0xff]
    %v4148 = vld [vmem:[%s2 + $0x9c8] sm:$0xff]
    %v4149 = vld [vmem:[%s2 + $0x9d0] sm:$0xff]
    %v4150 = vld [vmem:[%s2 + $0x9d8] sm:$0xff]
    %v4151 = vld [vmem:[%s2 + $0x9e0] sm:$0xff]
    %v4152 = vld [vmem:[%s2 + $0x9e8] sm:$0xff]
    %v4153 = vld [vmem:[%s2 + $0x9f0] sm:$0xff]
    %v4154 = vld [vmem:[%s2 + $0x9f8] sm:$0xff]
    %v4155 = vld [vmem:[%s2 + $0xa00] sm:$0xff]
    %v4156 = vld [vmem:[%s2 + $0xa08] sm:$0xff]
    %v4157 = vld [vmem:[%s2 + $0xa10] sm:$0xff]
    %v4158 = vld [vmem:[%s2 + $0xa18] sm:$0xff]
    %v4159 = vld [vmem:[%s2 + $0xa20] sm:$0xff]
    %v4160 = vld [vmem:[%s2 + $0xa28] sm:$0xff]
    %v4161 = vld [vmem:[%s2 + $0xa30] sm:$0xff]
    %v4162 = vld [vmem:[%s2 + $0xa38] sm:$0xff]
    %v4163 = vld [vmem:[%s2 + $0xa40] sm:$0xff]
    %v4164 = vld [vmem:[%s2 + $0xa48] sm:$0xff]
    %v4165 = vld [vmem:[%s2 + $0xa50] sm:$0xff]
    %v4166 = vld [vmem:[%s2 + $0xa58] sm:$0xff]
    %v4167 = vld [vmem:[%s2 + $0xa60] sm:$0xff]
    %v4168 = vld [vmem:[%s2 + $0xa68] sm:$0xff]
    %v4169 = vld [vmem:[%s2 + $0xa70] sm:$0xff]
    %v4170 = vld [vmem:[%s2 + $0xa78] sm:$0xff]
    %v4171 = vld [vmem:[%s2 + $0xa80] sm:$0xff]
    %v4172 = vld [vmem:[%s2 + $0xa88] sm:$0xff]
    %v4173 = vld [vmem:[%s2 + $0xa90] sm:$0xff]
    %v4174 = vld [vmem:[%s2 + $0xa98] sm:$0xff]
    %v4175 = vld [vmem:[%s2 + $0xaa0] sm:$0xff]
    %v4176 = vld [vmem:[%s2 + $0xaa8] sm:$0xff]
    %v4177 = vld [vmem:[%s2 + $0xab0] sm:$0xff]
    %v4178 = vld [vmem:[%s2 + $0xab8] sm:$0xff]
    %v4179 = vld [vmem:[%s2 + $0xac0] sm:$0xff]
    %v4180 = vld [vmem:[%s2 + $0xac8] sm:$0xff]
    %v4181 = vld [vmem:[%s2 + $0xad0] sm:$0xff]
    %v4182 = vld [vmem:[%s2 + $0xad8] sm:$0xff]
    %v4183 = vld [vmem:[%s2 + $0xae0] sm:$0xff]
    %v4184 = vld [vmem:[%s2 + $0xae8] sm:$0xff]
    %v4185 = vld [vmem:[%s2 + $0xaf0] sm:$0xff]
    %v4186 = vld [vmem:[%s2 + $0xaf8] sm:$0xff]
    %v4187 = vld [vmem:[%s2 + $0xb00] sm:$0xff]
    %v4188 = vld [vmem:[%s2 + $0xb08] sm:$0xff]
    %v4189 = vld [vmem:[%s2 + $0xb10] sm:$0xff]
    %v4190 = vld [vmem:[%s2 + $0xb18] sm:$0xff]
    %v4191 = vld [vmem:[%s2 + $0xb20] sm:$0xff]
    %v4192 = vld [vmem:[%s2 + $0xb28] sm:$0xff]
    %v4193 = vld [vmem:[%s2 + $0xb30] sm:$0xff]
    %v4194 = vld [vmem:[%s2 + $0xb38] sm:$0xff]
    %v4195 = vld [vmem:[%s2 + $0xb40] sm:$0xff]
    %v4196 = vld [vmem:[%s2 + $0xb48] sm:$0xff]
    %v4197 = vld [vmem:[%s2 + $0xb50] sm:$0xff]
    %v4198 = vld [vmem:[%s2 + $0xb58] sm:$0xff]
    %v4199 = vld [vmem:[%s2 + $0xb60] sm:$0xff]
    %v4200 = vld [vmem:[%s2 + $0xb68] sm:$0xff]
    %v4201 = vld [vmem:[%s2 + $0xb70] sm:$0xff]
    %v4202 = vld [vmem:[%s2 + $0xb78] sm:$0xff]
    %v4203 = vld [vmem:[%s2 + $0xb80] sm:$0xff]
    %v4204 = vld [vmem:[%s2 + $0xb88] sm:$0xff]
    %v4205 = vld [vmem:[%s2 + $0xb90] sm:$0xff]
    %v4206 = vld [vmem:[%s2 + $0xb98] sm:$0xff]
    %v4207 = vld [vmem:[%s2 + $0xba0] sm:$0xff]
    %v4208 = vld [vmem:[%s2 + $0xba8] sm:$0xff]
    %v4209 = vld [vmem:[%s2 + $0xbb0] sm:$0xff]
    %v4210 = vld [vmem:[%s2 + $0xbb8] sm:$0xff]
    %v4211 = vld [vmem:[%s2 + $0xbc0] sm:$0xff]
    %v4212 = vld [vmem:[%s2 + $0xbc8] sm:$0xff]
    %v4213 = vld [vmem:[%s2 + $0xbd0] sm:$0xff]
    %v4214 = vld [vmem:[%s2 + $0xbd8] sm:$0xff]
    %v4215 = vld [vmem:[%s2 + $0xbe0] sm:$0xff]
    %v4216 = vld [vmem:[%s2 + $0xbe8] sm:$0xff]
    %v4217 = vld [vmem:[%s2 + $0xbf0] sm:$0xff]
    %v4218 = vld [vmem:[%s2 + $0xbf8] sm:$0xff]
    %v4219 = vld [vmem:[%s2 + $0xc00] sm:$0xff]
    %v4220 = vld [vmem:[%s2 + $0xc08] sm:$0xff]
    %v4221 = vld [vmem:[%s2 + $0xc10] sm:$0xff]
    %v4222 = vld [vmem:[%s2 + $0xc18] sm:$0xff]
    %v4223 = vld [vmem:[%s2 + $0xc20] sm:$0xff]
    %v4224 = vld [vmem:[%s2 + $0xc28] sm:$0xff]
    %v4225 = vld [vmem:[%s2 + $0xc30] sm:$0xff]
    %v4226 = vld [vmem:[%s2 + $0xc38] sm:$0xff]
    %v4227 = vld [vmem:[%s2 + $0xc40] sm:$0xff]
    %v4228 = vld [vmem:[%s2 + $0xc48] sm:$0xff]
    %v4229 = vld [vmem:[%s2 + $0xc50] sm:$0xff]
    %v4230 = vld [vmem:[%s2 + $0xc58] sm:$0xff]
    %v4231 = vld [vmem:[%s2 + $0xc60] sm:$0xff]
    %v4232 = vld [vmem:[%s2 + $0xc68] sm:$0xff]
    %v4233 = vld [vmem:[%s2 + $0xc70] sm:$0xff]
    %v4234 = vld [vmem:[%s2 + $0xc78] sm:$0xff]
    %v4235 = vld [vmem:[%s2 + $0xc80] sm:$0xff]
    %v4236 = vld [vmem:[%s2 + $0xc88] sm:$0xff]
    %v4237 = vld [vmem:[%s2 + $0xc90] sm:$0xff]
    %v4238 = vld [vmem:[%s2 + $0xc98] sm:$0xff]
    %v4239 = vld [vmem:[%s2 + $0xca0] sm:$0xff]
    %v4240 = vld [vmem:[%s2 + $0xca8] sm:$0xff]
    %v4241 = vld [vmem:[%s2 + $0xcb0] sm:$0xff]
    %v4242 = vld [vmem:[%s2 + $0xcb8] sm:$0xff]
    %v4243 = vld [vmem:[%s2 + $0xcc0] sm:$0xff]
    %v4244 = vld [vmem:[%s2 + $0xcc8] sm:$0xff]
    %v4245 = vld [vmem:[%s2 + $0xcd0] sm:$0xff]
    %v4246 = vld [vmem:[%s2 + $0xcd8] sm:$0xff]
    %v4247 = vld [vmem:[%s2 + $0xce0] sm:$0xff]
    %v4248 = vld [vmem:[%s2 + $0xce8] sm:$0xff]
    %v4249 = vld [vmem:[%s2 + $0xcf0] sm:$0xff]
    %v4250 = vld [vmem:[%s2 + $0xcf8] sm:$0xff]
    %v4251 = vld [vmem:[%s2 + $0xd00] sm:$0xff]
    %v4252 = vld [vmem:[%s2 + $0xd08] sm:$0xff]
    %v4253 = vld [vmem:[%s2 + $0xd10] sm:$0xff]
    %v4254 = vld [vmem:[%s2 + $0xd18] sm:$0xff]
    %v4255 = vld [vmem:[%s2 + $0xd20] sm:$0xff]
    %v4256 = vld [vmem:[%s2 + $0xd28] sm:$0xff]
    %v4257 = vld [vmem:[%s2 + $0xd30] sm:$0xff]
    %v4258 = vld [vmem:[%s2 + $0xd38] sm:$0xff]
    %v4259 = vld [vmem:[%s2 + $0xd40] sm:$0xff]
    %v4260 = vld [vmem:[%s2 + $0xd48] sm:$0xff]
    %v4261 = vld [vmem:[%s2 + $0xd50] sm:$0xff]
    %v4262 = vld [vmem:[%s2 + $0xd58] sm:$0xff]
    %v4263 = vld [vmem:[%s2 + $0xd60] sm:$0xff]
    %v4264 = vld [vmem:[%s2 + $0xd68] sm:$0xff]
    %v4265 = vld [vmem:[%s2 + $0xd70] sm:$0xff]
    %v4266 = vld [vmem:[%s2 + $0xd78] sm:$0xff]
    %v4267 = vld [vmem:[%s2 + $0xd80] sm:$0xff]
    %v4268 = vld [vmem:[%s2 + $0xd88] sm:$0xff]
    %v4269 = vld [vmem:[%s2 + $0xd90] sm:$0xff]
    %v4270 = vld [vmem:[%s2 + $0xd98] sm:$0xff]
    %v4271 = vld [vmem:[%s2 + $0xda0] sm:$0xff]
    %v4272 = vld [vmem:[%s2 + $0xda8] sm:$0xff]
    %v4273 = vld [vmem:[%s2 + $0xdb0] sm:$0xff]
    %v4274 = vld [vmem:[%s2 + $0xdb8] sm:$0xff]
    %v4275 = vld [vmem:[%s2 + $0xdc0] sm:$0xff]
    %v4276 = vld [vmem:[%s2 + $0xdc8] sm:$0xff]
    %v4277 = vld [vmem:[%s2 + $0xdd0] sm:$0xff]
    %v4278 = vld [vmem:[%s2 + $0xdd8] sm:$0xff]
    %v4279 = vld [vmem:[%s2 + $0xde0] sm:$0xff]
    %v4280 = vld [vmem:[%s2 + $0xde8] sm:$0xff]
    %v4281 = vld [vmem:[%s2 + $0xdf0] sm:$0xff]
    %v4282 = vld [vmem:[%s2 + $0xdf8] sm:$0xff]
    %v4283 = vld [vmem:[%s2 + $0xe00] sm:$0xff]
    %v4284 = vld [vmem:[%s2 + $0xe08] sm:$0xff]
    %v4285 = vld [vmem:[%s2 + $0xe10] sm:$0xff]
    %v4286 = vld [vmem:[%s2 + $0xe18] sm:$0xff]
    %v4287 = vld [vmem:[%s2 + $0xe20] sm:$0xff]
    %v4288 = vld [vmem:[%s2 + $0xe28] sm:$0xff]
    %v4289 = vld [vmem:[%s2 + $0xe30] sm:$0xff]
    %v4290 = vld [vmem:[%s2 + $0xe38] sm:$0xff]
    %v4291 = vld [vmem:[%s2 + $0xe40] sm:$0xff]
    %v4292 = vld [vmem:[%s2 + $0xe48] sm:$0xff]
    %v4293 = vld [vmem:[%s2 + $0xe50] sm:$0xff]
    %v4294 = vld [vmem:[%s2 + $0xe58] sm:$0xff]
    %v4295 = vld [vmem:[%s2 + $0xe60] sm:$0xff]
    %v4296 = vld [vmem:[%s2 + $0xe68] sm:$0xff]
    %v4297 = vld [vmem:[%s2 + $0xe70] sm:$0xff]
    %v4298 = vld [vmem:[%s2 + $0xe78] sm:$0xff]
    %v4299 = vld [vmem:[%s2 + $0xe80] sm:$0xff]
    %v4300 = vld [vmem:[%s2 + $0xe88] sm:$0xff]
    %v4301 = vld [vmem:[%s2 + $0xe90] sm:$0xff]
    %v4302 = vld [vmem:[%s2 + $0xe98] sm:$0xff]
    %v4303 = vld [vmem:[%s2 + $0xea0] sm:$0xff]
    %v4304 = vld [vmem:[%s2 + $0xea8] sm:$0xff]
    %v4305 = vld [vmem:[%s2 + $0xeb0] sm:$0xff]
    %v4306 = vld [vmem:[%s2 + $0xeb8] sm:$0xff]
    %v4307 = vld [vmem:[%s2 + $0xec0] sm:$0xff]
    %v4308 = vld [vmem:[%s2 + $0xec8] sm:$0xff]
    %v4309 = vld [vmem:[%s2 + $0xed0] sm:$0xff]
    %v4310 = vld [vmem:[%s2 + $0xed8] sm:$0xff]
    %v4311 = vld [vmem:[%s2 + $0xee0] sm:$0xff]
    %v4312 = vld [vmem:[%s2 + $0xee8] sm:$0xff]
    %v4313 = vld [vmem:[%s2 + $0xef0] sm:$0xff]
    %v4314 = vld [vmem:[%s2 + $0xef8] sm:$0xff]
    %v4315 = vld [vmem:[%s2 + $0xf00] sm:$0xff]
    %v4316 = vld [vmem:[%s2 + $0xf08] sm:$0xff]
    %v4317 = vld [vmem:[%s2 + $0xf10] sm:$0xff]
    %v4318 = vld [vmem:[%s2 + $0xf18] sm:$0xff]
    %v4319 = vld [vmem:[%s2 + $0xf20] sm:$0xff]
    %v4320 = vld [vmem:[%s2 + $0xf28] sm:$0xff]
    %v4321 = vld [vmem:[%s2 + $0xf30] sm:$0xff]
    %v4322 = vld [vmem:[%s2 + $0xf38] sm:$0xff]
    %v4323 = vld [vmem:[%s2 + $0xf40] sm:$0xff]
    %v4324 = vld [vmem:[%s2 + $0xf48] sm:$0xff]
    %v4325 = vld [vmem:[%s2 + $0xf50] sm:$0xff]
    %v4326 = vld [vmem:[%s2 + $0xf58] sm:$0xff]
    %v4327 = vld [vmem:[%s2 + $0xf60] sm:$0xff]
    %v4328 = vld [vmem:[%s2 + $0xf68] sm:$0xff]
    %v4329 = vld [vmem:[%s2 + $0xf70] sm:$0xff]
    %v4330 = vld [vmem:[%s2 + $0xf78] sm:$0xff]
    %v4331 = vld [vmem:[%s2 + $0xf80] sm:$0xff]
    %v4332 = vld [vmem:[%s2 + $0xf88] sm:$0xff]
    %v4333 = vld [vmem:[%s2 + $0xf90] sm:$0xff]
    %v4334 = vld [vmem:[%s2 + $0xf98] sm:$0xff]
    %v4335 = vld [vmem:[%s2 + $0xfa0] sm:$0xff]
    %v4336 = vld [vmem:[%s2 + $0xfa8] sm:$0xff]
    %v4337 = vld [vmem:[%s2 + $0xfb0] sm:$0xff]
    %v4338 = vld [vmem:[%s2 + $0xfb8] sm:$0xff]
    %v4339 = vld [vmem:[%s2 + $0xfc0] sm:$0xff]
    %v4340 = vld [vmem:[%s2 + $0xfc8] sm:$0xff]
    %v4341 = vld [vmem:[%s2 + $0xfd0] sm:$0xff]
    %v4342 = vld [vmem:[%s2 + $0xfd8] sm:$0xff]
    %v4343 = vld [vmem:[%s2 + $0xfe0] sm:$0xff]
    %v4344 = vld [vmem:[%s2 + $0xfe8] sm:$0xff]
    %v4345 = vld [vmem:[%s2 + $0xff0] sm:$0xff]
    %v4346 = vld [vmem:[%s2 + $0xff8] sm:$0xff]
    %v4859 = vunpack.c.l.b16 %v3835
    %v4860 = vunpack.c.h.b16 %v3835
    %v4861 = vunpack.c.l.b16 %v3836
    %v4862 = vunpack.c.h.b16 %v3836
    %v4863 = vunpack.c.l.b16 %v3837
    %v4864 = vunpack.c.h.b16 %v3837
    %v4865 = vunpack.c.l.b16 %v3838
    %v4866 = vunpack.c.h.b16 %v3838
    %v4867 = vunpack.c.l.b16 %v3839
    %v4868 = vunpack.c.h.b16 %v3839
    %v4869 = vunpack.c.l.b16 %v3840
    %v4870 = vunpack.c.h.b16 %v3840
    %v4871 = vunpack.c.l.b16 %v3841
    %v4872 = vunpack.c.h.b16 %v3841
    %v4873 = vunpack.c.l.b16 %v3842
    %v4874 = vunpack.c.h.b16 %v3842
    %v4875 = vunpack.c.l.b16 %v3843
    %v4876 = vunpack.c.h.b16 %v3843
    %v4877 = vunpack.c.l.b16 %v3844
    %v4878 = vunpack.c.h.b16 %v3844
    %v4879 = vunpack.c.l.b16 %v3845
    %v4880 = vunpack.c.h.b16 %v3845
    %v4881 = vunpack.c.l.b16 %v3846
    %v4882 = vunpack.c.h.b16 %v3846
    %v4883 = vunpack.c.l.b16 %v3847
    %v4884 = vunpack.c.h.b16 %v3847
    %v4885 = vunpack.c.l.b16 %v3848
    %v4886 = vunpack.c.h.b16 %v3848
    %v4887 = vunpack.c.l.b16 %v3849
    %v4888 = vunpack.c.h.b16 %v3849
    %v4889 = vunpack.c.l.b16 %v3850
    %v4890 = vunpack.c.h.b16 %v3850
    %v4891 = vunpack.c.l.b16 %v3851
    %v4892 = vunpack.c.h.b16 %v3851
    %v4893 = vunpack.c.l.b16 %v3852
    %v4894 = vunpack.c.h.b16 %v3852
    %v4895 = vunpack.c.l.b16 %v3853
    %v4896 = vunpack.c.h.b16 %v3853
    %v4897 = vunpack.c.l.b16 %v3854
    %v4898 = vunpack.c.h.b16 %v3854
    %v4899 = vunpack.c.l.b16 %v3855
    %v4900 = vunpack.c.h.b16 %v3855
    %v4901 = vunpack.c.l.b16 %v3856
    %v4902 = vunpack.c.h.b16 %v3856
    %v4903 = vunpack.c.l.b16 %v3857
    %v4904 = vunpack.c.h.b16 %v3857
    %v4905 = vunpack.c.l.b16 %v3858
    %v4906 = vunpack.c.h.b16 %v3858
    %v4907 = vunpack.c.l.b16 %v3859
    %v4908 = vunpack.c.h.b16 %v3859
    %v4909 = vunpack.c.l.b16 %v3860
    %v4910 = vunpack.c.h.b16 %v3860
    %v4911 = vunpack.c.l.b16 %v3861
    %v4912 = vunpack.c.h.b16 %v3861
    %v4913 = vunpack.c.l.b16 %v3862
    %v4914 = vunpack.c.h.b16 %v3862
    %v4915 = vunpack.c.l.b16 %v3863
    %v4916 = vunpack.c.h.b16 %v3863
    %v4917 = vunpack.c.l.b16 %v3864
    %v4918 = vunpack.c.h.b16 %v3864
    %v4919 = vunpack.c.l.b16 %v3865
    %v4920 = vunpack.c.h.b16 %v3865
    %v4921 = vunpack.c.l.b16 %v3866
    %v4922 = vunpack.c.h.b16 %v3866
    %v4923 = vunpack.c.l.b16 %v3867
    %v4924 = vunpack.c.h.b16 %v3867
    %v4925 = vunpack.c.l.b16 %v3868
    %v4926 = vunpack.c.h.b16 %v3868
    %v4927 = vunpack.c.l.b16 %v3869
    %v4928 = vunpack.c.h.b16 %v3869
    %v4929 = vunpack.c.l.b16 %v3870
    %v4930 = vunpack.c.h.b16 %v3870
    %v4931 = vunpack.c.l.b16 %v3871
    %v4932 = vunpack.c.h.b16 %v3871
    %v4933 = vunpack.c.l.b16 %v3872
    %v4934 = vunpack.c.h.b16 %v3872
    %v4935 = vunpack.c.l.b16 %v3873
    %v4936 = vunpack.c.h.b16 %v3873
    %v4937 = vunpack.c.l.b16 %v3874
    %v4938 = vunpack.c.h.b16 %v3874
    %v4939 = vunpack.c.l.b16 %v3875
    %v4940 = vunpack.c.h.b16 %v3875
    %v4941 = vunpack.c.l.b16 %v3876
    %v4942 = vunpack.c.h.b16 %v3876
    %v4943 = vunpack.c.l.b16 %v3877
    %v4944 = vunpack.c.h.b16 %v3877
    %v4945 = vunpack.c.l.b16 %v3878
    %v4946 = vunpack.c.h.b16 %v3878
    %v4947 = vunpack.c.l.b16 %v3879
    %v4948 = vunpack.c.h.b16 %v3879
    %v4949 = vunpack.c.l.b16 %v3880
    %v4950 = vunpack.c.h.b16 %v3880
    %v4951 = vunpack.c.l.b16 %v3881
    %v4952 = vunpack.c.h.b16 %v3881
    %v4953 = vunpack.c.l.b16 %v3882
    %v4954 = vunpack.c.h.b16 %v3882
    %v4955 = vunpack.c.l.b16 %v3883
    %v4956 = vunpack.c.h.b16 %v3883
    %v4957 = vunpack.c.l.b16 %v3884
    %v4958 = vunpack.c.h.b16 %v3884
    %v4959 = vunpack.c.l.b16 %v3885
    %v4960 = vunpack.c.h.b16 %v3885
    %v4961 = vunpack.c.l.b16 %v3886
    %v4962 = vunpack.c.h.b16 %v3886
    %v4963 = vunpack.c.l.b16 %v3887
    %v4964 = vunpack.c.h.b16 %v3887
    %v4965 = vunpack.c.l.b16 %v3888
    %v4966 = vunpack.c.h.b16 %v3888
    %v4967 = vunpack.c.l.b16 %v3889
    %v4968 = vunpack.c.h.b16 %v3889
    %v4969 = vunpack.c.l.b16 %v3890
    %v4970 = vunpack.c.h.b16 %v3890
    %v4971 = vunpack.c.l.b16 %v3891
    %v4972 = vunpack.c.h.b16 %v3891
    %v4973 = vunpack.c.l.b16 %v3892
    %v4974 = vunpack.c.h.b16 %v3892
    %v4975 = vunpack.c.l.b16 %v3893
    %v4976 = vunpack.c.h.b16 %v3893
    %v4977 = vunpack.c.l.b16 %v3894
    %v4978 = vunpack.c.h.b16 %v3894
    %v4979 = vunpack.c.l.b16 %v3895
    %v4980 = vunpack.c.h.b16 %v3895
    %v4981 = vunpack.c.l.b16 %v3896
    %v4982 = vunpack.c.h.b16 %v3896
    %v4983 = vunpack.c.l.b16 %v3897
    %v4984 = vunpack.c.h.b16 %v3897
    %v4985 = vunpack.c.l.b16 %v3898
    %v4986 = vunpack.c.h.b16 %v3898
    %v4987 = vunpack.c.l.b16 %v3899
    %v4988 = vunpack.c.h.b16 %v3899
    %v4989 = vunpack.c.l.b16 %v3900
    %v4990 = vunpack.c.h.b16 %v3900
    %v4991 = vunpack.c.l.b16 %v3901
    %v4992 = vunpack.c.h.b16 %v3901
    %v4993 = vunpack.c.l.b16 %v3902
    %v4994 = vunpack.c.h.b16 %v3902
    %v4995 = vunpack.c.l.b16 %v3903
    %v4996 = vunpack.c.h.b16 %v3903
    %v4997 = vunpack.c.l.b16 %v3904
    %v4998 = vunpack.c.h.b16 %v3904
    %v4999 = vunpack.c.l.b16 %v3905
    %v5000 = vunpack.c.h.b16 %v3905
    %v5001 = vunpack.c.l.b16 %v3906
    %v5002 = vunpack.c.h.b16 %v3906
    %v5003 = vunpack.c.l.b16 %v3907
    %v5004 = vunpack.c.h.b16 %v3907
    %v5005 = vunpack.c.l.b16 %v3908
    %v5006 = vunpack.c.h.b16 %v3908
    %v5007 = vunpack.c.l.b16 %v3909
    %v5008 = vunpack.c.h.b16 %v3909
    %v5009 = vunpack.c.l.b16 %v3910
    %v5010 = vunpack.c.h.b16 %v3910
    %v5011 = vunpack.c.l.b16 %v3911
    %v5012 = vunpack.c.h.b16 %v3911
    %v5013 = vunpack.c.l.b16 %v3912
    %v5014 = vunpack.c.h.b16 %v3912
    %v5015 = vunpack.c.l.b16 %v3913
    %v5016 = vunpack.c.h.b16 %v3913
    %v5017 = vunpack.c.l.b16 %v3914
    %v5018 = vunpack.c.h.b16 %v3914
    %v5019 = vunpack.c.l.b16 %v3915
    %v5020 = vunpack.c.h.b16 %v3915
    %v5021 = vunpack.c.l.b16 %v3916
    %v5022 = vunpack.c.h.b16 %v3916
    %v5023 = vunpack.c.l.b16 %v3917
    %v5024 = vunpack.c.h.b16 %v3917
    %v5025 = vunpack.c.l.b16 %v3918
    %v5026 = vunpack.c.h.b16 %v3918
    %v5027 = vunpack.c.l.b16 %v3919
    %v5028 = vunpack.c.h.b16 %v3919
    %v5029 = vunpack.c.l.b16 %v3920
    %v5030 = vunpack.c.h.b16 %v3920
    %v5031 = vunpack.c.l.b16 %v3921
    %v5032 = vunpack.c.h.b16 %v3921
    %v5033 = vunpack.c.l.b16 %v3922
    %v5034 = vunpack.c.h.b16 %v3922
    %v5035 = vunpack.c.l.b16 %v3923
    %v5036 = vunpack.c.h.b16 %v3923
    %v5037 = vunpack.c.l.b16 %v3924
    %v5038 = vunpack.c.h.b16 %v3924
    %v5039 = vunpack.c.l.b16 %v3925
    %v5040 = vunpack.c.h.b16 %v3925
    %v5041 = vunpack.c.l.b16 %v3926
    %v5042 = vunpack.c.h.b16 %v3926
    %v5043 = vunpack.c.l.b16 %v3927
    %v5044 = vunpack.c.h.b16 %v3927
    %v5045 = vunpack.c.l.b16 %v3928
    %v5046 = vunpack.c.h.b16 %v3928
    %v5047 = vunpack.c.l.b16 %v3929
    %v5048 = vunpack.c.h.b16 %v3929
    %v5049 = vunpack.c.l.b16 %v3930
    %v5050 = vunpack.c.h.b16 %v3930
    %v5051 = vunpack.c.l.b16 %v3931
    %v5052 = vunpack.c.h.b16 %v3931
    %v5053 = vunpack.c.l.b16 %v3932
    %v5054 = vunpack.c.h.b16 %v3932
    %v5055 = vunpack.c.l.b16 %v3933
    %v5056 = vunpack.c.h.b16 %v3933
    %v5057 = vunpack.c.l.b16 %v3934
    %v5058 = vunpack.c.h.b16 %v3934
    %v5059 = vunpack.c.l.b16 %v3935
    %v5060 = vunpack.c.h.b16 %v3935
    %v5061 = vunpack.c.l.b16 %v3936
    %v5062 = vunpack.c.h.b16 %v3936
    %v5063 = vunpack.c.l.b16 %v3937
    %v5064 = vunpack.c.h.b16 %v3937
    %v5065 = vunpack.c.l.b16 %v3938
    %v5066 = vunpack.c.h.b16 %v3938
    %v5067 = vunpack.c.l.b16 %v3939
    %v5068 = vunpack.c.h.b16 %v3939
    %v5069 = vunpack.c.l.b16 %v3940
    %v5070 = vunpack.c.h.b16 %v3940
    %v5071 = vunpack.c.l.b16 %v3941
    %v5072 = vunpack.c.h.b16 %v3941
    %v5073 = vunpack.c.l.b16 %v3942
    %v5074 = vunpack.c.h.b16 %v3942
    %v5075 = vunpack.c.l.b16 %v3943
    %v5076 = vunpack.c.h.b16 %v3943
    %v5077 = vunpack.c.l.b16 %v3944
    %v5078 = vunpack.c.h.b16 %v3944
    %v5079 = vunpack.c.l.b16 %v3945
    %v5080 = vunpack.c.h.b16 %v3945
    %v5081 = vunpack.c.l.b16 %v3946
    %v5082 = vunpack.c.h.b16 %v3946
    %v5083 = vunpack.c.l.b16 %v3947
    %v5084 = vunpack.c.h.b16 %v3947
    %v5085 = vunpack.c.l.b16 %v3948
    %v5086 = vunpack.c.h.b16 %v3948
    %v5087 = vunpack.c.l.b16 %v3949
    %v5088 = vunpack.c.h.b16 %v3949
    %v5089 = vunpack.c.l.b16 %v3950
    %v5090 = vunpack.c.h.b16 %v3950
    %v5091 = vunpack.c.l.b16 %v3951
    %v5092 = vunpack.c.h.b16 %v3951
    %v5093 = vunpack.c.l.b16 %v3952
    %v5094 = vunpack.c.h.b16 %v3952
    %v5095 = vunpack.c.l.b16 %v3953
    %v5096 = vunpack.c.h.b16 %v3953
    %v5097 = vunpack.c.l.b16 %v3954
    %v5098 = vunpack.c.h.b16 %v3954
    %v5099 = vunpack.c.l.b16 %v3955
    %v5100 = vunpack.c.h.b16 %v3955
    %v5101 = vunpack.c.l.b16 %v3956
    %v5102 = vunpack.c.h.b16 %v3956
    %v5103 = vunpack.c.l.b16 %v3957
    %v5104 = vunpack.c.h.b16 %v3957
    %v5105 = vunpack.c.l.b16 %v3958
    %v5106 = vunpack.c.h.b16 %v3958
    %v5107 = vunpack.c.l.b16 %v3959
    %v5108 = vunpack.c.h.b16 %v3959
    %v5109 = vunpack.c.l.b16 %v3960
    %v5110 = vunpack.c.h.b16 %v3960
    %v5111 = vunpack.c.l.b16 %v3961
    %v5112 = vunpack.c.h.b16 %v3961
    %v5113 = vunpack.c.l.b16 %v3962
    %v5114 = vunpack.c.h.b16 %v3962
    %v5115 = vunpack.c.l.b16 %v3963
    %v5116 = vunpack.c.h.b16 %v3963
    %v5117 = vunpack.c.l.b16 %v3964
    %v5118 = vunpack.c.h.b16 %v3964
    %v5119 = vunpack.c.l.b16 %v3965
    %v5120 = vunpack.c.h.b16 %v3965
    %v5121 = vunpack.c.l.b16 %v3966
    %v5122 = vunpack.c.h.b16 %v3966
    %v5123 = vunpack.c.l.b16 %v3967
    %v5124 = vunpack.c.h.b16 %v3967
    %v5125 = vunpack.c.l.b16 %v3968
    %v5126 = vunpack.c.h.b16 %v3968
    %v5127 = vunpack.c.l.b16 %v3969
    %v5128 = vunpack.c.h.b16 %v3969
    %v5129 = vunpack.c.l.b16 %v3970
    %v5130 = vunpack.c.h.b16 %v3970
    %v5131 = vunpack.c.l.b16 %v3971
    %v5132 = vunpack.c.h.b16 %v3971
    %v5133 = vunpack.c.l.b16 %v3972
    %v5134 = vunpack.c.h.b16 %v3972
    %v5135 = vunpack.c.l.b16 %v3973
    %v5136 = vunpack.c.h.b16 %v3973
    %v5137 = vunpack.c.l.b16 %v3974
    %v5138 = vunpack.c.h.b16 %v3974
    %v5139 = vunpack.c.l.b16 %v3975
    %v5140 = vunpack.c.h.b16 %v3975
    %v5141 = vunpack.c.l.b16 %v3976
    %v5142 = vunpack.c.h.b16 %v3976
    %v5143 = vunpack.c.l.b16 %v3977
    %v5144 = vunpack.c.h.b16 %v3977
    %v5145 = vunpack.c.l.b16 %v3978
    %v5146 = vunpack.c.h.b16 %v3978
    %v5147 = vunpack.c.l.b16 %v3979
    %v5148 = vunpack.c.h.b16 %v3979
    %v5149 = vunpack.c.l.b16 %v3980
    %v5150 = vunpack.c.h.b16 %v3980
    %v5151 = vunpack.c.l.b16 %v3981
    %v5152 = vunpack.c.h.b16 %v3981
    %v5153 = vunpack.c.l.b16 %v3982
    %v5154 = vunpack.c.h.b16 %v3982
    %v5155 = vunpack.c.l.b16 %v3983
    %v5156 = vunpack.c.h.b16 %v3983
    %v5157 = vunpack.c.l.b16 %v3984
    %v5158 = vunpack.c.h.b16 %v3984
    %v5159 = vunpack.c.l.b16 %v3985
    %v5160 = vunpack.c.h.b16 %v3985
    %v5161 = vunpack.c.l.b16 %v3986
    %v5162 = vunpack.c.h.b16 %v3986
    %v5163 = vunpack.c.l.b16 %v3987
    %v5164 = vunpack.c.h.b16 %v3987
    %v5165 = vunpack.c.l.b16 %v3988
    %v5166 = vunpack.c.h.b16 %v3988
    %v5167 = vunpack.c.l.b16 %v3989
    %v5168 = vunpack.c.h.b16 %v3989
    %v5169 = vunpack.c.l.b16 %v3990
    %v5170 = vunpack.c.h.b16 %v3990
    %v5171 = vunpack.c.l.b16 %v3991
    %v5172 = vunpack.c.h.b16 %v3991
    %v5173 = vunpack.c.l.b16 %v3992
    %v5174 = vunpack.c.h.b16 %v3992
    %v5175 = vunpack.c.l.b16 %v3993
    %v5176 = vunpack.c.h.b16 %v3993
    %v5177 = vunpack.c.l.b16 %v3994
    %v5178 = vunpack.c.h.b16 %v3994
    %v5179 = vunpack.c.l.b16 %v3995
    %v5180 = vunpack.c.h.b16 %v3995
    %v5181 = vunpack.c.l.b16 %v3996
    %v5182 = vunpack.c.h.b16 %v3996
    %v5183 = vunpack.c.l.b16 %v3997
    %v5184 = vunpack.c.h.b16 %v3997
    %v5185 = vunpack.c.l.b16 %v3998
    %v5186 = vunpack.c.h.b16 %v3998
    %v5187 = vunpack.c.l.b16 %v3999
    %v5188 = vunpack.c.h.b16 %v3999
    %v5189 = vunpack.c.l.b16 %v4000
    %v5190 = vunpack.c.h.b16 %v4000
    %v5191 = vunpack.c.l.b16 %v4001
    %v5192 = vunpack.c.h.b16 %v4001
    %v5193 = vunpack.c.l.b16 %v4002
    %v5194 = vunpack.c.h.b16 %v4002
    %v5195 = vunpack.c.l.b16 %v4003
    %v5196 = vunpack.c.h.b16 %v4003
    %v5197 = vunpack.c.l.b16 %v4004
    %v5198 = vunpack.c.h.b16 %v4004
    %v5199 = vunpack.c.l.b16 %v4005
    %v5200 = vunpack.c.h.b16 %v4005
    %v5201 = vunpack.c.l.b16 %v4006
    %v5202 = vunpack.c.h.b16 %v4006
    %v5203 = vunpack.c.l.b16 %v4007
    %v5204 = vunpack.c.h.b16 %v4007
    %v5205 = vunpack.c.l.b16 %v4008
    %v5206 = vunpack.c.h.b16 %v4008
    %v5207 = vunpack.c.l.b16 %v4009
    %v5208 = vunpack.c.h.b16 %v4009
    %v5209 = vunpack.c.l.b16 %v4010
    %v5210 = vunpack.c.h.b16 %v4010
    %v5211 = vunpack.c.l.b16 %v4011
    %v5212 = vunpack.c.h.b16 %v4011
    %v5213 = vunpack.c.l.b16 %v4012
    %v5214 = vunpack.c.h.b16 %v4012
    %v5215 = vunpack.c.l.b16 %v4013
    %v5216 = vunpack.c.h.b16 %v4013
    %v5217 = vunpack.c.l.b16 %v4014
    %v5218 = vunpack.c.h.b16 %v4014
    %v5219 = vunpack.c.l.b16 %v4015
    %v5220 = vunpack.c.h.b16 %v4015
    %v5221 = vunpack.c.l.b16 %v4016
    %v5222 = vunpack.c.h.b16 %v4016
    %v5223 = vunpack.c.l.b16 %v4017
    %v5224 = vunpack.c.h.b16 %v4017
    %v5225 = vunpack.c.l.b16 %v4018
    %v5226 = vunpack.c.h.b16 %v4018
    %v5227 = vunpack.c.l.b16 %v4019
    %v5228 = vunpack.c.h.b16 %v4019
    %v5229 = vunpack.c.l.b16 %v4020
    %v5230 = vunpack.c.h.b16 %v4020
    %v5231 = vunpack.c.l.b16 %v4021
    %v5232 = vunpack.c.h.b16 %v4021
    %v5233 = vunpack.c.l.b16 %v4022
    %v5234 = vunpack.c.h.b16 %v4022
    %v5235 = vunpack.c.l.b16 %v4023
    %v5236 = vunpack.c.h.b16 %v4023
    %v5237 = vunpack.c.l.b16 %v4024
    %v5238 = vunpack.c.h.b16 %v4024
    %v5239 = vunpack.c.l.b16 %v4025
    %v5240 = vunpack.c.h.b16 %v4025
    %v5241 = vunpack.c.l.b16 %v4026
    %v5242 = vunpack.c.h.b16 %v4026
    %v5243 = vunpack.c.l.b16 %v4027
    %v5244 = vunpack.c.h.b16 %v4027
    %v5245 = vunpack.c.l.b16 %v4028
    %v5246 = vunpack.c.h.b16 %v4028
    %v5247 = vunpack.c.l.b16 %v4029
    %v5248 = vunpack.c.h.b16 %v4029
    %v5249 = vunpack.c.l.b16 %v4030
    %v5250 = vunpack.c.h.b16 %v4030
    %v5251 = vunpack.c.l.b16 %v4031
    %v5252 = vunpack.c.h.b16 %v4031
    %v5253 = vunpack.c.l.b16 %v4032
    %v5254 = vunpack.c.h.b16 %v4032
    %v5255 = vunpack.c.l.b16 %v4033
    %v5256 = vunpack.c.h.b16 %v4033
    %v5257 = vunpack.c.l.b16 %v4034
    %v5258 = vunpack.c.h.b16 %v4034
    %v5259 = vunpack.c.l.b16 %v4035
    %v5260 = vunpack.c.h.b16 %v4035
    %v5261 = vunpack.c.l.b16 %v4036
    %v5262 = vunpack.c.h.b16 %v4036
    %v5263 = vunpack.c.l.b16 %v4037
    %v5264 = vunpack.c.h.b16 %v4037
    %v5265 = vunpack.c.l.b16 %v4038
    %v5266 = vunpack.c.h.b16 %v4038
    %v5267 = vunpack.c.l.b16 %v4039
    %v5268 = vunpack.c.h.b16 %v4039
    %v5269 = vunpack.c.l.b16 %v4040
    %v5270 = vunpack.c.h.b16 %v4040
    %v5271 = vunpack.c.l.b16 %v4041
    %v5272 = vunpack.c.h.b16 %v4041
    %v5273 = vunpack.c.l.b16 %v4042
    %v5274 = vunpack.c.h.b16 %v4042
    %v5275 = vunpack.c.l.b16 %v4043
    %v5276 = vunpack.c.h.b16 %v4043
    %v5277 = vunpack.c.l.b16 %v4044
    %v5278 = vunpack.c.h.b16 %v4044
    %v5279 = vunpack.c.l.b16 %v4045
    %v5280 = vunpack.c.h.b16 %v4045
    %v5281 = vunpack.c.l.b16 %v4046
    %v5282 = vunpack.c.h.b16 %v4046
    %v5283 = vunpack.c.l.b16 %v4047
    %v5284 = vunpack.c.h.b16 %v4047
    %v5285 = vunpack.c.l.b16 %v4048
    %v5286 = vunpack.c.h.b16 %v4048
    %v5287 = vunpack.c.l.b16 %v4049
    %v5288 = vunpack.c.h.b16 %v4049
    %v5289 = vunpack.c.l.b16 %v4050
    %v5290 = vunpack.c.h.b16 %v4050
    %v5291 = vunpack.c.l.b16 %v4051
    %v5292 = vunpack.c.h.b16 %v4051
    %v5293 = vunpack.c.l.b16 %v4052
    %v5294 = vunpack.c.h.b16 %v4052
    %v5295 = vunpack.c.l.b16 %v4053
    %v5296 = vunpack.c.h.b16 %v4053
    %v5297 = vunpack.c.l.b16 %v4054
    %v5298 = vunpack.c.h.b16 %v4054
    %v5299 = vunpack.c.l.b16 %v4055
    %v5300 = vunpack.c.h.b16 %v4055
    %v5301 = vunpack.c.l.b16 %v4056
    %v5302 = vunpack.c.h.b16 %v4056
    %v5303 = vunpack.c.l.b16 %v4057
    %v5304 = vunpack.c.h.b16 %v4057
    %v5305 = vunpack.c.l.b16 %v4058
    %v5306 = vunpack.c.h.b16 %v4058
    %v5307 = vunpack.c.l.b16 %v4059
    %v5308 = vunpack.c.h.b16 %v4059
    %v5309 = vunpack.c.l.b16 %v4060
    %v5310 = vunpack.c.h.b16 %v4060
    %v5311 = vunpack.c.l.b16 %v4061
    %v5312 = vunpack.c.h.b16 %v4061
    %v5313 = vunpack.c.l.b16 %v4062
    %v5314 = vunpack.c.h.b16 %v4062
    %v5315 = vunpack.c.l.b16 %v4063
    %v5316 = vunpack.c.h.b16 %v4063
    %v5317 = vunpack.c.l.b16 %v4064
    %v5318 = vunpack.c.h.b16 %v4064
    %v5319 = vunpack.c.l.b16 %v4065
    %v5320 = vunpack.c.h.b16 %v4065
    %v5321 = vunpack.c.l.b16 %v4066
    %v5322 = vunpack.c.h.b16 %v4066
    %v5323 = vunpack.c.l.b16 %v4067
    %v5324 = vunpack.c.h.b16 %v4067
    %v5325 = vunpack.c.l.b16 %v4068
    %v5326 = vunpack.c.h.b16 %v4068
    %v5327 = vunpack.c.l.b16 %v4069
    %v5328 = vunpack.c.h.b16 %v4069
    %v5329 = vunpack.c.l.b16 %v4070
    %v5330 = vunpack.c.h.b16 %v4070
    %v5331 = vunpack.c.l.b16 %v4071
    %v5332 = vunpack.c.h.b16 %v4071
    %v5333 = vunpack.c.l.b16 %v4072
    %v5334 = vunpack.c.h.b16 %v4072
    %v5335 = vunpack.c.l.b16 %v4073
    %v5336 = vunpack.c.h.b16 %v4073
    %v5337 = vunpack.c.l.b16 %v4074
    %v5338 = vunpack.c.h.b16 %v4074
    %v5339 = vunpack.c.l.b16 %v4075
    %v5340 = vunpack.c.h.b16 %v4075
    %v5341 = vunpack.c.l.b16 %v4076
    %v5342 = vunpack.c.h.b16 %v4076
    %v5343 = vunpack.c.l.b16 %v4077
    %v5344 = vunpack.c.h.b16 %v4077
    %v5345 = vunpack.c.l.b16 %v4078
    %v5346 = vunpack.c.h.b16 %v4078
    %v5347 = vunpack.c.l.b16 %v4079
    %v5348 = vunpack.c.h.b16 %v4079
    %v5349 = vunpack.c.l.b16 %v4080
    %v5350 = vunpack.c.h.b16 %v4080
    %v5351 = vunpack.c.l.b16 %v4081
    %v5352 = vunpack.c.h.b16 %v4081
    %v5353 = vunpack.c.l.b16 %v4082
    %v5354 = vunpack.c.h.b16 %v4082
    %v5355 = vunpack.c.l.b16 %v4083
    %v5356 = vunpack.c.h.b16 %v4083
    %v5357 = vunpack.c.l.b16 %v4084
    %v5358 = vunpack.c.h.b16 %v4084
    %v5359 = vunpack.c.l.b16 %v4085
    %v5360 = vunpack.c.h.b16 %v4085
    %v5361 = vunpack.c.l.b16 %v4086
    %v5362 = vunpack.c.h.b16 %v4086
    %v5363 = vunpack.c.l.b16 %v4087
    %v5364 = vunpack.c.h.b16 %v4087
    %v5365 = vunpack.c.l.b16 %v4088
    %v5366 = vunpack.c.h.b16 %v4088
    %v5367 = vunpack.c.l.b16 %v4089
    %v5368 = vunpack.c.h.b16 %v4089
    %v5369 = vunpack.c.l.b16 %v4090
    %v5370 = vunpack.c.h.b16 %v4090
    %v5371 = vunpack.c.l.b16 %v4091
    %v5372 = vunpack.c.h.b16 %v4091
    %v5373 = vunpack.c.l.b16 %v4092
    %v5374 = vunpack.c.h.b16 %v4092
    %v5375 = vunpack.c.l.b16 %v4093
    %v5376 = vunpack.c.h.b16 %v4093
    %v5377 = vunpack.c.l.b16 %v4094
    %v5378 = vunpack.c.h.b16 %v4094
    %v5379 = vunpack.c.l.b16 %v4095
    %v5380 = vunpack.c.h.b16 %v4095
    %v5381 = vunpack.c.l.b16 %v4096
    %v5382 = vunpack.c.h.b16 %v4096
    %v5383 = vunpack.c.l.b16 %v4097
    %v5384 = vunpack.c.h.b16 %v4097
    %v5385 = vunpack.c.l.b16 %v4098
    %v5386 = vunpack.c.h.b16 %v4098
    %v5387 = vunpack.c.l.b16 %v4099
    %v5388 = vunpack.c.h.b16 %v4099
    %v5389 = vunpack.c.l.b16 %v4100
    %v5390 = vunpack.c.h.b16 %v4100
    %v5391 = vunpack.c.l.b16 %v4101
    %v5392 = vunpack.c.h.b16 %v4101
    %v5393 = vunpack.c.l.b16 %v4102
    %v5394 = vunpack.c.h.b16 %v4102
    %v5395 = vunpack.c.l.b16 %v4103
    %v5396 = vunpack.c.h.b16 %v4103
    %v5397 = vunpack.c.l.b16 %v4104
    %v5398 = vunpack.c.h.b16 %v4104
    %v5399 = vunpack.c.l.b16 %v4105
    %v5400 = vunpack.c.h.b16 %v4105
    %v5401 = vunpack.c.l.b16 %v4106
    %v5402 = vunpack.c.h.b16 %v4106
    %v5403 = vunpack.c.l.b16 %v4107
    %v5404 = vunpack.c.h.b16 %v4107
    %v5405 = vunpack.c.l.b16 %v4108
    %v5406 = vunpack.c.h.b16 %v4108
    %v5407 = vunpack.c.l.b16 %v4109
    %v5408 = vunpack.c.h.b16 %v4109
    %v5409 = vunpack.c.l.b16 %v4110
    %v5410 = vunpack.c.h.b16 %v4110
    %v5411 = vunpack.c.l.b16 %v4111
    %v5412 = vunpack.c.h.b16 %v4111
    %v5413 = vunpack.c.l.b16 %v4112
    %v5414 = vunpack.c.h.b16 %v4112
    %v5415 = vunpack.c.l.b16 %v4113
    %v5416 = vunpack.c.h.b16 %v4113
    %v5417 = vunpack.c.l.b16 %v4114
    %v5418 = vunpack.c.h.b16 %v4114
    %v5419 = vunpack.c.l.b16 %v4115
    %v5420 = vunpack.c.h.b16 %v4115
    %v5421 = vunpack.c.l.b16 %v4116
    %v5422 = vunpack.c.h.b16 %v4116
    %v5423 = vunpack.c.l.b16 %v4117
    %v5424 = vunpack.c.h.b16 %v4117
    %v5425 = vunpack.c.l.b16 %v4118
    %v5426 = vunpack.c.h.b16 %v4118
    %v5427 = vunpack.c.l.b16 %v4119
    %v5428 = vunpack.c.h.b16 %v4119
    %v5429 = vunpack.c.l.b16 %v4120
    %v5430 = vunpack.c.h.b16 %v4120
    %v5431 = vunpack.c.l.b16 %v4121
    %v5432 = vunpack.c.h.b16 %v4121
    %v5433 = vunpack.c.l.b16 %v4122
    %v5434 = vunpack.c.h.b16 %v4122
    %v5435 = vunpack.c.l.b16 %v4123
    %v5436 = vunpack.c.h.b16 %v4123
    %v5437 = vunpack.c.l.b16 %v4124
    %v5438 = vunpack.c.h.b16 %v4124
    %v5439 = vunpack.c.l.b16 %v4125
    %v5440 = vunpack.c.h.b16 %v4125
    %v5441 = vunpack.c.l.b16 %v4126
    %v5442 = vunpack.c.h.b16 %v4126
    %v5443 = vunpack.c.l.b16 %v4127
    %v5444 = vunpack.c.h.b16 %v4127
    %v5445 = vunpack.c.l.b16 %v4128
    %v5446 = vunpack.c.h.b16 %v4128
    %v5447 = vunpack.c.l.b16 %v4129
    %v5448 = vunpack.c.h.b16 %v4129
    %v5449 = vunpack.c.l.b16 %v4130
    %v5450 = vunpack.c.h.b16 %v4130
    %v5451 = vunpack.c.l.b16 %v4131
    %v5452 = vunpack.c.h.b16 %v4131
    %v5453 = vunpack.c.l.b16 %v4132
    %v5454 = vunpack.c.h.b16 %v4132
    %v5455 = vunpack.c.l.b16 %v4133
    %v5456 = vunpack.c.h.b16 %v4133
    %v5457 = vunpack.c.l.b16 %v4134
    %v5458 = vunpack.c.h.b16 %v4134
    %v5459 = vunpack.c.l.b16 %v4135
    %v5460 = vunpack.c.h.b16 %v4135
    %v5461 = vunpack.c.l.b16 %v4136
    %v5462 = vunpack.c.h.b16 %v4136
    %v5463 = vunpack.c.l.b16 %v4137
    %v5464 = vunpack.c.h.b16 %v4137
    %v5465 = vunpack.c.l.b16 %v4138
    %v5466 = vunpack.c.h.b16 %v4138
    %v5467 = vunpack.c.l.b16 %v4139
    %v5468 = vunpack.c.h.b16 %v4139
    %v5469 = vunpack.c.l.b16 %v4140
    %v5470 = vunpack.c.h.b16 %v4140
    %v5471 = vunpack.c.l.b16 %v4141
    %v5472 = vunpack.c.h.b16 %v4141
    %v5473 = vunpack.c.l.b16 %v4142
    %v5474 = vunpack.c.h.b16 %v4142
    %v5475 = vunpack.c.l.b16 %v4143
    %v5476 = vunpack.c.h.b16 %v4143
    %v5477 = vunpack.c.l.b16 %v4144
    %v5478 = vunpack.c.h.b16 %v4144
    %v5479 = vunpack.c.l.b16 %v4145
    %v5480 = vunpack.c.h.b16 %v4145
    %v5481 = vunpack.c.l.b16 %v4146
    %v5482 = vunpack.c.h.b16 %v4146
    %v5483 = vunpack.c.l.b16 %v4147
    %v5484 = vunpack.c.h.b16 %v4147
    %v5485 = vunpack.c.l.b16 %v4148
    %v5486 = vunpack.c.h.b16 %v4148
    %v5487 = vunpack.c.l.b16 %v4149
    %v5488 = vunpack.c.h.b16 %v4149
    %v5489 = vunpack.c.l.b16 %v4150
    %v5490 = vunpack.c.h.b16 %v4150
    %v5491 = vunpack.c.l.b16 %v4151
    %v5492 = vunpack.c.h.b16 %v4151
    %v5493 = vunpack.c.l.b16 %v4152
    %v5494 = vunpack.c.h.b16 %v4152
    %v5495 = vunpack.c.l.b16 %v4153
    %v5496 = vunpack.c.h.b16 %v4153
    %v5497 = vunpack.c.l.b16 %v4154
    %v5498 = vunpack.c.h.b16 %v4154
    %v5499 = vunpack.c.l.b16 %v4155
    %v5500 = vunpack.c.h.b16 %v4155
    %v5501 = vunpack.c.l.b16 %v4156
    %v5502 = vunpack.c.h.b16 %v4156
    %v5503 = vunpack.c.l.b16 %v4157
    %v5504 = vunpack.c.h.b16 %v4157
    %v5505 = vunpack.c.l.b16 %v4158
    %v5506 = vunpack.c.h.b16 %v4158
    %v5507 = vunpack.c.l.b16 %v4159
    %v5508 = vunpack.c.h.b16 %v4159
    %v5509 = vunpack.c.l.b16 %v4160
    %v5510 = vunpack.c.h.b16 %v4160
    %v5511 = vunpack.c.l.b16 %v4161
    %v5512 = vunpack.c.h.b16 %v4161
    %v5513 = vunpack.c.l.b16 %v4162
    %v5514 = vunpack.c.h.b16 %v4162
    %v5515 = vunpack.c.l.b16 %v4163
    %v5516 = vunpack.c.h.b16 %v4163
    %v5517 = vunpack.c.l.b16 %v4164
    %v5518 = vunpack.c.h.b16 %v4164
    %v5519 = vunpack.c.l.b16 %v4165
    %v5520 = vunpack.c.h.b16 %v4165
    %v5521 = vunpack.c.l.b16 %v4166
    %v5522 = vunpack.c.h.b16 %v4166
    %v5523 = vunpack.c.l.b16 %v4167
    %v5524 = vunpack.c.h.b16 %v4167
    %v5525 = vunpack.c.l.b16 %v4168
    %v5526 = vunpack.c.h.b16 %v4168
    %v5527 = vunpack.c.l.b16 %v4169
    %v5528 = vunpack.c.h.b16 %v4169
    %v5529 = vunpack.c.l.b16 %v4170
    %v5530 = vunpack.c.h.b16 %v4170
    %v5531 = vunpack.c.l.b16 %v4171
    %v5532 = vunpack.c.h.b16 %v4171
    %v5533 = vunpack.c.l.b16 %v4172
    %v5534 = vunpack.c.h.b16 %v4172
    %v5535 = vunpack.c.l.b16 %v4173
    %v5536 = vunpack.c.h.b16 %v4173
    %v5537 = vunpack.c.l.b16 %v4174
    %v5538 = vunpack.c.h.b16 %v4174
    %v5539 = vunpack.c.l.b16 %v4175
    %v5540 = vunpack.c.h.b16 %v4175
    %v5541 = vunpack.c.l.b16 %v4176
    %v5542 = vunpack.c.h.b16 %v4176
    %v5543 = vunpack.c.l.b16 %v4177
    %v5544 = vunpack.c.h.b16 %v4177
    %v5545 = vunpack.c.l.b16 %v4178
    %v5546 = vunpack.c.h.b16 %v4178
    %v5547 = vunpack.c.l.b16 %v4179
    %v5548 = vunpack.c.h.b16 %v4179
    %v5549 = vunpack.c.l.b16 %v4180
    %v5550 = vunpack.c.h.b16 %v4180
    %v5551 = vunpack.c.l.b16 %v4181
    %v5552 = vunpack.c.h.b16 %v4181
    %v5553 = vunpack.c.l.b16 %v4182
    %v5554 = vunpack.c.h.b16 %v4182
    %v5555 = vunpack.c.l.b16 %v4183
    %v5556 = vunpack.c.h.b16 %v4183
    %v5557 = vunpack.c.l.b16 %v4184
    %v5558 = vunpack.c.h.b16 %v4184
    %v5559 = vunpack.c.l.b16 %v4185
    %v5560 = vunpack.c.h.b16 %v4185
    %v5561 = vunpack.c.l.b16 %v4186
    %v5562 = vunpack.c.h.b16 %v4186
    %v5563 = vunpack.c.l.b16 %v4187
    %v5564 = vunpack.c.h.b16 %v4187
    %v5565 = vunpack.c.l.b16 %v4188
    %v5566 = vunpack.c.h.b16 %v4188
    %v5567 = vunpack.c.l.b16 %v4189
    %v5568 = vunpack.c.h.b16 %v4189
    %v5569 = vunpack.c.l.b16 %v4190
    %v5570 = vunpack.c.h.b16 %v4190
    %v5571 = vunpack.c.l.b16 %v4191
    %v5572 = vunpack.c.h.b16 %v4191
    %v5573 = vunpack.c.l.b16 %v4192
    %v5574 = vunpack.c.h.b16 %v4192
    %v5575 = vunpack.c.l.b16 %v4193
    %v5576 = vunpack.c.h.b16 %v4193
    %v5577 = vunpack.c.l.b16 %v4194
    %v5578 = vunpack.c.h.b16 %v4194
    %v5579 = vunpack.c.l.b16 %v4195
    %v5580 = vunpack.c.h.b16 %v4195
    %v5581 = vunpack.c.l.b16 %v4196
    %v5582 = vunpack.c.h.b16 %v4196
    %v5583 = vunpack.c.l.b16 %v4197
    %v5584 = vunpack.c.h.b16 %v4197
    %v5585 = vunpack.c.l.b16 %v4198
    %v5586 = vunpack.c.h.b16 %v4198
    %v5587 = vunpack.c.l.b16 %v4199
    %v5588 = vunpack.c.h.b16 %v4199
    %v5589 = vunpack.c.l.b16 %v4200
    %v5590 = vunpack.c.h.b16 %v4200
    %v5591 = vunpack.c.l.b16 %v4201
    %v5592 = vunpack.c.h.b16 %v4201
    %v5593 = vunpack.c.l.b16 %v4202
    %v5594 = vunpack.c.h.b16 %v4202
    %v5595 = vunpack.c.l.b16 %v4203
    %v5596 = vunpack.c.h.b16 %v4203
    %v5597 = vunpack.c.l.b16 %v4204
    %v5598 = vunpack.c.h.b16 %v4204
    %v5599 = vunpack.c.l.b16 %v4205
    %v5600 = vunpack.c.h.b16 %v4205
    %v5601 = vunpack.c.l.b16 %v4206
    %v5602 = vunpack.c.h.b16 %v4206
    %v5603 = vunpack.c.l.b16 %v4207
    %v5604 = vunpack.c.h.b16 %v4207
    %v5605 = vunpack.c.l.b16 %v4208
    %v5606 = vunpack.c.h.b16 %v4208
    %v5607 = vunpack.c.l.b16 %v4209
    %v5608 = vunpack.c.h.b16 %v4209
    %v5609 = vunpack.c.l.b16 %v4210
    %v5610 = vunpack.c.h.b16 %v4210
    %v5611 = vunpack.c.l.b16 %v4211
    %v5612 = vunpack.c.h.b16 %v4211
    %v5613 = vunpack.c.l.b16 %v4212
    %v5614 = vunpack.c.h.b16 %v4212
    %v5615 = vunpack.c.l.b16 %v4213
    %v5616 = vunpack.c.h.b16 %v4213
    %v5617 = vunpack.c.l.b16 %v4214
    %v5618 = vunpack.c.h.b16 %v4214
    %v5619 = vunpack.c.l.b16 %v4215
    %v5620 = vunpack.c.h.b16 %v4215
    %v5621 = vunpack.c.l.b16 %v4216
    %v5622 = vunpack.c.h.b16 %v4216
    %v5623 = vunpack.c.l.b16 %v4217
    %v5624 = vunpack.c.h.b16 %v4217
    %v5625 = vunpack.c.l.b16 %v4218
    %v5626 = vunpack.c.h.b16 %v4218
    %v5627 = vunpack.c.l.b16 %v4219
    %v5628 = vunpack.c.h.b16 %v4219
    %v5629 = vunpack.c.l.b16 %v4220
    %v5630 = vunpack.c.h.b16 %v4220
    %v5631 = vunpack.c.l.b16 %v4221
    %v5632 = vunpack.c.h.b16 %v4221
    %v5633 = vunpack.c.l.b16 %v4222
    %v5634 = vunpack.c.h.b16 %v4222
    %v5635 = vunpack.c.l.b16 %v4223
    %v5636 = vunpack.c.h.b16 %v4223
    %v5637 = vunpack.c.l.b16 %v4224
    %v5638 = vunpack.c.h.b16 %v4224
    %v5639 = vunpack.c.l.b16 %v4225
    %v5640 = vunpack.c.h.b16 %v4225
    %v5641 = vunpack.c.l.b16 %v4226
    %v5642 = vunpack.c.h.b16 %v4226
    %v5643 = vunpack.c.l.b16 %v4227
    %v5644 = vunpack.c.h.b16 %v4227
    %v5645 = vunpack.c.l.b16 %v4228
    %v5646 = vunpack.c.h.b16 %v4228
    %v5647 = vunpack.c.l.b16 %v4229
    %v5648 = vunpack.c.h.b16 %v4229
    %v5649 = vunpack.c.l.b16 %v4230
    %v5650 = vunpack.c.h.b16 %v4230
    %v5651 = vunpack.c.l.b16 %v4231
    %v5652 = vunpack.c.h.b16 %v4231
    %v5653 = vunpack.c.l.b16 %v4232
    %v5654 = vunpack.c.h.b16 %v4232
    %v5655 = vunpack.c.l.b16 %v4233
    %v5656 = vunpack.c.h.b16 %v4233
    %v5657 = vunpack.c.l.b16 %v4234
    %v5658 = vunpack.c.h.b16 %v4234
    %v5659 = vunpack.c.l.b16 %v4235
    %v5660 = vunpack.c.h.b16 %v4235
    %v5661 = vunpack.c.l.b16 %v4236
    %v5662 = vunpack.c.h.b16 %v4236
    %v5663 = vunpack.c.l.b16 %v4237
    %v5664 = vunpack.c.h.b16 %v4237
    %v5665 = vunpack.c.l.b16 %v4238
    %v5666 = vunpack.c.h.b16 %v4238
    %v5667 = vunpack.c.l.b16 %v4239
    %v5668 = vunpack.c.h.b16 %v4239
    %v5669 = vunpack.c.l.b16 %v4240
    %v5670 = vunpack.c.h.b16 %v4240
    %v5671 = vunpack.c.l.b16 %v4241
    %v5672 = vunpack.c.h.b16 %v4241
    %v5673 = vunpack.c.l.b16 %v4242
    %v5674 = vunpack.c.h.b16 %v4242
    %v5675 = vunpack.c.l.b16 %v4243
    %v5676 = vunpack.c.h.b16 %v4243
    %v5677 = vunpack.c.l.b16 %v4244
    %v5678 = vunpack.c.h.b16 %v4244
    %v5679 = vunpack.c.l.b16 %v4245
    %v5680 = vunpack.c.h.b16 %v4245
    %v5681 = vunpack.c.l.b16 %v4246
    %v5682 = vunpack.c.h.b16 %v4246
    %v5683 = vunpack.c.l.b16 %v4247
    %v5684 = vunpack.c.h.b16 %v4247
    %v5685 = vunpack.c.l.b16 %v4248
    %v5686 = vunpack.c.h.b16 %v4248
    %v5687 = vunpack.c.l.b16 %v4249
    %v5688 = vunpack.c.h.b16 %v4249
    %v5689 = vunpack.c.l.b16 %v4250
    %v5690 = vunpack.c.h.b16 %v4250
    %v5691 = vunpack.c.l.b16 %v4251
    %v5692 = vunpack.c.h.b16 %v4251
    %v5693 = vunpack.c.l.b16 %v4252
    %v5694 = vunpack.c.h.b16 %v4252
    %v5695 = vunpack.c.l.b16 %v4253
    %v5696 = vunpack.c.h.b16 %v4253
    %v5697 = vunpack.c.l.b16 %v4254
    %v5698 = vunpack.c.h.b16 %v4254
    %v5699 = vunpack.c.l.b16 %v4255
    %v5700 = vunpack.c.h.b16 %v4255
    %v5701 = vunpack.c.l.b16 %v4256
    %v5702 = vunpack.c.h.b16 %v4256
    %v5703 = vunpack.c.l.b16 %v4257
    %v5704 = vunpack.c.h.b16 %v4257
    %v5705 = vunpack.c.l.b16 %v4258
    %v5706 = vunpack.c.h.b16 %v4258
    %v5707 = vunpack.c.l.b16 %v4259
    %v5708 = vunpack.c.h.b16 %v4259
    %v5709 = vunpack.c.l.b16 %v4260
    %v5710 = vunpack.c.h.b16 %v4260
    %v5711 = vunpack.c.l.b16 %v4261
    %v5712 = vunpack.c.h.b16 %v4261
    %v5713 = vunpack.c.l.b16 %v4262
    %v5714 = vunpack.c.h.b16 %v4262
    %v5715 = vunpack.c.l.b16 %v4263
    %v5716 = vunpack.c.h.b16 %v4263
    %v5717 = vunpack.c.l.b16 %v4264
    %v5718 = vunpack.c.h.b16 %v4264
    %v5719 = vunpack.c.l.b16 %v4265
    %v5720 = vunpack.c.h.b16 %v4265
    %v5721 = vunpack.c.l.b16 %v4266
    %v5722 = vunpack.c.h.b16 %v4266
    %v5723 = vunpack.c.l.b16 %v4267
    %v5724 = vunpack.c.h.b16 %v4267
    %v5725 = vunpack.c.l.b16 %v4268
    %v5726 = vunpack.c.h.b16 %v4268
    %v5727 = vunpack.c.l.b16 %v4269
    %v5728 = vunpack.c.h.b16 %v4269
    %v5729 = vunpack.c.l.b16 %v4270
    %v5730 = vunpack.c.h.b16 %v4270
    %v5731 = vunpack.c.l.b16 %v4271
    %v5732 = vunpack.c.h.b16 %v4271
    %v5733 = vunpack.c.l.b16 %v4272
    %v5734 = vunpack.c.h.b16 %v4272
    %v5735 = vunpack.c.l.b16 %v4273
    %v5736 = vunpack.c.h.b16 %v4273
    %v5737 = vunpack.c.l.b16 %v4274
    %v5738 = vunpack.c.h.b16 %v4274
    %v5739 = vunpack.c.l.b16 %v4275
    %v5740 = vunpack.c.h.b16 %v4275
    %v5741 = vunpack.c.l.b16 %v4276
    %v5742 = vunpack.c.h.b16 %v4276
    %v5743 = vunpack.c.l.b16 %v4277
    %v5744 = vunpack.c.h.b16 %v4277
    %v5745 = vunpack.c.l.b16 %v4278
    %v5746 = vunpack.c.h.b16 %v4278
    %v5747 = vunpack.c.l.b16 %v4279
    %v5748 = vunpack.c.h.b16 %v4279
    %v5749 = vunpack.c.l.b16 %v4280
    %v5750 = vunpack.c.h.b16 %v4280
    %v5751 = vunpack.c.l.b16 %v4281
    %v5752 = vunpack.c.h.b16 %v4281
    %v5753 = vunpack.c.l.b16 %v4282
    %v5754 = vunpack.c.h.b16 %v4282
    %v5755 = vunpack.c.l.b16 %v4283
    %v5756 = vunpack.c.h.b16 %v4283
    %v5757 = vunpack.c.l.b16 %v4284
    %v5758 = vunpack.c.h.b16 %v4284
    %v5759 = vunpack.c.l.b16 %v4285
    %v5760 = vunpack.c.h.b16 %v4285
    %v5761 = vunpack.c.l.b16 %v4286
    %v5762 = vunpack.c.h.b16 %v4286
    %v5763 = vunpack.c.l.b16 %v4287
    %v5764 = vunpack.c.h.b16 %v4287
    %v5765 = vunpack.c.l.b16 %v4288
    %v5766 = vunpack.c.h.b16 %v4288
    %v5767 = vunpack.c.l.b16 %v4289
    %v5768 = vunpack.c.h.b16 %v4289
    %v5769 = vunpack.c.l.b16 %v4290
    %v5770 = vunpack.c.h.b16 %v4290
    %v5771 = vunpack.c.l.b16 %v4291
    %v5772 = vunpack.c.h.b16 %v4291
    %v5773 = vunpack.c.l.b16 %v4292
    %v5774 = vunpack.c.h.b16 %v4292
    %v5775 = vunpack.c.l.b16 %v4293
    %v5776 = vunpack.c.h.b16 %v4293
    %v5777 = vunpack.c.l.b16 %v4294
    %v5778 = vunpack.c.h.b16 %v4294
    %v5779 = vunpack.c.l.b16 %v4295
    %v5780 = vunpack.c.h.b16 %v4295
    %v5781 = vunpack.c.l.b16 %v4296
    %v5782 = vunpack.c.h.b16 %v4296
    %v5783 = vunpack.c.l.b16 %v4297
    %v5784 = vunpack.c.h.b16 %v4297
    %v5785 = vunpack.c.l.b16 %v4298
    %v5786 = vunpack.c.h.b16 %v4298
    %v5787 = vunpack.c.l.b16 %v4299
    %v5788 = vunpack.c.h.b16 %v4299
    %v5789 = vunpack.c.l.b16 %v4300
    %v5790 = vunpack.c.h.b16 %v4300
    %v5791 = vunpack.c.l.b16 %v4301
    %v5792 = vunpack.c.h.b16 %v4301
    %v5793 = vunpack.c.l.b16 %v4302
    %v5794 = vunpack.c.h.b16 %v4302
    %v5795 = vunpack.c.l.b16 %v4303
    %v5796 = vunpack.c.h.b16 %v4303
    %v5797 = vunpack.c.l.b16 %v4304
    %v5798 = vunpack.c.h.b16 %v4304
    %v5799 = vunpack.c.l.b16 %v4305
    %v5800 = vunpack.c.h.b16 %v4305
    %v5801 = vunpack.c.l.b16 %v4306
    %v5802 = vunpack.c.h.b16 %v4306
    %v5803 = vunpack.c.l.b16 %v4307
    %v5804 = vunpack.c.h.b16 %v4307
    %v5805 = vunpack.c.l.b16 %v4308
    %v5806 = vunpack.c.h.b16 %v4308
    %v5807 = vunpack.c.l.b16 %v4309
    %v5808 = vunpack.c.h.b16 %v4309
    %v5809 = vunpack.c.l.b16 %v4310
    %v5810 = vunpack.c.h.b16 %v4310
    %v5811 = vunpack.c.l.b16 %v4311
    %v5812 = vunpack.c.h.b16 %v4311
    %v5813 = vunpack.c.l.b16 %v4312
    %v5814 = vunpack.c.h.b16 %v4312
    %v5815 = vunpack.c.l.b16 %v4313
    %v5816 = vunpack.c.h.b16 %v4313
    %v5817 = vunpack.c.l.b16 %v4314
    %v5818 = vunpack.c.h.b16 %v4314
    %v5819 = vunpack.c.l.b16 %v4315
    %v5820 = vunpack.c.h.b16 %v4315
    %v5821 = vunpack.c.l.b16 %v4316
    %v5822 = vunpack.c.h.b16 %v4316
    %v5823 = vunpack.c.l.b16 %v4317
    %v5824 = vunpack.c.h.b16 %v4317
    %v5825 = vunpack.c.l.b16 %v4318
    %v5826 = vunpack.c.h.b16 %v4318
    %v5827 = vunpack.c.l.b16 %v4319
    %v5828 = vunpack.c.h.b16 %v4319
    %v5829 = vunpack.c.l.b16 %v4320
    %v5830 = vunpack.c.h.b16 %v4320
    %v5831 = vunpack.c.l.b16 %v4321
    %v5832 = vunpack.c.h.b16 %v4321
    %v5833 = vunpack.c.l.b16 %v4322
    %v5834 = vunpack.c.h.b16 %v4322
    %v5835 = vunpack.c.l.b16 %v4323
    %v5836 = vunpack.c.h.b16 %v4323
    %v5837 = vunpack.c.l.b16 %v4324
    %v5838 = vunpack.c.h.b16 %v4324
    %v5839 = vunpack.c.l.b16 %v4325
    %v5840 = vunpack.c.h.b16 %v4325
    %v5841 = vunpack.c.l.b16 %v4326
    %v5842 = vunpack.c.h.b16 %v4326
    %v5843 = vunpack.c.l.b16 %v4327
    %v5844 = vunpack.c.h.b16 %v4327
    %v5845 = vunpack.c.l.b16 %v4328
    %v5846 = vunpack.c.h.b16 %v4328
    %v5847 = vunpack.c.l.b16 %v4329
    %v5848 = vunpack.c.h.b16 %v4329
    %v5849 = vunpack.c.l.b16 %v4330
    %v5850 = vunpack.c.h.b16 %v4330
    %v5851 = vunpack.c.l.b16 %v4331
    %v5852 = vunpack.c.h.b16 %v4331
    %v5853 = vunpack.c.l.b16 %v4332
    %v5854 = vunpack.c.h.b16 %v4332
    %v5855 = vunpack.c.l.b16 %v4333
    %v5856 = vunpack.c.h.b16 %v4333
    %v5857 = vunpack.c.l.b16 %v4334
    %v5858 = vunpack.c.h.b16 %v4334
    %v5859 = vunpack.c.l.b16 %v4335
    %v5860 = vunpack.c.h.b16 %v4335
    %v5861 = vunpack.c.l.b16 %v4336
    %v5862 = vunpack.c.h.b16 %v4336
    %v5863 = vunpack.c.l.b16 %v4337
    %v5864 = vunpack.c.h.b16 %v4337
    %v5865 = vunpack.c.l.b16 %v4338
    %v5866 = vunpack.c.h.b16 %v4338
    %v5867 = vunpack.c.l.b16 %v4339
    %v5868 = vunpack.c.h.b16 %v4339
    %v5869 = vunpack.c.l.b16 %v4340
    %v5870 = vunpack.c.h.b16 %v4340
    %v5871 = vunpack.c.l.b16 %v4341
    %v5872 = vunpack.c.h.b16 %v4341
    %v5873 = vunpack.c.l.b16 %v4342
    %v5874 = vunpack.c.h.b16 %v4342
    %v5875 = vunpack.c.l.b16 %v4343
    %v5876 = vunpack.c.h.b16 %v4343
    %v5877 = vunpack.c.l.b16 %v4344
    %v5878 = vunpack.c.h.b16 %v4344
    %v5879 = vunpack.c.l.b16 %v4345
    %v5880 = vunpack.c.h.b16 %v4345
    %v5881 = vunpack.c.l.b16 %v4346
    %v5882 = vunpack.c.h.b16 %v4346
    %v5883 = vpack.c.b16 %v4863, %v4859
    %v5884 = vpack.c.b16 %v4864, %v4860
    %v5885 = vpack.c.b16 %v4865, %v4861
    %v5886 = vpack.c.b16 %v4866, %v4862
    %v5887 = vpack.c.b16 %v4871, %v4867
    %v5888 = vpack.c.b16 %v4872, %v4868
    %v5889 = vpack.c.b16 %v4873, %v4869
    %v5890 = vpack.c.b16 %v4874, %v4870
    %v5891 = vpack.c.b16 %v4879, %v4875
    %v5892 = vpack.c.b16 %v4880, %v4876
    %v5893 = vpack.c.b16 %v4881, %v4877
    %v5894 = vpack.c.b16 %v4882, %v4878
    %v5895 = vpack.c.b16 %v4887, %v4883
    %v5896 = vpack.c.b16 %v4888, %v4884
    %v5897 = vpack.c.b16 %v4889, %v4885
    %v5898 = vpack.c.b16 %v4890, %v4886
    %v5899 = vpack.c.b16 %v4895, %v4891
    %v5900 = vpack.c.b16 %v4896, %v4892
    %v5901 = vpack.c.b16 %v4897, %v4893
    %v5902 = vpack.c.b16 %v4898, %v4894
    %v5903 = vpack.c.b16 %v4903, %v4899
    %v5904 = vpack.c.b16 %v4904, %v4900
    %v5905 = vpack.c.b16 %v4905, %v4901
    %v5906 = vpack.c.b16 %v4906, %v4902
    %v5907 = vpack.c.b16 %v4911, %v4907
    %v5908 = vpack.c.b16 %v4912, %v4908
    %v5909 = vpack.c.b16 %v4913, %v4909
    %v5910 = vpack.c.b16 %v4914, %v4910
    %v5911 = vpack.c.b16 %v4919, %v4915
    %v5912 = vpack.c.b16 %v4920, %v4916
    %v5913 = vpack.c.b16 %v4921, %v4917
    %v5914 = vpack.c.b16 %v4922, %v4918
    %v5915 = vpack.c.b16 %v4927, %v4923
    %v5916 = vpack.c.b16 %v4928, %v4924
    %v5917 = vpack.c.b16 %v4929, %v4925
    %v5918 = vpack.c.b16 %v4930, %v4926
    %v5919 = vpack.c.b16 %v4935, %v4931
    %v5920 = vpack.c.b16 %v4936, %v4932
    %v5921 = vpack.c.b16 %v4937, %v4933
    %v5922 = vpack.c.b16 %v4938, %v4934
    %v5923 = vpack.c.b16 %v4943, %v4939
    %v5924 = vpack.c.b16 %v4944, %v4940
    %v5925 = vpack.c.b16 %v4945, %v4941
    %v5926 = vpack.c.b16 %v4946, %v4942
    %v5927 = vpack.c.b16 %v4951, %v4947
    %v5928 = vpack.c.b16 %v4952, %v4948
    %v5929 = vpack.c.b16 %v4953, %v4949
    %v5930 = vpack.c.b16 %v4954, %v4950
    %v5931 = vpack.c.b16 %v4959, %v4955
    %v5932 = vpack.c.b16 %v4960, %v4956
    %v5933 = vpack.c.b16 %v4961, %v4957
    %v5934 = vpack.c.b16 %v4962, %v4958
    %v5935 = vpack.c.b16 %v4967, %v4963
    %v5936 = vpack.c.b16 %v4968, %v4964
    %v5937 = vpack.c.b16 %v4969, %v4965
    %v5938 = vpack.c.b16 %v4970, %v4966
    %v5939 = vpack.c.b16 %v4975, %v4971
    %v5940 = vpack.c.b16 %v4976, %v4972
    %v5941 = vpack.c.b16 %v4977, %v4973
    %v5942 = vpack.c.b16 %v4978, %v4974
    %v5943 = vpack.c.b16 %v4983, %v4979
    %v5944 = vpack.c.b16 %v4984, %v4980
    %v5945 = vpack.c.b16 %v4985, %v4981
    %v5946 = vpack.c.b16 %v4986, %v4982
    %v5947 = vpack.c.b16 %v4991, %v4987
    %v5948 = vpack.c.b16 %v4992, %v4988
    %v5949 = vpack.c.b16 %v4993, %v4989
    %v5950 = vpack.c.b16 %v4994, %v4990
    %v5951 = vpack.c.b16 %v4999, %v4995
    %v5952 = vpack.c.b16 %v5000, %v4996
    %v5953 = vpack.c.b16 %v5001, %v4997
    %v5954 = vpack.c.b16 %v5002, %v4998
    %v5955 = vpack.c.b16 %v5007, %v5003
    %v5956 = vpack.c.b16 %v5008, %v5004
    %v5957 = vpack.c.b16 %v5009, %v5005
    %v5958 = vpack.c.b16 %v5010, %v5006
    %v5959 = vpack.c.b16 %v5015, %v5011
    %v5960 = vpack.c.b16 %v5016, %v5012
    %v5961 = vpack.c.b16 %v5017, %v5013
    %v5962 = vpack.c.b16 %v5018, %v5014
    %v5963 = vpack.c.b16 %v5023, %v5019
    %v5964 = vpack.c.b16 %v5024, %v5020
    %v5965 = vpack.c.b16 %v5025, %v5021
    %v5966 = vpack.c.b16 %v5026, %v5022
    %v5967 = vpack.c.b16 %v5031, %v5027
    %v5968 = vpack.c.b16 %v5032, %v5028
    %v5969 = vpack.c.b16 %v5033, %v5029
    %v5970 = vpack.c.b16 %v5034, %v5030
    %v5971 = vpack.c.b16 %v5039, %v5035
    %v5972 = vpack.c.b16 %v5040, %v5036
    %v5973 = vpack.c.b16 %v5041, %v5037
    %v5974 = vpack.c.b16 %v5042, %v5038
    %v5975 = vpack.c.b16 %v5047, %v5043
    %v5976 = vpack.c.b16 %v5048, %v5044
    %v5977 = vpack.c.b16 %v5049, %v5045
    %v5978 = vpack.c.b16 %v5050, %v5046
    %v5979 = vpack.c.b16 %v5055, %v5051
    %v5980 = vpack.c.b16 %v5056, %v5052
    %v5981 = vpack.c.b16 %v5057, %v5053
    %v5982 = vpack.c.b16 %v5058, %v5054
    %v5983 = vpack.c.b16 %v5063, %v5059
    %v5984 = vpack.c.b16 %v5064, %v5060
    %v5985 = vpack.c.b16 %v5065, %v5061
    %v5986 = vpack.c.b16 %v5066, %v5062
    %v5987 = vpack.c.b16 %v5071, %v5067
    %v5988 = vpack.c.b16 %v5072, %v5068
    %v5989 = vpack.c.b16 %v5073, %v5069
    %v5990 = vpack.c.b16 %v5074, %v5070
    %v5991 = vpack.c.b16 %v5079, %v5075
    %v5992 = vpack.c.b16 %v5080, %v5076
    %v5993 = vpack.c.b16 %v5081, %v5077
    %v5994 = vpack.c.b16 %v5082, %v5078
    %v5995 = vpack.c.b16 %v5087, %v5083
    %v5996 = vpack.c.b16 %v5088, %v5084
    %v5997 = vpack.c.b16 %v5089, %v5085
    %v5998 = vpack.c.b16 %v5090, %v5086
    %v5999 = vpack.c.b16 %v5095, %v5091
    %v6000 = vpack.c.b16 %v5096, %v5092
    %v6001 = vpack.c.b16 %v5097, %v5093
    %v6002 = vpack.c.b16 %v5098, %v5094
    %v6003 = vpack.c.b16 %v5103, %v5099
    %v6004 = vpack.c.b16 %v5104, %v5100
    %v6005 = vpack.c.b16 %v5105, %v5101
    %v6006 = vpack.c.b16 %v5106, %v5102
    %v6007 = vpack.c.b16 %v5111, %v5107
    %v6008 = vpack.c.b16 %v5112, %v5108
    %v6009 = vpack.c.b16 %v5113, %v5109
    %v6010 = vpack.c.b16 %v5114, %v5110
    %v6011 = vpack.c.b16 %v5119, %v5115
    %v6012 = vpack.c.b16 %v5120, %v5116
    %v6013 = vpack.c.b16 %v5121, %v5117
    %v6014 = vpack.c.b16 %v5122, %v5118
    %v6015 = vpack.c.b16 %v5127, %v5123
    %v6016 = vpack.c.b16 %v5128, %v5124
    %v6017 = vpack.c.b16 %v5129, %v5125
    %v6018 = vpack.c.b16 %v5130, %v5126
    %v6019 = vpack.c.b16 %v5135, %v5131
    %v6020 = vpack.c.b16 %v5136, %v5132
    %v6021 = vpack.c.b16 %v5137, %v5133
    %v6022 = vpack.c.b16 %v5138, %v5134
    %v6023 = vpack.c.b16 %v5143, %v5139
    %v6024 = vpack.c.b16 %v5144, %v5140
    %v6025 = vpack.c.b16 %v5145, %v5141
    %v6026 = vpack.c.b16 %v5146, %v5142
    %v6027 = vpack.c.b16 %v5151, %v5147
    %v6028 = vpack.c.b16 %v5152, %v5148
    %v6029 = vpack.c.b16 %v5153, %v5149
    %v6030 = vpack.c.b16 %v5154, %v5150
    %v6031 = vpack.c.b16 %v5159, %v5155
    %v6032 = vpack.c.b16 %v5160, %v5156
    %v6033 = vpack.c.b16 %v5161, %v5157
    %v6034 = vpack.c.b16 %v5162, %v5158
    %v6035 = vpack.c.b16 %v5167, %v5163
    %v6036 = vpack.c.b16 %v5168, %v5164
    %v6037 = vpack.c.b16 %v5169, %v5165
    %v6038 = vpack.c.b16 %v5170, %v5166
    %v6039 = vpack.c.b16 %v5175, %v5171
    %v6040 = vpack.c.b16 %v5176, %v5172
    %v6041 = vpack.c.b16 %v5177, %v5173
    %v6042 = vpack.c.b16 %v5178, %v5174
    %v6043 = vpack.c.b16 %v5183, %v5179
    %v6044 = vpack.c.b16 %v5184, %v5180
    %v6045 = vpack.c.b16 %v5185, %v5181
    %v6046 = vpack.c.b16 %v5186, %v5182
    %v6047 = vpack.c.b16 %v5191, %v5187
    %v6048 = vpack.c.b16 %v5192, %v5188
    %v6049 = vpack.c.b16 %v5193, %v5189
    %v6050 = vpack.c.b16 %v5194, %v5190
    %v6051 = vpack.c.b16 %v5199, %v5195
    %v6052 = vpack.c.b16 %v5200, %v5196
    %v6053 = vpack.c.b16 %v5201, %v5197
    %v6054 = vpack.c.b16 %v5202, %v5198
    %v6055 = vpack.c.b16 %v5207, %v5203
    %v6056 = vpack.c.b16 %v5208, %v5204
    %v6057 = vpack.c.b16 %v5209, %v5205
    %v6058 = vpack.c.b16 %v5210, %v5206
    %v6059 = vpack.c.b16 %v5215, %v5211
    %v6060 = vpack.c.b16 %v5216, %v5212
    %v6061 = vpack.c.b16 %v5217, %v5213
    %v6062 = vpack.c.b16 %v5218, %v5214
    %v6063 = vpack.c.b16 %v5223, %v5219
    %v6064 = vpack.c.b16 %v5224, %v5220
    %v6065 = vpack.c.b16 %v5225, %v5221
    %v6066 = vpack.c.b16 %v5226, %v5222
    %v6067 = vpack.c.b16 %v5231, %v5227
    %v6068 = vpack.c.b16 %v5232, %v5228
    %v6069 = vpack.c.b16 %v5233, %v5229
    %v6070 = vpack.c.b16 %v5234, %v5230
    %v6071 = vpack.c.b16 %v5239, %v5235
    %v6072 = vpack.c.b16 %v5240, %v5236
    %v6073 = vpack.c.b16 %v5241, %v5237
    %v6074 = vpack.c.b16 %v5242, %v5238
    %v6075 = vpack.c.b16 %v5247, %v5243
    %v6076 = vpack.c.b16 %v5248, %v5244
    %v6077 = vpack.c.b16 %v5249, %v5245
    %v6078 = vpack.c.b16 %v5250, %v5246
    %v6079 = vpack.c.b16 %v5255, %v5251
    %v6080 = vpack.c.b16 %v5256, %v5252
    %v6081 = vpack.c.b16 %v5257, %v5253
    %v6082 = vpack.c.b16 %v5258, %v5254
    %v6083 = vpack.c.b16 %v5263, %v5259
    %v6084 = vpack.c.b16 %v5264, %v5260
    %v6085 = vpack.c.b16 %v5265, %v5261
    %v6086 = vpack.c.b16 %v5266, %v5262
    %v6087 = vpack.c.b16 %v5271, %v5267
    %v6088 = vpack.c.b16 %v5272, %v5268
    %v6089 = vpack.c.b16 %v5273, %v5269
    %v6090 = vpack.c.b16 %v5274, %v5270
    %v6091 = vpack.c.b16 %v5279, %v5275
    %v6092 = vpack.c.b16 %v5280, %v5276
    %v6093 = vpack.c.b16 %v5281, %v5277
    %v6094 = vpack.c.b16 %v5282, %v5278
    %v6095 = vpack.c.b16 %v5287, %v5283
    %v6096 = vpack.c.b16 %v5288, %v5284
    %v6097 = vpack.c.b16 %v5289, %v5285
    %v6098 = vpack.c.b16 %v5290, %v5286
    %v6099 = vpack.c.b16 %v5295, %v5291
    %v6100 = vpack.c.b16 %v5296, %v5292
    %v6101 = vpack.c.b16 %v5297, %v5293
    %v6102 = vpack.c.b16 %v5298, %v5294
    %v6103 = vpack.c.b16 %v5303, %v5299
    %v6104 = vpack.c.b16 %v5304, %v5300
    %v6105 = vpack.c.b16 %v5305, %v5301
    %v6106 = vpack.c.b16 %v5306, %v5302
    %v6107 = vpack.c.b16 %v5311, %v5307
    %v6108 = vpack.c.b16 %v5312, %v5308
    %v6109 = vpack.c.b16 %v5313, %v5309
    %v6110 = vpack.c.b16 %v5314, %v5310
    %v6111 = vpack.c.b16 %v5319, %v5315
    %v6112 = vpack.c.b16 %v5320, %v5316
    %v6113 = vpack.c.b16 %v5321, %v5317
    %v6114 = vpack.c.b16 %v5322, %v5318
    %v6115 = vpack.c.b16 %v5327, %v5323
    %v6116 = vpack.c.b16 %v5328, %v5324
    %v6117 = vpack.c.b16 %v5329, %v5325
    %v6118 = vpack.c.b16 %v5330, %v5326
    %v6119 = vpack.c.b16 %v5335, %v5331
    %v6120 = vpack.c.b16 %v5336, %v5332
    %v6121 = vpack.c.b16 %v5337, %v5333
    %v6122 = vpack.c.b16 %v5338, %v5334
    %v6123 = vpack.c.b16 %v5343, %v5339
    %v6124 = vpack.c.b16 %v5344, %v5340
    %v6125 = vpack.c.b16 %v5345, %v5341
    %v6126 = vpack.c.b16 %v5346, %v5342
    %v6127 = vpack.c.b16 %v5351, %v5347
    %v6128 = vpack.c.b16 %v5352, %v5348
    %v6129 = vpack.c.b16 %v5353, %v5349
    %v6130 = vpack.c.b16 %v5354, %v5350
    %v6131 = vpack.c.b16 %v5359, %v5355
    %v6132 = vpack.c.b16 %v5360, %v5356
    %v6133 = vpack.c.b16 %v5361, %v5357
    %v6134 = vpack.c.b16 %v5362, %v5358
    %v6135 = vpack.c.b16 %v5367, %v5363
    %v6136 = vpack.c.b16 %v5368, %v5364
    %v6137 = vpack.c.b16 %v5369, %v5365
    %v6138 = vpack.c.b16 %v5370, %v5366
    %v6139 = vpack.c.b16 %v5375, %v5371
    %v6140 = vpack.c.b16 %v5376, %v5372
    %v6141 = vpack.c.b16 %v5377, %v5373
    %v6142 = vpack.c.b16 %v5378, %v5374
    %v6143 = vpack.c.b16 %v5383, %v5379
    %v6144 = vpack.c.b16 %v5384, %v5380
    %v6145 = vpack.c.b16 %v5385, %v5381
    %v6146 = vpack.c.b16 %v5386, %v5382
    %v6147 = vpack.c.b16 %v5391, %v5387
    %v6148 = vpack.c.b16 %v5392, %v5388
    %v6149 = vpack.c.b16 %v5393, %v5389
    %v6150 = vpack.c.b16 %v5394, %v5390
    %v6151 = vpack.c.b16 %v5399, %v5395
    %v6152 = vpack.c.b16 %v5400, %v5396
    %v6153 = vpack.c.b16 %v5401, %v5397
    %v6154 = vpack.c.b16 %v5402, %v5398
    %v6155 = vpack.c.b16 %v5407, %v5403
    %v6156 = vpack.c.b16 %v5408, %v5404
    %v6157 = vpack.c.b16 %v5409, %v5405
    %v6158 = vpack.c.b16 %v5410, %v5406
    %v6159 = vpack.c.b16 %v5415, %v5411
    %v6160 = vpack.c.b16 %v5416, %v5412
    %v6161 = vpack.c.b16 %v5417, %v5413
    %v6162 = vpack.c.b16 %v5418, %v5414
    %v6163 = vpack.c.b16 %v5423, %v5419
    %v6164 = vpack.c.b16 %v5424, %v5420
    %v6165 = vpack.c.b16 %v5425, %v5421
    %v6166 = vpack.c.b16 %v5426, %v5422
    %v6167 = vpack.c.b16 %v5431, %v5427
    %v6168 = vpack.c.b16 %v5432, %v5428
    %v6169 = vpack.c.b16 %v5433, %v5429
    %v6170 = vpack.c.b16 %v5434, %v5430
    %v6171 = vpack.c.b16 %v5439, %v5435
    %v6172 = vpack.c.b16 %v5440, %v5436
    %v6173 = vpack.c.b16 %v5441, %v5437
    %v6174 = vpack.c.b16 %v5442, %v5438
    %v6175 = vpack.c.b16 %v5447, %v5443
    %v6176 = vpack.c.b16 %v5448, %v5444
    %v6177 = vpack.c.b16 %v5449, %v5445
    %v6178 = vpack.c.b16 %v5450, %v5446
    %v6179 = vpack.c.b16 %v5455, %v5451
    %v6180 = vpack.c.b16 %v5456, %v5452
    %v6181 = vpack.c.b16 %v5457, %v5453
    %v6182 = vpack.c.b16 %v5458, %v5454
    %v6183 = vpack.c.b16 %v5463, %v5459
    %v6184 = vpack.c.b16 %v5464, %v5460
    %v6185 = vpack.c.b16 %v5465, %v5461
    %v6186 = vpack.c.b16 %v5466, %v5462
    %v6187 = vpack.c.b16 %v5471, %v5467
    %v6188 = vpack.c.b16 %v5472, %v5468
    %v6189 = vpack.c.b16 %v5473, %v5469
    %v6190 = vpack.c.b16 %v5474, %v5470
    %v6191 = vpack.c.b16 %v5479, %v5475
    %v6192 = vpack.c.b16 %v5480, %v5476
    %v6193 = vpack.c.b16 %v5481, %v5477
    %v6194 = vpack.c.b16 %v5482, %v5478
    %v6195 = vpack.c.b16 %v5487, %v5483
    %v6196 = vpack.c.b16 %v5488, %v5484
    %v6197 = vpack.c.b16 %v5489, %v5485
    %v6198 = vpack.c.b16 %v5490, %v5486
    %v6199 = vpack.c.b16 %v5495, %v5491
    %v6200 = vpack.c.b16 %v5496, %v5492
    %v6201 = vpack.c.b16 %v5497, %v5493
    %v6202 = vpack.c.b16 %v5498, %v5494
    %v6203 = vpack.c.b16 %v5503, %v5499
    %v6204 = vpack.c.b16 %v5504, %v5500
    %v6205 = vpack.c.b16 %v5505, %v5501
    %v6206 = vpack.c.b16 %v5506, %v5502
    %v6207 = vpack.c.b16 %v5511, %v5507
    %v6208 = vpack.c.b16 %v5512, %v5508
    %v6209 = vpack.c.b16 %v5513, %v5509
    %v6210 = vpack.c.b16 %v5514, %v5510
    %v6211 = vpack.c.b16 %v5519, %v5515
    %v6212 = vpack.c.b16 %v5520, %v5516
    %v6213 = vpack.c.b16 %v5521, %v5517
    %v6214 = vpack.c.b16 %v5522, %v5518
    %v6215 = vpack.c.b16 %v5527, %v5523
    %v6216 = vpack.c.b16 %v5528, %v5524
    %v6217 = vpack.c.b16 %v5529, %v5525
    %v6218 = vpack.c.b16 %v5530, %v5526
    %v6219 = vpack.c.b16 %v5535, %v5531
    %v6220 = vpack.c.b16 %v5536, %v5532
    %v6221 = vpack.c.b16 %v5537, %v5533
    %v6222 = vpack.c.b16 %v5538, %v5534
    %v6223 = vpack.c.b16 %v5543, %v5539
    %v6224 = vpack.c.b16 %v5544, %v5540
    %v6225 = vpack.c.b16 %v5545, %v5541
    %v6226 = vpack.c.b16 %v5546, %v5542
    %v6227 = vpack.c.b16 %v5551, %v5547
    %v6228 = vpack.c.b16 %v5552, %v5548
    %v6229 = vpack.c.b16 %v5553, %v5549
    %v6230 = vpack.c.b16 %v5554, %v5550
    %v6231 = vpack.c.b16 %v5559, %v5555
    %v6232 = vpack.c.b16 %v5560, %v5556
    %v6233 = vpack.c.b16 %v5561, %v5557
    %v6234 = vpack.c.b16 %v5562, %v5558
    %v6235 = vpack.c.b16 %v5567, %v5563
    %v6236 = vpack.c.b16 %v5568, %v5564
    %v6237 = vpack.c.b16 %v5569, %v5565
    %v6238 = vpack.c.b16 %v5570, %v5566
    %v6239 = vpack.c.b16 %v5575, %v5571
    %v6240 = vpack.c.b16 %v5576, %v5572
    %v6241 = vpack.c.b16 %v5577, %v5573
    %v6242 = vpack.c.b16 %v5578, %v5574
    %v6243 = vpack.c.b16 %v5583, %v5579
    %v6244 = vpack.c.b16 %v5584, %v5580
    %v6245 = vpack.c.b16 %v5585, %v5581
    %v6246 = vpack.c.b16 %v5586, %v5582
    %v6247 = vpack.c.b16 %v5591, %v5587
    %v6248 = vpack.c.b16 %v5592, %v5588
    %v6249 = vpack.c.b16 %v5593, %v5589
    %v6250 = vpack.c.b16 %v5594, %v5590
    %v6251 = vpack.c.b16 %v5599, %v5595
    %v6252 = vpack.c.b16 %v5600, %v5596
    %v6253 = vpack.c.b16 %v5601, %v5597
    %v6254 = vpack.c.b16 %v5602, %v5598
    %v6255 = vpack.c.b16 %v5607, %v5603
    %v6256 = vpack.c.b16 %v5608, %v5604
    %v6257 = vpack.c.b16 %v5609, %v5605
    %v6258 = vpack.c.b16 %v5610, %v5606
    %v6259 = vpack.c.b16 %v5615, %v5611
    %v6260 = vpack.c.b16 %v5616, %v5612
    %v6261 = vpack.c.b16 %v5617, %v5613
    %v6262 = vpack.c.b16 %v5618, %v5614
    %v6263 = vpack.c.b16 %v5623, %v5619
    %v6264 = vpack.c.b16 %v5624, %v5620
    %v6265 = vpack.c.b16 %v5625, %v5621
    %v6266 = vpack.c.b16 %v5626, %v5622
    %v6267 = vpack.c.b16 %v5631, %v5627
    %v6268 = vpack.c.b16 %v5632, %v5628
    %v6269 = vpack.c.b16 %v5633, %v5629
    %v6270 = vpack.c.b16 %v5634, %v5630
    %v6271 = vpack.c.b16 %v5639, %v5635
    %v6272 = vpack.c.b16 %v5640, %v5636
    %v6273 = vpack.c.b16 %v5641, %v5637
    %v6274 = vpack.c.b16 %v5642, %v5638
    %v6275 = vpack.c.b16 %v5647, %v5643
    %v6276 = vpack.c.b16 %v5648, %v5644
    %v6277 = vpack.c.b16 %v5649, %v5645
    %v6278 = vpack.c.b16 %v5650, %v5646
    %v6279 = vpack.c.b16 %v5655, %v5651
    %v6280 = vpack.c.b16 %v5656, %v5652
    %v6281 = vpack.c.b16 %v5657, %v5653
    %v6282 = vpack.c.b16 %v5658, %v5654
    %v6283 = vpack.c.b16 %v5663, %v5659
    %v6284 = vpack.c.b16 %v5664, %v5660
    %v6285 = vpack.c.b16 %v5665, %v5661
    %v6286 = vpack.c.b16 %v5666, %v5662
    %v6287 = vpack.c.b16 %v5671, %v5667
    %v6288 = vpack.c.b16 %v5672, %v5668
    %v6289 = vpack.c.b16 %v5673, %v5669
    %v6290 = vpack.c.b16 %v5674, %v5670
    %v6291 = vpack.c.b16 %v5679, %v5675
    %v6292 = vpack.c.b16 %v5680, %v5676
    %v6293 = vpack.c.b16 %v5681, %v5677
    %v6294 = vpack.c.b16 %v5682, %v5678
    %v6295 = vpack.c.b16 %v5687, %v5683
    %v6296 = vpack.c.b16 %v5688, %v5684
    %v6297 = vpack.c.b16 %v5689, %v5685
    %v6298 = vpack.c.b16 %v5690, %v5686
    %v6299 = vpack.c.b16 %v5695, %v5691
    %v6300 = vpack.c.b16 %v5696, %v5692
    %v6301 = vpack.c.b16 %v5697, %v5693
    %v6302 = vpack.c.b16 %v5698, %v5694
    %v6303 = vpack.c.b16 %v5703, %v5699
    %v6304 = vpack.c.b16 %v5704, %v5700
    %v6305 = vpack.c.b16 %v5705, %v5701
    %v6306 = vpack.c.b16 %v5706, %v5702
    %v6307 = vpack.c.b16 %v5711, %v5707
    %v6308 = vpack.c.b16 %v5712, %v5708
    %v6309 = vpack.c.b16 %v5713, %v5709
    %v6310 = vpack.c.b16 %v5714, %v5710
    %v6311 = vpack.c.b16 %v5719, %v5715
    %v6312 = vpack.c.b16 %v5720, %v5716
    %v6313 = vpack.c.b16 %v5721, %v5717
    %v6314 = vpack.c.b16 %v5722, %v5718
    %v6315 = vpack.c.b16 %v5727, %v5723
    %v6316 = vpack.c.b16 %v5728, %v5724
    %v6317 = vpack.c.b16 %v5729, %v5725
    %v6318 = vpack.c.b16 %v5730, %v5726
    %v6319 = vpack.c.b16 %v5735, %v5731
    %v6320 = vpack.c.b16 %v5736, %v5732
    %v6321 = vpack.c.b16 %v5737, %v5733
    %v6322 = vpack.c.b16 %v5738, %v5734
    %v6323 = vpack.c.b16 %v5743, %v5739
    %v6324 = vpack.c.b16 %v5744, %v5740
    %v6325 = vpack.c.b16 %v5745, %v5741
    %v6326 = vpack.c.b16 %v5746, %v5742
    %v6327 = vpack.c.b16 %v5751, %v5747
    %v6328 = vpack.c.b16 %v5752, %v5748
    %v6329 = vpack.c.b16 %v5753, %v5749
    %v6330 = vpack.c.b16 %v5754, %v5750
    %v6331 = vpack.c.b16 %v5759, %v5755
    %v6332 = vpack.c.b16 %v5760, %v5756
    %v6333 = vpack.c.b16 %v5761, %v5757
    %v6334 = vpack.c.b16 %v5762, %v5758
    %v6335 = vpack.c.b16 %v5767, %v5763
    %v6336 = vpack.c.b16 %v5768, %v5764
    %v6337 = vpack.c.b16 %v5769, %v5765
    %v6338 = vpack.c.b16 %v5770, %v5766
    %v6339 = vpack.c.b16 %v5775, %v5771
    %v6340 = vpack.c.b16 %v5776, %v5772
    %v6341 = vpack.c.b16 %v5777, %v5773
    %v6342 = vpack.c.b16 %v5778, %v5774
    %v6343 = vpack.c.b16 %v5783, %v5779
    %v6344 = vpack.c.b16 %v5784, %v5780
    %v6345 = vpack.c.b16 %v5785, %v5781
    %v6346 = vpack.c.b16 %v5786, %v5782
    %v6347 = vpack.c.b16 %v5791, %v5787
    %v6348 = vpack.c.b16 %v5792, %v5788
    %v6349 = vpack.c.b16 %v5793, %v5789
    %v6350 = vpack.c.b16 %v5794, %v5790
    %v6351 = vpack.c.b16 %v5799, %v5795
    %v6352 = vpack.c.b16 %v5800, %v5796
    %v6353 = vpack.c.b16 %v5801, %v5797
    %v6354 = vpack.c.b16 %v5802, %v5798
    %v6355 = vpack.c.b16 %v5807, %v5803
    %v6356 = vpack.c.b16 %v5808, %v5804
    %v6357 = vpack.c.b16 %v5809, %v5805
    %v6358 = vpack.c.b16 %v5810, %v5806
    %v6359 = vpack.c.b16 %v5815, %v5811
    %v6360 = vpack.c.b16 %v5816, %v5812
    %v6361 = vpack.c.b16 %v5817, %v5813
    %v6362 = vpack.c.b16 %v5818, %v5814
    %v6363 = vpack.c.b16 %v5823, %v5819
    %v6364 = vpack.c.b16 %v5824, %v5820
    %v6365 = vpack.c.b16 %v5825, %v5821
    %v6366 = vpack.c.b16 %v5826, %v5822
    %v6367 = vpack.c.b16 %v5831, %v5827
    %v6368 = vpack.c.b16 %v5832, %v5828
    %v6369 = vpack.c.b16 %v5833, %v5829
    %v6370 = vpack.c.b16 %v5834, %v5830
    %v6371 = vpack.c.b16 %v5839, %v5835
    %v6372 = vpack.c.b16 %v5840, %v5836
    %v6373 = vpack.c.b16 %v5841, %v5837
    %v6374 = vpack.c.b16 %v5842, %v5838
    %v6375 = vpack.c.b16 %v5847, %v5843
    %v6376 = vpack.c.b16 %v5848, %v5844
    %v6377 = vpack.c.b16 %v5849, %v5845
    %v6378 = vpack.c.b16 %v5850, %v5846
    %v6379 = vpack.c.b16 %v5855, %v5851
    %v6380 = vpack.c.b16 %v5856, %v5852
    %v6381 = vpack.c.b16 %v5857, %v5853
    %v6382 = vpack.c.b16 %v5858, %v5854
    %v6383 = vpack.c.b16 %v5863, %v5859
    %v6384 = vpack.c.b16 %v5864, %v5860
    %v6385 = vpack.c.b16 %v5865, %v5861
    %v6386 = vpack.c.b16 %v5866, %v5862
    %v6387 = vpack.c.b16 %v5871, %v5867
    %v6388 = vpack.c.b16 %v5872, %v5868
    %v6389 = vpack.c.b16 %v5873, %v5869
    %v6390 = vpack.c.b16 %v5874, %v5870
    %v6391 = vpack.c.b16 %v5879, %v5875
    %v6392 = vpack.c.b16 %v5880, %v5876
    %v6393 = vpack.c.b16 %v5881, %v5877
    %v6394 = vpack.c.b16 %v5882, %v5878
    %6907 = vmatprep.subr.bf16.mxu0 %v5884
    %6908 = vmatpush1.bf16.msra.mxu0 %v5883
    %6909 = vmatprep.subr.bf16.mxu0 %v5888
    %6910 = vmatpush1.bf16.msra.mxu0 %v5887
    %6911 = vmatprep.subr.bf16.mxu0 %v5892
    %6912 = vmatpush1.bf16.msra.mxu0 %v5891
    %6913 = vmatprep.subr.bf16.mxu0 %v5896
    %6914 = vmatpush1.bf16.msra.mxu0 %v5895
    %6915 = vmatprep.subr.bf16.mxu0 %v5900
    %6916 = vmatpush1.bf16.msra.mxu0 %v5899
    %6917 = vmatprep.subr.bf16.mxu0 %v5904
    %6918 = vmatpush1.bf16.msra.mxu0 %v5903
    %6919 = vmatprep.subr.bf16.mxu0 %v5908
    %6920 = vmatpush1.bf16.msra.mxu0 %v5907
    %6921 = vmatprep.subr.bf16.mxu0 %v5912
    %6922 = vmatpush1.bf16.msra.mxu0 %v5911
    %6923 = vmatprep.subr.bf16.mxu0 %v5916
    %6924 = vmatpush1.bf16.msra.mxu0 %v5915
    %6925 = vmatprep.subr.bf16.mxu0 %v5920
    %6926 = vmatpush1.bf16.msra.mxu0 %v5919
    %6927 = vmatprep.subr.bf16.mxu0 %v5924
    %6928 = vmatpush1.bf16.msra.mxu0 %v5923
    %6929 = vmatprep.subr.bf16.mxu0 %v5928
    %6930 = vmatpush1.bf16.msra.mxu0 %v5927
    %6931 = vmatprep.subr.bf16.mxu0 %v5932
    %6932 = vmatpush1.bf16.msra.mxu0 %v5931
    %6933 = vmatprep.subr.bf16.mxu0 %v5936
    %6934 = vmatpush1.bf16.msra.mxu0 %v5935
    %6935 = vmatprep.subr.bf16.mxu0 %v5940
    %6936 = vmatpush1.bf16.msra.mxu0 %v5939
    %6937 = vmatprep.subr.bf16.mxu0 %v5944
    %6938 = vmatpush1.bf16.msra.mxu0 %v5943
    %6939 = vmatprep.mubr.bf16.mxu0 %v3820
    %6940 = vmatmul.mubr.bf16.gmra.mrb[0].mxu0 %v3819
    %v6941 = vpop.f32.mrb[0].mxu0
    %v6942 = vadd.f32 %v15, %v6941
    %v6943 = vpop.f32.mrb[0].mxu0
    %v6944 = vadd.f32 %v16, %v6943
    %v6945 = vpop.f32.mrb[0].mxu0
    %v6946 = vadd.f32 %v19, %v6945
    %v6947 = vpop.f32.mrb[0].mxu0
    %v6948 = vadd.f32 %v20, %v6947
    %6949 = vdwg.mxu0
    %6950 = vmatprep.subr.bf16.mxu0 %v5948
    %6951 = vmatpush1.bf16.msra.mxu0 %v5947
    %6952 = vmatprep.subr.bf16.mxu0 %v5952
    %6953 = vmatpush1.bf16.msra.mxu0 %v5951
    %6954 = vmatprep.subr.bf16.mxu0 %v5956
    %6955 = vmatpush1.bf16.msra.mxu0 %v5955
    %6956 = vmatprep.subr.bf16.mxu0 %v5960
    %6957 = vmatpush1.bf16.msra.mxu0 %v5959
    %6958 = vmatprep.subr.bf16.mxu0 %v5964
    %6959 = vmatpush1.bf16.msra.mxu0 %v5963
    %6960 = vmatprep.subr.bf16.mxu0 %v5968
    %6961 = vmatpush1.bf16.msra.mxu0 %v5967
    %6962 = vmatprep.subr.bf16.mxu0 %v5972
    %6963 = vmatpush1.bf16.msra.mxu0 %v5971
    %6964 = vmatprep.subr.bf16.mxu0 %v5976
    %6965 = vmatpush1.bf16.msra.mxu0 %v5975
    %6966 = vmatprep.subr.bf16.mxu0 %v5980
    %6967 = vmatpush1.bf16.msra.mxu0 %v5979
    %6968 = vmatprep.subr.bf16.mxu0 %v5984
    %6969 = vmatpush1.bf16.msra.mxu0 %v5983
    %6970 = vmatprep.subr.bf16.mxu0 %v5988
    %6971 = vmatpush1.bf16.msra.mxu0 %v5987
    %6972 = vmatprep.subr.bf16.mxu0 %v5992
    %6973 = vmatpush1.bf16.msra.mxu0 %v5991
    %6974 = vmatprep.subr.bf16.mxu0 %v5996
    %6975 = vmatpush1.bf16.msra.mxu0 %v5995
    %6976 = vmatprep.subr.bf16.mxu0 %v6000
    %6977 = vmatpush1.bf16.msra.mxu0 %v5999
    %6978 = vmatprep.subr.bf16.mxu0 %v6004
    %6979 = vmatpush1.bf16.msra.mxu0 %v6003
    %6980 = vmatprep.subr.bf16.mxu0 %v6008
    %6981 = vmatpush1.bf16.msra.mxu0 %v6007
    %6982 = vmatprep.mubr.bf16.mxu0 %v3822
    %6983 = vmatmul.mubr.bf16.gmra.mrb[0].mxu0 %v3821
    %v6984 = vpop.f32.mrb[0].mxu0
    %v6985 = vadd.f32 %v6942, %v6984
    %v6986 = vpop.f32.mrb[0].mxu0
    %v6987 = vadd.f32 %v6944, %v6986
    %v6988 = vpop.f32.mrb[0].mxu0
    %v6989 = vadd.f32 %v6946, %v6988
    %v6990 = vpop.f32.mrb[0].mxu0
    %v6991 = vadd.f32 %v6948, %v6990
    %6992 = vdwg.mxu0
    %6993 = vmatprep.subr.bf16.mxu0 %v6012
    %6994 = vmatpush1.bf16.msra.mxu0 %v6011
    %6995 = vmatprep.subr.bf16.mxu0 %v6016
    %6996 = vmatpush1.bf16.msra.mxu0 %v6015
    %6997 = vmatprep.subr.bf16.mxu0 %v6020
    %6998 = vmatpush1.bf16.msra.mxu0 %v6019
    %6999 = vmatprep.subr.bf16.mxu0 %v6024
    %7000 = vmatpush1.bf16.msra.mxu0 %v6023
    %7001 = vmatprep.subr.bf16.mxu0 %v6028
    %7002 = vmatpush1.bf16.msra.mxu0 %v6027
    %7003 = vmatprep.subr.bf16.mxu0 %v6032
    %7004 = vmatpush1.bf16.msra.mxu0 %v6031
    %7005 = vmatprep.subr.bf16.mxu0 %v6036
    %7006 = vmatpush1.bf16.msra.mxu0 %v6035
    %7007 = vmatprep.subr.bf16.mxu0 %v6040
    %7008 = vmatpush1.bf16.msra.mxu0 %v6039
    %7009 = vmatprep.subr.bf16.mxu0 %v6044
    %7010 = vmatpush1.bf16.msra.mxu0 %v6043
    %7011 = vmatprep.subr.bf16.mxu0 %v6048
    %7012 = vmatpush1.bf16.msra.mxu0 %v6047
    %7013 = vmatprep.subr.bf16.mxu0 %v6052
    %7014 = vmatpush1.bf16.msra.mxu0 %v6051
    %7015 = vmatprep.subr.bf16.mxu0 %v6056
    %7016 = vmatpush1.bf16.msra.mxu0 %v6055
    %7017 = vmatprep.subr.bf16.mxu0 %v6060
    %7018 = vmatpush1.bf16.msra.mxu0 %v6059
    %7019 = vmatprep.subr.bf16.mxu0 %v6064
    %7020 = vmatpush1.bf16.msra.mxu0 %v6063
    %7021 = vmatprep.subr.bf16.mxu0 %v6068
    %7022 = vmatpush1.bf16.msra.mxu0 %v6067
    %7023 = vmatprep.subr.bf16.mxu0 %v6072
    %7024 = vmatpush1.bf16.msra.mxu0 %v6071
    %7025 = vmatprep.mubr.bf16.mxu0 %v3824
    %7026 = vmatmul.mubr.bf16.gmra.mrb[0].mxu0 %v3823
    %v7027 = vpop.f32.mrb[0].mxu0
    %v7028 = vadd.f32 %v6985, %v7027
    %v7029 = vpop.f32.mrb[0].mxu0
    %v7030 = vadd.f32 %v6987, %v7029
    %v7031 = vpop.f32.mrb[0].mxu0
    %v7032 = vadd.f32 %v6989, %v7031
    %v7033 = vpop.f32.mrb[0].mxu0
    %v7034 = vadd.f32 %v6991, %v7033
    %7035 = vdwg.mxu0
    %7036 = vmatprep.subr.bf16.mxu0 %v6076
    %7037 = vmatpush1.bf16.msra.mxu0 %v6075
    %7038 = vmatprep.subr.bf16.mxu0 %v6080
    %7039 = vmatpush1.bf16.msra.mxu0 %v6079
    %7040 = vmatprep.subr.bf16.mxu0 %v6084
    %7041 = vmatpush1.bf16.msra.mxu0 %v6083
    %7042 = vmatprep.subr.bf16.mxu0 %v6088
    %7043 = vmatpush1.bf16.msra.mxu0 %v6087
    %7044 = vmatprep.subr.bf16.mxu0 %v6092
    %7045 = vmatpush1.bf16.msra.mxu0 %v6091
    %7046 = vmatprep.subr.bf16.mxu0 %v6096
    %7047 = vmatpush1.bf16.msra.mxu0 %v6095
    %7048 = vmatprep.subr.bf16.mxu0 %v6100
    %7049 = vmatpush1.bf16.msra.mxu0 %v6099
    %7050 = vmatprep.subr.bf16.mxu0 %v6104
    %7051 = vmatpush1.bf16.msra.mxu0 %v6103
    %7052 = vmatprep.subr.bf16.mxu0 %v6108
    %7053 = vmatpush1.bf16.msra.mxu0 %v6107
    %7054 = vmatprep.subr.bf16.mxu0 %v6112
    %7055 = vmatpush1.bf16.msra.mxu0 %v6111
    %7056 = vmatprep.subr.bf16.mxu0 %v6116
    %7057 = vmatpush1.bf16.msra.mxu0 %v6115
    %7058 = vmatprep.subr.bf16.mxu0 %v6120
    %7059 = vmatpush1.bf16.msra.mxu0 %v6119
    %7060 = vmatprep.subr.bf16.mxu0 %v6124
    %7061 = vmatpush1.bf16.msra.mxu0 %v6123
    %7062 = vmatprep.subr.bf16.mxu0 %v6128
    %7063 = vmatpush1.bf16.msra.mxu0 %v6127
    %7064 = vmatprep.subr.bf16.mxu0 %v6132
    %7065 = vmatpush1.bf16.msra.mxu0 %v6131
    %7066 = vmatprep.subr.bf16.mxu0 %v6136
    %7067 = vmatpush1.bf16.msra.mxu0 %v6135
    %7068 = vmatprep.mubr.bf16.mxu0 %v3826
    %7069 = vmatmul.mubr.bf16.gmra.mrb[0].mxu0 %v3825
    %v7070 = vpop.f32.mrb[0].mxu0
    %v7071 = vadd.f32 %v7028, %v7070
    %v7072 = vpop.f32.mrb[0].mxu0
    %v7073 = vadd.f32 %v7030, %v7072
    %v7074 = vpop.f32.mrb[0].mxu0
    %v7075 = vadd.f32 %v7032, %v7074
    %v7076 = vpop.f32.mrb[0].mxu0
    %v7077 = vadd.f32 %v7034, %v7076
    %7078 = vdwg.mxu0
    %7079 = vmatprep.subr.bf16.mxu0 %v6140
    %7080 = vmatpush1.bf16.msra.mxu0 %v6139
    %7081 = vmatprep.subr.bf16.mxu0 %v6144
    %7082 = vmatpush1.bf16.msra.mxu0 %v6143
    %7083 = vmatprep.subr.bf16.mxu0 %v6148
    %7084 = vmatpush1.bf16.msra.mxu0 %v6147
    %7085 = vmatprep.subr.bf16.mxu0 %v6152
    %7086 = vmatpush1.bf16.msra.mxu0 %v6151
    %7087 = vmatprep.subr.bf16.mxu0 %v6156
    %7088 = vmatpush1.bf16.msra.mxu0 %v6155
    %7089 = vmatprep.subr.bf16.mxu0 %v6160
    %7090 = vmatpush1.bf16.msra.mxu0 %v6159
    %7091 = vmatprep.subr.bf16.mxu0 %v6164
    %7092 = vmatpush1.bf16.msra.mxu0 %v6163
    %7093 = vmatprep.subr.bf16.mxu0 %v6168
    %7094 = vmatpush1.bf16.msra.mxu0 %v6167
    %7095 = vmatprep.subr.bf16.mxu0 %v6172
    %7096 = vmatpush1.bf16.msra.mxu0 %v6171
    %7097 = vmatprep.subr.bf16.mxu0 %v6176
    %7098 = vmatpush1.bf16.msra.mxu0 %v6175
    %7099 = vmatprep.subr.bf16.mxu0 %v6180
    %7100 = vmatpush1.bf16.msra.mxu0 %v6179
    %7101 = vmatprep.subr.bf16.mxu0 %v6184
    %7102 = vmatpush1.bf16.msra.mxu0 %v6183
    %7103 = vmatprep.subr.bf16.mxu0 %v6188
    %7104 = vmatpush1.bf16.msra.mxu0 %v6187
    %7105 = vmatprep.subr.bf16.mxu0 %v6192
    %7106 = vmatpush1.bf16.msra.mxu0 %v6191
    %7107 = vmatprep.subr.bf16.mxu0 %v6196
    %7108 = vmatpush1.bf16.msra.mxu0 %v6195
    %7109 = vmatprep.subr.bf16.mxu0 %v6200
    %7110 = vmatpush1.bf16.msra.mxu0 %v6199
    %7111 = vmatprep.mubr.bf16.mxu0 %v3828
    %7112 = vmatmul.mubr.bf16.gmra.mrb[0].mxu0 %v3827
    %v7113 = vpop.f32.mrb[0].mxu0
    %v7114 = vadd.f32 %v7071, %v7113
    %v7115 = vpop.f32.mrb[0].mxu0
    %v7116 = vadd.f32 %v7073, %v7115
    %v7117 = vpop.f32.mrb[0].mxu0
    %v7118 = vadd.f32 %v7075, %v7117
    %v7119 = vpop.f32.mrb[0].mxu0
    %v7120 = vadd.f32 %v7077, %v7119
    %7121 = vdwg.mxu0
    %7122 = vmatprep.subr.bf16.mxu0 %v6204
    %7123 = vmatpush1.bf16.msra.mxu0 %v6203
    %7124 = vmatprep.subr.bf16.mxu0 %v6208
    %7125 = vmatpush1.bf16.msra.mxu0 %v6207
    %7126 = vmatprep.subr.bf16.mxu0 %v6212
    %7127 = vmatpush1.bf16.msra.mxu0 %v6211
    %7128 = vmatprep.subr.bf16.mxu0 %v6216
    %7129 = vmatpush1.bf16.msra.mxu0 %v6215
    %7130 = vmatprep.subr.bf16.mxu0 %v6220
    %7131 = vmatpush1.bf16.msra.mxu0 %v6219
    %7132 = vmatprep.subr.bf16.mxu0 %v6224
    %7133 = vmatpush1.bf16.msra.mxu0 %v6223
    %7134 = vmatprep.subr.bf16.mxu0 %v6228
    %7135 = vmatpush1.bf16.msra.mxu0 %v6227
    %7136 = vmatprep.subr.bf16.mxu0 %v6232
    %7137 = vmatpush1.bf16.msra.mxu0 %v6231
    %7138 = vmatprep.subr.bf16.mxu0 %v6236
    %7139 = vmatpush1.bf16.msra.mxu0 %v6235
    %7140 = vmatprep.subr.bf16.mxu0 %v6240
    %7141 = vmatpush1.bf16.msra.mxu0 %v6239
    %7142 = vmatprep.subr.bf16.mxu0 %v6244
    %7143 = vmatpush1.bf16.msra.mxu0 %v6243
    %7144 = vmatprep.subr.bf16.mxu0 %v6248
    %7145 = vmatpush1.bf16.msra.mxu0 %v6247
    %7146 = vmatprep.subr.bf16.mxu0 %v6252
    %7147 = vmatpush1.bf16.msra.mxu0 %v6251
    %7148 = vmatprep.subr.bf16.mxu0 %v6256
    %7149 = vmatpush1.bf16.msra.mxu0 %v6255
    %7150 = vmatprep.subr.bf16.mxu0 %v6260
    %7151 = vmatpush1.bf16.msra.mxu0 %v6259
    %7152 = vmatprep.subr.bf16.mxu0 %v6264
    %7153 = vmatpush1.bf16.msra.mxu0 %v6263
    %7154 = vmatprep.mubr.bf16.mxu0 %v3830
    %7155 = vmatmul.mubr.bf16.gmra.mrb[0].mxu0 %v3829
    %v7156 = vpop.f32.mrb[0].mxu0
    %v7157 = vadd.f32 %v7114, %v7156
    %v7158 = vpop.f32.mrb[0].mxu0
    %v7159 = vadd.f32 %v7116, %v7158
    %v7160 = vpop.f32.mrb[0].mxu0
    %v7161 = vadd.f32 %v7118, %v7160
    %v7162 = vpop.f32.mrb[0].mxu0
    %v7163 = vadd.f32 %v7120, %v7162
    %7164 = vdwg.mxu0
    %7165 = vmatprep.subr.bf16.mxu0 %v6268
    %7166 = vmatpush1.bf16.msra.mxu0 %v6267
    %7167 = vmatprep.subr.bf16.mxu0 %v6272
    %7168 = vmatpush1.bf16.msra.mxu0 %v6271
    %7169 = vmatprep.subr.bf16.mxu0 %v6276
    %7170 = vmatpush1.bf16.msra.mxu0 %v6275
    %7171 = vmatprep.subr.bf16.mxu0 %v6280
    %7172 = vmatpush1.bf16.msra.mxu0 %v6279
    %7173 = vmatprep.subr.bf16.mxu0 %v6284
    %7174 = vmatpush1.bf16.msra.mxu0 %v6283
    %7175 = vmatprep.subr.bf16.mxu0 %v6288
    %7176 = vmatpush1.bf16.msra.mxu0 %v6287
    %7177 = vmatprep.subr.bf16.mxu0 %v6292
    %7178 = vmatpush1.bf16.msra.mxu0 %v6291
    %7179 = vmatprep.subr.bf16.mxu0 %v6296
    %7180 = vmatpush1.bf16.msra.mxu0 %v6295
    %7181 = vmatprep.subr.bf16.mxu0 %v6300
    %7182 = vmatpush1.bf16.msra.mxu0 %v6299
    %7183 = vmatprep.subr.bf16.mxu0 %v6304
    %7184 = vmatpush1.bf16.msra.mxu0 %v6303
    %7185 = vmatprep.subr.bf16.mxu0 %v6308
    %7186 = vmatpush1.bf16.msra.mxu0 %v6307
    %7187 = vmatprep.subr.bf16.mxu0 %v6312
    %7188 = vmatpush1.bf16.msra.mxu0 %v6311
    %7189 = vmatprep.subr.bf16.mxu0 %v6316
    %7190 = vmatpush1.bf16.msra.mxu0 %v6315
    %7191 = vmatprep.subr.bf16.mxu0 %v6320
    %7192 = vmatpush1.bf16.msra.mxu0 %v6319
    %7193 = vmatprep.subr.bf16.mxu0 %v6324
    %7194 = vmatpush1.bf16.msra.mxu0 %v6323
    %7195 = vmatprep.subr.bf16.mxu0 %v6328
    %7196 = vmatpush1.bf16.msra.mxu0 %v6327
    %7197 = vmatprep.mubr.bf16.mxu0 %v3832
    %7198 = vmatmul.mubr.bf16.gmra.mrb[0].mxu0 %v3831
    %v7199 = vpop.f32.mrb[0].mxu0
    %v7200 = vadd.f32 %v7157, %v7199
    %v7201 = vpop.f32.mrb[0].mxu0
    %v7202 = vadd.f32 %v7159, %v7201
    %v7203 = vpop.f32.mrb[0].mxu0
    %v7204 = vadd.f32 %v7161, %v7203
    %v7205 = vpop.f32.mrb[0].mxu0
    %v7206 = vadd.f32 %v7163, %v7205
    %7207 = vdwg.mxu0
    %7208 = vmatprep.subr.bf16.mxu0 %v6332
    %7209 = vmatpush1.bf16.msra.mxu0 %v6331
    %7210 = vmatprep.subr.bf16.mxu0 %v6336
    %7211 = vmatpush1.bf16.msra.mxu0 %v6335
    %7212 = vmatprep.subr.bf16.mxu0 %v6340
    %7213 = vmatpush1.bf16.msra.mxu0 %v6339
    %7214 = vmatprep.subr.bf16.mxu0 %v6344
    %7215 = vmatpush1.bf16.msra.mxu0 %v6343
    %7216 = vmatprep.subr.bf16.mxu0 %v6348
    %7217 = vmatpush1.bf16.msra.mxu0 %v6347
    %7218 = vmatprep.subr.bf16.mxu0 %v6352
    %7219 = vmatpush1.bf16.msra.mxu0 %v6351
    %7220 = vmatprep.subr.bf16.mxu0 %v6356
    %7221 = vmatpush1.bf16.msra.mxu0 %v6355
    %7222 = vmatprep.subr.bf16.mxu0 %v6360
    %7223 = vmatpush1.bf16.msra.mxu0 %v6359
    %7224 = vmatprep.subr.bf16.mxu0 %v6364
    %7225 = vmatpush1.bf16.msra.mxu0 %v6363
    %7226 = vmatprep.subr.bf16.mxu0 %v6368
    %7227 = vmatpush1.bf16.msra.mxu0 %v6367
    %7228 = vmatprep.subr.bf16.mxu0 %v6372
    %7229 = vmatpush1.bf16.msra.mxu0 %v6371
    %7230 = vmatprep.subr.bf16.mxu0 %v6376
    %7231 = vmatpush1.bf16.msra.mxu0 %v6375
    %7232 = vmatprep.subr.bf16.mxu0 %v6380
    %7233 = vmatpush1.bf16.msra.mxu0 %v6379
    %7234 = vmatprep.subr.bf16.mxu0 %v6384
    %7235 = vmatpush1.bf16.msra.mxu0 %v6383
    %7236 = vmatprep.subr.bf16.mxu0 %v6388
    %7237 = vmatpush1.bf16.msra.mxu0 %v6387
    %7238 = vmatprep.subr.bf16.mxu0 %v6392
    %7239 = vmatpush1.bf16.msra.mxu0 %v6391
    %7240 = vmatprep.mubr.bf16.mxu0 %v3834
    %7241 = vmatmul.mubr.bf16.gmra.mrb[0].mxu0 %v3833
    %v7242 = vpop.f32.mrb[0].mxu0
    %v7243 = vadd.f32 %v7200, %v7242
    %v7244 = vpop.f32.mrb[0].mxu0
    %v7245 = vadd.f32 %v7202, %v7244
    %v7246 = vpop.f32.mrb[0].mxu0
    %v7247 = vadd.f32 %v7204, %v7246
    %v7248 = vpop.f32.mrb[0].mxu0
    %v7249 = vadd.f32 %v7206, %v7248
    %7250 = vdwg.mxu0
    %7251 = vmatprep.subr.bf16.mxu0 %v5886
    %7252 = vmatpush1.bf16.msra.mxu0 %v5885
    %7253 = vmatprep.subr.bf16.mxu0 %v5890
    %7254 = vmatpush1.bf16.msra.mxu0 %v5889
    %7255 = vmatprep.subr.bf16.mxu0 %v5894
    %7256 = vmatpush1.bf16.msra.mxu0 %v5893
    %7257 = vmatprep.subr.bf16.mxu0 %v5898
    %7258 = vmatpush1.bf16.msra.mxu0 %v5897
    %7259 = vmatprep.subr.bf16.mxu0 %v5902
    %7260 = vmatpush1.bf16.msra.mxu0 %v5901
    %7261 = vmatprep.subr.bf16.mxu0 %v5906
    %7262 = vmatpush1.bf16.msra.mxu0 %v5905
    %7263 = vmatprep.subr.bf16.mxu0 %v5910
    %7264 = vmatpush1.bf16.msra.mxu0 %v5909
    %7265 = vmatprep.subr.bf16.mxu0 %v5914
    %7266 = vmatpush1.bf16.msra.mxu0 %v5913
    %7267 = vmatprep.subr.bf16.mxu0 %v5918
    %7268 = vmatpush1.bf16.msra.mxu0 %v5917
    %7269 = vmatprep.subr.bf16.mxu0 %v5922
    %7270 = vmatpush1.bf16.msra.mxu0 %v5921
    %7271 = vmatprep.subr.bf16.mxu0 %v5926
    %7272 = vmatpush1.bf16.msra.mxu0 %v5925
    %7273 = vmatprep.subr.bf16.mxu0 %v5930
    %7274 = vmatpush1.bf16.msra.mxu0 %v5929
    %7275 = vmatprep.subr.bf16.mxu0 %v5934
    %7276 = vmatpush1.bf16.msra.mxu0 %v5933
    %7277 = vmatprep.subr.bf16.mxu0 %v5938
    %7278 = vmatpush1.bf16.msra.mxu0 %v5937
    %7279 = vmatprep.subr.bf16.mxu0 %v5942
    %7280 = vmatpush1.bf16.msra.mxu0 %v5941
    %7281 = vmatprep.subr.bf16.mxu0 %v5946
    %7282 = vmatpush1.bf16.msra.mxu0 %v5945
    %7283 = vmatprep.mubr.bf16.mxu0 %v3820
    %7284 = vmatmul.mubr.bf16.gmra.mrb[0].mxu0 %v3819
    %v7285 = vpop.f32.mrb[0].mxu0
    %v7286 = vadd.f32 %v17, %v7285
    %v7287 = vpop.f32.mrb[0].mxu0
    %v7288 = vadd.f32 %v18, %v7287
    %v7289 = vpop.f32.mrb[0].mxu0
    %v7290 = vadd.f32 %v21, %v7289
    %v7291 = vpop.f32.mrb[0].mxu0
    %v7292 = vadd.f32 %v22, %v7291
    %7293 = vdwg.mxu0
    %7294 = vmatprep.subr.bf16.mxu0 %v5950
    %7295 = vmatpush1.bf16.msra.mxu0 %v5949
    %7296 = vmatprep.subr.bf16.mxu0 %v5954
    %7297 = vmatpush1.bf16.msra.mxu0 %v5953
    %7298 = vmatprep.subr.bf16.mxu0 %v5958
    %7299 = vmatpush1.bf16.msra.mxu0 %v5957
    %7300 = vmatprep.subr.bf16.mxu0 %v5962
    %7301 = vmatpush1.bf16.msra.mxu0 %v5961
    %7302 = vmatprep.subr.bf16.mxu0 %v5966
    %7303 = vmatpush1.bf16.msra.mxu0 %v5965
    %7304 = vmatprep.subr.bf16.mxu0 %v5970
    %7305 = vmatpush1.bf16.msra.mxu0 %v5969
    %7306 = vmatprep.subr.bf16.mxu0 %v5974
    %7307 = vmatpush1.bf16.msra.mxu0 %v5973
    %7308 = vmatprep.subr.bf16.mxu0 %v5978
    %7309 = vmatpush1.bf16.msra.mxu0 %v5977
    %7310 = vmatprep.subr.bf16.mxu0 %v5982
    %7311 = vmatpush1.bf16.msra.mxu0 %v5981
    %7312 = vmatprep.subr.bf16.mxu0 %v5986
    %7313 = vmatpush1.bf16.msra.mxu0 %v5985
    %7314 = vmatprep.subr.bf16.mxu0 %v5990
    %7315 = vmatpush1.bf16.msra.mxu0 %v5989
    %7316 = vmatprep.subr.bf16.mxu0 %v5994
    %7317 = vmatpush1.bf16.msra.mxu0 %v5993
    %7318 = vmatprep.subr.bf16.mxu0 %v5998
    %7319 = vmatpush1.bf16.msra.mxu0 %v5997
    %7320 = vmatprep.subr.bf16.mxu0 %v6002
    %7321 = vmatpush1.bf16.msra.mxu0 %v6001
    %7322 = vmatprep.subr.bf16.mxu0 %v6006
    %7323 = vmatpush1.bf16.msra.mxu0 %v6005
    %7324 = vmatprep.subr.bf16.mxu0 %v6010
    %7325 = vmatpush1.bf16.msra.mxu0 %v6009
    %7326 = vmatprep.mubr.bf16.mxu0 %v3822
    %7327 = vmatmul.mubr.bf16.gmra.mrb[0].mxu0 %v3821
    %v7328 = vpop.f32.mrb[0].mxu0
    %v7329 = vadd.f32 %v7286, %v7328
    %v7330 = vpop.f32.mrb[0].mxu0
    %v7331 = vadd.f32 %v7288, %v7330
    %v7332 = vpop.f32.mrb[0].mxu0
    %v7333 = vadd.f32 %v7290, %v7332
    %v7334 = vpop.f32.mrb[0].mxu0
    %v7335 = vadd.f32 %v7292, %v7334
    %7336 = vdwg.mxu0
    %7337 = vmatprep.subr.bf16.mxu0 %v6014
    %7338 = vmatpush1.bf16.msra.mxu0 %v6013
    %7339 = vmatprep.subr.bf16.mxu0 %v6018
    %7340 = vmatpush1.bf16.msra.mxu0 %v6017
    %7341 = vmatprep.subr.bf16.mxu0 %v6022
    %7342 = vmatpush1.bf16.msra.mxu0 %v6021
    %7343 = vmatprep.subr.bf16.mxu0 %v6026
    %7344 = vmatpush1.bf16.msra.mxu0 %v6025
    %7345 = vmatprep.subr.bf16.mxu0 %v6030
    %7346 = vmatpush1.bf16.msra.mxu0 %v6029
    %7347 = vmatprep.subr.bf16.mxu0 %v6034
    %7348 = vmatpush1.bf16.msra.mxu0 %v6033
    %7349 = vmatprep.subr.bf16.mxu0 %v6038
    %7350 = vmatpush1.bf16.msra.mxu0 %v6037
    %7351 = vmatprep.subr.bf16.mxu0 %v6042
    %7352 = vmatpush1.bf16.msra.mxu0 %v6041
    %7353 = vmatprep.subr.bf16.mxu0 %v6046
    %7354 = vmatpush1.bf16.msra.mxu0 %v6045
    %7355 = vmatprep.subr.bf16.mxu0 %v6050
    %7356 = vmatpush1.bf16.msra.mxu0 %v6049
    %7357 = vmatprep.subr.bf16.mxu0 %v6054
    %7358 = vmatpush1.bf16.msra.mxu0 %v6053
    %7359 = vmatprep.subr.bf16.mxu0 %v6058
    %7360 = vmatpush1.bf16.msra.mxu0 %v6057
    %7361 = vmatprep.subr.bf16.mxu0 %v6062
    %7362 = vmatpush1.bf16.msra.mxu0 %v6061
    %7363 = vmatprep.subr.bf16.mxu0 %v6066
    %7364 = vmatpush1.bf16.msra.mxu0 %v6065
    %7365 = vmatprep.subr.bf16.mxu0 %v6070
    %7366 = vmatpush1.bf16.msra.mxu0 %v6069
    %7367 = vmatprep.subr.bf16.mxu0 %v6074
    %7368 = vmatpush1.bf16.msra.mxu0 %v6073
    %7369 = vmatprep.mubr.bf16.mxu0 %v3824
    %7370 = vmatmul.mubr.bf16.gmra.mrb[0].mxu0 %v3823
    %v7371 = vpop.f32.mrb[0].mxu0
    %v7372 = vadd.f32 %v7329, %v7371
    %v7373 = vpop.f32.mrb[0].mxu0
    %v7374 = vadd.f32 %v7331, %v7373
    %v7375 = vpop.f32.mrb[0].mxu0
    %v7376 = vadd.f32 %v7333, %v7375
    %v7377 = vpop.f32.mrb[0].mxu0
    %v7378 = vadd.f32 %v7335, %v7377
    %7379 = vdwg.mxu0
    %7380 = vmatprep.subr.bf16.mxu0 %v6078
    %7381 = vmatpush1.bf16.msra.mxu0 %v6077
    %7382 = vmatprep.subr.bf16.mxu0 %v6082
    %7383 = vmatpush1.bf16.msra.mxu0 %v6081
    %7384 = vmatprep.subr.bf16.mxu0 %v6086
    %7385 = vmatpush1.bf16.msra.mxu0 %v6085
    %7386 = vmatprep.subr.bf16.mxu0 %v6090
    %7387 = vmatpush1.bf16.msra.mxu0 %v6089
    %7388 = vmatprep.subr.bf16.mxu0 %v6094
    %7389 = vmatpush1.bf16.msra.mxu0 %v6093
    %7390 = vmatprep.subr.bf16.mxu0 %v6098
    %7391 = vmatpush1.bf16.msra.mxu0 %v6097
    %7392 = vmatprep.subr.bf16.mxu0 %v6102
    %7393 = vmatpush1.bf16.msra.mxu0 %v6101
    %7394 = vmatprep.subr.bf16.mxu0 %v6106
    %7395 = vmatpush1.bf16.msra.mxu0 %v6105
    %7396 = vmatprep.subr.bf16.mxu0 %v6110
    %7397 = vmatpush1.bf16.msra.mxu0 %v6109
    %7398 = vmatprep.subr.bf16.mxu0 %v6114
    %7399 = vmatpush1.bf16.msra.mxu0 %v6113
    %7400 = vmatprep.subr.bf16.mxu0 %v6118
    %7401 = vmatpush1.bf16.msra.mxu0 %v6117
    %7402 = vmatprep.subr.bf16.mxu0 %v6122
    %7403 = vmatpush1.bf16.msra.mxu0 %v6121
    %7404 = vmatprep.subr.bf16.mxu0 %v6126
    %7405 = vmatpush1.bf16.msra.mxu0 %v6125
    %7406 = vmatprep.subr.bf16.mxu0 %v6130
    %7407 = vmatpush1.bf16.msra.mxu0 %v6129
    %7408 = vmatprep.subr.bf16.mxu0 %v6134
    %7409 = vmatpush1.bf16.msra.mxu0 %v6133
    %7410 = vmatprep.subr.bf16.mxu0 %v6138
    %7411 = vmatpush1.bf16.msra.mxu0 %v6137
    %7412 = vmatprep.mubr.bf16.mxu0 %v3826
    %7413 = vmatmul.mubr.bf16.gmra.mrb[0].mxu0 %v3825
    %v7414 = vpop.f32.mrb[0].mxu0
    %v7415 = vadd.f32 %v7372, %v7414
    %v7416 = vpop.f32.mrb[0].mxu0
    %v7417 = vadd.f32 %v7374, %v7416
    %v7418 = vpop.f32.mrb[0].mxu0
    %v7419 = vadd.f32 %v7376, %v7418
    %v7420 = vpop.f32.mrb[0].mxu0
    %v7421 = vadd.f32 %v7378, %v7420
    %7422 = vdwg.mxu0
    %7423 = vmatprep.subr.bf16.mxu0 %v6142
    %7424 = vmatpush1.bf16.msra.mxu0 %v6141
    %7425 = vmatprep.subr.bf16.mxu0 %v6146
    %7426 = vmatpush1.bf16.msra.mxu0 %v6145
    %7427 = vmatprep.subr.bf16.mxu0 %v6150
    %7428 = vmatpush1.bf16.msra.mxu0 %v6149
    %7429 = vmatprep.subr.bf16.mxu0 %v6154
    %7430 = vmatpush1.bf16.msra.mxu0 %v6153
    %7431 = vmatprep.subr.bf16.mxu0 %v6158
    %7432 = vmatpush1.bf16.msra.mxu0 %v6157
    %7433 = vmatprep.subr.bf16.mxu0 %v6162
    %7434 = vmatpush1.bf16.msra.mxu0 %v6161
    %7435 = vmatprep.subr.bf16.mxu0 %v6166
    %7436 = vmatpush1.bf16.msra.mxu0 %v6165
    %7437 = vmatprep.subr.bf16.mxu0 %v6170
    %7438 = vmatpush1.bf16.msra.mxu0 %v6169
    %7439 = vmatprep.subr.bf16.mxu0 %v6174
    %7440 = vmatpush1.bf16.msra.mxu0 %v6173
    %7441 = vmatprep.subr.bf16.mxu0 %v6178
    %7442 = vmatpush1.bf16.msra.mxu0 %v6177
    %7443 = vmatprep.subr.bf16.mxu0 %v6182
    %7444 = vmatpush1.bf16.msra.mxu0 %v6181
    %7445 = vmatprep.subr.bf16.mxu0 %v6186
    %7446 = vmatpush1.bf16.msra.mxu0 %v6185
    %7447 = vmatprep.subr.bf16.mxu0 %v6190
    %7448 = vmatpush1.bf16.msra.mxu0 %v6189
    %7449 = vmatprep.subr.bf16.mxu0 %v6194
    %7450 = vmatpush1.bf16.msra.mxu0 %v6193
    %7451 = vmatprep.subr.bf16.mxu0 %v6198
    %7452 = vmatpush1.bf16.msra.mxu0 %v6197
    %7453 = vmatprep.subr.bf16.mxu0 %v6202
    %7454 = vmatpush1.bf16.msra.mxu0 %v6201
    %7455 = vmatprep.mubr.bf16.mxu0 %v3828
    %7456 = vmatmul.mubr.bf16.gmra.mrb[0].mxu0 %v3827
    %v7457 = vpop.f32.mrb[0].mxu0
    %v7458 = vadd.f32 %v7415, %v7457
    %v7459 = vpop.f32.mrb[0].mxu0
    %v7460 = vadd.f32 %v7417, %v7459
    %v7461 = vpop.f32.mrb[0].mxu0
    %v7462 = vadd.f32 %v7419, %v7461
    %v7463 = vpop.f32.mrb[0].mxu0
    %v7464 = vadd.f32 %v7421, %v7463
    %7465 = vdwg.mxu0
    %7466 = vmatprep.subr.bf16.mxu0 %v6206
    %7467 = vmatpush1.bf16.msra.mxu0 %v6205
    %7468 = vmatprep.subr.bf16.mxu0 %v6210
    %7469 = vmatpush1.bf16.msra.mxu0 %v6209
    %7470 = vmatprep.subr.bf16.mxu0 %v6214
    %7471 = vmatpush1.bf16.msra.mxu0 %v6213
    %7472 = vmatprep.subr.bf16.mxu0 %v6218
    %7473 = vmatpush1.bf16.msra.mxu0 %v6217
    %7474 = vmatprep.subr.bf16.mxu0 %v6222
    %7475 = vmatpush1.bf16.msra.mxu0 %v6221
    %7476 = vmatprep.subr.bf16.mxu0 %v6226
    %7477 = vmatpush1.bf16.msra.mxu0 %v6225
    %7478 = vmatprep.subr.bf16.mxu0 %v6230
    %7479 = vmatpush1.bf16.msra.mxu0 %v6229
    %7480 = vmatprep.subr.bf16.mxu0 %v6234
    %7481 = vmatpush1.bf16.msra.mxu0 %v6233
    %7482 = vmatprep.subr.bf16.mxu0 %v6238
    %7483 = vmatpush1.bf16.msra.mxu0 %v6237
    %7484 = vmatprep.subr.bf16.mxu0 %v6242
    %7485 = vmatpush1.bf16.msra.mxu0 %v6241
    %7486 = vmatprep.subr.bf16.mxu0 %v6246
    %7487 = vmatpush1.bf16.msra.mxu0 %v6245
    %7488 = vmatprep.subr.bf16.mxu0 %v6250
    %7489 = vmatpush1.bf16.msra.mxu0 %v6249
    %7490 = vmatprep.subr.bf16.mxu0 %v6254
    %7491 = vmatpush1.bf16.msra.mxu0 %v6253
    %7492 = vmatprep.subr.bf16.mxu0 %v6258
    %7493 = vmatpush1.bf16.msra.mxu0 %v6257
    %7494 = vmatprep.subr.bf16.mxu0 %v6262
    %7495 = vmatpush1.bf16.msra.mxu0 %v6261
    %7496 = vmatprep.subr.bf16.mxu0 %v6266
    %7497 = vmatpush1.bf16.msra.mxu0 %v6265
    %7498 = vmatprep.mubr.bf16.mxu0 %v3830
    %7499 = vmatmul.mubr.bf16.gmra.mrb[0].mxu0 %v3829
    %v7500 = vpop.f32.mrb[0].mxu0
    %v7501 = vadd.f32 %v7458, %v7500
    %v7502 = vpop.f32.mrb[0].mxu0
    %v7503 = vadd.f32 %v7460, %v7502
    %v7504 = vpop.f32.mrb[0].mxu0
    %v7505 = vadd.f32 %v7462, %v7504
    %v7506 = vpop.f32.mrb[0].mxu0
    %v7507 = vadd.f32 %v7464, %v7506
    %7508 = vdwg.mxu0
    %7509 = vmatprep.subr.bf16.mxu0 %v6270
    %7510 = vmatpush1.bf16.msra.mxu0 %v6269
    %7511 = vmatprep.subr.bf16.mxu0 %v6274
    %7512 = vmatpush1.bf16.msra.mxu0 %v6273
    %7513 = vmatprep.subr.bf16.mxu0 %v6278
    %7514 = vmatpush1.bf16.msra.mxu0 %v6277
    %7515 = vmatprep.subr.bf16.mxu0 %v6282
    %7516 = vmatpush1.bf16.msra.mxu0 %v6281
    %7517 = vmatprep.subr.bf16.mxu0 %v6286
    %7518 = vmatpush1.bf16.msra.mxu0 %v6285
    %7519 = vmatprep.subr.bf16.mxu0 %v6290
    %7520 = vmatpush1.bf16.msra.mxu0 %v6289
    %7521 = vmatprep.subr.bf16.mxu0 %v6294
    %7522 = vmatpush1.bf16.msra.mxu0 %v6293
    %7523 = vmatprep.subr.bf16.mxu0 %v6298
    %7524 = vmatpush1.bf16.msra.mxu0 %v6297
    %7525 = vmatprep.subr.bf16.mxu0 %v6302
    %7526 = vmatpush1.bf16.msra.mxu0 %v6301
    %7527 = vmatprep.subr.bf16.mxu0 %v6306
    %7528 = vmatpush1.bf16.msra.mxu0 %v6305
    %7529 = vmatprep.subr.bf16.mxu0 %v6310
    %7530 = vmatpush1.bf16.msra.mxu0 %v6309
    %7531 = vmatprep.subr.bf16.mxu0 %v6314
    %7532 = vmatpush1.bf16.msra.mxu0 %v6313
    %7533 = vmatprep.subr.bf16.mxu0 %v6318
    %7534 = vmatpush1.bf16.msra.mxu0 %v6317
    %7535 = vmatprep.subr.bf16.mxu0 %v6322
    %7536 = vmatpush1.bf16.msra.mxu0 %v6321
    %7537 = vmatprep.subr.bf16.mxu0 %v6326
    %7538 = vmatpush1.bf16.msra.mxu0 %v6325
    %7539 = vmatprep.subr.bf16.mxu0 %v6330
    %7540 = vmatpush1.bf16.msra.mxu0 %v6329
    %7541 = vmatprep.mubr.bf16.mxu0 %v3832
    %7542 = vmatmul.mubr.bf16.gmra.mrb[0].mxu0 %v3831
    %v7543 = vpop.f32.mrb[0].mxu0
    %v7544 = vadd.f32 %v7501, %v7543
    %v7545 = vpop.f32.mrb[0].mxu0
    %v7546 = vadd.f32 %v7503, %v7545
    %v7547 = vpop.f32.mrb[0].mxu0
    %v7548 = vadd.f32 %v7505, %v7547
    %v7549 = vpop.f32.mrb[0].mxu0
    %v7550 = vadd.f32 %v7507, %v7549
    %7551 = vdwg.mxu0
    %7552 = vmatprep.subr.bf16.mxu0 %v6334
    %7553 = vmatpush1.bf16.msra.mxu0 %v6333
    %7554 = vmatprep.subr.bf16.mxu0 %v6338
    %7555 = vmatpush1.bf16.msra.mxu0 %v6337
    %7556 = vmatprep.subr.bf16.mxu0 %v6342
    %7557 = vmatpush1.bf16.msra.mxu0 %v6341
    %7558 = vmatprep.subr.bf16.mxu0 %v6346
    %7559 = vmatpush1.bf16.msra.mxu0 %v6345
    %7560 = vmatprep.subr.bf16.mxu0 %v6350
    %7561 = vmatpush1.bf16.msra.mxu0 %v6349
    %7562 = vmatprep.subr.bf16.mxu0 %v6354
    %7563 = vmatpush1.bf16.msra.mxu0 %v6353
    %7564 = vmatprep.subr.bf16.mxu0 %v6358
    %7565 = vmatpush1.bf16.msra.mxu0 %v6357
    %7566 = vmatprep.subr.bf16.mxu0 %v6362
    %7567 = vmatpush1.bf16.msra.mxu0 %v6361
    %7568 = vmatprep.subr.bf16.mxu0 %v6366
    %7569 = vmatpush1.bf16.msra.mxu0 %v6365
    %7570 = vmatprep.subr.bf16.mxu0 %v6370
    %7571 = vmatpush1.bf16.msra.mxu0 %v6369
    %7572 = vmatprep.subr.bf16.mxu0 %v6374
    %7573 = vmatpush1.bf16.msra.mxu0 %v6373
    %7574 = vmatprep.subr.bf16.mxu0 %v6378
    %7575 = vmatpush1.bf16.msra.mxu0 %v6377
    %7576 = vmatprep.subr.bf16.mxu0 %v6382
    %7577 = vmatpush1.bf16.msra.mxu0 %v6381
    %7578 = vmatprep.subr.bf16.mxu0 %v6386
    %7579 = vmatpush1.bf16.msra.mxu0 %v6385
    %7580 = vmatprep.subr.bf16.mxu0 %v6390
    %7581 = vmatpush1.bf16.msra.mxu0 %v6389
    %7582 = vmatprep.subr.bf16.mxu0 %v6394
    %7583 = vmatpush1.bf16.msra.mxu0 %v6393
    %7584 = vmatprep.mubr.bf16.mxu0 %v3834
    %7585 = vmatmul.mubr.bf16.gmra.mrb[0].mxu0 %v3833
    %v7586 = vpop.f32.mrb[0].mxu0
    %v7587 = vadd.f32 %v7544, %v7586
    %v7588 = vpop.f32.mrb[0].mxu0
    %v7589 = vadd.f32 %v7546, %v7588
    %v7590 = vpop.f32.mrb[0].mxu0
    %v7591 = vadd.f32 %v7548, %v7590
    %v7592 = vpop.f32.mrb[0].mxu0
    %v7593 = vadd.f32 %v7550, %v7592
    %7594 = vdwg.mxu0
    %v7595 = vadd.f32 %v7243, %v7245
    %v7596 = vadd.f32 %v7595, %v7587
    %v7597 = vadd.f32 %v7596, %v7589
    %7598 = vadd.xlane.f32.xlu0 %v7597
    %v7599 = vpop.xlane.xlu0 %7598
    %v7600 = vadd.f32 %v7247, %v7249
    %v7601 = vadd.f32 %v7600, %v7591
    %v7602 = vadd.f32 %v7601, %v7593
    %7603 = vadd.xlane.f32.xlu0 %v7602
    %v7604 = vpop.xlane.xlu0 %7603
    %v7605 = vrcp.pop 512.0
    %v7606 = vmul.f32 %v7599, %v7605
    %v7607 = vmul.f32 %v7604, %v7605
    %v7608 = vsub.f32 %v7243, %v7606
    %v7609 = vsub.f32 %v7245, %v7606
    %v7610 = vsub.f32 %v7587, %v7606
    %v7611 = vsub.f32 %v7589, %v7606
    %v7612 = vsub.f32 %v7247, %v7607
    %v7613 = vsub.f32 %v7249, %v7607
    %v7614 = vsub.f32 %v7591, %v7607
    %v7615 = vsub.f32 %v7593, %v7607
    %v7616 = vmul.f32 %v7608, %v7608
    %v7617 = vmul.f32 %v7609, %v7609
    %v7618 = vmul.f32 %v7610, %v7610
    %v7619 = vmul.f32 %v7611, %v7611
    %v7620 = vmul.f32 %v7612, %v7612
    %v7621 = vmul.f32 %v7613, %v7613
    %v7622 = vmul.f32 %v7614, %v7614
    %v7623 = vmul.f32 %v7615, %v7615
    %v7624 = vadd.f32 %v7616, %v7617
    %v7625 = vadd.f32 %v7624, %v7618
    %v7626 = vadd.f32 %v7625, %v7619
    %7627 = vadd.xlane.f32.xlu0 %v7626
    %v7628 = vpop.xlane.xlu0 %7627
    %v7629 = vadd.f32 %v7620, %v7621
    %v7630 = vadd.f32 %v7629, %v7622
    %v7631 = vadd.f32 %v7630, %v7623
    %7632 = vadd.xlane.f32.xlu0 %v7631
    %v7633 = vpop.xlane.xlu0 %7632
    %v7634 = vmul.f32 %v7628, %v7605
    %v7635 = vmul.f32 %v7633, %v7605
    %v7636 = vadd.f32 %v7634, 1e-05
    %v7637 = vadd.f32 %v7635, 1e-05
    %v7638 = vrsqrt.pop %v7636
    %v7639 = vrsqrt.pop %v7637
    %v7640 = vmul.f32 %v7608, %v7638
    %v7641 = vmul.f32 %v7609, %v7638
    %v7642 = vmul.f32 %v7610, %v7638
    %v7643 = vmul.f32 %v7611, %v7638
    %v7644 = vmul.f32 %v7612, %v7639
    %v7645 = vmul.f32 %v7613, %v7639
    %v7646 = vmul.f32 %v7614, %v7639
    %v7647 = vmul.f32 %v7615, %v7639
    %7648 = vst [vmem:[#allocation2] sm:$0xff] %v7640
    %7649 = vst [vmem:[#allocation2 + $0x8] sm:$0xff] %v7641
    %7650 = vst [vmem:[#allocation2 + $0x10] sm:$0xff] %v7642
    %7651 = vst [vmem:[#allocation2 + $0x18] sm:$0xff] %v7643
    %7652 = vst [vmem:[#allocation2 + $0x20] sm:$0xff] %v7644
    %7653 = vst [vmem:[#allocation2 + $0x28] sm:$0xff] %v7645
    %7654 = vst [vmem:[#allocation2 + $0x30] sm:$0xff] %v7646
    %7655 = vst [vmem:[#allocation2 + $0x38] sm:$0xff] %v7647
    // Predicated region
    $region14: #{encoder_layer.3} parent=1 // pred_check
      _
    $region15: #{encoder_layer.3} parent=1 // pred_check_branch
      %7657 = sbr.rel (0) target = $region17
    $region16: #{encoder_layer.3} parent=1 // pred_region
      %s7659 = ssub.s32 1024, 1024
      %7660 = vsyncadd [#allocation3], %s7659
      %s7661 = sshll.u32 [#allocation2], 4
      %s7662 = int_to_ptr.vmem [resolvable:$true] %s7661
      %7667 = dma.vmem_to_hbm [thread:$0]  %s7662, 1024, %s3, [#allocation3], 512, 512, 32
    $region17: #{encoder_layer.3} parent=1 // pred_fallthru
      _
    // Predicated region
    $region18: #{encoder_layer.3} parent=1 // pred_check
      _
    $region19: #{encoder_layer.3} parent=1 // pred_check_branch
      %7669 = sbr.rel (0) target = $region21
    $region20: #{encoder_layer.3} parent=1 // pred_region
      %7670 = dma.done [#allocation3], 1024
    $region21: #{encoder_layer.3} parent=1 // pred_fallthru
      _
    %7671 = vsyncpa [#allocation3], 1

</llo_original>
